<compile_context>
chip_gen: v5e
topology: v5e:2x2
jax: 0.10.0
libtpu: 0.0.40
codegen_flags: <defaults>
</compile_context>

<pallas_src>
import math

import jax
import jax.numpy as jnp
from jax import lax
from jax.experimental import pallas as pl
from jax.experimental.pallas import tpu as pltpu

# ---------------------------------------------------------------------------
# Config (small, consistent with the module's forward)
# ---------------------------------------------------------------------------
VOCAB = 100
EMB = 64
EMB_OTHER = 50
HIDDEN = 32
CLASSES = 3


def _zero_index_map(rank):
    zeros = (0,) * rank
    return lambda i: zeros


# ---------------------------------------------------------------------------
# Fully fused ESIM_f forward kernel
# ---------------------------------------------------------------------------
def esim_fused_pallas(xp, xh, mp_len, mh_len, mp_tok, mh_tok,
                      mask_ph, mask_hp, pm_col, hm_col, cnt_p, cnt_h, W):
    """All shapes are time-major; 2-D activations use row index = t*B + b."""
    H, C = HIDDEN, CLASSES
    Sp, B, _ = mp_len.shape
    Sh = mh_len.shape[0]
    PN, HN = Sp * B, Sh * B
    Smax = max(Sp, Sh)
    H4, H8, H10, H12, H16 = 4 * H, 8 * H, 10 * H, 12 * H, 16 * H
    NEG = -10000000.0

    def kernel(xp_ref, xh_ref, mp_len_ref, mh_len_ref, mp_tok_ref, mh_tok_ref,
               mask_ph_ref, mask_hp_ref, pm_col_ref, hm_col_ref, cnt_p_ref, cnt_h_ref,
               w_enc_in_ref, b_enc_in_ref, w_hh_enc_ref, w2_ref, b2_ref,
               w_gate_ref, b_gate_ref, w_proj_ref, b_proj_ref,
               w_comp_in_ref, b_comp_in_ref, w_hh_comp_ref,
               w34_ref, b34_ref, wc1_ref, bc1_ref, wc2_ref, bc2_ref,
               logits_ref, probs_ref,
               prep_p, prep_h, enc_p, enc_h, gc_p, gc_h):
        f32 = jnp.float32
        zmask = jnp.zeros((B, 1), f32)

        def mm(a, b):
            return jnp.dot(a, b, preferred_element_type=f32)

        # Row-group selectors (hoisted out of the loops; built from iota, no consts).
        rowid4 = lax.broadcasted_iota(jnp.int32, (4 * B, 1), 0)
        sel_fw = (rowid4 < 2 * B).astype(f32)                       # fw rows of the 8-row block
        rowid8 = lax.broadcasted_iota(jnp.int32, (8 * B, 1), 0)
        sgrp = [jnp.logical_and(rowid8 >= g * 2 * B,
                                rowid8 < (g + 1) * 2 * B).astype(f32) for g in range(4)]

        # ---- Phase 1: hoisted LSTM input projections + fusion_w1 (one matmul / seq) ----
        # columns: [fw pre-gates 0:4H | bw pre-gates 4H:8H | fusion_w1 8H:10H]
        prep_p[...] = mm(xp_ref[...], w_enc_in_ref[...]) + b_enc_in_ref[...]
        prep_h[...] = mm(xh_ref[...], w_enc_in_ref[...]) + b_enc_in_ref[...]

        def lstm_cell(gates, c_prev):
            # One sigmoid + one tanh over the whole gate block, then lane slices.
            sg = jax.nn.sigmoid(gates)
            tg = jnp.tanh(gates)
            c_new = sg[:, H:2 * H] * c_prev + sg[:, 0:H] * tg[:, 2 * H:3 * H]
            h_new = sg[:, 3 * H:4 * H] * jnp.tanh(c_new)
            return h_new, c_new

        def step_indices(t):
            pf = min(t, Sp - 1); pb = max(Sp - 1 - t, 0); p_live = t < Sp
            hf = min(t, Sh - 1); hb = max(Sh - 1 - t, 0); h_live = t < Sh
            return pf, pb, p_live, hf, hb, h_live

        # ---- Phase 2: encoding BiLSTM, 4 recurrences stacked into 8 rows per step ----
        # row groups: [p_fw | h_fw | p_bw | h_bw], B rows each
        whh_e = w_hh_enc_ref[...]
        h = jnp.zeros((4 * B, H), f32)
        c = jnp.zeros((4 * B, H), f32)
        for t in range(Smax):
            pf, pb, p_live, hf, hb, h_live = step_indices(t)
            gx = jnp.concatenate([
                prep_p[pf * B:(pf + 1) * B, 0:H4],
                prep_h[hf * B:(hf + 1) * B, 0:H4],
                prep_p[pb * B:(pb + 1) * B, H4:H8],
                prep_h[hb * B:(hb + 1) * B, H4:H8]], axis=0)          # (8, 4H)
            m_pf = mp_len_ref[pf] if p_live else zmask
            m_pb = mp_len_ref[pb] if p_live else zmask
            m_hf = mh_len_ref[hf] if h_live else zmask
            m_hb = mh_len_ref[hb] if h_live else zmask
            m = jnp.concatenate([m_pf, m_hf, m_pb, m_hb], axis=0)     # (8, 1)

            raw = mm(h, whh_e)                                        # (8, 8H)
            rec = sel_fw * raw[:, 0:H4] + (1.0 - sel_fw) * raw[:, H4:H8]
            h_cand, c_new = lstm_cell(gx + rec, c)
            h_out = m * h_cand                                        # packed-seq zeros
            if p_live:
                enc_p[pf * B:(pf + 1) * B, 0:H] = h_out[0:B]
                enc_p[pb * B:(pb + 1) * B, H:2 * H] = h_out[2 * B:3 * B]
            if h_live:
                enc_h[hf * B:(hf + 1) * B, 0:H] = h_out[B:2 * B]
                enc_h[hb * B:(hb + 1) * B, H:2 * H] = h_out[3 * B:4 * B]
            h = h_out + (1.0 - m) * h
            c = m * c_new + (1.0 - m) * c

        # ---- Phase 3: encoder sigmoid-gate fusion (fusion_w1 vs fusion_w2) ----
        w2v, b2v = w2_ref[...], b2_ref[...]

        def encoder_gate(prep_ref, enc_ref):
            f1 = prep_ref[:, H8:H10]
            f2 = mm(enc_ref[...], w2v) + b2v
            g = jax.nn.sigmoid(f1 + f2)
            return g * f1 + (1.0 - g) * f2

        encg_p = encoder_gate(prep_p, enc_p)                          # (PN, 2H)
        encg_h = encoder_gate(prep_h, enc_h)                          # (HN, 2H)

        # ---- Phase 4: decomposed softmax attention (batch-blind, batch-block masks) ----
        # TODO(synk): SoftmaxAttention_Decompose source unavailable; "related" is the
        # standard ESIM masked-softmax alignment, "unrelated" the negated similarity.
        sim_ph = lax.dot_general(encg_p, encg_h, (((1,), (1,)), ((), ())),
                                 preferred_element_type=f32)          # (PN, HN)
        sim_hp = lax.dot_general(encg_h, encg_p, (((1,), (1,)), ((), ())),
                                 preferred_element_type=f32)          # (HN, PN)
        mph, mhp = mask_ph_ref[...], mask_hp_ref[...]
        pmc, hmc = pm_col_ref[...], hm_col_ref[...]

        def masked_softmax(z, msk):
            z = z * msk
            z = z - jnp.max(z, axis=-1, keepdims=True)
            e = jnp.exp(z)
            s = e * pl.reciprocal(jnp.sum(e, axis=-1, keepdims=True), approx=True)
            s = s * msk
            return s * pl.reciprocal(jnp.sum(s, axis=-1, keepdims=True) + 1e-13,
                                     approx=True)

        attR_p = mm(masked_softmax(sim_ph, mph), encg_h) * pmc        # (PN, 2H)
        attU_p = mm(masked_softmax(-sim_ph, mph), encg_h) * pmc
        attR_h = mm(masked_softmax(sim_hp, mhp), encg_p) * hmc        # (HN, 2H)
        attU_h = mm(masked_softmax(-sim_hp, mhp), encg_p) * hmc

        # ---- Phase 5: fusion_w5..8 gated enhancement + ReLU projection + comp pre-gates ----
        wgv, bgv = w_gate_ref[...], b_gate_ref[...]
        wpv, bpv = w_proj_ref[...], b_proj_ref[...]
        wciv, bciv = w_comp_in_ref[...], b_comp_in_ref[...]

        def enhance_project(encg, attR, attU, gc_ref):
            gp = mm(jnp.concatenate([encg, attR, attU], axis=1), wgv) + bgv   # (rows, 4H)
            g = jax.nn.sigmoid(gp)
            g1, g2 = g[:, 0:2 * H], g[:, 2 * H:4 * H]
            enh1 = g1 * attR + (1.0 - g1) * encg
            enh2 = g2 * attU + (1.0 - g2) * encg
            proj = jnp.maximum(mm(jnp.concatenate([enh1, enh2], axis=1), wpv) + bpv, 0.0)
            gc_ref[...] = mm(proj, wciv) + bciv                        # (rows, 16H) pre-gates

        enhance_project(encg_p, attR_p, attU_p, gc_p)
        enhance_project(encg_h, attR_h, attU_h, gc_h)

        # ---- Phase 6: both composition BiLSTMs stacked (16 rows/step) + on-the-fly pooling ----
        # row groups: [p_c1f | h_c1f | p_c1b | h_c1b | p_c2f | h_c2f | p_c2b | h_c2b]
        whh_c = w_hh_comp_ref[...]
        R = 8 * B
        h = jnp.zeros((R, H), f32)
        c = jnp.zeros((R, H), f32)
        sum_acc = jnp.zeros((R, H), f32)
        max_acc = jnp.full((R, H), NEG, f32)
        for t in range(Smax):
            pf, pb, p_live, hf, hb, h_live = step_indices(t)
            gx = jnp.concatenate([
                gc_p[pf * B:(pf + 1) * B, 0:H4],    gc_h[hf * B:(hf + 1) * B, 0:H4],
                gc_p[pb * B:(pb + 1) * B, H4:H8],   gc_h[hb * B:(hb + 1) * B, H4:H8],
                gc_p[pf * B:(pf + 1) * B, H8:H12],  gc_h[hf * B:(hf + 1) * B, H8:H12],
                gc_p[pb * B:(pb + 1) * B, H12:H16], gc_h[hb * B:(hb + 1) * B, H12:H16]],
                axis=0)                                               # (16, 4H)
            m_pf = mp_len_ref[pf] if p_live else zmask
            m_pb = mp_len_ref[pb] if p_live else zmask
            m_hf = mh_len_ref[hf] if h_live else zmask
            m_hb = mh_len_ref[hb] if h_live else zmask
            t_pf = mp_tok_ref[pf] if p_live else zmask
            t_pb = mp_tok_ref[pb] if p_live else zmask
            t_hf = mh_tok_ref[hf] if h_live else zmask
            t_hb = mh_tok_ref[hb] if h_live else zmask
            mfw = jnp.concatenate([m_pf, m_hf], axis=0)
            mbw = jnp.concatenate([m_pb, m_hb], axis=0)
            m = jnp.concatenate([mfw, mbw, mfw, mbw], axis=0)         # (16, 1)
            tfw = jnp.concatenate([t_pf, t_hf], axis=0)
            tbw = jnp.concatenate([t_pb, t_hb], axis=0)
            tok = jnp.concatenate([tfw, tbw, tfw, tbw], axis=0)       # (16, 1)

            raw = mm(h, whh_c)                                        # (16, 16H)
            rec = (sgrp[0] * raw[:, 0:H4] + sgrp[1] * raw[:, H4:H8]
                   + sgrp[2] * raw[:, H8:H12] + sgrp[3] * raw[:, H12:H16])
            h_cand, c_new = lstm_cell(gx + rec, c)
            h_out = m * h_cand
            sum_acc = sum_acc + tok * h_out
            max_acc = jnp.maximum(max_acc, tok * h_out + (1.0 - tok) * NEG)
            h = h_out + (1.0 - m) * h
            c = m * c_new + (1.0 - m) * c

        # ---- Phase 7: pooled vectors, fusion_w3/w4 gate, classifier ----
        rcp_p = pl.reciprocal(cnt_p_ref[...], approx=True)            # (B, 1)
        rcp_h = pl.reciprocal(cnt_h_ref[...], approx=True)

        def pooled(o):   # o = 0 -> relate branch, o = 4B -> unrelate branch
            return jnp.concatenate([
                sum_acc[o:o + B] * rcp_p,            sum_acc[o + 2 * B:o + 3 * B] * rcp_p,
                max_acc[o:o + B],                    max_acc[o + 2 * B:o + 3 * B],
                sum_acc[o + B:o + 2 * B] * rcp_h,    sum_acc[o + 3 * B:o + 4 * B] * rcp_h,
                max_acc[o + B:o + 2 * B],            max_acc[o + 3 * B:o + 4 * B]],
                axis=1)                                               # (B, 8H)

        relate = pooled(0)
        unrelate = pooled(4 * B)

        gpre = mm(jnp.concatenate([relate, unrelate], axis=1), w34_ref[...]) + b34_ref[...]
        fus = jax.nn.sigmoid(gpre)
        relation = fus * relate + (1.0 - fus) * unrelate
        hid = jnp.tanh(mm(relation, wc1_ref[...]) + bc1_ref[...])
        logits = mm(hid, wc2_ref[...]) + bc2_ref[...]
        logits_ref[...] = logits
        z = logits - jnp.max(logits, axis=-1, keepdims=True)
        e = jnp.exp(z)
        probs_ref[...] = e / jnp.sum(e, axis=-1, keepdims=True)

    in_arrays = (xp, xh, mp_len, mh_len, mp_tok, mh_tok,
                 mask_ph, mask_hp, pm_col, hm_col, cnt_p, cnt_h,
                 W["w_enc_in"], W["b_enc_in"], W["w_hh_enc"], W["w2"], W["b2"],
                 W["w_gate"], W["b_gate"], W["w_proj"], W["b_proj"],
                 W["w_comp_in"], W["b_comp_in"], W["w_hh_comp"],
                 W["w34"], W["b34"], W["wc1"], W["bc1"], W["wc2"], W["bc2"])
    out_shapes = (jax.ShapeDtypeStruct((B, C), jnp.float32),
                  jax.ShapeDtypeStruct((B, C), jnp.float32))
    return pl.pallas_call(
        kernel,
        out_shape=out_shapes,
        grid=(1,),
        in_specs=[pl.BlockSpec(tuple(a.shape), _zero_index_map(a.ndim)) for a in in_arrays],
        out_specs=tuple(pl.BlockSpec((B, C), _zero_index_map(2)) for _ in range(2)),
        scratch_shapes=[pltpu.VMEM((PN, H10), jnp.float32),   # premise pre-gates + fusion_w1
                        pltpu.VMEM((HN, H10), jnp.float32),
                        pltpu.VMEM((PN, 2 * H), jnp.float32),  # encoder outputs [fw|bw]
                        pltpu.VMEM((HN, 2 * H), jnp.float32),
                        pltpu.VMEM((PN, H16), jnp.float32),    # composition pre-gates (both branches)
                        pltpu.VMEM((HN, H16), jnp.float32)],
        compiler_params=pltpu.CompilerParams(dimension_semantics=("arbitrary",)),
    )(*in_arrays)


# ---------------------------------------------------------------------------
# Parameter initialization (deterministic, synthetic)
# ---------------------------------------------------------------------------
def _xavier(key, out_dim, in_dim):
    limit = math.sqrt(6.0 / (in_dim + out_dim))
    return jax.random.uniform(key, (out_dim, in_dim), jnp.float32, -limit, limit)


def init_linear(key, in_dim, out_dim):
    w = _xavier(key, out_dim, in_dim)
    return {"w": w.T, "b": jnp.zeros((out_dim,), jnp.float32)}


def init_lstm(key, in_dim, hidden):
    keys = jax.random.split(key, 4)
    params = {}
    for d, (k1, k2) in zip(("fw", "bw"), ((keys[0], keys[1]), (keys[2], keys[3]))):
        w_ih = _xavier(k1, 4 * hidden, in_dim)
        # orthogonal init approximated with a small random matrix (synthetic weights)
        w_hh = jax.random.normal(k2, (4 * hidden, hidden), jnp.float32) * 0.1
        b_ih = jnp.zeros((4 * hidden,), jnp.float32)
        b_hh = jnp.zeros((4 * hidden,), jnp.float32).at[hidden:2 * hidden].set(1.0)
        params[d] = {"w_ih_t": w_ih.T, "w_hh_t": w_hh.T, "b": b_ih + b_hh}
    return params


def init_params(key):
    keys = iter(jax.random.split(key, 32))
    D = EMB + EMB_OTHER
    H = HIDDEN
    p = {}
    p["emb"] = jax.random.normal(next(keys), (VOCAB, EMB), jnp.float32).at[0].set(0.0)
    p["emb_other"] = jax.random.normal(next(keys), (VOCAB, EMB_OTHER), jnp.float32).at[0].set(0.0)
    p["fusion_w1"] = init_linear(next(keys), D, 2 * H)
    p["fusion_w2"] = init_linear(next(keys), 2 * H, 2 * H)
    p["proj1"] = init_linear(next(keys), 2 * H, H)
    p["proj2"] = init_linear(next(keys), 2 * H, H)
    p["fusion_w3"] = init_linear(next(keys), 8 * H, 8 * H)
    p["fusion_w4"] = init_linear(next(keys), 8 * H, 8 * H)
    p["fusion_w5"] = init_linear(next(keys), 2 * H, 2 * H)
    p["fusion_w6"] = init_linear(next(keys), 2 * H, 2 * H)
    p["fusion_w7"] = init_linear(next(keys), 2 * H, 2 * H)
    p["fusion_w8"] = init_linear(next(keys), 2 * H, 2 * H)
    p["encoding"] = init_lstm(next(keys), D, H)
    p["comp1"] = init_lstm(next(keys), H, H)
    p["comp2"] = init_lstm(next(keys), H, H)
    p["cls1"] = init_linear(next(keys), 8 * H, H)
    p["cls2"] = init_linear(next(keys), H, CLASSES)
    return p


# ---------------------------------------------------------------------------
# Host-side weight packing (block-diagonal / concatenated layouts for the kernel)
# ---------------------------------------------------------------------------
def _pack_weights(params):
    H = HIDDEN
    f32 = jnp.float32
    enc = params["encoding"]
    w_enc_in = jnp.concatenate([enc["fw"]["w_ih_t"], enc["bw"]["w_ih_t"],
                                params["fusion_w1"]["w"]], axis=1)               # (Din, 10H)
    b_enc_in = jnp.concatenate([enc["fw"]["b"], enc["bw"]["b"],
                                params["fusion_w1"]["b"]]).reshape(1, -1)
    w_hh_enc = jnp.concatenate([enc["fw"]["w_hh_t"], enc["bw"]["w_hh_t"]], axis=1)  # (H, 8H)

    z22 = jnp.zeros((2 * H, 2 * H), f32)
    w_gate = jnp.concatenate([
        jnp.concatenate([params["fusion_w5"]["w"], params["fusion_w7"]["w"]], axis=1),
        jnp.concatenate([params["fusion_w6"]["w"], z22], axis=1),
        jnp.concatenate([z22, params["fusion_w8"]["w"]], axis=1)], axis=0)       # (6H, 4H)
    b_gate = jnp.concatenate([params["fusion_w5"]["b"] + params["fusion_w6"]["b"],
                              params["fusion_w7"]["b"] + params["fusion_w8"]["b"]]).reshape(1, -1)

    z21 = jnp.zeros((2 * H, H), f32)
    w_proj = jnp.concatenate([
        jnp.concatenate([params["proj1"]["w"], z21], axis=1),
        jnp.concatenate([z21, params["proj2"]["w"]], axis=1)], axis=0)           # (4H, 2H)
    b_proj = jnp.concatenate([params["proj1"]["b"], params["proj2"]["b"]]).reshape(1, -1)

    c1, c2 = params["comp1"], params["comp2"]
    z14 = jnp.zeros((H, 4 * H), f32)
    w_comp_in = jnp.concatenate([
        jnp.concatenate([c1["fw"]["w_ih_t"], c1["bw"]["w_ih_t"], z14, z14], axis=1),
        jnp.concatenate([z14, z14, c2["fw"]["w_ih_t"], c2["bw"]["w_ih_t"]], axis=1)],
        axis=0)                                                                   # (2H, 16H)
    b_comp_in = jnp.concatenate([c1["fw"]["b"], c1["bw"]["b"],
                                 c2["fw"]["b"], c2["bw"]["b"]]).reshape(1, -1)
    w_hh_comp = jnp.concatenate([c1["fw"]["w_hh_t"], c1["bw"]["w_hh_t"],
                                 c2["fw"]["w_hh_t"], c2["bw"]["w_hh_t"]], axis=1)  # (H, 16H)

    w34 = jnp.concatenate([params["fusion_w3"]["w"], params["fusion_w4"]["w"]], axis=0)
    b34 = (params["fusion_w3"]["b"] + params["fusion_w4"]["b"]).reshape(1, -1)
    return dict(
        w_enc_in=w_enc_in, b_enc_in=b_enc_in, w_hh_enc=w_hh_enc,
        w2=params["fusion_w2"]["w"], b2=params["fusion_w2"]["b"].reshape(1, -1),
        w_gate=w_gate, b_gate=b_gate, w_proj=w_proj, b_proj=b_proj,
        w_comp_in=w_comp_in, b_comp_in=b_comp_in, w_hh_comp=w_hh_comp,
        w34=w34, b34=b34,
        wc1=params["cls1"]["w"], bc1=params["cls1"]["b"].reshape(1, -1),
        wc2=params["cls2"]["w"], bc2=params["cls2"]["b"].reshape(1, -1))


# ---------------------------------------------------------------------------
# ESIM_f forward (one Pallas kernel call)
# ---------------------------------------------------------------------------
@jax.jit
def esim_f_forward(params, premises, premises_lengths, hypotheses, hypotheses_lengths):
    B, Sp = premises.shape
    Sh = hypotheses.shape[1]
    D = EMB + EMB_OTHER

    prem_t = premises.T                      # (Sp, B) time-major token ids
    hyp_t = hypotheses.T

    # embeddings directly in time-major row order (row = t*B + b)
    emb_p = jnp.concatenate([params["emb"][prem_t], params["emb_other"][prem_t]], axis=-1)
    emb_h = jnp.concatenate([params["emb"][hyp_t], params["emb_other"][hyp_t]], axis=-1)
    xp = emb_p.reshape(Sp * B, D)
    xh = emb_h.reshape(Sh * B, D)

    # get_mask: token != padding_idx; pack_padded_sequence emulated via length masks.
    p_tok = (prem_t != 0).astype(jnp.float32)                    # (Sp, B)
    h_tok = (hyp_t != 0).astype(jnp.float32)
    p_len = (jnp.arange(Sp)[:, None] < premises_lengths[None, :]).astype(jnp.float32)
    h_len = (jnp.arange(Sh)[:, None] < hypotheses_lengths[None, :]).astype(jnp.float32)

    mp_tok, mh_tok = p_tok[:, :, None], h_tok[:, :, None]        # (S, B, 1)
    mp_len, mh_len = p_len[:, :, None], h_len[:, :, None]

    pm_col = p_tok.reshape(Sp * B, 1)                            # time-major column masks
    hm_col = h_tok.reshape(Sh * B, 1)
    # batch-block mask so attention can run "batch-blind" on time-major row slabs
    bm = (jnp.arange(Sp * B)[:, None] % B == jnp.arange(Sh * B)[None, :] % B).astype(jnp.float32)
    mask_ph = bm * h_tok.reshape(1, Sh * B)                      # (Sp*B, Sh*B)
    mask_hp = bm.T * p_tok.reshape(1, Sp * B)                    # (Sh*B, Sp*B)
    cnt_p = jnp.sum(p_tok, axis=0)[:, None]                      # (B, 1) valid-token counts
    cnt_h = jnp.sum(h_tok, axis=0)[:, None]

    W = _pack_weights(params)
    return esim_fused_pallas(xp, xh, mp_len, mh_len, mp_tok, mh_tok,
                             mask_ph, mask_hp, pm_col, hm_col, cnt_p, cnt_h, W)


# ---------------------------------------------------------------------------
# Main
# ---------------------------------------------------------------------------
if __name__ == "__main__":
    params = init_params(jax.random.PRNGKey(0))

    B, Sp, Sh = 2, 10, 8
    premises_lengths = jnp.array([10, 7], dtype=jnp.int32)
    hypotheses_lengths = jnp.array([8, 5], dtype=jnp.int32)

    kp, kh = jax.random.split(jax.random.PRNGKey(1))
    premises = jax.random.randint(kp, (B, Sp), 1, VOCAB, dtype=jnp.int32)
    hypotheses = jax.random.randint(kh, (B, Sh), 1, VOCAB, dtype=jnp.int32)
    premises = jnp.where(jnp.arange(Sp)[None, :] < premises_lengths[:, None], premises, 0)
    hypotheses = jnp.where(jnp.arange(Sh)[None, :] < hypotheses_lengths[:, None], hypotheses, 0)

    logits, probs = esim_f_forward(params, premises, premises_lengths,
                                   hypotheses, hypotheses_lengths)
    jax.block_until_ready((logits, probs))
    assert logits.shape == (B, CLASSES) and probs.shape == (B, CLASSES)
    assert bool(jnp.all(jnp.isfinite(logits))) and bool(jnp.all(jnp.isfinite(probs)))
    print("KERNEL_OK")
</pallas_src>

<mosaic_0001>
module attributes {stable_mosaic.version = 11 : i64} {
  func.func @kernel(%arg0: i32, %arg1: memref<20x114xf32, #tpu.memory_space<vmem>>, %arg2: memref<16x114xf32, #tpu.memory_space<vmem>>, %arg3: memref<10x2x1xf32, #tpu.memory_space<vmem>>, %arg4: memref<8x2x1xf32, #tpu.memory_space<vmem>>, %arg5: memref<10x2x1xf32, #tpu.memory_space<vmem>>, %arg6: memref<8x2x1xf32, #tpu.memory_space<vmem>>, %arg7: memref<20x16xf32, #tpu.memory_space<vmem>>, %arg8: memref<16x20xf32, #tpu.memory_space<vmem>>, %arg9: memref<20x1xf32, #tpu.memory_space<vmem>>, %arg10: memref<16x1xf32, #tpu.memory_space<vmem>>, %arg11: memref<2x1xf32, #tpu.memory_space<vmem>>, %arg12: memref<2x1xf32, #tpu.memory_space<vmem>>, %arg13: memref<114x320xf32, #tpu.memory_space<vmem>>, %arg14: memref<1x320xf32, #tpu.memory_space<vmem>>, %arg15: memref<32x256xf32, #tpu.memory_space<vmem>>, %arg16: memref<64x64xf32, #tpu.memory_space<vmem>>, %arg17: memref<1x64xf32, #tpu.memory_space<vmem>>, %arg18: memref<192x128xf32, #tpu.memory_space<vmem>>, %arg19: memref<1x128xf32, #tpu.memory_space<vmem>>, %arg20: memref<128x64xf32, #tpu.memory_space<vmem>>, %arg21: memref<1x64xf32, #tpu.memory_space<vmem>>, %arg22: memref<64x512xf32, #tpu.memory_space<vmem>>, %arg23: memref<1x512xf32, #tpu.memory_space<vmem>>, %arg24: memref<32x512xf32, #tpu.memory_space<vmem>>, %arg25: memref<512x256xf32, #tpu.memory_space<vmem>>, %arg26: memref<1x256xf32, #tpu.memory_space<vmem>>, %arg27: memref<256x32xf32, #tpu.memory_space<vmem>>, %arg28: memref<1x32xf32, #tpu.memory_space<vmem>>, %arg29: memref<32x3xf32, #tpu.memory_space<vmem>>, %arg30: memref<1x3xf32, #tpu.memory_space<vmem>>, %arg31: memref<2x3xf32, #tpu.memory_space<vmem>>, %arg32: memref<2x3xf32, #tpu.memory_space<vmem>>, %arg33: memref<20x320xf32, #tpu.memory_space<vmem>>, %arg34: memref<16x320xf32, #tpu.memory_space<vmem>>, %arg35: memref<20x64xf32, #tpu.memory_space<vmem>>, %arg36: memref<16x64xf32, #tpu.memory_space<vmem>>, %arg37: memref<20x512xf32, #tpu.memory_space<vmem>>, %arg38: memref<16x512xf32, #tpu.memory_space<vmem>>) attributes {dimension_semantics = [#tpu.dimension_semantics<arbitrary>], iteration_bounds = array<i64: 1>, scalar_prefetch = 0 : i64, scratch_operands = 6 : i64, tpu.core_type = #tpu.core_type<tc>, window_params = [{pipeline_mode = #tpu.pipeline_mode<synchronous>, transform_indices = @transform_0, window_bounds = array<i64: 20, 114>}, {pipeline_mode = #tpu.pipeline_mode<synchronous>, transform_indices = @transform_1, window_bounds = array<i64: 16, 114>}, {pipeline_mode = #tpu.pipeline_mode<synchronous>, transform_indices = @transform_2, window_bounds = array<i64: 10, 2, 1>}, {pipeline_mode = #tpu.pipeline_mode<synchronous>, transform_indices = @transform_3, window_bounds = array<i64: 8, 2, 1>}, {pipeline_mode = #tpu.pipeline_mode<synchronous>, transform_indices = @transform_4, window_bounds = array<i64: 10, 2, 1>}, {pipeline_mode = #tpu.pipeline_mode<synchronous>, transform_indices = @transform_5, window_bounds = array<i64: 8, 2, 1>}, {pipeline_mode = #tpu.pipeline_mode<synchronous>, transform_indices = @transform_6, window_bounds = array<i64: 20, 16>}, {pipeline_mode = #tpu.pipeline_mode<synchronous>, transform_indices = @transform_7, window_bounds = array<i64: 16, 20>}, {pipeline_mode = #tpu.pipeline_mode<synchronous>, transform_indices = @transform_8, window_bounds = array<i64: 20, 1>}, {pipeline_mode = #tpu.pipeline_mode<synchronous>, transform_indices = @transform_9, window_bounds = array<i64: 16, 1>}, {pipeline_mode = #tpu.pipeline_mode<synchronous>, transform_indices = @transform_10, window_bounds = array<i64: 2, 1>}, {pipeline_mode = #tpu.pipeline_mode<synchronous>, transform_indices = @transform_11, window_bounds = array<i64: 2, 1>}, {pipeline_mode = #tpu.pipeline_mode<synchronous>, transform_indices = @transform_12, window_bounds = array<i64: 114, 320>}, {pipeline_mode = #tpu.pipeline_mode<synchronous>, transform_indices = @transform_13, window_bounds = array<i64: 1, 320>}, {pipeline_mode = #tpu.pipeline_mode<synchronous>, transform_indices = @transform_14, window_bounds = array<i64: 32, 256>}, {pipeline_mode = #tpu.pipeline_mode<synchronous>, transform_indices = @transform_15, window_bounds = array<i64: 64, 64>}, {pipeline_mode = #tpu.pipeline_mode<synchronous>, transform_indices = @transform_16, window_bounds = array<i64: 1, 64>}, {pipeline_mode = #tpu.pipeline_mode<synchronous>, transform_indices = @transform_17, window_bounds = array<i64: 192, 128>}, {pipeline_mode = #tpu.pipeline_mode<synchronous>, transform_indices = @transform_18, window_bounds = array<i64: 1, 128>}, {pipeline_mode = #tpu.pipeline_mode<synchronous>, transform_indices = @transform_19, window_bounds = array<i64: 128, 64>}, {pipeline_mode = #tpu.pipeline_mode<synchronous>, transform_indices = @transform_20, window_bounds = array<i64: 1, 64>}, {pipeline_mode = #tpu.pipeline_mode<synchronous>, transform_indices = @transform_21, window_bounds = array<i64: 64, 512>}, {pipeline_mode = #tpu.pipeline_mode<synchronous>, transform_indices = @transform_22, window_bounds = array<i64: 1, 512>}, {pipeline_mode = #tpu.pipeline_mode<synchronous>, transform_indices = @transform_23, window_bounds = array<i64: 32, 512>}, {pipeline_mode = #tpu.pipeline_mode<synchronous>, transform_indices = @transform_24, window_bounds = array<i64: 512, 256>}, {pipeline_mode = #tpu.pipeline_mode<synchronous>, transform_indices = @transform_25, window_bounds = array<i64: 1, 256>}, {pipeline_mode = #tpu.pipeline_mode<synchronous>, transform_indices = @transform_26, window_bounds = array<i64: 256, 32>}, {pipeline_mode = #tpu.pipeline_mode<synchronous>, transform_indices = @transform_27, window_bounds = array<i64: 1, 32>}, {pipeline_mode = #tpu.pipeline_mode<synchronous>, transform_indices = @transform_28, window_bounds = array<i64: 32, 3>}, {pipeline_mode = #tpu.pipeline_mode<synchronous>, transform_indices = @transform_29, window_bounds = array<i64: 1, 3>}, {pipeline_mode = #tpu.pipeline_mode<synchronous>, transform_indices = @transform_30, window_bounds = array<i64: 2, 3>}, {pipeline_mode = #tpu.pipeline_mode<synchronous>, transform_indices = @transform_31, window_bounds = array<i64: 2, 3>}]} {
    %cst = arith.constant 0.000000e+00 : f32
    %0 = vector.broadcast %cst : f32 to vector<2x1xf32>
    %1 = tpu.iota {dimensions = array<i32: 0>} : vector<8x1xi32>
    %c4_i32 = arith.constant 4 : i32
    %2 = vector.broadcast %c4_i32 : i32 to vector<8x1xi32>
    %3 = arith.cmpi slt, %1, %2 : vector<8x1xi32>
    %4 = arith.extui %3 : vector<8x1xi1> to vector<8x1xi32>
    %5 = arith.sitofp %4 : vector<8x1xi32> to vector<8x1xf32>
    %6 = tpu.iota {dimensions = array<i32: 0>} : vector<16x1xi32>
    %c0_i32 = arith.constant 0 : i32
    %7 = vector.broadcast %c0_i32 : i32 to vector<16x1xi32>
    %8 = arith.cmpi sge, %6, %7 : vector<16x1xi32>
    %c4_i32_0 = arith.constant 4 : i32
    %9 = vector.broadcast %c4_i32_0 : i32 to vector<16x1xi32>
    %10 = arith.cmpi slt, %6, %9 : vector<16x1xi32>
    %11 = arith.andi %8, %10 : vector<16x1xi1>
    %12 = arith.extui %11 : vector<16x1xi1> to vector<16x1xi32>
    %13 = arith.sitofp %12 : vector<16x1xi32> to vector<16x1xf32>
    %c4_i32_1 = arith.constant 4 : i32
    %14 = vector.broadcast %c4_i32_1 : i32 to vector<16x1xi32>
    %15 = arith.cmpi sge, %6, %14 : vector<16x1xi32>
    %c8_i32 = arith.constant 8 : i32
    %16 = vector.broadcast %c8_i32 : i32 to vector<16x1xi32>
    %17 = arith.cmpi slt, %6, %16 : vector<16x1xi32>
    %18 = arith.andi %15, %17 : vector<16x1xi1>
    %19 = arith.extui %18 : vector<16x1xi1> to vector<16x1xi32>
    %20 = arith.sitofp %19 : vector<16x1xi32> to vector<16x1xf32>
    %c8_i32_2 = arith.constant 8 : i32
    %21 = vector.broadcast %c8_i32_2 : i32 to vector<16x1xi32>
    %22 = arith.cmpi sge, %6, %21 : vector<16x1xi32>
    %c12_i32 = arith.constant 12 : i32
    %23 = vector.broadcast %c12_i32 : i32 to vector<16x1xi32>
    %24 = arith.cmpi slt, %6, %23 : vector<16x1xi32>
    %25 = arith.andi %22, %24 : vector<16x1xi1>
    %26 = arith.extui %25 : vector<16x1xi1> to vector<16x1xi32>
    %27 = arith.sitofp %26 : vector<16x1xi32> to vector<16x1xf32>
    %c12_i32_3 = arith.constant 12 : i32
    %28 = vector.broadcast %c12_i32_3 : i32 to vector<16x1xi32>
    %29 = arith.cmpi sge, %6, %28 : vector<16x1xi32>
    %c16_i32 = arith.constant 16 : i32
    %30 = vector.broadcast %c16_i32 : i32 to vector<16x1xi32>
    %31 = arith.cmpi slt, %6, %30 : vector<16x1xi32>
    %32 = arith.andi %29, %31 : vector<16x1xi1>
    %33 = arith.extui %32 : vector<16x1xi1> to vector<16x1xi32>
    %34 = arith.sitofp %33 : vector<16x1xi32> to vector<16x1xf32>
    %c0 = arith.constant 0 : index
    %c0_4 = arith.constant 0 : index
    %35 = vector.load %arg1[%c0, %c0_4] : memref<20x114xf32, #tpu.memory_space<vmem>>, vector<20x114xf32>
    %c0_5 = arith.constant 0 : index
    %c0_6 = arith.constant 0 : index
    %36 = vector.load %arg13[%c0_5, %c0_6] : memref<114x320xf32, #tpu.memory_space<vmem>>, vector<114x320xf32>
    %cst_7 = arith.constant dense<0.000000e+00> : vector<20x320xf32>
    %37 = tpu.matmul %35, %36, %cst_7 {dimension_numbers = #tpu.dot_dimension_numbers<[1], [0], [0], [1], [0, 0, 1, 1], [], []>} : vector<20x114xf32>, vector<114x320xf32>, vector<20x320xf32> -> vector<20x320xf32>
    %c0_8 = arith.constant 0 : index
    %c0_9 = arith.constant 0 : index
    %38 = vector.load %arg14[%c0_8, %c0_9] : memref<1x320xf32, #tpu.memory_space<vmem>>, vector<1x320xf32>
    %39 = vector.broadcast %38 : vector<1x320xf32> to vector<20x320xf32>
    %40 = arith.addf %37, %39 : vector<20x320xf32>
    %c0_10 = arith.constant 0 : index
    %c0_11 = arith.constant 0 : index
    %41 = vector.load %arg33[%c0_10, %c0_11] : memref<20x320xf32, #tpu.memory_space<vmem>>, vector<20x320xf32>
    tpu.vector_store %arg33[%c0_10, %c0_11], %40 {strides = array<i32>} : memref<20x320xf32, #tpu.memory_space<vmem>>, vector<20x320xf32>,
    %c0_12 = arith.constant 0 : index
    %c0_13 = arith.constant 0 : index
    %42 = vector.load %arg2[%c0_12, %c0_13] : memref<16x114xf32, #tpu.memory_space<vmem>>, vector<16x114xf32>
    %c0_14 = arith.constant 0 : index
    %c0_15 = arith.constant 0 : index
    %43 = vector.load %arg13[%c0_14, %c0_15] : memref<114x320xf32, #tpu.memory_space<vmem>>, vector<114x320xf32>
    %cst_16 = arith.constant dense<0.000000e+00> : vector<16x320xf32>
    %44 = tpu.matmul %42, %43, %cst_16 {dimension_numbers = #tpu.dot_dimension_numbers<[1], [0], [0], [1], [0, 0, 1, 1], [], []>} : vector<16x114xf32>, vector<114x320xf32>, vector<16x320xf32> -> vector<16x320xf32>
    %c0_17 = arith.constant 0 : index
    %c0_18 = arith.constant 0 : index
    %45 = vector.load %arg14[%c0_17, %c0_18] : memref<1x320xf32, #tpu.memory_space<vmem>>, vector<1x320xf32>
    %46 = vector.broadcast %45 : vector<1x320xf32> to vector<16x320xf32>
    %47 = arith.addf %44, %46 : vector<16x320xf32>
    %c0_19 = arith.constant 0 : index
    %c0_20 = arith.constant 0 : index
    %48 = vector.load %arg34[%c0_19, %c0_20] : memref<16x320xf32, #tpu.memory_space<vmem>>, vector<16x320xf32>
    tpu.vector_store %arg34[%c0_19, %c0_20], %47 {strides = array<i32>} : memref<16x320xf32, #tpu.memory_space<vmem>>, vector<16x320xf32>,
    %c0_21 = arith.constant 0 : index
    %c0_22 = arith.constant 0 : index
    %49 = vector.load %arg15[%c0_21, %c0_22] : memref<32x256xf32, #tpu.memory_space<vmem>>, vector<32x256xf32>
    %cst_23 = arith.constant 0.000000e+00 : f32
    %50 = vector.broadcast %cst_23 : f32 to vector<8x32xf32>
    %cst_24 = arith.constant 0.000000e+00 : f32
    %51 = vector.broadcast %cst_24 : f32 to vector<8x32xf32>
    %c0_25 = arith.constant 0 : index
    %c0_26 = arith.constant 0 : index
    %52 = vector.load %arg33[%c0_25, %c0_26] : memref<20x320xf32, #tpu.memory_space<vmem>>, vector<2x128xf32>
    %c0_27 = arith.constant 0 : index
    %c0_28 = arith.constant 0 : index
    %53 = vector.load %arg34[%c0_27, %c0_28] : memref<16x320xf32, #tpu.memory_space<vmem>>, vector<2x128xf32>
    %c18 = arith.constant 18 : index
    %c128 = arith.constant 128 : index
    %54 = vector.load %arg33[%c18, %c128] : memref<20x320xf32, #tpu.memory_space<vmem>>, vector<2x128xf32>
    %c14 = arith.constant 14 : index
    %c128_29 = arith.constant 128 : index
    %55 = vector.load %arg34[%c14, %c128_29] : memref<16x320xf32, #tpu.memory_space<vmem>>, vector<2x128xf32>
    %56 = tpu.concatenate %52, %53, %54, %55 in 0 : vector<2x128xf32>, vector<2x128xf32>, vector<2x128xf32>, vector<2x128xf32> -> vector<8x128xf32>
    %c0_30 = arith.constant 0 : index
    %c0_31 = arith.constant 0 : index
    %c0_32 = arith.constant 0 : index
    %57 = vector.load %arg3[%c0_30, %c0_31, %c0_32] : memref<10x2x1xf32, #tpu.memory_space<vmem>>, vector<1x2x1xf32>
    %58 = vector.shape_cast %57 : vector<1x2x1xf32> to vector<2x1xf32>
    %c9 = arith.constant 9 : index
    %c0_33 = arith.constant 0 : index
    %c0_34 = arith.constant 0 : index
    %59 = vector.load %arg3[%c9, %c0_33, %c0_34] : memref<10x2x1xf32, #tpu.memory_space<vmem>>, vector<1x2x1xf32>
    %60 = vector.shape_cast %59 : vector<1x2x1xf32> to vector<2x1xf32>
    %c0_35 = arith.constant 0 : index
    %c0_36 = arith.constant 0 : index
    %c0_37 = arith.constant 0 : index
    %61 = vector.load %arg4[%c0_35, %c0_36, %c0_37] : memref<8x2x1xf32, #tpu.memory_space<vmem>>, vector<1x2x1xf32>
    %62 = vector.shape_cast %61 : vector<1x2x1xf32> to vector<2x1xf32>
    %c7 = arith.constant 7 : index
    %c0_38 = arith.constant 0 : index
    %c0_39 = arith.constant 0 : index
    %63 = vector.load %arg4[%c7, %c0_38, %c0_39] : memref<8x2x1xf32, #tpu.memory_space<vmem>>, vector<1x2x1xf32>
    %64 = vector.shape_cast %63 : vector<1x2x1xf32> to vector<2x1xf32>
    %65 = tpu.concatenate %58, %62, %60, %64 in 0 : vector<2x1xf32>, vector<2x1xf32>, vector<2x1xf32>, vector<2x1xf32> -> vector<8x1xf32>
    %cst_40 = arith.constant dense<0.000000e+00> : vector<8x256xf32>
    %66 = tpu.matmul %50, %49, %cst_40 {dimension_numbers = #tpu.dot_dimension_numbers<[1], [0], [0], [1], [0, 0, 1, 1], [], []>} : vector<8x32xf32>, vector<32x256xf32>, vector<8x256xf32> -> vector<8x256xf32>
    %67 = vector.extract_strided_slice %66 {offsets = [0, 0], sizes = [8, 128], strides = [1, 1]} : vector<8x256xf32> to vector<8x128xf32>
    %68 = vector.broadcast %5 : vector<8x1xf32> to vector<8x128xf32>
    %69 = arith.mulf %68, %67 : vector<8x128xf32>
    %cst_41 = arith.constant 1.000000e+00 : f32
    %70 = vector.broadcast %cst_41 : f32 to vector<8x1xf32>
    %71 = arith.subf %70, %5 : vector<8x1xf32>
    %72 = vector.extract_strided_slice %66 {offsets = [0, 128], sizes = [8, 128], strides = [1, 1]} : vector<8x256xf32> to vector<8x128xf32>
    %73 = vector.broadcast %71 : vector<8x1xf32> to vector<8x128xf32>
    %74 = arith.mulf %73, %72 : vector<8x128xf32>
    %75 = arith.addf %69, %74 : vector<8x128xf32>
    %76 = arith.addf %56, %75 : vector<8x128xf32>
    %77 = arith.negf %76 : vector<8x128xf32>
    %78 = math.exp %77 : vector<8x128xf32>
    %cst_42 = arith.constant 1.000000e+00 : f32
    %79 = vector.broadcast %cst_42 : f32 to vector<8x128xf32>
    %80 = arith.addf %79, %78 : vector<8x128xf32>
    %81 = arith.divf %79, %80 : vector<8x128xf32>
    %82 = math.tanh %76 : vector<8x128xf32>
    %83 = vector.extract_strided_slice %81 {offsets = [0, 32], sizes = [8, 32], strides = [1, 1]} : vector<8x128xf32> to vector<8x32xf32>
    %84 = arith.mulf %83, %51 : vector<8x32xf32>
    %85 = vector.extract_strided_slice %81 {offsets = [0, 0], sizes = [8, 32], strides = [1, 1]} : vector<8x128xf32> to vector<8x32xf32>
    %86 = vector.extract_strided_slice %82 {offsets = [0, 64], sizes = [8, 32], strides = [1, 1]} : vector<8x128xf32> to vector<8x32xf32>
    %87 = arith.mulf %85, %86 : vector<8x32xf32>
    %88 = arith.addf %84, %87 : vector<8x32xf32>
    %89 = vector.extract_strided_slice %81 {offsets = [0, 96], sizes = [8, 32], strides = [1, 1]} : vector<8x128xf32> to vector<8x32xf32>
    %90 = math.tanh %88 : vector<8x32xf32>
    %91 = arith.mulf %89, %90 : vector<8x32xf32>
    %92 = vector.broadcast %65 : vector<8x1xf32> to vector<8x32xf32>
    %93 = arith.mulf %92, %91 : vector<8x32xf32>
    %94 = vector.extract_strided_slice %93 {offsets = [0, 0], sizes = [2, 32], strides = [1, 1]} : vector<8x32xf32> to vector<2x32xf32>
    %c0_43 = arith.constant 0 : index
    %c0_44 = arith.constant 0 : index
    %95 = vector.load %arg35[%c0_43, %c0_44] : memref<20x64xf32, #tpu.memory_space<vmem>>, vector<2x32xf32>
    tpu.vector_store %arg35[%c0_43, %c0_44], %94 {strides = array<i32>} : memref<20x64xf32, #tpu.memory_space<vmem>>, vector<2x32xf32>,
    %96 = vector.extract_strided_slice %93 {offsets = [4, 0], sizes = [2, 32], strides = [1, 1]} : vector<8x32xf32> to vector<2x32xf32>
    %c18_45 = arith.constant 18 : index
    %c32 = arith.constant 32 : index
    %97 = vector.load %arg35[%c18_45, %c32] : memref<20x64xf32, #tpu.memory_space<vmem>>, vector<2x32xf32>
    tpu.vector_store %arg35[%c18_45, %c32], %96 {strides = array<i32>} : memref<20x64xf32, #tpu.memory_space<vmem>>, vector<2x32xf32>,
    %98 = vector.extract_strided_slice %93 {offsets = [2, 0], sizes = [2, 32], strides = [1, 1]} : vector<8x32xf32> to vector<2x32xf32>
    %c0_46 = arith.constant 0 : index
    %c0_47 = arith.constant 0 : index
    %99 = vector.load %arg36[%c0_46, %c0_47] : memref<16x64xf32, #tpu.memory_space<vmem>>, vector<2x32xf32>
    tpu.vector_store %arg36[%c0_46, %c0_47], %98 {strides = array<i32>} : memref<16x64xf32, #tpu.memory_space<vmem>>, vector<2x32xf32>,
    %100 = vector.extract_strided_slice %93 {offsets = [6, 0], sizes = [2, 32], strides = [1, 1]} : vector<8x32xf32> to vector<2x32xf32>
    %c14_48 = arith.constant 14 : index
    %c32_49 = arith.constant 32 : index
    %101 = vector.load %arg36[%c14_48, %c32_49] : memref<16x64xf32, #tpu.memory_space<vmem>>, vector<2x32xf32>
    tpu.vector_store %arg36[%c14_48, %c32_49], %100 {strides = array<i32>} : memref<16x64xf32, #tpu.memory_space<vmem>>, vector<2x32xf32>,
    %cst_50 = arith.constant 1.000000e+00 : f32
    %102 = vector.broadcast %cst_50 : f32 to vector<8x1xf32>
    %103 = arith.subf %102, %65 : vector<8x1xf32>
    %104 = vector.broadcast %103 : vector<8x1xf32> to vector<8x32xf32>
    %105 = arith.mulf %104, %50 : vector<8x32xf32>
    %106 = arith.addf %93, %105 : vector<8x32xf32>
    %107 = vector.broadcast %65 : vector<8x1xf32> to vector<8x32xf32>
    %108 = arith.mulf %107, %88 : vector<8x32xf32>
    %cst_51 = arith.constant 1.000000e+00 : f32
    %109 = vector.broadcast %cst_51 : f32 to vector<8x1xf32>
    %110 = arith.subf %109, %65 : vector<8x1xf32>
    %111 = vector.broadcast %110 : vector<8x1xf32> to vector<8x32xf32>
    %112 = arith.mulf %111, %51 : vector<8x32xf32>
    %113 = arith.addf %108, %112 : vector<8x32xf32>
    %c2 = arith.constant 2 : index
    %c0_52 = arith.constant 0 : index
    %114 = vector.load %arg33[%c2, %c0_52] : memref<20x320xf32, #tpu.memory_space<vmem>>, vector<2x128xf32>
    %c2_53 = arith.constant 2 : index
    %c0_54 = arith.constant 0 : index
    %115 = vector.load %arg34[%c2_53, %c0_54] : memref<16x320xf32, #tpu.memory_space<vmem>>, vector<2x128xf32>
    %c16 = arith.constant 16 : index
    %c128_55 = arith.constant 128 : index
    %116 = vector.load %arg33[%c16, %c128_55] : memref<20x320xf32, #tpu.memory_space<vmem>>, vector<2x128xf32>
    %c12 = arith.constant 12 : index
    %c128_56 = arith.constant 128 : index
    %117 = vector.load %arg34[%c12, %c128_56] : memref<16x320xf32, #tpu.memory_space<vmem>>, vector<2x128xf32>
    %118 = tpu.concatenate %114, %115, %116, %117 in 0 : vector<2x128xf32>, vector<2x128xf32>, vector<2x128xf32>, vector<2x128xf32> -> vector<8x128xf32>
    %c1 = arith.constant 1 : index
    %c0_57 = arith.constant 0 : index
    %c0_58 = arith.constant 0 : index
    %119 = vector.load %arg3[%c1, %c0_57, %c0_58] : memref<10x2x1xf32, #tpu.memory_space<vmem>>, vector<1x2x1xf32>
    %120 = vector.shape_cast %119 : vector<1x2x1xf32> to vector<2x1xf32>
    %c8 = arith.constant 8 : index
    %c0_59 = arith.constant 0 : index
    %c0_60 = arith.constant 0 : index
    %121 = vector.load %arg3[%c8, %c0_59, %c0_60] : memref<10x2x1xf32, #tpu.memory_space<vmem>>, vector<1x2x1xf32>
    %122 = vector.shape_cast %121 : vector<1x2x1xf32> to vector<2x1xf32>
    %c1_61 = arith.constant 1 : index
    %c0_62 = arith.constant 0 : index
    %c0_63 = arith.constant 0 : index
    %123 = vector.load %arg4[%c1_61, %c0_62, %c0_63] : memref<8x2x1xf32, #tpu.memory_space<vmem>>, vector<1x2x1xf32>
    %124 = vector.shape_cast %123 : vector<1x2x1xf32> to vector<2x1xf32>
    %c6 = arith.constant 6 : index
    %c0_64 = arith.constant 0 : index
    %c0_65 = arith.constant 0 : index
    %125 = vector.load %arg4[%c6, %c0_64, %c0_65] : memref<8x2x1xf32, #tpu.memory_space<vmem>>, vector<1x2x1xf32>
    %126 = vector.shape_cast %125 : vector<1x2x1xf32> to vector<2x1xf32>
    %127 = tpu.concatenate %120, %124, %122, %126 in 0 : vector<2x1xf32>, vector<2x1xf32>, vector<2x1xf32>, vector<2x1xf32> -> vector<8x1xf32>
    %cst_66 = arith.constant dense<0.000000e+00> : vector<8x256xf32>
    %128 = tpu.matmul %106, %49, %cst_66 {dimension_numbers = #tpu.dot_dimension_numbers<[1], [0], [0], [1], [0, 0, 1, 1], [], []>} : vector<8x32xf32>, vector<32x256xf32>, vector<8x256xf32> -> vector<8x256xf32>
    %129 = vector.extract_strided_slice %128 {offsets = [0, 0], sizes = [8, 128], strides = [1, 1]} : vector<8x256xf32> to vector<8x128xf32>
    %130 = vector.broadcast %5 : vector<8x1xf32> to vector<8x128xf32>
    %131 = arith.mulf %130, %129 : vector<8x128xf32>
    %cst_67 = arith.constant 1.000000e+00 : f32
    %132 = vector.broadcast %cst_67 : f32 to vector<8x1xf32>
    %133 = arith.subf %132, %5 : vector<8x1xf32>
    %134 = vector.extract_strided_slice %128 {offsets = [0, 128], sizes = [8, 128], strides = [1, 1]} : vector<8x256xf32> to vector<8x128xf32>
    %135 = vector.broadcast %133 : vector<8x1xf32> to vector<8x128xf32>
    %136 = arith.mulf %135, %134 : vector<8x128xf32>
    %137 = arith.addf %131, %136 : vector<8x128xf32>
    %138 = arith.addf %118, %137 : vector<8x128xf32>
    %139 = arith.negf %138 : vector<8x128xf32>
    %140 = math.exp %139 : vector<8x128xf32>
    %cst_68 = arith.constant 1.000000e+00 : f32
    %141 = vector.broadcast %cst_68 : f32 to vector<8x128xf32>
    %142 = arith.addf %141, %140 : vector<8x128xf32>
    %143 = arith.divf %141, %142 : vector<8x128xf32>
    %144 = math.tanh %138 : vector<8x128xf32>
    %145 = vector.extract_strided_slice %143 {offsets = [0, 32], sizes = [8, 32], strides = [1, 1]} : vector<8x128xf32> to vector<8x32xf32>
    %146 = arith.mulf %145, %113 : vector<8x32xf32>
    %147 = vector.extract_strided_slice %143 {offsets = [0, 0], sizes = [8, 32], strides = [1, 1]} : vector<8x128xf32> to vector<8x32xf32>
    %148 = vector.extract_strided_slice %144 {offsets = [0, 64], sizes = [8, 32], strides = [1, 1]} : vector<8x128xf32> to vector<8x32xf32>
    %149 = arith.mulf %147, %148 : vector<8x32xf32>
    %150 = arith.addf %146, %149 : vector<8x32xf32>
    %151 = vector.extract_strided_slice %143 {offsets = [0, 96], sizes = [8, 32], strides = [1, 1]} : vector<8x128xf32> to vector<8x32xf32>
    %152 = math.tanh %150 : vector<8x32xf32>
    %153 = arith.mulf %151, %152 : vector<8x32xf32>
    %154 = vector.broadcast %127 : vector<8x1xf32> to vector<8x32xf32>
    %155 = arith.mulf %154, %153 : vector<8x32xf32>
    %156 = vector.extract_strided_slice %155 {offsets = [0, 0], sizes = [2, 32], strides = [1, 1]} : vector<8x32xf32> to vector<2x32xf32>
    %c2_69 = arith.constant 2 : index
    %c0_70 = arith.constant 0 : index
    %157 = vector.load %arg35[%c2_69, %c0_70] : memref<20x64xf32, #tpu.memory_space<vmem>>, vector<2x32xf32>
    tpu.vector_store %arg35[%c2_69, %c0_70], %156 {strides = array<i32>} : memref<20x64xf32, #tpu.memory_space<vmem>>, vector<2x32xf32>,
    %158 = vector.extract_strided_slice %155 {offsets = [4, 0], sizes = [2, 32], strides = [1, 1]} : vector<8x32xf32> to vector<2x32xf32>
    %c16_71 = arith.constant 16 : index
    %c32_72 = arith.constant 32 : index
    %159 = vector.load %arg35[%c16_71, %c32_72] : memref<20x64xf32, #tpu.memory_space<vmem>>, vector<2x32xf32>
    tpu.vector_store %arg35[%c16_71, %c32_72], %158 {strides = array<i32>} : memref<20x64xf32, #tpu.memory_space<vmem>>, vector<2x32xf32>,
    %160 = vector.extract_strided_slice %155 {offsets = [2, 0], sizes = [2, 32], strides = [1, 1]} : vector<8x32xf32> to vector<2x32xf32>
    %c2_73 = arith.constant 2 : index
    %c0_74 = arith.constant 0 : index
    %161 = vector.load %arg36[%c2_73, %c0_74] : memref<16x64xf32, #tpu.memory_space<vmem>>, vector<2x32xf32>
    tpu.vector_store %arg36[%c2_73, %c0_74], %160 {strides = array<i32>} : memref<16x64xf32, #tpu.memory_space<vmem>>, vector<2x32xf32>,
    %162 = vector.extract_strided_slice %155 {offsets = [6, 0], sizes = [2, 32], strides = [1, 1]} : vector<8x32xf32> to vector<2x32xf32>
    %c12_75 = arith.constant 12 : index
    %c32_76 = arith.constant 32 : index
    %163 = vector.load %arg36[%c12_75, %c32_76] : memref<16x64xf32, #tpu.memory_space<vmem>>, vector<2x32xf32>
    tpu.vector_store %arg36[%c12_75, %c32_76], %162 {strides = array<i32>} : memref<16x64xf32, #tpu.memory_space<vmem>>, vector<2x32xf32>,
    %cst_77 = arith.constant 1.000000e+00 : f32
    %164 = vector.broadcast %cst_77 : f32 to vector<8x1xf32>
    %165 = arith.subf %164, %127 : vector<8x1xf32>
    %166 = vector.broadcast %165 : vector<8x1xf32> to vector<8x32xf32>
    %167 = arith.mulf %166, %106 : vector<8x32xf32>
    %168 = arith.addf %155, %167 : vector<8x32xf32>
    %169 = vector.broadcast %127 : vector<8x1xf32> to vector<8x32xf32>
    %170 = arith.mulf %169, %150 : vector<8x32xf32>
    %cst_78 = arith.constant 1.000000e+00 : f32
    %171 = vector.broadcast %cst_78 : f32 to vector<8x1xf32>
    %172 = arith.subf %171, %127 : vector<8x1xf32>
    %173 = vector.broadcast %172 : vector<8x1xf32> to vector<8x32xf32>
    %174 = arith.mulf %173, %113 : vector<8x32xf32>
    %175 = arith.addf %170, %174 : vector<8x32xf32>
    %c4 = arith.constant 4 : index
    %c0_79 = arith.constant 0 : index
    %176 = vector.load %arg33[%c4, %c0_79] : memref<20x320xf32, #tpu.memory_space<vmem>>, vector<2x128xf32>
    %c4_80 = arith.constant 4 : index
    %c0_81 = arith.constant 0 : index
    %177 = vector.load %arg34[%c4_80, %c0_81] : memref<16x320xf32, #tpu.memory_space<vmem>>, vector<2x128xf32>
    %c14_82 = arith.constant 14 : index
    %c128_83 = arith.constant 128 : index
    %178 = vector.load %arg33[%c14_82, %c128_83] : memref<20x320xf32, #tpu.memory_space<vmem>>, vector<2x128xf32>
    %c10 = arith.constant 10 : index
    %c128_84 = arith.constant 128 : index
    %179 = vector.load %arg34[%c10, %c128_84] : memref<16x320xf32, #tpu.memory_space<vmem>>, vector<2x128xf32>
    %180 = tpu.concatenate %176, %177, %178, %179 in 0 : vector<2x128xf32>, vector<2x128xf32>, vector<2x128xf32>, vector<2x128xf32> -> vector<8x128xf32>
    %c2_85 = arith.constant 2 : index
    %c0_86 = arith.constant 0 : index
    %c0_87 = arith.constant 0 : index
    %181 = vector.load %arg3[%c2_85, %c0_86, %c0_87] : memref<10x2x1xf32, #tpu.memory_space<vmem>>, vector<1x2x1xf32>
    %182 = vector.shape_cast %181 : vector<1x2x1xf32> to vector<2x1xf32>
    %c7_88 = arith.constant 7 : index
    %c0_89 = arith.constant 0 : index
    %c0_90 = arith.constant 0 : index
    %183 = vector.load %arg3[%c7_88, %c0_89, %c0_90] : memref<10x2x1xf32, #tpu.memory_space<vmem>>, vector<1x2x1xf32>
    %184 = vector.shape_cast %183 : vector<1x2x1xf32> to vector<2x1xf32>
    %c2_91 = arith.constant 2 : index
    %c0_92 = arith.constant 0 : index
    %c0_93 = arith.constant 0 : index
    %185 = vector.load %arg4[%c2_91, %c0_92, %c0_93] : memref<8x2x1xf32, #tpu.memory_space<vmem>>, vector<1x2x1xf32>
    %186 = vector.shape_cast %185 : vector<1x2x1xf32> to vector<2x1xf32>
    %c5 = arith.constant 5 : index
    %c0_94 = arith.constant 0 : index
    %c0_95 = arith.constant 0 : index
    %187 = vector.load %arg4[%c5, %c0_94, %c0_95] : memref<8x2x1xf32, #tpu.memory_space<vmem>>, vector<1x2x1xf32>
    %188 = vector.shape_cast %187 : vector<1x2x1xf32> to vector<2x1xf32>
    %189 = tpu.concatenate %182, %186, %184, %188 in 0 : vector<2x1xf32>, vector<2x1xf32>, vector<2x1xf32>, vector<2x1xf32> -> vector<8x1xf32>
    %cst_96 = arith.constant dense<0.000000e+00> : vector<8x256xf32>
    %190 = tpu.matmul %168, %49, %cst_96 {dimension_numbers = #tpu.dot_dimension_numbers<[1], [0], [0], [1], [0, 0, 1, 1], [], []>} : vector<8x32xf32>, vector<32x256xf32>, vector<8x256xf32> -> vector<8x256xf32>
    %191 = vector.extract_strided_slice %190 {offsets = [0, 0], sizes = [8, 128], strides = [1, 1]} : vector<8x256xf32> to vector<8x128xf32>
    %192 = vector.broadcast %5 : vector<8x1xf32> to vector<8x128xf32>
    %193 = arith.mulf %192, %191 : vector<8x128xf32>
    %cst_97 = arith.constant 1.000000e+00 : f32
    %194 = vector.broadcast %cst_97 : f32 to vector<8x1xf32>
    %195 = arith.subf %194, %5 : vector<8x1xf32>
    %196 = vector.extract_strided_slice %190 {offsets = [0, 128], sizes = [8, 128], strides = [1, 1]} : vector<8x256xf32> to vector<8x128xf32>
    %197 = vector.broadcast %195 : vector<8x1xf32> to vector<8x128xf32>
    %198 = arith.mulf %197, %196 : vector<8x128xf32>
    %199 = arith.addf %193, %198 : vector<8x128xf32>
    %200 = arith.addf %180, %199 : vector<8x128xf32>
    %201 = arith.negf %200 : vector<8x128xf32>
    %202 = math.exp %201 : vector<8x128xf32>
    %cst_98 = arith.constant 1.000000e+00 : f32
    %203 = vector.broadcast %cst_98 : f32 to vector<8x128xf32>
    %204 = arith.addf %203, %202 : vector<8x128xf32>
    %205 = arith.divf %203, %204 : vector<8x128xf32>
    %206 = math.tanh %200 : vector<8x128xf32>
    %207 = vector.extract_strided_slice %205 {offsets = [0, 32], sizes = [8, 32], strides = [1, 1]} : vector<8x128xf32> to vector<8x32xf32>
    %208 = arith.mulf %207, %175 : vector<8x32xf32>
    %209 = vector.extract_strided_slice %205 {offsets = [0, 0], sizes = [8, 32], strides = [1, 1]} : vector<8x128xf32> to vector<8x32xf32>
    %210 = vector.extract_strided_slice %206 {offsets = [0, 64], sizes = [8, 32], strides = [1, 1]} : vector<8x128xf32> to vector<8x32xf32>
    %211 = arith.mulf %209, %210 : vector<8x32xf32>
    %212 = arith.addf %208, %211 : vector<8x32xf32>
    %213 = vector.extract_strided_slice %205 {offsets = [0, 96], sizes = [8, 32], strides = [1, 1]} : vector<8x128xf32> to vector<8x32xf32>
    %214 = math.tanh %212 : vector<8x32xf32>
    %215 = arith.mulf %213, %214 : vector<8x32xf32>
    %216 = vector.broadcast %189 : vector<8x1xf32> to vector<8x32xf32>
    %217 = arith.mulf %216, %215 : vector<8x32xf32>
    %218 = vector.extract_strided_slice %217 {offsets = [0, 0], sizes = [2, 32], strides = [1, 1]} : vector<8x32xf32> to vector<2x32xf32>
    %c4_99 = arith.constant 4 : index
    %c0_100 = arith.constant 0 : index
    %219 = vector.load %arg35[%c4_99, %c0_100] : memref<20x64xf32, #tpu.memory_space<vmem>>, vector<2x32xf32>
    tpu.vector_store %arg35[%c4_99, %c0_100], %218 {strides = array<i32>} : memref<20x64xf32, #tpu.memory_space<vmem>>, vector<2x32xf32>,
    %220 = vector.extract_strided_slice %217 {offsets = [4, 0], sizes = [2, 32], strides = [1, 1]} : vector<8x32xf32> to vector<2x32xf32>
    %c14_101 = arith.constant 14 : index
    %c32_102 = arith.constant 32 : index
    %221 = vector.load %arg35[%c14_101, %c32_102] : memref<20x64xf32, #tpu.memory_space<vmem>>, vector<2x32xf32>
    tpu.vector_store %arg35[%c14_101, %c32_102], %220 {strides = array<i32>} : memref<20x64xf32, #tpu.memory_space<vmem>>, vector<2x32xf32>,
    %222 = vector.extract_strided_slice %217 {offsets = [2, 0], sizes = [2, 32], strides = [1, 1]} : vector<8x32xf32> to vector<2x32xf32>
    %c4_103 = arith.constant 4 : index
    %c0_104 = arith.constant 0 : index
    %223 = vector.load %arg36[%c4_103, %c0_104] : memref<16x64xf32, #tpu.memory_space<vmem>>, vector<2x32xf32>
    tpu.vector_store %arg36[%c4_103, %c0_104], %222 {strides = array<i32>} : memref<16x64xf32, #tpu.memory_space<vmem>>, vector<2x32xf32>,
    %224 = vector.extract_strided_slice %217 {offsets = [6, 0], sizes = [2, 32], strides = [1, 1]} : vector<8x32xf32> to vector<2x32xf32>
    %c10_105 = arith.constant 10 : index
    %c32_106 = arith.constant 32 : index
    %225 = vector.load %arg36[%c10_105, %c32_106] : memref<16x64xf32, #tpu.memory_space<vmem>>, vector<2x32xf32>
    tpu.vector_store %arg36[%c10_105, %c32_106], %224 {strides = array<i32>} : memref<16x64xf32, #tpu.memory_space<vmem>>, vector<2x32xf32>,
    %cst_107 = arith.constant 1.000000e+00 : f32
    %226 = vector.broadcast %cst_107 : f32 to vector<8x1xf32>
    %227 = arith.subf %226, %189 : vector<8x1xf32>
    %228 = vector.broadcast %227 : vector<8x1xf32> to vector<8x32xf32>
    %229 = arith.mulf %228, %168 : vector<8x32xf32>
    %230 = arith.addf %217, %229 : vector<8x32xf32>
    %231 = vector.broadcast %189 : vector<8x1xf32> to vector<8x32xf32>
    %232 = arith.mulf %231, %212 : vector<8x32xf32>
    %cst_108 = arith.constant 1.000000e+00 : f32
    %233 = vector.broadcast %cst_108 : f32 to vector<8x1xf32>
    %234 = arith.subf %233, %189 : vector<8x1xf32>
    %235 = vector.broadcast %234 : vector<8x1xf32> to vector<8x32xf32>
    %236 = arith.mulf %235, %175 : vector<8x32xf32>
    %237 = arith.addf %232, %236 : vector<8x32xf32>
    %c6_109 = arith.constant 6 : index
    %c0_110 = arith.constant 0 : index
    %238 = vector.load %arg33[%c6_109, %c0_110] : memref<20x320xf32, #tpu.memory_space<vmem>>, vector<2x128xf32>
    %c6_111 = arith.constant 6 : index
    %c0_112 = arith.constant 0 : index
    %239 = vector.load %arg34[%c6_111, %c0_112] : memref<16x320xf32, #tpu.memory_space<vmem>>, vector<2x128xf32>
    %c12_113 = arith.constant 12 : index
    %c128_114 = arith.constant 128 : index
    %240 = vector.load %arg33[%c12_113, %c128_114] : memref<20x320xf32, #tpu.memory_space<vmem>>, vector<2x128xf32>
    %c8_115 = arith.constant 8 : index
    %c128_116 = arith.constant 128 : index
    %241 = vector.load %arg34[%c8_115, %c128_116] : memref<16x320xf32, #tpu.memory_space<vmem>>, vector<2x128xf32>
    %242 = tpu.concatenate %238, %239, %240, %241 in 0 : vector<2x128xf32>, vector<2x128xf32>, vector<2x128xf32>, vector<2x128xf32> -> vector<8x128xf32>
    %c3 = arith.constant 3 : index
    %c0_117 = arith.constant 0 : index
    %c0_118 = arith.constant 0 : index
    %243 = vector.load %arg3[%c3, %c0_117, %c0_118] : memref<10x2x1xf32, #tpu.memory_space<vmem>>, vector<1x2x1xf32>
    %244 = vector.shape_cast %243 : vector<1x2x1xf32> to vector<2x1xf32>
    %c6_119 = arith.constant 6 : index
    %c0_120 = arith.constant 0 : index
    %c0_121 = arith.constant 0 : index
    %245 = vector.load %arg3[%c6_119, %c0_120, %c0_121] : memref<10x2x1xf32, #tpu.memory_space<vmem>>, vector<1x2x1xf32>
    %246 = vector.shape_cast %245 : vector<1x2x1xf32> to vector<2x1xf32>
    %c3_122 = arith.constant 3 : index
    %c0_123 = arith.constant 0 : index
    %c0_124 = arith.constant 0 : index
    %247 = vector.load %arg4[%c3_122, %c0_123, %c0_124] : memref<8x2x1xf32, #tpu.memory_space<vmem>>, vector<1x2x1xf32>
    %248 = vector.shape_cast %247 : vector<1x2x1xf32> to vector<2x1xf32>
    %c4_125 = arith.constant 4 : index
    %c0_126 = arith.constant 0 : index
    %c0_127 = arith.constant 0 : index
    %249 = vector.load %arg4[%c4_125, %c0_126, %c0_127] : memref<8x2x1xf32, #tpu.memory_space<vmem>>, vector<1x2x1xf32>
    %250 = vector.shape_cast %249 : vector<1x2x1xf32> to vector<2x1xf32>
    %251 = tpu.concatenate %244, %248, %246, %250 in 0 : vector<2x1xf32>, vector<2x1xf32>, vector<2x1xf32>, vector<2x1xf32> -> vector<8x1xf32>
    %cst_128 = arith.constant dense<0.000000e+00> : vector<8x256xf32>
    %252 = tpu.matmul %230, %49, %cst_128 {dimension_numbers = #tpu.dot_dimension_numbers<[1], [0], [0], [1], [0, 0, 1, 1], [], []>} : vector<8x32xf32>, vector<32x256xf32>, vector<8x256xf32> -> vector<8x256xf32>
    %253 = vector.extract_strided_slice %252 {offsets = [0, 0], sizes = [8, 128], strides = [1, 1]} : vector<8x256xf32> to vector<8x128xf32>
    %254 = vector.broadcast %5 : vector<8x1xf32> to vector<8x128xf32>
    %255 = arith.mulf %254, %253 : vector<8x128xf32>
    %cst_129 = arith.constant 1.000000e+00 : f32
    %256 = vector.broadcast %cst_129 : f32 to vector<8x1xf32>
    %257 = arith.subf %256, %5 : vector<8x1xf32>
    %258 = vector.extract_strided_slice %252 {offsets = [0, 128], sizes = [8, 128], strides = [1, 1]} : vector<8x256xf32> to vector<8x128xf32>
    %259 = vector.broadcast %257 : vector<8x1xf32> to vector<8x128xf32>
    %260 = arith.mulf %259, %258 : vector<8x128xf32>
    %261 = arith.addf %255, %260 : vector<8x128xf32>
    %262 = arith.addf %242, %261 : vector<8x128xf32>
    %263 = arith.negf %262 : vector<8x128xf32>
    %264 = math.exp %263 : vector<8x128xf32>
    %cst_130 = arith.constant 1.000000e+00 : f32
    %265 = vector.broadcast %cst_130 : f32 to vector<8x128xf32>
    %266 = arith.addf %265, %264 : vector<8x128xf32>
    %267 = arith.divf %265, %266 : vector<8x128xf32>
    %268 = math.tanh %262 : vector<8x128xf32>
    %269 = vector.extract_strided_slice %267 {offsets = [0, 32], sizes = [8, 32], strides = [1, 1]} : vector<8x128xf32> to vector<8x32xf32>
    %270 = arith.mulf %269, %237 : vector<8x32xf32>
    %271 = vector.extract_strided_slice %267 {offsets = [0, 0], sizes = [8, 32], strides = [1, 1]} : vector<8x128xf32> to vector<8x32xf32>
    %272 = vector.extract_strided_slice %268 {offsets = [0, 64], sizes = [8, 32], strides = [1, 1]} : vector<8x128xf32> to vector<8x32xf32>
    %273 = arith.mulf %271, %272 : vector<8x32xf32>
    %274 = arith.addf %270, %273 : vector<8x32xf32>
    %275 = vector.extract_strided_slice %267 {offsets = [0, 96], sizes = [8, 32], strides = [1, 1]} : vector<8x128xf32> to vector<8x32xf32>
    %276 = math.tanh %274 : vector<8x32xf32>
    %277 = arith.mulf %275, %276 : vector<8x32xf32>
    %278 = vector.broadcast %251 : vector<8x1xf32> to vector<8x32xf32>
    %279 = arith.mulf %278, %277 : vector<8x32xf32>
    %280 = vector.extract_strided_slice %279 {offsets = [0, 0], sizes = [2, 32], strides = [1, 1]} : vector<8x32xf32> to vector<2x32xf32>
    %c6_131 = arith.constant 6 : index
    %c0_132 = arith.constant 0 : index
    %281 = vector.load %arg35[%c6_131, %c0_132] : memref<20x64xf32, #tpu.memory_space<vmem>>, vector<2x32xf32>
    tpu.vector_store %arg35[%c6_131, %c0_132], %280 {strides = array<i32>} : memref<20x64xf32, #tpu.memory_space<vmem>>, vector<2x32xf32>,
    %282 = vector.extract_strided_slice %279 {offsets = [4, 0], sizes = [2, 32], strides = [1, 1]} : vector<8x32xf32> to vector<2x32xf32>
    %c12_133 = arith.constant 12 : index
    %c32_134 = arith.constant 32 : index
    %283 = vector.load %arg35[%c12_133, %c32_134] : memref<20x64xf32, #tpu.memory_space<vmem>>, vector<2x32xf32>
    tpu.vector_store %arg35[%c12_133, %c32_134], %282 {strides = array<i32>} : memref<20x64xf32, #tpu.memory_space<vmem>>, vector<2x32xf32>,
    %284 = vector.extract_strided_slice %279 {offsets = [2, 0], sizes = [2, 32], strides = [1, 1]} : vector<8x32xf32> to vector<2x32xf32>
    %c6_135 = arith.constant 6 : index
    %c0_136 = arith.constant 0 : index
    %285 = vector.load %arg36[%c6_135, %c0_136] : memref<16x64xf32, #tpu.memory_space<vmem>>, vector<2x32xf32>
    tpu.vector_store %arg36[%c6_135, %c0_136], %284 {strides = array<i32>} : memref<16x64xf32, #tpu.memory_space<vmem>>, vector<2x32xf32>,
    %286 = vector.extract_strided_slice %279 {offsets = [6, 0], sizes = [2, 32], strides = [1, 1]} : vector<8x32xf32> to vector<2x32xf32>
    %c8_137 = arith.constant 8 : index
    %c32_138 = arith.constant 32 : index
    %287 = vector.load %arg36[%c8_137, %c32_138] : memref<16x64xf32, #tpu.memory_space<vmem>>, vector<2x32xf32>
    tpu.vector_store %arg36[%c8_137, %c32_138], %286 {strides = array<i32>} : memref<16x64xf32, #tpu.memory_space<vmem>>, vector<2x32xf32>,
    %cst_139 = arith.constant 1.000000e+00 : f32
    %288 = vector.broadcast %cst_139 : f32 to vector<8x1xf32>
    %289 = arith.subf %288, %251 : vector<8x1xf32>
    %290 = vector.broadcast %289 : vector<8x1xf32> to vector<8x32xf32>
    %291 = arith.mulf %290, %230 : vector<8x32xf32>
    %292 = arith.addf %279, %291 : vector<8x32xf32>
    %293 = vector.broadcast %251 : vector<8x1xf32> to vector<8x32xf32>
    %294 = arith.mulf %293, %274 : vector<8x32xf32>
    %cst_140 = arith.constant 1.000000e+00 : f32
    %295 = vector.broadcast %cst_140 : f32 to vector<8x1xf32>
    %296 = arith.subf %295, %251 : vector<8x1xf32>
    %297 = vector.broadcast %296 : vector<8x1xf32> to vector<8x32xf32>
    %298 = arith.mulf %297, %237 : vector<8x32xf32>
    %299 = arith.addf %294, %298 : vector<8x32xf32>
    %c8_141 = arith.constant 8 : index
    %c0_142 = arith.constant 0 : index
    %300 = vector.load %arg33[%c8_141, %c0_142] : memref<20x320xf32, #tpu.memory_space<vmem>>, vector<2x128xf32>
    %c8_143 = arith.constant 8 : index
    %c0_144 = arith.constant 0 : index
    %301 = vector.load %arg34[%c8_143, %c0_144] : memref<16x320xf32, #tpu.memory_space<vmem>>, vector<2x128xf32>
    %c10_145 = arith.constant 10 : index
    %c128_146 = arith.constant 128 : index
    %302 = vector.load %arg33[%c10_145, %c128_146] : memref<20x320xf32, #tpu.memory_space<vmem>>, vector<2x128xf32>
    %c6_147 = arith.constant 6 : index
    %c128_148 = arith.constant 128 : index
    %303 = vector.load %arg34[%c6_147, %c128_148] : memref<16x320xf32, #tpu.memory_space<vmem>>, vector<2x128xf32>
    %304 = tpu.concatenate %300, %301, %302, %303 in 0 : vector<2x128xf32>, vector<2x128xf32>, vector<2x128xf32>, vector<2x128xf32> -> vector<8x128xf32>
    %c4_149 = arith.constant 4 : index
    %c0_150 = arith.constant 0 : index
    %c0_151 = arith.constant 0 : index
    %305 = vector.load %arg3[%c4_149, %c0_150, %c0_151] : memref<10x2x1xf32, #tpu.memory_space<vmem>>, vector<1x2x1xf32>
    %306 = vector.shape_cast %305 : vector<1x2x1xf32> to vector<2x1xf32>
    %c5_152 = arith.constant 5 : index
    %c0_153 = arith.constant 0 : index
    %c0_154 = arith.constant 0 : index
    %307 = vector.load %arg3[%c5_152, %c0_153, %c0_154] : memref<10x2x1xf32, #tpu.memory_space<vmem>>, vector<1x2x1xf32>
    %308 = vector.shape_cast %307 : vector<1x2x1xf32> to vector<2x1xf32>
    %c4_155 = arith.constant 4 : index
    %c0_156 = arith.constant 0 : index
    %c0_157 = arith.constant 0 : index
    %309 = vector.load %arg4[%c4_155, %c0_156, %c0_157] : memref<8x2x1xf32, #tpu.memory_space<vmem>>, vector<1x2x1xf32>
    %310 = vector.shape_cast %309 : vector<1x2x1xf32> to vector<2x1xf32>
    %c3_158 = arith.constant 3 : index
    %c0_159 = arith.constant 0 : index
    %c0_160 = arith.constant 0 : index
    %311 = vector.load %arg4[%c3_158, %c0_159, %c0_160] : memref<8x2x1xf32, #tpu.memory_space<vmem>>, vector<1x2x1xf32>
    %312 = vector.shape_cast %311 : vector<1x2x1xf32> to vector<2x1xf32>
    %313 = tpu.concatenate %306, %310, %308, %312 in 0 : vector<2x1xf32>, vector<2x1xf32>, vector<2x1xf32>, vector<2x1xf32> -> vector<8x1xf32>
    %cst_161 = arith.constant dense<0.000000e+00> : vector<8x256xf32>
    %314 = tpu.matmul %292, %49, %cst_161 {dimension_numbers = #tpu.dot_dimension_numbers<[1], [0], [0], [1], [0, 0, 1, 1], [], []>} : vector<8x32xf32>, vector<32x256xf32>, vector<8x256xf32> -> vector<8x256xf32>
    %315 = vector.extract_strided_slice %314 {offsets = [0, 0], sizes = [8, 128], strides = [1, 1]} : vector<8x256xf32> to vector<8x128xf32>
    %316 = vector.broadcast %5 : vector<8x1xf32> to vector<8x128xf32>
    %317 = arith.mulf %316, %315 : vector<8x128xf32>
    %cst_162 = arith.constant 1.000000e+00 : f32
    %318 = vector.broadcast %cst_162 : f32 to vector<8x1xf32>
    %319 = arith.subf %318, %5 : vector<8x1xf32>
    %320 = vector.extract_strided_slice %314 {offsets = [0, 128], sizes = [8, 128], strides = [1, 1]} : vector<8x256xf32> to vector<8x128xf32>
    %321 = vector.broadcast %319 : vector<8x1xf32> to vector<8x128xf32>
    %322 = arith.mulf %321, %320 : vector<8x128xf32>
    %323 = arith.addf %317, %322 : vector<8x128xf32>
    %324 = arith.addf %304, %323 : vector<8x128xf32>
    %325 = arith.negf %324 : vector<8x128xf32>
    %326 = math.exp %325 : vector<8x128xf32>
    %cst_163 = arith.constant 1.000000e+00 : f32
    %327 = vector.broadcast %cst_163 : f32 to vector<8x128xf32>
    %328 = arith.addf %327, %326 : vector<8x128xf32>
    %329 = arith.divf %327, %328 : vector<8x128xf32>
    %330 = math.tanh %324 : vector<8x128xf32>
    %331 = vector.extract_strided_slice %329 {offsets = [0, 32], sizes = [8, 32], strides = [1, 1]} : vector<8x128xf32> to vector<8x32xf32>
    %332 = arith.mulf %331, %299 : vector<8x32xf32>
    %333 = vector.extract_strided_slice %329 {offsets = [0, 0], sizes = [8, 32], strides = [1, 1]} : vector<8x128xf32> to vector<8x32xf32>
    %334 = vector.extract_strided_slice %330 {offsets = [0, 64], sizes = [8, 32], strides = [1, 1]} : vector<8x128xf32> to vector<8x32xf32>
    %335 = arith.mulf %333, %334 : vector<8x32xf32>
    %336 = arith.addf %332, %335 : vector<8x32xf32>
    %337 = vector.extract_strided_slice %329 {offsets = [0, 96], sizes = [8, 32], strides = [1, 1]} : vector<8x128xf32> to vector<8x32xf32>
    %338 = math.tanh %336 : vector<8x32xf32>
    %339 = arith.mulf %337, %338 : vector<8x32xf32>
    %340 = vector.broadcast %313 : vector<8x1xf32> to vector<8x32xf32>
    %341 = arith.mulf %340, %339 : vector<8x32xf32>
    %342 = vector.extract_strided_slice %341 {offsets = [0, 0], sizes = [2, 32], strides = [1, 1]} : vector<8x32xf32> to vector<2x32xf32>
    %c8_164 = arith.constant 8 : index
    %c0_165 = arith.constant 0 : index
    %343 = vector.load %arg35[%c8_164, %c0_165] : memref<20x64xf32, #tpu.memory_space<vmem>>, vector<2x32xf32>
    tpu.vector_store %arg35[%c8_164, %c0_165], %342 {strides = array<i32>} : memref<20x64xf32, #tpu.memory_space<vmem>>, vector<2x32xf32>,
    %344 = vector.extract_strided_slice %341 {offsets = [4, 0], sizes = [2, 32], strides = [1, 1]} : vector<8x32xf32> to vector<2x32xf32>
    %c10_166 = arith.constant 10 : index
    %c32_167 = arith.constant 32 : index
    %345 = vector.load %arg35[%c10_166, %c32_167] : memref<20x64xf32, #tpu.memory_space<vmem>>, vector<2x32xf32>
    tpu.vector_store %arg35[%c10_166, %c32_167], %344 {strides = array<i32>} : memref<20x64xf32, #tpu.memory_space<vmem>>, vector<2x32xf32>,
    %346 = vector.extract_strided_slice %341 {offsets = [2, 0], sizes = [2, 32], strides = [1, 1]} : vector<8x32xf32> to vector<2x32xf32>
    %c8_168 = arith.constant 8 : index
    %c0_169 = arith.constant 0 : index
    %347 = vector.load %arg36[%c8_168, %c0_169] : memref<16x64xf32, #tpu.memory_space<vmem>>, vector<2x32xf32>
    tpu.vector_store %arg36[%c8_168, %c0_169], %346 {strides = array<i32>} : memref<16x64xf32, #tpu.memory_space<vmem>>, vector<2x32xf32>,
    %348 = vector.extract_strided_slice %341 {offsets = [6, 0], sizes = [2, 32], strides = [1, 1]} : vector<8x32xf32> to vector<2x32xf32>
    %c6_170 = arith.constant 6 : index
    %c32_171 = arith.constant 32 : index
    %349 = vector.load %arg36[%c6_170, %c32_171] : memref<16x64xf32, #tpu.memory_space<vmem>>, vector<2x32xf32>
    tpu.vector_store %arg36[%c6_170, %c32_171], %348 {strides = array<i32>} : memref<16x64xf32, #tpu.memory_space<vmem>>, vector<2x32xf32>,
    %cst_172 = arith.constant 1.000000e+00 : f32
    %350 = vector.broadcast %cst_172 : f32 to vector<8x1xf32>
    %351 = arith.subf %350, %313 : vector<8x1xf32>
    %352 = vector.broadcast %351 : vector<8x1xf32> to vector<8x32xf32>
    %353 = arith.mulf %352, %292 : vector<8x32xf32>
    %354 = arith.addf %341, %353 : vector<8x32xf32>
    %355 = vector.broadcast %313 : vector<8x1xf32> to vector<8x32xf32>
    %356 = arith.mulf %355, %336 : vector<8x32xf32>
    %cst_173 = arith.constant 1.000000e+00 : f32
    %357 = vector.broadcast %cst_173 : f32 to vector<8x1xf32>
    %358 = arith.subf %357, %313 : vector<8x1xf32>
    %359 = vector.broadcast %358 : vector<8x1xf32> to vector<8x32xf32>
    %360 = arith.mulf %359, %299 : vector<8x32xf32>
    %361 = arith.addf %356, %360 : vector<8x32xf32>
    %c10_174 = arith.constant 10 : index
    %c0_175 = arith.constant 0 : index
    %362 = vector.load %arg33[%c10_174, %c0_175] : memref<20x320xf32, #tpu.memory_space<vmem>>, vector<2x128xf32>
    %c10_176 = arith.constant 10 : index
    %c0_177 = arith.constant 0 : index
    %363 = vector.load %arg34[%c10_176, %c0_177] : memref<16x320xf32, #tpu.memory_space<vmem>>, vector<2x128xf32>
    %c8_178 = arith.constant 8 : index
    %c128_179 = arith.constant 128 : index
    %364 = vector.load %arg33[%c8_178, %c128_179] : memref<20x320xf32, #tpu.memory_space<vmem>>, vector<2x128xf32>
    %c4_180 = arith.constant 4 : index
    %c128_181 = arith.constant 128 : index
    %365 = vector.load %arg34[%c4_180, %c128_181] : memref<16x320xf32, #tpu.memory_space<vmem>>, vector<2x128xf32>
    %366 = tpu.concatenate %362, %363, %364, %365 in 0 : vector<2x128xf32>, vector<2x128xf32>, vector<2x128xf32>, vector<2x128xf32> -> vector<8x128xf32>
    %c5_182 = arith.constant 5 : index
    %c0_183 = arith.constant 0 : index
    %c0_184 = arith.constant 0 : index
    %367 = vector.load %arg3[%c5_182, %c0_183, %c0_184] : memref<10x2x1xf32, #tpu.memory_space<vmem>>, vector<1x2x1xf32>
    %368 = vector.shape_cast %367 : vector<1x2x1xf32> to vector<2x1xf32>
    %c4_185 = arith.constant 4 : index
    %c0_186 = arith.constant 0 : index
    %c0_187 = arith.constant 0 : index
    %369 = vector.load %arg3[%c4_185, %c0_186, %c0_187] : memref<10x2x1xf32, #tpu.memory_space<vmem>>, vector<1x2x1xf32>
    %370 = vector.shape_cast %369 : vector<1x2x1xf32> to vector<2x1xf32>
    %c5_188 = arith.constant 5 : index
    %c0_189 = arith.constant 0 : index
    %c0_190 = arith.constant 0 : index
    %371 = vector.load %arg4[%c5_188, %c0_189, %c0_190] : memref<8x2x1xf32, #tpu.memory_space<vmem>>, vector<1x2x1xf32>
    %372 = vector.shape_cast %371 : vector<1x2x1xf32> to vector<2x1xf32>
    %c2_191 = arith.constant 2 : index
    %c0_192 = arith.constant 0 : index
    %c0_193 = arith.constant 0 : index
    %373 = vector.load %arg4[%c2_191, %c0_192, %c0_193] : memref<8x2x1xf32, #tpu.memory_space<vmem>>, vector<1x2x1xf32>
    %374 = vector.shape_cast %373 : vector<1x2x1xf32> to vector<2x1xf32>
    %375 = tpu.concatenate %368, %372, %370, %374 in 0 : vector<2x1xf32>, vector<2x1xf32>, vector<2x1xf32>, vector<2x1xf32> -> vector<8x1xf32>
    %cst_194 = arith.constant dense<0.000000e+00> : vector<8x256xf32>
    %376 = tpu.matmul %354, %49, %cst_194 {dimension_numbers = #tpu.dot_dimension_numbers<[1], [0], [0], [1], [0, 0, 1, 1], [], []>} : vector<8x32xf32>, vector<32x256xf32>, vector<8x256xf32> -> vector<8x256xf32>
    %377 = vector.extract_strided_slice %376 {offsets = [0, 0], sizes = [8, 128], strides = [1, 1]} : vector<8x256xf32> to vector<8x128xf32>
    %378 = vector.broadcast %5 : vector<8x1xf32> to vector<8x128xf32>
    %379 = arith.mulf %378, %377 : vector<8x128xf32>
    %cst_195 = arith.constant 1.000000e+00 : f32
    %380 = vector.broadcast %cst_195 : f32 to vector<8x1xf32>
    %381 = arith.subf %380, %5 : vector<8x1xf32>
    %382 = vector.extract_strided_slice %376 {offsets = [0, 128], sizes = [8, 128], strides = [1, 1]} : vector<8x256xf32> to vector<8x128xf32>
    %383 = vector.broadcast %381 : vector<8x1xf32> to vector<8x128xf32>
    %384 = arith.mulf %383, %382 : vector<8x128xf32>
    %385 = arith.addf %379, %384 : vector<8x128xf32>
    %386 = arith.addf %366, %385 : vector<8x128xf32>
    %387 = arith.negf %386 : vector<8x128xf32>
    %388 = math.exp %387 : vector<8x128xf32>
    %cst_196 = arith.constant 1.000000e+00 : f32
    %389 = vector.broadcast %cst_196 : f32 to vector<8x128xf32>
    %390 = arith.addf %389, %388 : vector<8x128xf32>
    %391 = arith.divf %389, %390 : vector<8x128xf32>
    %392 = math.tanh %386 : vector<8x128xf32>
    %393 = vector.extract_strided_slice %391 {offsets = [0, 32], sizes = [8, 32], strides = [1, 1]} : vector<8x128xf32> to vector<8x32xf32>
    %394 = arith.mulf %393, %361 : vector<8x32xf32>
    %395 = vector.extract_strided_slice %391 {offsets = [0, 0], sizes = [8, 32], strides = [1, 1]} : vector<8x128xf32> to vector<8x32xf32>
    %396 = vector.extract_strided_slice %392 {offsets = [0, 64], sizes = [8, 32], strides = [1, 1]} : vector<8x128xf32> to vector<8x32xf32>
    %397 = arith.mulf %395, %396 : vector<8x32xf32>
    %398 = arith.addf %394, %397 : vector<8x32xf32>
    %399 = vector.extract_strided_slice %391 {offsets = [0, 96], sizes = [8, 32], strides = [1, 1]} : vector<8x128xf32> to vector<8x32xf32>
    %400 = math.tanh %398 : vector<8x32xf32>
    %401 = arith.mulf %399, %400 : vector<8x32xf32>
    %402 = vector.broadcast %375 : vector<8x1xf32> to vector<8x32xf32>
    %403 = arith.mulf %402, %401 : vector<8x32xf32>
    %404 = vector.extract_strided_slice %403 {offsets = [0, 0], sizes = [2, 32], strides = [1, 1]} : vector<8x32xf32> to vector<2x32xf32>
    %c10_197 = arith.constant 10 : index
    %c0_198 = arith.constant 0 : index
    %405 = vector.load %arg35[%c10_197, %c0_198] : memref<20x64xf32, #tpu.memory_space<vmem>>, vector<2x32xf32>
    tpu.vector_store %arg35[%c10_197, %c0_198], %404 {strides = array<i32>} : memref<20x64xf32, #tpu.memory_space<vmem>>, vector<2x32xf32>,
    %406 = vector.extract_strided_slice %403 {offsets = [4, 0], sizes = [2, 32], strides = [1, 1]} : vector<8x32xf32> to vector<2x32xf32>
    %c8_199 = arith.constant 8 : index
    %c32_200 = arith.constant 32 : index
    %407 = vector.load %arg35[%c8_199, %c32_200] : memref<20x64xf32, #tpu.memory_space<vmem>>, vector<2x32xf32>
    tpu.vector_store %arg35[%c8_199, %c32_200], %406 {strides = array<i32>} : memref<20x64xf32, #tpu.memory_space<vmem>>, vector<2x32xf32>,
    %408 = vector.extract_strided_slice %403 {offsets = [2, 0], sizes = [2, 32], strides = [1, 1]} : vector<8x32xf32> to vector<2x32xf32>
    %c10_201 = arith.constant 10 : index
    %c0_202 = arith.constant 0 : index
    %409 = vector.load %arg36[%c10_201, %c0_202] : memref<16x64xf32, #tpu.memory_space<vmem>>, vector<2x32xf32>
    tpu.vector_store %arg36[%c10_201, %c0_202], %408 {strides = array<i32>} : memref<16x64xf32, #tpu.memory_space<vmem>>, vector<2x32xf32>,
    %410 = vector.extract_strided_slice %403 {offsets = [6, 0], sizes = [2, 32], strides = [1, 1]} : vector<8x32xf32> to vector<2x32xf32>
    %c4_203 = arith.constant 4 : index
    %c32_204 = arith.constant 32 : index
    %411 = vector.load %arg36[%c4_203, %c32_204] : memref<16x64xf32, #tpu.memory_space<vmem>>, vector<2x32xf32>
    tpu.vector_store %arg36[%c4_203, %c32_204], %410 {strides = array<i32>} : memref<16x64xf32, #tpu.memory_space<vmem>>, vector<2x32xf32>,
    %cst_205 = arith.constant 1.000000e+00 : f32
    %412 = vector.broadcast %cst_205 : f32 to vector<8x1xf32>
    %413 = arith.subf %412, %375 : vector<8x1xf32>
    %414 = vector.broadcast %413 : vector<8x1xf32> to vector<8x32xf32>
    %415 = arith.mulf %414, %354 : vector<8x32xf32>
    %416 = arith.addf %403, %415 : vector<8x32xf32>
    %417 = vector.broadcast %375 : vector<8x1xf32> to vector<8x32xf32>
    %418 = arith.mulf %417, %398 : vector<8x32xf32>
    %cst_206 = arith.constant 1.000000e+00 : f32
    %419 = vector.broadcast %cst_206 : f32 to vector<8x1xf32>
    %420 = arith.subf %419, %375 : vector<8x1xf32>
    %421 = vector.broadcast %420 : vector<8x1xf32> to vector<8x32xf32>
    %422 = arith.mulf %421, %361 : vector<8x32xf32>
    %423 = arith.addf %418, %422 : vector<8x32xf32>
    %c12_207 = arith.constant 12 : index
    %c0_208 = arith.constant 0 : index
    %424 = vector.load %arg33[%c12_207, %c0_208] : memref<20x320xf32, #tpu.memory_space<vmem>>, vector<2x128xf32>
    %c12_209 = arith.constant 12 : index
    %c0_210 = arith.constant 0 : index
    %425 = vector.load %arg34[%c12_209, %c0_210] : memref<16x320xf32, #tpu.memory_space<vmem>>, vector<2x128xf32>
    %c6_211 = arith.constant 6 : index
    %c128_212 = arith.constant 128 : index
    %426 = vector.load %arg33[%c6_211, %c128_212] : memref<20x320xf32, #tpu.memory_space<vmem>>, vector<2x128xf32>
    %c2_213 = arith.constant 2 : index
    %c128_214 = arith.constant 128 : index
    %427 = vector.load %arg34[%c2_213, %c128_214] : memref<16x320xf32, #tpu.memory_space<vmem>>, vector<2x128xf32>
    %428 = tpu.concatenate %424, %425, %426, %427 in 0 : vector<2x128xf32>, vector<2x128xf32>, vector<2x128xf32>, vector<2x128xf32> -> vector<8x128xf32>
    %c6_215 = arith.constant 6 : index
    %c0_216 = arith.constant 0 : index
    %c0_217 = arith.constant 0 : index
    %429 = vector.load %arg3[%c6_215, %c0_216, %c0_217] : memref<10x2x1xf32, #tpu.memory_space<vmem>>, vector<1x2x1xf32>
    %430 = vector.shape_cast %429 : vector<1x2x1xf32> to vector<2x1xf32>
    %c3_218 = arith.constant 3 : index
    %c0_219 = arith.constant 0 : index
    %c0_220 = arith.constant 0 : index
    %431 = vector.load %arg3[%c3_218, %c0_219, %c0_220] : memref<10x2x1xf32, #tpu.memory_space<vmem>>, vector<1x2x1xf32>
    %432 = vector.shape_cast %431 : vector<1x2x1xf32> to vector<2x1xf32>
    %c6_221 = arith.constant 6 : index
    %c0_222 = arith.constant 0 : index
    %c0_223 = arith.constant 0 : index
    %433 = vector.load %arg4[%c6_221, %c0_222, %c0_223] : memref<8x2x1xf32, #tpu.memory_space<vmem>>, vector<1x2x1xf32>
    %434 = vector.shape_cast %433 : vector<1x2x1xf32> to vector<2x1xf32>
    %c1_224 = arith.constant 1 : index
    %c0_225 = arith.constant 0 : index
    %c0_226 = arith.constant 0 : index
    %435 = vector.load %arg4[%c1_224, %c0_225, %c0_226] : memref<8x2x1xf32, #tpu.memory_space<vmem>>, vector<1x2x1xf32>
    %436 = vector.shape_cast %435 : vector<1x2x1xf32> to vector<2x1xf32>
    %437 = tpu.concatenate %430, %434, %432, %436 in 0 : vector<2x1xf32>, vector<2x1xf32>, vector<2x1xf32>, vector<2x1xf32> -> vector<8x1xf32>
    %cst_227 = arith.constant dense<0.000000e+00> : vector<8x256xf32>
    %438 = tpu.matmul %416, %49, %cst_227 {dimension_numbers = #tpu.dot_dimension_numbers<[1], [0], [0], [1], [0, 0, 1, 1], [], []>} : vector<8x32xf32>, vector<32x256xf32>, vector<8x256xf32> -> vector<8x256xf32>
    %439 = vector.extract_strided_slice %438 {offsets = [0, 0], sizes = [8, 128], strides = [1, 1]} : vector<8x256xf32> to vector<8x128xf32>
    %440 = vector.broadcast %5 : vector<8x1xf32> to vector<8x128xf32>
    %441 = arith.mulf %440, %439 : vector<8x128xf32>
    %cst_228 = arith.constant 1.000000e+00 : f32
    %442 = vector.broadcast %cst_228 : f32 to vector<8x1xf32>
    %443 = arith.subf %442, %5 : vector<8x1xf32>
    %444 = vector.extract_strided_slice %438 {offsets = [0, 128], sizes = [8, 128], strides = [1, 1]} : vector<8x256xf32> to vector<8x128xf32>
    %445 = vector.broadcast %443 : vector<8x1xf32> to vector<8x128xf32>
    %446 = arith.mulf %445, %444 : vector<8x128xf32>
    %447 = arith.addf %441, %446 : vector<8x128xf32>
    %448 = arith.addf %428, %447 : vector<8x128xf32>
    %449 = arith.negf %448 : vector<8x128xf32>
    %450 = math.exp %449 : vector<8x128xf32>
    %cst_229 = arith.constant 1.000000e+00 : f32
    %451 = vector.broadcast %cst_229 : f32 to vector<8x128xf32>
    %452 = arith.addf %451, %450 : vector<8x128xf32>
    %453 = arith.divf %451, %452 : vector<8x128xf32>
    %454 = math.tanh %448 : vector<8x128xf32>
    %455 = vector.extract_strided_slice %453 {offsets = [0, 32], sizes = [8, 32], strides = [1, 1]} : vector<8x128xf32> to vector<8x32xf32>
    %456 = arith.mulf %455, %423 : vector<8x32xf32>
    %457 = vector.extract_strided_slice %453 {offsets = [0, 0], sizes = [8, 32], strides = [1, 1]} : vector<8x128xf32> to vector<8x32xf32>
    %458 = vector.extract_strided_slice %454 {offsets = [0, 64], sizes = [8, 32], strides = [1, 1]} : vector<8x128xf32> to vector<8x32xf32>
    %459 = arith.mulf %457, %458 : vector<8x32xf32>
    %460 = arith.addf %456, %459 : vector<8x32xf32>
    %461 = vector.extract_strided_slice %453 {offsets = [0, 96], sizes = [8, 32], strides = [1, 1]} : vector<8x128xf32> to vector<8x32xf32>
    %462 = math.tanh %460 : vector<8x32xf32>
    %463 = arith.mulf %461, %462 : vector<8x32xf32>
    %464 = vector.broadcast %437 : vector<8x1xf32> to vector<8x32xf32>
    %465 = arith.mulf %464, %463 : vector<8x32xf32>
    %466 = vector.extract_strided_slice %465 {offsets = [0, 0], sizes = [2, 32], strides = [1, 1]} : vector<8x32xf32> to vector<2x32xf32>
    %c12_230 = arith.constant 12 : index
    %c0_231 = arith.constant 0 : index
    %467 = vector.load %arg35[%c12_230, %c0_231] : memref<20x64xf32, #tpu.memory_space<vmem>>, vector<2x32xf32>
    tpu.vector_store %arg35[%c12_230, %c0_231], %466 {strides = array<i32>} : memref<20x64xf32, #tpu.memory_space<vmem>>, vector<2x32xf32>,
    %468 = vector.extract_strided_slice %465 {offsets = [4, 0], sizes = [2, 32], strides = [1, 1]} : vector<8x32xf32> to vector<2x32xf32>
    %c6_232 = arith.constant 6 : index
    %c32_233 = arith.constant 32 : index
    %469 = vector.load %arg35[%c6_232, %c32_233] : memref<20x64xf32, #tpu.memory_space<vmem>>, vector<2x32xf32>
    tpu.vector_store %arg35[%c6_232, %c32_233], %468 {strides = array<i32>} : memref<20x64xf32, #tpu.memory_space<vmem>>, vector<2x32xf32>,
    %470 = vector.extract_strided_slice %465 {offsets = [2, 0], sizes = [2, 32], strides = [1, 1]} : vector<8x32xf32> to vector<2x32xf32>
    %c12_234 = arith.constant 12 : index
    %c0_235 = arith.constant 0 : index
    %471 = vector.load %arg36[%c12_234, %c0_235] : memref<16x64xf32, #tpu.memory_space<vmem>>, vector<2x32xf32>
    tpu.vector_store %arg36[%c12_234, %c0_235], %470 {strides = array<i32>} : memref<16x64xf32, #tpu.memory_space<vmem>>, vector<2x32xf32>,
    %472 = vector.extract_strided_slice %465 {offsets = [6, 0], sizes = [2, 32], strides = [1, 1]} : vector<8x32xf32> to vector<2x32xf32>
    %c2_236 = arith.constant 2 : index
    %c32_237 = arith.constant 32 : index
    %473 = vector.load %arg36[%c2_236, %c32_237] : memref<16x64xf32, #tpu.memory_space<vmem>>, vector<2x32xf32>
    tpu.vector_store %arg36[%c2_236, %c32_237], %472 {strides = array<i32>} : memref<16x64xf32, #tpu.memory_space<vmem>>, vector<2x32xf32>,
    %cst_238 = arith.constant 1.000000e+00 : f32
    %474 = vector.broadcast %cst_238 : f32 to vector<8x1xf32>
    %475 = arith.subf %474, %437 : vector<8x1xf32>
    %476 = vector.broadcast %475 : vector<8x1xf32> to vector<8x32xf32>
    %477 = arith.mulf %476, %416 : vector<8x32xf32>
    %478 = arith.addf %465, %477 : vector<8x32xf32>
    %479 = vector.broadcast %437 : vector<8x1xf32> to vector<8x32xf32>
    %480 = arith.mulf %479, %460 : vector<8x32xf32>
    %cst_239 = arith.constant 1.000000e+00 : f32
    %481 = vector.broadcast %cst_239 : f32 to vector<8x1xf32>
    %482 = arith.subf %481, %437 : vector<8x1xf32>
    %483 = vector.broadcast %482 : vector<8x1xf32> to vector<8x32xf32>
    %484 = arith.mulf %483, %423 : vector<8x32xf32>
    %485 = arith.addf %480, %484 : vector<8x32xf32>
    %c14_240 = arith.constant 14 : index
    %c0_241 = arith.constant 0 : index
    %486 = vector.load %arg33[%c14_240, %c0_241] : memref<20x320xf32, #tpu.memory_space<vmem>>, vector<2x128xf32>
    %c14_242 = arith.constant 14 : index
    %c0_243 = arith.constant 0 : index
    %487 = vector.load %arg34[%c14_242, %c0_243] : memref<16x320xf32, #tpu.memory_space<vmem>>, vector<2x128xf32>
    %c4_244 = arith.constant 4 : index
    %c128_245 = arith.constant 128 : index
    %488 = vector.load %arg33[%c4_244, %c128_245] : memref<20x320xf32, #tpu.memory_space<vmem>>, vector<2x128xf32>
    %c0_246 = arith.constant 0 : index
    %c128_247 = arith.constant 128 : index
    %489 = vector.load %arg34[%c0_246, %c128_247] : memref<16x320xf32, #tpu.memory_space<vmem>>, vector<2x128xf32>
    %490 = tpu.concatenate %486, %487, %488, %489 in 0 : vector<2x128xf32>, vector<2x128xf32>, vector<2x128xf32>, vector<2x128xf32> -> vector<8x128xf32>
    %c7_248 = arith.constant 7 : index
    %c0_249 = arith.constant 0 : index
    %c0_250 = arith.constant 0 : index
    %491 = vector.load %arg3[%c7_248, %c0_249, %c0_250] : memref<10x2x1xf32, #tpu.memory_space<vmem>>, vector<1x2x1xf32>
    %492 = vector.shape_cast %491 : vector<1x2x1xf32> to vector<2x1xf32>
    %c2_251 = arith.constant 2 : index
    %c0_252 = arith.constant 0 : index
    %c0_253 = arith.constant 0 : index
    %493 = vector.load %arg3[%c2_251, %c0_252, %c0_253] : memref<10x2x1xf32, #tpu.memory_space<vmem>>, vector<1x2x1xf32>
    %494 = vector.shape_cast %493 : vector<1x2x1xf32> to vector<2x1xf32>
    %c7_254 = arith.constant 7 : index
    %c0_255 = arith.constant 0 : index
    %c0_256 = arith.constant 0 : index
    %495 = vector.load %arg4[%c7_254, %c0_255, %c0_256] : memref<8x2x1xf32, #tpu.memory_space<vmem>>, vector<1x2x1xf32>
    %496 = vector.shape_cast %495 : vector<1x2x1xf32> to vector<2x1xf32>
    %c0_257 = arith.constant 0 : index
    %c0_258 = arith.constant 0 : index
    %c0_259 = arith.constant 0 : index
    %497 = vector.load %arg4[%c0_257, %c0_258, %c0_259] : memref<8x2x1xf32, #tpu.memory_space<vmem>>, vector<1x2x1xf32>
    %498 = vector.shape_cast %497 : vector<1x2x1xf32> to vector<2x1xf32>
    %499 = tpu.concatenate %492, %496, %494, %498 in 0 : vector<2x1xf32>, vector<2x1xf32>, vector<2x1xf32>, vector<2x1xf32> -> vector<8x1xf32>
    %cst_260 = arith.constant dense<0.000000e+00> : vector<8x256xf32>
    %500 = tpu.matmul %478, %49, %cst_260 {dimension_numbers = #tpu.dot_dimension_numbers<[1], [0], [0], [1], [0, 0, 1, 1], [], []>} : vector<8x32xf32>, vector<32x256xf32>, vector<8x256xf32> -> vector<8x256xf32>
    %501 = vector.extract_strided_slice %500 {offsets = [0, 0], sizes = [8, 128], strides = [1, 1]} : vector<8x256xf32> to vector<8x128xf32>
    %502 = vector.broadcast %5 : vector<8x1xf32> to vector<8x128xf32>
    %503 = arith.mulf %502, %501 : vector<8x128xf32>
    %cst_261 = arith.constant 1.000000e+00 : f32
    %504 = vector.broadcast %cst_261 : f32 to vector<8x1xf32>
    %505 = arith.subf %504, %5 : vector<8x1xf32>
    %506 = vector.extract_strided_slice %500 {offsets = [0, 128], sizes = [8, 128], strides = [1, 1]} : vector<8x256xf32> to vector<8x128xf32>
    %507 = vector.broadcast %505 : vector<8x1xf32> to vector<8x128xf32>
    %508 = arith.mulf %507, %506 : vector<8x128xf32>
    %509 = arith.addf %503, %508 : vector<8x128xf32>
    %510 = arith.addf %490, %509 : vector<8x128xf32>
    %511 = arith.negf %510 : vector<8x128xf32>
    %512 = math.exp %511 : vector<8x128xf32>
    %cst_262 = arith.constant 1.000000e+00 : f32
    %513 = vector.broadcast %cst_262 : f32 to vector<8x128xf32>
    %514 = arith.addf %513, %512 : vector<8x128xf32>
    %515 = arith.divf %513, %514 : vector<8x128xf32>
    %516 = math.tanh %510 : vector<8x128xf32>
    %517 = vector.extract_strided_slice %515 {offsets = [0, 32], sizes = [8, 32], strides = [1, 1]} : vector<8x128xf32> to vector<8x32xf32>
    %518 = arith.mulf %517, %485 : vector<8x32xf32>
    %519 = vector.extract_strided_slice %515 {offsets = [0, 0], sizes = [8, 32], strides = [1, 1]} : vector<8x128xf32> to vector<8x32xf32>
    %520 = vector.extract_strided_slice %516 {offsets = [0, 64], sizes = [8, 32], strides = [1, 1]} : vector<8x128xf32> to vector<8x32xf32>
    %521 = arith.mulf %519, %520 : vector<8x32xf32>
    %522 = arith.addf %518, %521 : vector<8x32xf32>
    %523 = vector.extract_strided_slice %515 {offsets = [0, 96], sizes = [8, 32], strides = [1, 1]} : vector<8x128xf32> to vector<8x32xf32>
    %524 = math.tanh %522 : vector<8x32xf32>
    %525 = arith.mulf %523, %524 : vector<8x32xf32>
    %526 = vector.broadcast %499 : vector<8x1xf32> to vector<8x32xf32>
    %527 = arith.mulf %526, %525 : vector<8x32xf32>
    %528 = vector.extract_strided_slice %527 {offsets = [0, 0], sizes = [2, 32], strides = [1, 1]} : vector<8x32xf32> to vector<2x32xf32>
    %c14_263 = arith.constant 14 : index
    %c0_264 = arith.constant 0 : index
    %529 = vector.load %arg35[%c14_263, %c0_264] : memref<20x64xf32, #tpu.memory_space<vmem>>, vector<2x32xf32>
    tpu.vector_store %arg35[%c14_263, %c0_264], %528 {strides = array<i32>} : memref<20x64xf32, #tpu.memory_space<vmem>>, vector<2x32xf32>,
    %530 = vector.extract_strided_slice %527 {offsets = [4, 0], sizes = [2, 32], strides = [1, 1]} : vector<8x32xf32> to vector<2x32xf32>
    %c4_265 = arith.constant 4 : index
    %c32_266 = arith.constant 32 : index
    %531 = vector.load %arg35[%c4_265, %c32_266] : memref<20x64xf32, #tpu.memory_space<vmem>>, vector<2x32xf32>
    tpu.vector_store %arg35[%c4_265, %c32_266], %530 {strides = array<i32>} : memref<20x64xf32, #tpu.memory_space<vmem>>, vector<2x32xf32>,
    %532 = vector.extract_strided_slice %527 {offsets = [2, 0], sizes = [2, 32], strides = [1, 1]} : vector<8x32xf32> to vector<2x32xf32>
    %c14_267 = arith.constant 14 : index
    %c0_268 = arith.constant 0 : index
    %533 = vector.load %arg36[%c14_267, %c0_268] : memref<16x64xf32, #tpu.memory_space<vmem>>, vector<2x32xf32>
    tpu.vector_store %arg36[%c14_267, %c0_268], %532 {strides = array<i32>} : memref<16x64xf32, #tpu.memory_space<vmem>>, vector<2x32xf32>,
    %534 = vector.extract_strided_slice %527 {offsets = [6, 0], sizes = [2, 32], strides = [1, 1]} : vector<8x32xf32> to vector<2x32xf32>
    %c0_269 = arith.constant 0 : index
    %c32_270 = arith.constant 32 : index
    %535 = vector.load %arg36[%c0_269, %c32_270] : memref<16x64xf32, #tpu.memory_space<vmem>>, vector<2x32xf32>
    tpu.vector_store %arg36[%c0_269, %c32_270], %534 {strides = array<i32>} : memref<16x64xf32, #tpu.memory_space<vmem>>, vector<2x32xf32>,
    %cst_271 = arith.constant 1.000000e+00 : f32
    %536 = vector.broadcast %cst_271 : f32 to vector<8x1xf32>
    %537 = arith.subf %536, %499 : vector<8x1xf32>
    %538 = vector.broadcast %537 : vector<8x1xf32> to vector<8x32xf32>
    %539 = arith.mulf %538, %478 : vector<8x32xf32>
    %540 = arith.addf %527, %539 : vector<8x32xf32>
    %541 = vector.broadcast %499 : vector<8x1xf32> to vector<8x32xf32>
    %542 = arith.mulf %541, %522 : vector<8x32xf32>
    %cst_272 = arith.constant 1.000000e+00 : f32
    %543 = vector.broadcast %cst_272 : f32 to vector<8x1xf32>
    %544 = arith.subf %543, %499 : vector<8x1xf32>
    %545 = vector.broadcast %544 : vector<8x1xf32> to vector<8x32xf32>
    %546 = arith.mulf %545, %485 : vector<8x32xf32>
    %547 = arith.addf %542, %546 : vector<8x32xf32>
    %c16_273 = arith.constant 16 : index
    %c0_274 = arith.constant 0 : index
    %548 = vector.load %arg33[%c16_273, %c0_274] : memref<20x320xf32, #tpu.memory_space<vmem>>, vector<2x128xf32>
    %c14_275 = arith.constant 14 : index
    %c0_276 = arith.constant 0 : index
    %549 = vector.load %arg34[%c14_275, %c0_276] : memref<16x320xf32, #tpu.memory_space<vmem>>, vector<2x128xf32>
    %c2_277 = arith.constant 2 : index
    %c128_278 = arith.constant 128 : index
    %550 = vector.load %arg33[%c2_277, %c128_278] : memref<20x320xf32, #tpu.memory_space<vmem>>, vector<2x128xf32>
    %c0_279 = arith.constant 0 : index
    %c128_280 = arith.constant 128 : index
    %551 = vector.load %arg34[%c0_279, %c128_280] : memref<16x320xf32, #tpu.memory_space<vmem>>, vector<2x128xf32>
    %552 = tpu.concatenate %548, %549, %550, %551 in 0 : vector<2x128xf32>, vector<2x128xf32>, vector<2x128xf32>, vector<2x128xf32> -> vector<8x128xf32>
    %c8_281 = arith.constant 8 : index
    %c0_282 = arith.constant 0 : index
    %c0_283 = arith.constant 0 : index
    %553 = vector.load %arg3[%c8_281, %c0_282, %c0_283] : memref<10x2x1xf32, #tpu.memory_space<vmem>>, vector<1x2x1xf32>
    %554 = vector.shape_cast %553 : vector<1x2x1xf32> to vector<2x1xf32>
    %c1_284 = arith.constant 1 : index
    %c0_285 = arith.constant 0 : index
    %c0_286 = arith.constant 0 : index
    %555 = vector.load %arg3[%c1_284, %c0_285, %c0_286] : memref<10x2x1xf32, #tpu.memory_space<vmem>>, vector<1x2x1xf32>
    %556 = vector.shape_cast %555 : vector<1x2x1xf32> to vector<2x1xf32>
    %557 = tpu.concatenate %554, %0, %556, %0 in 0 : vector<2x1xf32>, vector<2x1xf32>, vector<2x1xf32>, vector<2x1xf32> -> vector<8x1xf32>
    %cst_287 = arith.constant dense<0.000000e+00> : vector<8x256xf32>
    %558 = tpu.matmul %540, %49, %cst_287 {dimension_numbers = #tpu.dot_dimension_numbers<[1], [0], [0], [1], [0, 0, 1, 1], [], []>} : vector<8x32xf32>, vector<32x256xf32>, vector<8x256xf32> -> vector<8x256xf32>
    %559 = vector.extract_strided_slice %558 {offsets = [0, 0], sizes = [8, 128], strides = [1, 1]} : vector<8x256xf32> to vector<8x128xf32>
    %560 = vector.broadcast %5 : vector<8x1xf32> to vector<8x128xf32>
    %561 = arith.mulf %560, %559 : vector<8x128xf32>
    %cst_288 = arith.constant 1.000000e+00 : f32
    %562 = vector.broadcast %cst_288 : f32 to vector<8x1xf32>
    %563 = arith.subf %562, %5 : vector<8x1xf32>
    %564 = vector.extract_strided_slice %558 {offsets = [0, 128], sizes = [8, 128], strides = [1, 1]} : vector<8x256xf32> to vector<8x128xf32>
    %565 = vector.broadcast %563 : vector<8x1xf32> to vector<8x128xf32>
    %566 = arith.mulf %565, %564 : vector<8x128xf32>
    %567 = arith.addf %561, %566 : vector<8x128xf32>
    %568 = arith.addf %552, %567 : vector<8x128xf32>
    %569 = arith.negf %568 : vector<8x128xf32>
    %570 = math.exp %569 : vector<8x128xf32>
    %cst_289 = arith.constant 1.000000e+00 : f32
    %571 = vector.broadcast %cst_289 : f32 to vector<8x128xf32>
    %572 = arith.addf %571, %570 : vector<8x128xf32>
    %573 = arith.divf %571, %572 : vector<8x128xf32>
    %574 = math.tanh %568 : vector<8x128xf32>
    %575 = vector.extract_strided_slice %573 {offsets = [0, 32], sizes = [8, 32], strides = [1, 1]} : vector<8x128xf32> to vector<8x32xf32>
    %576 = arith.mulf %575, %547 : vector<8x32xf32>
    %577 = vector.extract_strided_slice %573 {offsets = [0, 0], sizes = [8, 32], strides = [1, 1]} : vector<8x128xf32> to vector<8x32xf32>
    %578 = vector.extract_strided_slice %574 {offsets = [0, 64], sizes = [8, 32], strides = [1, 1]} : vector<8x128xf32> to vector<8x32xf32>
    %579 = arith.mulf %577, %578 : vector<8x32xf32>
    %580 = arith.addf %576, %579 : vector<8x32xf32>
    %581 = vector.extract_strided_slice %573 {offsets = [0, 96], sizes = [8, 32], strides = [1, 1]} : vector<8x128xf32> to vector<8x32xf32>
    %582 = math.tanh %580 : vector<8x32xf32>
    %583 = arith.mulf %581, %582 : vector<8x32xf32>
    %584 = vector.broadcast %557 : vector<8x1xf32> to vector<8x32xf32>
    %585 = arith.mulf %584, %583 : vector<8x32xf32>
    %586 = vector.extract_strided_slice %585 {offsets = [0, 0], sizes = [2, 32], strides = [1, 1]} : vector<8x32xf32> to vector<2x32xf32>
    %c16_290 = arith.constant 16 : index
    %c0_291 = arith.constant 0 : index
    %587 = vector.load %arg35[%c16_290, %c0_291] : memref<20x64xf32, #tpu.memory_space<vmem>>, vector<2x32xf32>
    tpu.vector_store %arg35[%c16_290, %c0_291], %586 {strides = array<i32>} : memref<20x64xf32, #tpu.memory_space<vmem>>, vector<2x32xf32>,
    %588 = vector.extract_strided_slice %585 {offsets = [4, 0], sizes = [2, 32], strides = [1, 1]} : vector<8x32xf32> to vector<2x32xf32>
    %c2_292 = arith.constant 2 : index
    %c32_293 = arith.constant 32 : index
    %589 = vector.load %arg35[%c2_292, %c32_293] : memref<20x64xf32, #tpu.memory_space<vmem>>, vector<2x32xf32>
    tpu.vector_store %arg35[%c2_292, %c32_293], %588 {strides = array<i32>} : memref<20x64xf32, #tpu.memory_space<vmem>>, vector<2x32xf32>,
    %cst_294 = arith.constant 1.000000e+00 : f32
    %590 = vector.broadcast %cst_294 : f32 to vector<8x1xf32>
    %591 = arith.subf %590, %557 : vector<8x1xf32>
    %592 = vector.broadcast %591 : vector<8x1xf32> to vector<8x32xf32>
    %593 = arith.mulf %592, %540 : vector<8x32xf32>
    %594 = arith.addf %585, %593 : vector<8x32xf32>
    %595 = vector.broadcast %557 : vector<8x1xf32> to vector<8x32xf32>
    %596 = arith.mulf %595, %580 : vector<8x32xf32>
    %cst_295 = arith.constant 1.000000e+00 : f32
    %597 = vector.broadcast %cst_295 : f32 to vector<8x1xf32>
    %598 = arith.subf %597, %557 : vector<8x1xf32>
    %599 = vector.broadcast %598 : vector<8x1xf32> to vector<8x32xf32>
    %600 = arith.mulf %599, %547 : vector<8x32xf32>
    %601 = arith.addf %596, %600 : vector<8x32xf32>
    %c18_296 = arith.constant 18 : index
    %c0_297 = arith.constant 0 : index
    %602 = vector.load %arg33[%c18_296, %c0_297] : memref<20x320xf32, #tpu.memory_space<vmem>>, vector<2x128xf32>
    %c14_298 = arith.constant 14 : index
    %c0_299 = arith.constant 0 : index
    %603 = vector.load %arg34[%c14_298, %c0_299] : memref<16x320xf32, #tpu.memory_space<vmem>>, vector<2x128xf32>
    %c0_300 = arith.constant 0 : index
    %c128_301 = arith.constant 128 : index
    %604 = vector.load %arg33[%c0_300, %c128_301] : memref<20x320xf32, #tpu.memory_space<vmem>>, vector<2x128xf32>
    %c0_302 = arith.constant 0 : index
    %c128_303 = arith.constant 128 : index
    %605 = vector.load %arg34[%c0_302, %c128_303] : memref<16x320xf32, #tpu.memory_space<vmem>>, vector<2x128xf32>
    %606 = tpu.concatenate %602, %603, %604, %605 in 0 : vector<2x128xf32>, vector<2x128xf32>, vector<2x128xf32>, vector<2x128xf32> -> vector<8x128xf32>
    %c9_304 = arith.constant 9 : index
    %c0_305 = arith.constant 0 : index
    %c0_306 = arith.constant 0 : index
    %607 = vector.load %arg3[%c9_304, %c0_305, %c0_306] : memref<10x2x1xf32, #tpu.memory_space<vmem>>, vector<1x2x1xf32>
    %608 = vector.shape_cast %607 : vector<1x2x1xf32> to vector<2x1xf32>
    %c0_307 = arith.constant 0 : index
    %c0_308 = arith.constant 0 : index
    %c0_309 = arith.constant 0 : index
    %609 = vector.load %arg3[%c0_307, %c0_308, %c0_309] : memref<10x2x1xf32, #tpu.memory_space<vmem>>, vector<1x2x1xf32>
    %610 = vector.shape_cast %609 : vector<1x2x1xf32> to vector<2x1xf32>
    %611 = tpu.concatenate %608, %0, %610, %0 in 0 : vector<2x1xf32>, vector<2x1xf32>, vector<2x1xf32>, vector<2x1xf32> -> vector<8x1xf32>
    %cst_310 = arith.constant dense<0.000000e+00> : vector<8x256xf32>
    %612 = tpu.matmul %594, %49, %cst_310 {dimension_numbers = #tpu.dot_dimension_numbers<[1], [0], [0], [1], [0, 0, 1, 1], [], []>} : vector<8x32xf32>, vector<32x256xf32>, vector<8x256xf32> -> vector<8x256xf32>
    %613 = vector.extract_strided_slice %612 {offsets = [0, 0], sizes = [8, 128], strides = [1, 1]} : vector<8x256xf32> to vector<8x128xf32>
    %614 = vector.broadcast %5 : vector<8x1xf32> to vector<8x128xf32>
    %615 = arith.mulf %614, %613 : vector<8x128xf32>
    %cst_311 = arith.constant 1.000000e+00 : f32
    %616 = vector.broadcast %cst_311 : f32 to vector<8x1xf32>
    %617 = arith.subf %616, %5 : vector<8x1xf32>
    %618 = vector.extract_strided_slice %612 {offsets = [0, 128], sizes = [8, 128], strides = [1, 1]} : vector<8x256xf32> to vector<8x128xf32>
    %619 = vector.broadcast %617 : vector<8x1xf32> to vector<8x128xf32>
    %620 = arith.mulf %619, %618 : vector<8x128xf32>
    %621 = arith.addf %615, %620 : vector<8x128xf32>
    %622 = arith.addf %606, %621 : vector<8x128xf32>
    %623 = arith.negf %622 : vector<8x128xf32>
    %624 = math.exp %623 : vector<8x128xf32>
    %cst_312 = arith.constant 1.000000e+00 : f32
    %625 = vector.broadcast %cst_312 : f32 to vector<8x128xf32>
    %626 = arith.addf %625, %624 : vector<8x128xf32>
    %627 = arith.divf %625, %626 : vector<8x128xf32>
    %628 = math.tanh %622 : vector<8x128xf32>
    %629 = vector.extract_strided_slice %627 {offsets = [0, 32], sizes = [8, 32], strides = [1, 1]} : vector<8x128xf32> to vector<8x32xf32>
    %630 = arith.mulf %629, %601 : vector<8x32xf32>
    %631 = vector.extract_strided_slice %627 {offsets = [0, 0], sizes = [8, 32], strides = [1, 1]} : vector<8x128xf32> to vector<8x32xf32>
    %632 = vector.extract_strided_slice %628 {offsets = [0, 64], sizes = [8, 32], strides = [1, 1]} : vector<8x128xf32> to vector<8x32xf32>
    %633 = arith.mulf %631, %632 : vector<8x32xf32>
    %634 = arith.addf %630, %633 : vector<8x32xf32>
    %635 = vector.extract_strided_slice %627 {offsets = [0, 96], sizes = [8, 32], strides = [1, 1]} : vector<8x128xf32> to vector<8x32xf32>
    %636 = math.tanh %634 : vector<8x32xf32>
    %637 = arith.mulf %635, %636 : vector<8x32xf32>
    %638 = vector.broadcast %611 : vector<8x1xf32> to vector<8x32xf32>
    %639 = arith.mulf %638, %637 : vector<8x32xf32>
    %640 = vector.extract_strided_slice %639 {offsets = [0, 0], sizes = [2, 32], strides = [1, 1]} : vector<8x32xf32> to vector<2x32xf32>
    %c18_313 = arith.constant 18 : index
    %c0_314 = arith.constant 0 : index
    %641 = vector.load %arg35[%c18_313, %c0_314] : memref<20x64xf32, #tpu.memory_space<vmem>>, vector<2x32xf32>
    tpu.vector_store %arg35[%c18_313, %c0_314], %640 {strides = array<i32>} : memref<20x64xf32, #tpu.memory_space<vmem>>, vector<2x32xf32>,
    %642 = vector.extract_strided_slice %639 {offsets = [4, 0], sizes = [2, 32], strides = [1, 1]} : vector<8x32xf32> to vector<2x32xf32>
    %c0_315 = arith.constant 0 : index
    %c32_316 = arith.constant 32 : index
    %643 = vector.load %arg35[%c0_315, %c32_316] : memref<20x64xf32, #tpu.memory_space<vmem>>, vector<2x32xf32>
    tpu.vector_store %arg35[%c0_315, %c32_316], %642 {strides = array<i32>} : memref<20x64xf32, #tpu.memory_space<vmem>>, vector<2x32xf32>,
    %c0_317 = arith.constant 0 : index
    %c0_318 = arith.constant 0 : index
    %644 = vector.load %arg16[%c0_317, %c0_318] : memref<64x64xf32, #tpu.memory_space<vmem>>, vector<64x64xf32>
    %c0_319 = arith.constant 0 : index
    %c0_320 = arith.constant 0 : index
    %645 = vector.load %arg17[%c0_319, %c0_320] : memref<1x64xf32, #tpu.memory_space<vmem>>, vector<1x64xf32>
    %c0_321 = arith.constant 0 : index
    %c256 = arith.constant 256 : index
    %646 = vector.load %arg33[%c0_321, %c256] : memref<20x320xf32, #tpu.memory_space<vmem>>, vector<20x64xf32>
    %c0_322 = arith.constant 0 : index
    %c0_323 = arith.constant 0 : index
    %647 = vector.load %arg35[%c0_322, %c0_323] : memref<20x64xf32, #tpu.memory_space<vmem>>, vector<20x64xf32>
    %cst_324 = arith.constant dense<0.000000e+00> : vector<20x64xf32>
    %648 = tpu.matmul %647, %644, %cst_324 {dimension_numbers = #tpu.dot_dimension_numbers<[1], [0], [0], [1], [0, 0, 1, 1], [], []>} : vector<20x64xf32>, vector<64x64xf32>, vector<20x64xf32> -> vector<20x64xf32>
    %649 = vector.broadcast %645 : vector<1x64xf32> to vector<20x64xf32>
    %650 = arith.addf %648, %649 : vector<20x64xf32>
    %651 = arith.addf %646, %650 : vector<20x64xf32>
    %652 = arith.negf %651 : vector<20x64xf32>
    %653 = math.exp %652 : vector<20x64xf32>
    %cst_325 = arith.constant 1.000000e+00 : f32
    %654 = vector.broadcast %cst_325 : f32 to vector<20x64xf32>
    %655 = arith.addf %654, %653 : vector<20x64xf32>
    %656 = arith.divf %654, %655 : vector<20x64xf32>
    %657 = arith.mulf %656, %646 : vector<20x64xf32>
    %cst_326 = arith.constant 1.000000e+00 : f32
    %658 = vector.broadcast %cst_326 : f32 to vector<20x64xf32>
    %659 = arith.subf %658, %656 : vector<20x64xf32>
    %660 = arith.mulf %659, %650 : vector<20x64xf32>
    %661 = arith.addf %657, %660 : vector<20x64xf32>
    %c0_327 = arith.constant 0 : index
    %c256_328 = arith.constant 256 : index
    %662 = vector.load %arg34[%c0_327, %c256_328] : memref<16x320xf32, #tpu.memory_space<vmem>>, vector<16x64xf32>
    %c0_329 = arith.constant 0 : index
    %c0_330 = arith.constant 0 : index
    %663 = vector.load %arg36[%c0_329, %c0_330] : memref<16x64xf32, #tpu.memory_space<vmem>>, vector<16x64xf32>
    %cst_331 = arith.constant dense<0.000000e+00> : vector<16x64xf32>
    %664 = tpu.matmul %663, %644, %cst_331 {dimension_numbers = #tpu.dot_dimension_numbers<[1], [0], [0], [1], [0, 0, 1, 1], [], []>} : vector<16x64xf32>, vector<64x64xf32>, vector<16x64xf32> -> vector<16x64xf32>
    %665 = vector.broadcast %645 : vector<1x64xf32> to vector<16x64xf32>
    %666 = arith.addf %664, %665 : vector<16x64xf32>
    %667 = arith.addf %662, %666 : vector<16x64xf32>
    %668 = arith.negf %667 : vector<16x64xf32>
    %669 = math.exp %668 : vector<16x64xf32>
    %cst_332 = arith.constant 1.000000e+00 : f32
    %670 = vector.broadcast %cst_332 : f32 to vector<16x64xf32>
    %671 = arith.addf %670, %669 : vector<16x64xf32>
    %672 = arith.divf %670, %671 : vector<16x64xf32>
    %673 = arith.mulf %672, %662 : vector<16x64xf32>
    %cst_333 = arith.constant 1.000000e+00 : f32
    %674 = vector.broadcast %cst_333 : f32 to vector<16x64xf32>
    %675 = arith.subf %674, %672 : vector<16x64xf32>
    %676 = arith.mulf %675, %666 : vector<16x64xf32>
    %677 = arith.addf %673, %676 : vector<16x64xf32>
    %cst_334 = arith.constant dense<0.000000e+00> : vector<20x16xf32>
    %678 = tpu.matmul %661, %677, %cst_334 {dimension_numbers = #tpu.dot_dimension_numbers<[1], [1], [0], [0], [0, 0, 1, 0], [], []>} : vector<20x64xf32>, vector<16x64xf32>, vector<20x16xf32> -> vector<20x16xf32>
    %cst_335 = arith.constant dense<0.000000e+00> : vector<16x20xf32>
    %679 = tpu.matmul %677, %661, %cst_335 {dimension_numbers = #tpu.dot_dimension_numbers<[1], [1], [0], [0], [0, 0, 1, 0], [], []>} : vector<16x64xf32>, vector<20x64xf32>, vector<16x20xf32> -> vector<16x20xf32>
    %c0_336 = arith.constant 0 : index
    %c0_337 = arith.constant 0 : index
    %680 = vector.load %arg7[%c0_336, %c0_337] : memref<20x16xf32, #tpu.memory_space<vmem>>, vector<20x16xf32>
    %c0_338 = arith.constant 0 : index
    %c0_339 = arith.constant 0 : index
    %681 = vector.load %arg8[%c0_338, %c0_339] : memref<16x20xf32, #tpu.memory_space<vmem>>, vector<16x20xf32>
    %c0_340 = arith.constant 0 : index
    %c0_341 = arith.constant 0 : index
    %682 = vector.load %arg9[%c0_340, %c0_341] : memref<20x1xf32, #tpu.memory_space<vmem>>, vector<20x1xf32>
    %c0_342 = arith.constant 0 : index
    %c0_343 = arith.constant 0 : index
    %683 = vector.load %arg10[%c0_342, %c0_343] : memref<16x1xf32, #tpu.memory_space<vmem>>, vector<16x1xf32>
    %684 = arith.mulf %678, %680 : vector<20x16xf32>
    %cst_344 = arith.constant dense<0xFF800000> : vector<20xf32>
    %685 = vector.multi_reduction <maximumf>, %684, %cst_344 [1] : vector<20x16xf32> to vector<20xf32>
    %686 = vector.shape_cast %685 : vector<20xf32> to vector<20x1xf32>
    %687 = vector.broadcast %686 : vector<20x1xf32> to vector<20x16xf32>
    %688 = arith.subf %684, %687 : vector<20x16xf32>
    %689 = math.exp %688 : vector<20x16xf32>
    %cst_345 = arith.constant dense<0.000000e+00> : vector<20xf32>
    %690 = vector.multi_reduction <add>, %689, %cst_345 [1] : vector<20x16xf32> to vector<20xf32>
    %691 = vector.shape_cast %690 : vector<20xf32> to vector<20x1xf32>
    %692 = tpu.reciprocal %691 {approx = true} : vector<20x1xf32> -> vector<20x1xf32>
    %693 = vector.broadcast %692 : vector<20x1xf32> to vector<20x16xf32>
    %694 = arith.mulf %689, %693 : vector<20x16xf32>
    %695 = arith.mulf %694, %680 : vector<20x16xf32>
    %cst_346 = arith.constant dense<0.000000e+00> : vector<20xf32>
    %696 = vector.multi_reduction <add>, %695, %cst_346 [1] : vector<20x16xf32> to vector<20xf32>
    %697 = vector.shape_cast %696 : vector<20xf32> to vector<20x1xf32>
    %cst_347 = arith.constant 9.99999982E-14 : f32
    %698 = vector.broadcast %cst_347 : f32 to vector<20x1xf32>
    %699 = arith.addf %697, %698 : vector<20x1xf32>
    %700 = tpu.reciprocal %699 {approx = true} : vector<20x1xf32> -> vector<20x1xf32>
    %701 = vector.broadcast %700 : vector<20x1xf32> to vector<20x16xf32>
    %702 = arith.mulf %695, %701 : vector<20x16xf32>
    %cst_348 = arith.constant dense<0.000000e+00> : vector<20x64xf32>
    %703 = tpu.matmul %702, %677, %cst_348 {dimension_numbers = #tpu.dot_dimension_numbers<[1], [0], [0], [1], [0, 0, 1, 1], [], []>} : vector<20x16xf32>, vector<16x64xf32>, vector<20x64xf32> -> vector<20x64xf32>
    %704 = vector.broadcast %682 : vector<20x1xf32> to vector<20x64xf32>
    %705 = arith.mulf %703, %704 : vector<20x64xf32>
    %cst_349 = arith.constant 0.000000e+00 : f32
    %706 = vector.broadcast %cst_349 : f32 to vector<20x16xf32>
    %707 = arith.subf %706, %678 : vector<20x16xf32>
    %708 = arith.mulf %707, %680 : vector<20x16xf32>
    %cst_350 = arith.constant dense<0xFF800000> : vector<20xf32>
    %709 = vector.multi_reduction <maximumf>, %708, %cst_350 [1] : vector<20x16xf32> to vector<20xf32>
    %710 = vector.shape_cast %709 : vector<20xf32> to vector<20x1xf32>
    %711 = vector.broadcast %710 : vector<20x1xf32> to vector<20x16xf32>
    %712 = arith.subf %708, %711 : vector<20x16xf32>
    %713 = math.exp %712 : vector<20x16xf32>
    %cst_351 = arith.constant dense<0.000000e+00> : vector<20xf32>
    %714 = vector.multi_reduction <add>, %713, %cst_351 [1] : vector<20x16xf32> to vector<20xf32>
    %715 = vector.shape_cast %714 : vector<20xf32> to vector<20x1xf32>
    %716 = tpu.reciprocal %715 {approx = true} : vector<20x1xf32> -> vector<20x1xf32>
    %717 = vector.broadcast %716 : vector<20x1xf32> to vector<20x16xf32>
    %718 = arith.mulf %713, %717 : vector<20x16xf32>
    %719 = arith.mulf %718, %680 : vector<20x16xf32>
    %cst_352 = arith.constant dense<0.000000e+00> : vector<20xf32>
    %720 = vector.multi_reduction <add>, %719, %cst_352 [1] : vector<20x16xf32> to vector<20xf32>
    %721 = vector.shape_cast %720 : vector<20xf32> to vector<20x1xf32>
    %cst_353 = arith.constant 9.99999982E-14 : f32
    %722 = vector.broadcast %cst_353 : f32 to vector<20x1xf32>
    %723 = arith.addf %721, %722 : vector<20x1xf32>
    %724 = tpu.reciprocal %723 {approx = true} : vector<20x1xf32> -> vector<20x1xf32>
    %725 = vector.broadcast %724 : vector<20x1xf32> to vector<20x16xf32>
    %726 = arith.mulf %719, %725 : vector<20x16xf32>
    %cst_354 = arith.constant dense<0.000000e+00> : vector<20x64xf32>
    %727 = tpu.matmul %726, %677, %cst_354 {dimension_numbers = #tpu.dot_dimension_numbers<[1], [0], [0], [1], [0, 0, 1, 1], [], []>} : vector<20x16xf32>, vector<16x64xf32>, vector<20x64xf32> -> vector<20x64xf32>
    %728 = vector.broadcast %682 : vector<20x1xf32> to vector<20x64xf32>
    %729 = arith.mulf %727, %728 : vector<20x64xf32>
    %730 = arith.mulf %679, %681 : vector<16x20xf32>
    %cst_355 = arith.constant dense<0xFF800000> : vector<16xf32>
    %731 = vector.multi_reduction <maximumf>, %730, %cst_355 [1] : vector<16x20xf32> to vector<16xf32>
    %732 = vector.shape_cast %731 : vector<16xf32> to vector<16x1xf32>
    %733 = vector.broadcast %732 : vector<16x1xf32> to vector<16x20xf32>
    %734 = arith.subf %730, %733 : vector<16x20xf32>
    %735 = math.exp %734 : vector<16x20xf32>
    %cst_356 = arith.constant dense<0.000000e+00> : vector<16xf32>
    %736 = vector.multi_reduction <add>, %735, %cst_356 [1] : vector<16x20xf32> to vector<16xf32>
    %737 = vector.shape_cast %736 : vector<16xf32> to vector<16x1xf32>
    %738 = tpu.reciprocal %737 {approx = true} : vector<16x1xf32> -> vector<16x1xf32>
    %739 = vector.broadcast %738 : vector<16x1xf32> to vector<16x20xf32>
    %740 = arith.mulf %735, %739 : vector<16x20xf32>
    %741 = arith.mulf %740, %681 : vector<16x20xf32>
    %cst_357 = arith.constant dense<0.000000e+00> : vector<16xf32>
    %742 = vector.multi_reduction <add>, %741, %cst_357 [1] : vector<16x20xf32> to vector<16xf32>
    %743 = vector.shape_cast %742 : vector<16xf32> to vector<16x1xf32>
    %cst_358 = arith.constant 9.99999982E-14 : f32
    %744 = vector.broadcast %cst_358 : f32 to vector<16x1xf32>
    %745 = arith.addf %743, %744 : vector<16x1xf32>
    %746 = tpu.reciprocal %745 {approx = true} : vector<16x1xf32> -> vector<16x1xf32>
    %747 = vector.broadcast %746 : vector<16x1xf32> to vector<16x20xf32>
    %748 = arith.mulf %741, %747 : vector<16x20xf32>
    %cst_359 = arith.constant dense<0.000000e+00> : vector<16x64xf32>
    %749 = tpu.matmul %748, %661, %cst_359 {dimension_numbers = #tpu.dot_dimension_numbers<[1], [0], [0], [1], [0, 0, 1, 1], [], []>} : vector<16x20xf32>, vector<20x64xf32>, vector<16x64xf32> -> vector<16x64xf32>
    %750 = vector.broadcast %683 : vector<16x1xf32> to vector<16x64xf32>
    %751 = arith.mulf %749, %750 : vector<16x64xf32>
    %cst_360 = arith.constant 0.000000e+00 : f32
    %752 = vector.broadcast %cst_360 : f32 to vector<16x20xf32>
    %753 = arith.subf %752, %679 : vector<16x20xf32>
    %754 = arith.mulf %753, %681 : vector<16x20xf32>
    %cst_361 = arith.constant dense<0xFF800000> : vector<16xf32>
    %755 = vector.multi_reduction <maximumf>, %754, %cst_361 [1] : vector<16x20xf32> to vector<16xf32>
    %756 = vector.shape_cast %755 : vector<16xf32> to vector<16x1xf32>
    %757 = vector.broadcast %756 : vector<16x1xf32> to vector<16x20xf32>
    %758 = arith.subf %754, %757 : vector<16x20xf32>
    %759 = math.exp %758 : vector<16x20xf32>
    %cst_362 = arith.constant dense<0.000000e+00> : vector<16xf32>
    %760 = vector.multi_reduction <add>, %759, %cst_362 [1] : vector<16x20xf32> to vector<16xf32>
    %761 = vector.shape_cast %760 : vector<16xf32> to vector<16x1xf32>
    %762 = tpu.reciprocal %761 {approx = true} : vector<16x1xf32> -> vector<16x1xf32>
    %763 = vector.broadcast %762 : vector<16x1xf32> to vector<16x20xf32>
    %764 = arith.mulf %759, %763 : vector<16x20xf32>
    %765 = arith.mulf %764, %681 : vector<16x20xf32>
    %cst_363 = arith.constant dense<0.000000e+00> : vector<16xf32>
    %766 = vector.multi_reduction <add>, %765, %cst_363 [1] : vector<16x20xf32> to vector<16xf32>
    %767 = vector.shape_cast %766 : vector<16xf32> to vector<16x1xf32>
    %cst_364 = arith.constant 9.99999982E-14 : f32
    %768 = vector.broadcast %cst_364 : f32 to vector<16x1xf32>
    %769 = arith.addf %767, %768 : vector<16x1xf32>
    %770 = tpu.reciprocal %769 {approx = true} : vector<16x1xf32> -> vector<16x1xf32>
    %771 = vector.broadcast %770 : vector<16x1xf32> to vector<16x20xf32>
    %772 = arith.mulf %765, %771 : vector<16x20xf32>
    %cst_365 = arith.constant dense<0.000000e+00> : vector<16x64xf32>
    %773 = tpu.matmul %772, %661, %cst_365 {dimension_numbers = #tpu.dot_dimension_numbers<[1], [0], [0], [1], [0, 0, 1, 1], [], []>} : vector<16x20xf32>, vector<20x64xf32>, vector<16x64xf32> -> vector<16x64xf32>
    %774 = vector.broadcast %683 : vector<16x1xf32> to vector<16x64xf32>
    %775 = arith.mulf %773, %774 : vector<16x64xf32>
    %c0_366 = arith.constant 0 : index
    %c0_367 = arith.constant 0 : index
    %776 = vector.load %arg18[%c0_366, %c0_367] : memref<192x128xf32, #tpu.memory_space<vmem>>, vector<192x128xf32>
    %c0_368 = arith.constant 0 : index
    %c0_369 = arith.constant 0 : index
    %777 = vector.load %arg19[%c0_368, %c0_369] : memref<1x128xf32, #tpu.memory_space<vmem>>, vector<1x128xf32>
    %c0_370 = arith.constant 0 : index
    %c0_371 = arith.constant 0 : index
    %778 = vector.load %arg20[%c0_370, %c0_371] : memref<128x64xf32, #tpu.memory_space<vmem>>, vector<128x64xf32>
    %c0_372 = arith.constant 0 : index
    %c0_373 = arith.constant 0 : index
    %779 = vector.load %arg21[%c0_372, %c0_373] : memref<1x64xf32, #tpu.memory_space<vmem>>, vector<1x64xf32>
    %c0_374 = arith.constant 0 : index
    %c0_375 = arith.constant 0 : index
    %780 = vector.load %arg22[%c0_374, %c0_375] : memref<64x512xf32, #tpu.memory_space<vmem>>, vector<64x512xf32>
    %c0_376 = arith.constant 0 : index
    %c0_377 = arith.constant 0 : index
    %781 = vector.load %arg23[%c0_376, %c0_377] : memref<1x512xf32, #tpu.memory_space<vmem>>, vector<1x512xf32>
    %782 = tpu.concatenate %661, %705, %729 in 1 : vector<20x64xf32>, vector<20x64xf32>, vector<20x64xf32> -> vector<20x192xf32>
    %cst_378 = arith.constant dense<0.000000e+00> : vector<20x128xf32>
    %783 = tpu.matmul %782, %776, %cst_378 {dimension_numbers = #tpu.dot_dimension_numbers<[1], [0], [0], [1], [0, 0, 1, 1], [], []>} : vector<20x192xf32>, vector<192x128xf32>, vector<20x128xf32> -> vector<20x128xf32>
    %784 = vector.broadcast %777 : vector<1x128xf32> to vector<20x128xf32>
    %785 = arith.addf %783, %784 : vector<20x128xf32>
    %786 = arith.negf %785 : vector<20x128xf32>
    %787 = math.exp %786 : vector<20x128xf32>
    %cst_379 = arith.constant 1.000000e+00 : f32
    %788 = vector.broadcast %cst_379 : f32 to vector<20x128xf32>
    %789 = arith.addf %788, %787 : vector<20x128xf32>
    %790 = arith.divf %788, %789 : vector<20x128xf32>
    %791 = vector.extract_strided_slice %790 {offsets = [0, 0], sizes = [20, 64], strides = [1, 1]} : vector<20x128xf32> to vector<20x64xf32>
    %792 = vector.extract_strided_slice %790 {offsets = [0, 64], sizes = [20, 64], strides = [1, 1]} : vector<20x128xf32> to vector<20x64xf32>
    %793 = arith.mulf %791, %705 : vector<20x64xf32>
    %cst_380 = arith.constant 1.000000e+00 : f32
    %794 = vector.broadcast %cst_380 : f32 to vector<20x64xf32>
    %795 = arith.subf %794, %791 : vector<20x64xf32>
    %796 = arith.mulf %795, %661 : vector<20x64xf32>
    %797 = arith.addf %793, %796 : vector<20x64xf32>
    %798 = arith.mulf %792, %729 : vector<20x64xf32>
    %cst_381 = arith.constant 1.000000e+00 : f32
    %799 = vector.broadcast %cst_381 : f32 to vector<20x64xf32>
    %800 = arith.subf %799, %792 : vector<20x64xf32>
    %801 = arith.mulf %800, %661 : vector<20x64xf32>
    %802 = arith.addf %798, %801 : vector<20x64xf32>
    %803 = tpu.concatenate %797, %802 in 1 : vector<20x64xf32>, vector<20x64xf32> -> vector<20x128xf32>
    %cst_382 = arith.constant dense<0.000000e+00> : vector<20x64xf32>
    %804 = tpu.matmul %803, %778, %cst_382 {dimension_numbers = #tpu.dot_dimension_numbers<[1], [0], [0], [1], [0, 0, 1, 1], [], []>} : vector<20x128xf32>, vector<128x64xf32>, vector<20x64xf32> -> vector<20x64xf32>
    %805 = vector.broadcast %779 : vector<1x64xf32> to vector<20x64xf32>
    %806 = arith.addf %804, %805 : vector<20x64xf32>
    %cst_383 = arith.constant 0.000000e+00 : f32
    %807 = vector.broadcast %cst_383 : f32 to vector<20x64xf32>
    %808 = arith.maximumf %806, %807 : vector<20x64xf32>
    %cst_384 = arith.constant dense<0.000000e+00> : vector<20x512xf32>
    %809 = tpu.matmul %808, %780, %cst_384 {dimension_numbers = #tpu.dot_dimension_numbers<[1], [0], [0], [1], [0, 0, 1, 1], [], []>} : vector<20x64xf32>, vector<64x512xf32>, vector<20x512xf32> -> vector<20x512xf32>
    %810 = vector.broadcast %781 : vector<1x512xf32> to vector<20x512xf32>
    %811 = arith.addf %809, %810 : vector<20x512xf32>
    %c0_385 = arith.constant 0 : index
    %c0_386 = arith.constant 0 : index
    %812 = vector.load %arg37[%c0_385, %c0_386] : memref<20x512xf32, #tpu.memory_space<vmem>>, vector<20x512xf32>
    tpu.vector_store %arg37[%c0_385, %c0_386], %811 {strides = array<i32>} : memref<20x512xf32, #tpu.memory_space<vmem>>, vector<20x512xf32>,
    %813 = tpu.concatenate %677, %751, %775 in 1 : vector<16x64xf32>, vector<16x64xf32>, vector<16x64xf32> -> vector<16x192xf32>
    %cst_387 = arith.constant dense<0.000000e+00> : vector<16x128xf32>
    %814 = tpu.matmul %813, %776, %cst_387 {dimension_numbers = #tpu.dot_dimension_numbers<[1], [0], [0], [1], [0, 0, 1, 1], [], []>} : vector<16x192xf32>, vector<192x128xf32>, vector<16x128xf32> -> vector<16x128xf32>
    %815 = vector.broadcast %777 : vector<1x128xf32> to vector<16x128xf32>
    %816 = arith.addf %814, %815 : vector<16x128xf32>
    %817 = arith.negf %816 : vector<16x128xf32>
    %818 = math.exp %817 : vector<16x128xf32>
    %cst_388 = arith.constant 1.000000e+00 : f32
    %819 = vector.broadcast %cst_388 : f32 to vector<16x128xf32>
    %820 = arith.addf %819, %818 : vector<16x128xf32>
    %821 = arith.divf %819, %820 : vector<16x128xf32>
    %822 = vector.extract_strided_slice %821 {offsets = [0, 0], sizes = [16, 64], strides = [1, 1]} : vector<16x128xf32> to vector<16x64xf32>
    %823 = vector.extract_strided_slice %821 {offsets = [0, 64], sizes = [16, 64], strides = [1, 1]} : vector<16x128xf32> to vector<16x64xf32>
    %824 = arith.mulf %822, %751 : vector<16x64xf32>
    %cst_389 = arith.constant 1.000000e+00 : f32
    %825 = vector.broadcast %cst_389 : f32 to vector<16x64xf32>
    %826 = arith.subf %825, %822 : vector<16x64xf32>
    %827 = arith.mulf %826, %677 : vector<16x64xf32>
    %828 = arith.addf %824, %827 : vector<16x64xf32>
    %829 = arith.mulf %823, %775 : vector<16x64xf32>
    %cst_390 = arith.constant 1.000000e+00 : f32
    %830 = vector.broadcast %cst_390 : f32 to vector<16x64xf32>
    %831 = arith.subf %830, %823 : vector<16x64xf32>
    %832 = arith.mulf %831, %677 : vector<16x64xf32>
    %833 = arith.addf %829, %832 : vector<16x64xf32>
    %834 = tpu.concatenate %828, %833 in 1 : vector<16x64xf32>, vector<16x64xf32> -> vector<16x128xf32>
    %cst_391 = arith.constant dense<0.000000e+00> : vector<16x64xf32>
    %835 = tpu.matmul %834, %778, %cst_391 {dimension_numbers = #tpu.dot_dimension_numbers<[1], [0], [0], [1], [0, 0, 1, 1], [], []>} : vector<16x128xf32>, vector<128x64xf32>, vector<16x64xf32> -> vector<16x64xf32>
    %836 = vector.broadcast %779 : vector<1x64xf32> to vector<16x64xf32>
    %837 = arith.addf %835, %836 : vector<16x64xf32>
    %cst_392 = arith.constant 0.000000e+00 : f32
    %838 = vector.broadcast %cst_392 : f32 to vector<16x64xf32>
    %839 = arith.maximumf %837, %838 : vector<16x64xf32>
    %cst_393 = arith.constant dense<0.000000e+00> : vector<16x512xf32>
    %840 = tpu.matmul %839, %780, %cst_393 {dimension_numbers = #tpu.dot_dimension_numbers<[1], [0], [0], [1], [0, 0, 1, 1], [], []>} : vector<16x64xf32>, vector<64x512xf32>, vector<16x512xf32> -> vector<16x512xf32>
    %841 = vector.broadcast %781 : vector<1x512xf32> to vector<16x512xf32>
    %842 = arith.addf %840, %841 : vector<16x512xf32>
    %c0_394 = arith.constant 0 : index
    %c0_395 = arith.constant 0 : index
    %843 = vector.load %arg38[%c0_394, %c0_395] : memref<16x512xf32, #tpu.memory_space<vmem>>, vector<16x512xf32>
    tpu.vector_store %arg38[%c0_394, %c0_395], %842 {strides = array<i32>} : memref<16x512xf32, #tpu.memory_space<vmem>>, vector<16x512xf32>,
    %c0_396 = arith.constant 0 : index
    %c0_397 = arith.constant 0 : index
    %844 = vector.load %arg24[%c0_396, %c0_397] : memref<32x512xf32, #tpu.memory_space<vmem>>, vector<32x512xf32>
    %cst_398 = arith.constant 0.000000e+00 : f32
    %845 = vector.broadcast %cst_398 : f32 to vector<16x32xf32>
    %cst_399 = arith.constant 0.000000e+00 : f32
    %846 = vector.broadcast %cst_399 : f32 to vector<16x32xf32>
    %cst_400 = arith.constant 0.000000e+00 : f32
    %847 = vector.broadcast %cst_400 : f32 to vector<16x32xf32>
    %cst_401 = arith.constant -1.000000e+07 : f32
    %848 = vector.broadcast %cst_401 : f32 to vector<16x32xf32>
    %c0_402 = arith.constant 0 : index
    %c0_403 = arith.constant 0 : index
    %849 = vector.load %arg37[%c0_402, %c0_403] : memref<20x512xf32, #tpu.memory_space<vmem>>, vector<2x128xf32>
    %c0_404 = arith.constant 0 : index
    %c0_405 = arith.constant 0 : index
    %850 = vector.load %arg38[%c0_404, %c0_405] : memref<16x512xf32, #tpu.memory_space<vmem>>, vector<2x128xf32>
    %c18_406 = arith.constant 18 : index
    %c128_407 = arith.constant 128 : index
    %851 = vector.load %arg37[%c18_406, %c128_407] : memref<20x512xf32, #tpu.memory_space<vmem>>, vector<2x128xf32>
    %c14_408 = arith.constant 14 : index
    %c128_409 = arith.constant 128 : index
    %852 = vector.load %arg38[%c14_408, %c128_409] : memref<16x512xf32, #tpu.memory_space<vmem>>, vector<2x128xf32>
    %c0_410 = arith.constant 0 : index
    %c256_411 = arith.constant 256 : index
    %853 = vector.load %arg37[%c0_410, %c256_411] : memref<20x512xf32, #tpu.memory_space<vmem>>, vector<2x128xf32>
    %c0_412 = arith.constant 0 : index
    %c256_413 = arith.constant 256 : index
    %854 = vector.load %arg38[%c0_412, %c256_413] : memref<16x512xf32, #tpu.memory_space<vmem>>, vector<2x128xf32>
    %c18_414 = arith.constant 18 : index
    %c384 = arith.constant 384 : index
    %855 = vector.load %arg37[%c18_414, %c384] : memref<20x512xf32, #tpu.memory_space<vmem>>, vector<2x128xf32>
    %c14_415 = arith.constant 14 : index
    %c384_416 = arith.constant 384 : index
    %856 = vector.load %arg38[%c14_415, %c384_416] : memref<16x512xf32, #tpu.memory_space<vmem>>, vector<2x128xf32>
    %857 = tpu.concatenate %849, %850, %851, %852, %853, %854, %855, %856 in 0 : vector<2x128xf32>, vector<2x128xf32>, vector<2x128xf32>, vector<2x128xf32>, vector<2x128xf32>, vector<2x128xf32>, vector<2x128xf32>, vector<2x128xf32> -> vector<16x128xf32>
    %c0_417 = arith.constant 0 : index
    %c0_418 = arith.constant 0 : index
    %c0_419 = arith.constant 0 : index
    %858 = vector.load %arg3[%c0_417, %c0_418, %c0_419] : memref<10x2x1xf32, #tpu.memory_space<vmem>>, vector<1x2x1xf32>
    %859 = vector.shape_cast %858 : vector<1x2x1xf32> to vector<2x1xf32>
    %c9_420 = arith.constant 9 : index
    %c0_421 = arith.constant 0 : index
    %c0_422 = arith.constant 0 : index
    %860 = vector.load %arg3[%c9_420, %c0_421, %c0_422] : memref<10x2x1xf32, #tpu.memory_space<vmem>>, vector<1x2x1xf32>
    %861 = vector.shape_cast %860 : vector<1x2x1xf32> to vector<2x1xf32>
    %c0_423 = arith.constant 0 : index
    %c0_424 = arith.constant 0 : index
    %c0_425 = arith.constant 0 : index
    %862 = vector.load %arg4[%c0_423, %c0_424, %c0_425] : memref<8x2x1xf32, #tpu.memory_space<vmem>>, vector<1x2x1xf32>
    %863 = vector.shape_cast %862 : vector<1x2x1xf32> to vector<2x1xf32>
    %c7_426 = arith.constant 7 : index
    %c0_427 = arith.constant 0 : index
    %c0_428 = arith.constant 0 : index
    %864 = vector.load %arg4[%c7_426, %c0_427, %c0_428] : memref<8x2x1xf32, #tpu.memory_space<vmem>>, vector<1x2x1xf32>
    %865 = vector.shape_cast %864 : vector<1x2x1xf32> to vector<2x1xf32>
    %c0_429 = arith.constant 0 : index
    %c0_430 = arith.constant 0 : index
    %c0_431 = arith.constant 0 : index
    %866 = vector.load %arg5[%c0_429, %c0_430, %c0_431] : memref<10x2x1xf32, #tpu.memory_space<vmem>>, vector<1x2x1xf32>
    %867 = vector.shape_cast %866 : vector<1x2x1xf32> to vector<2x1xf32>
    %c9_432 = arith.constant 9 : index
    %c0_433 = arith.constant 0 : index
    %c0_434 = arith.constant 0 : index
    %868 = vector.load %arg5[%c9_432, %c0_433, %c0_434] : memref<10x2x1xf32, #tpu.memory_space<vmem>>, vector<1x2x1xf32>
    %869 = vector.shape_cast %868 : vector<1x2x1xf32> to vector<2x1xf32>
    %c0_435 = arith.constant 0 : index
    %c0_436 = arith.constant 0 : index
    %c0_437 = arith.constant 0 : index
    %870 = vector.load %arg6[%c0_435, %c0_436, %c0_437] : memref<8x2x1xf32, #tpu.memory_space<vmem>>, vector<1x2x1xf32>
    %871 = vector.shape_cast %870 : vector<1x2x1xf32> to vector<2x1xf32>
    %c7_438 = arith.constant 7 : index
    %c0_439 = arith.constant 0 : index
    %c0_440 = arith.constant 0 : index
    %872 = vector.load %arg6[%c7_438, %c0_439, %c0_440] : memref<8x2x1xf32, #tpu.memory_space<vmem>>, vector<1x2x1xf32>
    %873 = vector.shape_cast %872 : vector<1x2x1xf32> to vector<2x1xf32>
    %874 = tpu.concatenate %859, %863 in 0 : vector<2x1xf32>, vector<2x1xf32> -> vector<4x1xf32>
    %875 = tpu.concatenate %861, %865 in 0 : vector<2x1xf32>, vector<2x1xf32> -> vector<4x1xf32>
    %876 = tpu.concatenate %874, %875, %874, %875 in 0 : vector<4x1xf32>, vector<4x1xf32>, vector<4x1xf32>, vector<4x1xf32> -> vector<16x1xf32>
    %877 = tpu.concatenate %867, %871 in 0 : vector<2x1xf32>, vector<2x1xf32> -> vector<4x1xf32>
    %878 = tpu.concatenate %869, %873 in 0 : vector<2x1xf32>, vector<2x1xf32> -> vector<4x1xf32>
    %879 = tpu.concatenate %877, %878, %877, %878 in 0 : vector<4x1xf32>, vector<4x1xf32>, vector<4x1xf32>, vector<4x1xf32> -> vector<16x1xf32>
    %cst_441 = arith.constant dense<0.000000e+00> : vector<16x512xf32>
    %880 = tpu.matmul %845, %844, %cst_441 {dimension_numbers = #tpu.dot_dimension_numbers<[1], [0], [0], [1], [0, 0, 1, 1], [], []>} : vector<16x32xf32>, vector<32x512xf32>, vector<16x512xf32> -> vector<16x512xf32>
    %881 = vector.extract_strided_slice %880 {offsets = [0, 0], sizes = [16, 128], strides = [1, 1]} : vector<16x512xf32> to vector<16x128xf32>
    %882 = vector.broadcast %13 : vector<16x1xf32> to vector<16x128xf32>
    %883 = arith.mulf %882, %881 : vector<16x128xf32>
    %884 = vector.extract_strided_slice %880 {offsets = [0, 128], sizes = [16, 128], strides = [1, 1]} : vector<16x512xf32> to vector<16x128xf32>
    %885 = vector.broadcast %20 : vector<16x1xf32> to vector<16x128xf32>
    %886 = arith.mulf %885, %884 : vector<16x128xf32>
    %887 = arith.addf %883, %886 : vector<16x128xf32>
    %888 = vector.extract_strided_slice %880 {offsets = [0, 256], sizes = [16, 128], strides = [1, 1]} : vector<16x512xf32> to vector<16x128xf32>
    %889 = vector.broadcast %27 : vector<16x1xf32> to vector<16x128xf32>
    %890 = arith.mulf %889, %888 : vector<16x128xf32>
    %891 = arith.addf %887, %890 : vector<16x128xf32>
    %892 = vector.extract_strided_slice %880 {offsets = [0, 384], sizes = [16, 128], strides = [1, 1]} : vector<16x512xf32> to vector<16x128xf32>
    %893 = vector.broadcast %34 : vector<16x1xf32> to vector<16x128xf32>
    %894 = arith.mulf %893, %892 : vector<16x128xf32>
    %895 = arith.addf %891, %894 : vector<16x128xf32>
    %896 = arith.addf %857, %895 : vector<16x128xf32>
    %897 = arith.negf %896 : vector<16x128xf32>
    %898 = math.exp %897 : vector<16x128xf32>
    %cst_442 = arith.constant 1.000000e+00 : f32
    %899 = vector.broadcast %cst_442 : f32 to vector<16x128xf32>
    %900 = arith.addf %899, %898 : vector<16x128xf32>
    %901 = arith.divf %899, %900 : vector<16x128xf32>
    %902 = math.tanh %896 : vector<16x128xf32>
    %903 = vector.extract_strided_slice %901 {offsets = [0, 32], sizes = [16, 32], strides = [1, 1]} : vector<16x128xf32> to vector<16x32xf32>
    %904 = arith.mulf %903, %846 : vector<16x32xf32>
    %905 = vector.extract_strided_slice %901 {offsets = [0, 0], sizes = [16, 32], strides = [1, 1]} : vector<16x128xf32> to vector<16x32xf32>
    %906 = vector.extract_strided_slice %902 {offsets = [0, 64], sizes = [16, 32], strides = [1, 1]} : vector<16x128xf32> to vector<16x32xf32>
    %907 = arith.mulf %905, %906 : vector<16x32xf32>
    %908 = arith.addf %904, %907 : vector<16x32xf32>
    %909 = vector.extract_strided_slice %901 {offsets = [0, 96], sizes = [16, 32], strides = [1, 1]} : vector<16x128xf32> to vector<16x32xf32>
    %910 = math.tanh %908 : vector<16x32xf32>
    %911 = arith.mulf %909, %910 : vector<16x32xf32>
    %912 = vector.broadcast %876 : vector<16x1xf32> to vector<16x32xf32>
    %913 = arith.mulf %912, %911 : vector<16x32xf32>
    %914 = vector.broadcast %879 : vector<16x1xf32> to vector<16x32xf32>
    %915 = arith.mulf %914, %913 : vector<16x32xf32>
    %916 = arith.addf %847, %915 : vector<16x32xf32>
    %917 = vector.broadcast %879 : vector<16x1xf32> to vector<16x32xf32>
    %918 = arith.mulf %917, %913 : vector<16x32xf32>
    %cst_443 = arith.constant 1.000000e+00 : f32
    %919 = vector.broadcast %cst_443 : f32 to vector<16x1xf32>
    %920 = arith.subf %919, %879 : vector<16x1xf32>
    %cst_444 = arith.constant -1.000000e+07 : f32
    %921 = vector.broadcast %cst_444 : f32 to vector<16x1xf32>
    %922 = arith.mulf %920, %921 : vector<16x1xf32>
    %923 = vector.broadcast %922 : vector<16x1xf32> to vector<16x32xf32>
    %924 = arith.addf %918, %923 : vector<16x32xf32>
    %925 = arith.maximumf %848, %924 : vector<16x32xf32>
    %cst_445 = arith.constant 1.000000e+00 : f32
    %926 = vector.broadcast %cst_445 : f32 to vector<16x1xf32>
    %927 = arith.subf %926, %876 : vector<16x1xf32>
    %928 = vector.broadcast %927 : vector<16x1xf32> to vector<16x32xf32>
    %929 = arith.mulf %928, %845 : vector<16x32xf32>
    %930 = arith.addf %913, %929 : vector<16x32xf32>
    %931 = vector.broadcast %876 : vector<16x1xf32> to vector<16x32xf32>
    %932 = arith.mulf %931, %908 : vector<16x32xf32>
    %cst_446 = arith.constant 1.000000e+00 : f32
    %933 = vector.broadcast %cst_446 : f32 to vector<16x1xf32>
    %934 = arith.subf %933, %876 : vector<16x1xf32>
    %935 = vector.broadcast %934 : vector<16x1xf32> to vector<16x32xf32>
    %936 = arith.mulf %935, %846 : vector<16x32xf32>
    %937 = arith.addf %932, %936 : vector<16x32xf32>
    %c2_447 = arith.constant 2 : index
    %c0_448 = arith.constant 0 : index
    %938 = vector.load %arg37[%c2_447, %c0_448] : memref<20x512xf32, #tpu.memory_space<vmem>>, vector<2x128xf32>
    %c2_449 = arith.constant 2 : index
    %c0_450 = arith.constant 0 : index
    %939 = vector.load %arg38[%c2_449, %c0_450] : memref<16x512xf32, #tpu.memory_space<vmem>>, vector<2x128xf32>
    %c16_451 = arith.constant 16 : index
    %c128_452 = arith.constant 128 : index
    %940 = vector.load %arg37[%c16_451, %c128_452] : memref<20x512xf32, #tpu.memory_space<vmem>>, vector<2x128xf32>
    %c12_453 = arith.constant 12 : index
    %c128_454 = arith.constant 128 : index
    %941 = vector.load %arg38[%c12_453, %c128_454] : memref<16x512xf32, #tpu.memory_space<vmem>>, vector<2x128xf32>
    %c2_455 = arith.constant 2 : index
    %c256_456 = arith.constant 256 : index
    %942 = vector.load %arg37[%c2_455, %c256_456] : memref<20x512xf32, #tpu.memory_space<vmem>>, vector<2x128xf32>
    %c2_457 = arith.constant 2 : index
    %c256_458 = arith.constant 256 : index
    %943 = vector.load %arg38[%c2_457, %c256_458] : memref<16x512xf32, #tpu.memory_space<vmem>>, vector<2x128xf32>
    %c16_459 = arith.constant 16 : index
    %c384_460 = arith.constant 384 : index
    %944 = vector.load %arg37[%c16_459, %c384_460] : memref<20x512xf32, #tpu.memory_space<vmem>>, vector<2x128xf32>
    %c12_461 = arith.constant 12 : index
    %c384_462 = arith.constant 384 : index
    %945 = vector.load %arg38[%c12_461, %c384_462] : memref<16x512xf32, #tpu.memory_space<vmem>>, vector<2x128xf32>
    %946 = tpu.concatenate %938, %939, %940, %941, %942, %943, %944, %945 in 0 : vector<2x128xf32>, vector<2x128xf32>, vector<2x128xf32>, vector<2x128xf32>, vector<2x128xf32>, vector<2x128xf32>, vector<2x128xf32>, vector<2x128xf32> -> vector<16x128xf32>
    %c1_463 = arith.constant 1 : index
    %c0_464 = arith.constant 0 : index
    %c0_465 = arith.constant 0 : index
    %947 = vector.load %arg3[%c1_463, %c0_464, %c0_465] : memref<10x2x1xf32, #tpu.memory_space<vmem>>, vector<1x2x1xf32>
    %948 = vector.shape_cast %947 : vector<1x2x1xf32> to vector<2x1xf32>
    %c8_466 = arith.constant 8 : index
    %c0_467 = arith.constant 0 : index
    %c0_468 = arith.constant 0 : index
    %949 = vector.load %arg3[%c8_466, %c0_467, %c0_468] : memref<10x2x1xf32, #tpu.memory_space<vmem>>, vector<1x2x1xf32>
    %950 = vector.shape_cast %949 : vector<1x2x1xf32> to vector<2x1xf32>
    %c1_469 = arith.constant 1 : index
    %c0_470 = arith.constant 0 : index
    %c0_471 = arith.constant 0 : index
    %951 = vector.load %arg4[%c1_469, %c0_470, %c0_471] : memref<8x2x1xf32, #tpu.memory_space<vmem>>, vector<1x2x1xf32>
    %952 = vector.shape_cast %951 : vector<1x2x1xf32> to vector<2x1xf32>
    %c6_472 = arith.constant 6 : index
    %c0_473 = arith.constant 0 : index
    %c0_474 = arith.constant 0 : index
    %953 = vector.load %arg4[%c6_472, %c0_473, %c0_474] : memref<8x2x1xf32, #tpu.memory_space<vmem>>, vector<1x2x1xf32>
    %954 = vector.shape_cast %953 : vector<1x2x1xf32> to vector<2x1xf32>
    %c1_475 = arith.constant 1 : index
    %c0_476 = arith.constant 0 : index
    %c0_477 = arith.constant 0 : index
    %955 = vector.load %arg5[%c1_475, %c0_476, %c0_477] : memref<10x2x1xf32, #tpu.memory_space<vmem>>, vector<1x2x1xf32>
    %956 = vector.shape_cast %955 : vector<1x2x1xf32> to vector<2x1xf32>
    %c8_478 = arith.constant 8 : index
    %c0_479 = arith.constant 0 : index
    %c0_480 = arith.constant 0 : index
    %957 = vector.load %arg5[%c8_478, %c0_479, %c0_480] : memref<10x2x1xf32, #tpu.memory_space<vmem>>, vector<1x2x1xf32>
    %958 = vector.shape_cast %957 : vector<1x2x1xf32> to vector<2x1xf32>
    %c1_481 = arith.constant 1 : index
    %c0_482 = arith.constant 0 : index
    %c0_483 = arith.constant 0 : index
    %959 = vector.load %arg6[%c1_481, %c0_482, %c0_483] : memref<8x2x1xf32, #tpu.memory_space<vmem>>, vector<1x2x1xf32>
    %960 = vector.shape_cast %959 : vector<1x2x1xf32> to vector<2x1xf32>
    %c6_484 = arith.constant 6 : index
    %c0_485 = arith.constant 0 : index
    %c0_486 = arith.constant 0 : index
    %961 = vector.load %arg6[%c6_484, %c0_485, %c0_486] : memref<8x2x1xf32, #tpu.memory_space<vmem>>, vector<1x2x1xf32>
    %962 = vector.shape_cast %961 : vector<1x2x1xf32> to vector<2x1xf32>
    %963 = tpu.concatenate %948, %952 in 0 : vector<2x1xf32>, vector<2x1xf32> -> vector<4x1xf32>
    %964 = tpu.concatenate %950, %954 in 0 : vector<2x1xf32>, vector<2x1xf32> -> vector<4x1xf32>
    %965 = tpu.concatenate %963, %964, %963, %964 in 0 : vector<4x1xf32>, vector<4x1xf32>, vector<4x1xf32>, vector<4x1xf32> -> vector<16x1xf32>
    %966 = tpu.concatenate %956, %960 in 0 : vector<2x1xf32>, vector<2x1xf32> -> vector<4x1xf32>
    %967 = tpu.concatenate %958, %962 in 0 : vector<2x1xf32>, vector<2x1xf32> -> vector<4x1xf32>
    %968 = tpu.concatenate %966, %967, %966, %967 in 0 : vector<4x1xf32>, vector<4x1xf32>, vector<4x1xf32>, vector<4x1xf32> -> vector<16x1xf32>
    %cst_487 = arith.constant dense<0.000000e+00> : vector<16x512xf32>
    %969 = tpu.matmul %930, %844, %cst_487 {dimension_numbers = #tpu.dot_dimension_numbers<[1], [0], [0], [1], [0, 0, 1, 1], [], []>} : vector<16x32xf32>, vector<32x512xf32>, vector<16x512xf32> -> vector<16x512xf32>
    %970 = vector.extract_strided_slice %969 {offsets = [0, 0], sizes = [16, 128], strides = [1, 1]} : vector<16x512xf32> to vector<16x128xf32>
    %971 = vector.broadcast %13 : vector<16x1xf32> to vector<16x128xf32>
    %972 = arith.mulf %971, %970 : vector<16x128xf32>
    %973 = vector.extract_strided_slice %969 {offsets = [0, 128], sizes = [16, 128], strides = [1, 1]} : vector<16x512xf32> to vector<16x128xf32>
    %974 = vector.broadcast %20 : vector<16x1xf32> to vector<16x128xf32>
    %975 = arith.mulf %974, %973 : vector<16x128xf32>
    %976 = arith.addf %972, %975 : vector<16x128xf32>
    %977 = vector.extract_strided_slice %969 {offsets = [0, 256], sizes = [16, 128], strides = [1, 1]} : vector<16x512xf32> to vector<16x128xf32>
    %978 = vector.broadcast %27 : vector<16x1xf32> to vector<16x128xf32>
    %979 = arith.mulf %978, %977 : vector<16x128xf32>
    %980 = arith.addf %976, %979 : vector<16x128xf32>
    %981 = vector.extract_strided_slice %969 {offsets = [0, 384], sizes = [16, 128], strides = [1, 1]} : vector<16x512xf32> to vector<16x128xf32>
    %982 = vector.broadcast %34 : vector<16x1xf32> to vector<16x128xf32>
    %983 = arith.mulf %982, %981 : vector<16x128xf32>
    %984 = arith.addf %980, %983 : vector<16x128xf32>
    %985 = arith.addf %946, %984 : vector<16x128xf32>
    %986 = arith.negf %985 : vector<16x128xf32>
    %987 = math.exp %986 : vector<16x128xf32>
    %cst_488 = arith.constant 1.000000e+00 : f32
    %988 = vector.broadcast %cst_488 : f32 to vector<16x128xf32>
    %989 = arith.addf %988, %987 : vector<16x128xf32>
    %990 = arith.divf %988, %989 : vector<16x128xf32>
    %991 = math.tanh %985 : vector<16x128xf32>
    %992 = vector.extract_strided_slice %990 {offsets = [0, 32], sizes = [16, 32], strides = [1, 1]} : vector<16x128xf32> to vector<16x32xf32>
    %993 = arith.mulf %992, %937 : vector<16x32xf32>
    %994 = vector.extract_strided_slice %990 {offsets = [0, 0], sizes = [16, 32], strides = [1, 1]} : vector<16x128xf32> to vector<16x32xf32>
    %995 = vector.extract_strided_slice %991 {offsets = [0, 64], sizes = [16, 32], strides = [1, 1]} : vector<16x128xf32> to vector<16x32xf32>
    %996 = arith.mulf %994, %995 : vector<16x32xf32>
    %997 = arith.addf %993, %996 : vector<16x32xf32>
    %998 = vector.extract_strided_slice %990 {offsets = [0, 96], sizes = [16, 32], strides = [1, 1]} : vector<16x128xf32> to vector<16x32xf32>
    %999 = math.tanh %997 : vector<16x32xf32>
    %1000 = arith.mulf %998, %999 : vector<16x32xf32>
    %1001 = vector.broadcast %965 : vector<16x1xf32> to vector<16x32xf32>
    %1002 = arith.mulf %1001, %1000 : vector<16x32xf32>
    %1003 = vector.broadcast %968 : vector<16x1xf32> to vector<16x32xf32>
    %1004 = arith.mulf %1003, %1002 : vector<16x32xf32>
    %1005 = arith.addf %916, %1004 : vector<16x32xf32>
    %1006 = vector.broadcast %968 : vector<16x1xf32> to vector<16x32xf32>
    %1007 = arith.mulf %1006, %1002 : vector<16x32xf32>
    %cst_489 = arith.constant 1.000000e+00 : f32
    %1008 = vector.broadcast %cst_489 : f32 to vector<16x1xf32>
    %1009 = arith.subf %1008, %968 : vector<16x1xf32>
    %cst_490 = arith.constant -1.000000e+07 : f32
    %1010 = vector.broadcast %cst_490 : f32 to vector<16x1xf32>
    %1011 = arith.mulf %1009, %1010 : vector<16x1xf32>
    %1012 = vector.broadcast %1011 : vector<16x1xf32> to vector<16x32xf32>
    %1013 = arith.addf %1007, %1012 : vector<16x32xf32>
    %1014 = arith.maximumf %925, %1013 : vector<16x32xf32>
    %cst_491 = arith.constant 1.000000e+00 : f32
    %1015 = vector.broadcast %cst_491 : f32 to vector<16x1xf32>
    %1016 = arith.subf %1015, %965 : vector<16x1xf32>
    %1017 = vector.broadcast %1016 : vector<16x1xf32> to vector<16x32xf32>
    %1018 = arith.mulf %1017, %930 : vector<16x32xf32>
    %1019 = arith.addf %1002, %1018 : vector<16x32xf32>
    %1020 = vector.broadcast %965 : vector<16x1xf32> to vector<16x32xf32>
    %1021 = arith.mulf %1020, %997 : vector<16x32xf32>
    %cst_492 = arith.constant 1.000000e+00 : f32
    %1022 = vector.broadcast %cst_492 : f32 to vector<16x1xf32>
    %1023 = arith.subf %1022, %965 : vector<16x1xf32>
    %1024 = vector.broadcast %1023 : vector<16x1xf32> to vector<16x32xf32>
    %1025 = arith.mulf %1024, %937 : vector<16x32xf32>
    %1026 = arith.addf %1021, %1025 : vector<16x32xf32>
    %c4_493 = arith.constant 4 : index
    %c0_494 = arith.constant 0 : index
    %1027 = vector.load %arg37[%c4_493, %c0_494] : memref<20x512xf32, #tpu.memory_space<vmem>>, vector<2x128xf32>
    %c4_495 = arith.constant 4 : index
    %c0_496 = arith.constant 0 : index
    %1028 = vector.load %arg38[%c4_495, %c0_496] : memref<16x512xf32, #tpu.memory_space<vmem>>, vector<2x128xf32>
    %c14_497 = arith.constant 14 : index
    %c128_498 = arith.constant 128 : index
    %1029 = vector.load %arg37[%c14_497, %c128_498] : memref<20x512xf32, #tpu.memory_space<vmem>>, vector<2x128xf32>
    %c10_499 = arith.constant 10 : index
    %c128_500 = arith.constant 128 : index
    %1030 = vector.load %arg38[%c10_499, %c128_500] : memref<16x512xf32, #tpu.memory_space<vmem>>, vector<2x128xf32>
    %c4_501 = arith.constant 4 : index
    %c256_502 = arith.constant 256 : index
    %1031 = vector.load %arg37[%c4_501, %c256_502] : memref<20x512xf32, #tpu.memory_space<vmem>>, vector<2x128xf32>
    %c4_503 = arith.constant 4 : index
    %c256_504 = arith.constant 256 : index
    %1032 = vector.load %arg38[%c4_503, %c256_504] : memref<16x512xf32, #tpu.memory_space<vmem>>, vector<2x128xf32>
    %c14_505 = arith.constant 14 : index
    %c384_506 = arith.constant 384 : index
    %1033 = vector.load %arg37[%c14_505, %c384_506] : memref<20x512xf32, #tpu.memory_space<vmem>>, vector<2x128xf32>
    %c10_507 = arith.constant 10 : index
    %c384_508 = arith.constant 384 : index
    %1034 = vector.load %arg38[%c10_507, %c384_508] : memref<16x512xf32, #tpu.memory_space<vmem>>, vector<2x128xf32>
    %1035 = tpu.concatenate %1027, %1028, %1029, %1030, %1031, %1032, %1033, %1034 in 0 : vector<2x128xf32>, vector<2x128xf32>, vector<2x128xf32>, vector<2x128xf32>, vector<2x128xf32>, vector<2x128xf32>, vector<2x128xf32>, vector<2x128xf32> -> vector<16x128xf32>
    %c2_509 = arith.constant 2 : index
    %c0_510 = arith.constant 0 : index
    %c0_511 = arith.constant 0 : index
    %1036 = vector.load %arg3[%c2_509, %c0_510, %c0_511] : memref<10x2x1xf32, #tpu.memory_space<vmem>>, vector<1x2x1xf32>
    %1037 = vector.shape_cast %1036 : vector<1x2x1xf32> to vector<2x1xf32>
    %c7_512 = arith.constant 7 : index
    %c0_513 = arith.constant 0 : index
    %c0_514 = arith.constant 0 : index
    %1038 = vector.load %arg3[%c7_512, %c0_513, %c0_514] : memref<10x2x1xf32, #tpu.memory_space<vmem>>, vector<1x2x1xf32>
    %1039 = vector.shape_cast %1038 : vector<1x2x1xf32> to vector<2x1xf32>
    %c2_515 = arith.constant 2 : index
    %c0_516 = arith.constant 0 : index
    %c0_517 = arith.constant 0 : index
    %1040 = vector.load %arg4[%c2_515, %c0_516, %c0_517] : memref<8x2x1xf32, #tpu.memory_space<vmem>>, vector<1x2x1xf32>
    %1041 = vector.shape_cast %1040 : vector<1x2x1xf32> to vector<2x1xf32>
    %c5_518 = arith.constant 5 : index
    %c0_519 = arith.constant 0 : index
    %c0_520 = arith.constant 0 : index
    %1042 = vector.load %arg4[%c5_518, %c0_519, %c0_520] : memref<8x2x1xf32, #tpu.memory_space<vmem>>, vector<1x2x1xf32>
    %1043 = vector.shape_cast %1042 : vector<1x2x1xf32> to vector<2x1xf32>
    %c2_521 = arith.constant 2 : index
    %c0_522 = arith.constant 0 : index
    %c0_523 = arith.constant 0 : index
    %1044 = vector.load %arg5[%c2_521, %c0_522, %c0_523] : memref<10x2x1xf32, #tpu.memory_space<vmem>>, vector<1x2x1xf32>
    %1045 = vector.shape_cast %1044 : vector<1x2x1xf32> to vector<2x1xf32>
    %c7_524 = arith.constant 7 : index
    %c0_525 = arith.constant 0 : index
    %c0_526 = arith.constant 0 : index
    %1046 = vector.load %arg5[%c7_524, %c0_525, %c0_526] : memref<10x2x1xf32, #tpu.memory_space<vmem>>, vector<1x2x1xf32>
    %1047 = vector.shape_cast %1046 : vector<1x2x1xf32> to vector<2x1xf32>
    %c2_527 = arith.constant 2 : index
    %c0_528 = arith.constant 0 : index
    %c0_529 = arith.constant 0 : index
    %1048 = vector.load %arg6[%c2_527, %c0_528, %c0_529] : memref<8x2x1xf32, #tpu.memory_space<vmem>>, vector<1x2x1xf32>
    %1049 = vector.shape_cast %1048 : vector<1x2x1xf32> to vector<2x1xf32>
    %c5_530 = arith.constant 5 : index
    %c0_531 = arith.constant 0 : index
    %c0_532 = arith.constant 0 : index
    %1050 = vector.load %arg6[%c5_530, %c0_531, %c0_532] : memref<8x2x1xf32, #tpu.memory_space<vmem>>, vector<1x2x1xf32>
    %1051 = vector.shape_cast %1050 : vector<1x2x1xf32> to vector<2x1xf32>
    %1052 = tpu.concatenate %1037, %1041 in 0 : vector<2x1xf32>, vector<2x1xf32> -> vector<4x1xf32>
    %1053 = tpu.concatenate %1039, %1043 in 0 : vector<2x1xf32>, vector<2x1xf32> -> vector<4x1xf32>
    %1054 = tpu.concatenate %1052, %1053, %1052, %1053 in 0 : vector<4x1xf32>, vector<4x1xf32>, vector<4x1xf32>, vector<4x1xf32> -> vector<16x1xf32>
    %1055 = tpu.concatenate %1045, %1049 in 0 : vector<2x1xf32>, vector<2x1xf32> -> vector<4x1xf32>
    %1056 = tpu.concatenate %1047, %1051 in 0 : vector<2x1xf32>, vector<2x1xf32> -> vector<4x1xf32>
    %1057 = tpu.concatenate %1055, %1056, %1055, %1056 in 0 : vector<4x1xf32>, vector<4x1xf32>, vector<4x1xf32>, vector<4x1xf32> -> vector<16x1xf32>
    %cst_533 = arith.constant dense<0.000000e+00> : vector<16x512xf32>
    %1058 = tpu.matmul %1019, %844, %cst_533 {dimension_numbers = #tpu.dot_dimension_numbers<[1], [0], [0], [1], [0, 0, 1, 1], [], []>} : vector<16x32xf32>, vector<32x512xf32>, vector<16x512xf32> -> vector<16x512xf32>
    %1059 = vector.extract_strided_slice %1058 {offsets = [0, 0], sizes = [16, 128], strides = [1, 1]} : vector<16x512xf32> to vector<16x128xf32>
    %1060 = vector.broadcast %13 : vector<16x1xf32> to vector<16x128xf32>
    %1061 = arith.mulf %1060, %1059 : vector<16x128xf32>
    %1062 = vector.extract_strided_slice %1058 {offsets = [0, 128], sizes = [16, 128], strides = [1, 1]} : vector<16x512xf32> to vector<16x128xf32>
    %1063 = vector.broadcast %20 : vector<16x1xf32> to vector<16x128xf32>
    %1064 = arith.mulf %1063, %1062 : vector<16x128xf32>
    %1065 = arith.addf %1061, %1064 : vector<16x128xf32>
    %1066 = vector.extract_strided_slice %1058 {offsets = [0, 256], sizes = [16, 128], strides = [1, 1]} : vector<16x512xf32> to vector<16x128xf32>
    %1067 = vector.broadcast %27 : vector<16x1xf32> to vector<16x128xf32>
    %1068 = arith.mulf %1067, %1066 : vector<16x128xf32>
    %1069 = arith.addf %1065, %1068 : vector<16x128xf32>
    %1070 = vector.extract_strided_slice %1058 {offsets = [0, 384], sizes = [16, 128], strides = [1, 1]} : vector<16x512xf32> to vector<16x128xf32>
    %1071 = vector.broadcast %34 : vector<16x1xf32> to vector<16x128xf32>
    %1072 = arith.mulf %1071, %1070 : vector<16x128xf32>
    %1073 = arith.addf %1069, %1072 : vector<16x128xf32>
    %1074 = arith.addf %1035, %1073 : vector<16x128xf32>
    %1075 = arith.negf %1074 : vector<16x128xf32>
    %1076 = math.exp %1075 : vector<16x128xf32>
    %cst_534 = arith.constant 1.000000e+00 : f32
    %1077 = vector.broadcast %cst_534 : f32 to vector<16x128xf32>
    %1078 = arith.addf %1077, %1076 : vector<16x128xf32>
    %1079 = arith.divf %1077, %1078 : vector<16x128xf32>
    %1080 = math.tanh %1074 : vector<16x128xf32>
    %1081 = vector.extract_strided_slice %1079 {offsets = [0, 32], sizes = [16, 32], strides = [1, 1]} : vector<16x128xf32> to vector<16x32xf32>
    %1082 = arith.mulf %1081, %1026 : vector<16x32xf32>
    %1083 = vector.extract_strided_slice %1079 {offsets = [0, 0], sizes = [16, 32], strides = [1, 1]} : vector<16x128xf32> to vector<16x32xf32>
    %1084 = vector.extract_strided_slice %1080 {offsets = [0, 64], sizes = [16, 32], strides = [1, 1]} : vector<16x128xf32> to vector<16x32xf32>
    %1085 = arith.mulf %1083, %1084 : vector<16x32xf32>
    %1086 = arith.addf %1082, %1085 : vector<16x32xf32>
    %1087 = vector.extract_strided_slice %1079 {offsets = [0, 96], sizes = [16, 32], strides = [1, 1]} : vector<16x128xf32> to vector<16x32xf32>
    %1088 = math.tanh %1086 : vector<16x32xf32>
    %1089 = arith.mulf %1087, %1088 : vector<16x32xf32>
    %1090 = vector.broadcast %1054 : vector<16x1xf32> to vector<16x32xf32>
    %1091 = arith.mulf %1090, %1089 : vector<16x32xf32>
    %1092 = vector.broadcast %1057 : vector<16x1xf32> to vector<16x32xf32>
    %1093 = arith.mulf %1092, %1091 : vector<16x32xf32>
    %1094 = arith.addf %1005, %1093 : vector<16x32xf32>
    %1095 = vector.broadcast %1057 : vector<16x1xf32> to vector<16x32xf32>
    %1096 = arith.mulf %1095, %1091 : vector<16x32xf32>
    %cst_535 = arith.constant 1.000000e+00 : f32
    %1097 = vector.broadcast %cst_535 : f32 to vector<16x1xf32>
    %1098 = arith.subf %1097, %1057 : vector<16x1xf32>
    %cst_536 = arith.constant -1.000000e+07 : f32
    %1099 = vector.broadcast %cst_536 : f32 to vector<16x1xf32>
    %1100 = arith.mulf %1098, %1099 : vector<16x1xf32>
    %1101 = vector.broadcast %1100 : vector<16x1xf32> to vector<16x32xf32>
    %1102 = arith.addf %1096, %1101 : vector<16x32xf32>
    %1103 = arith.maximumf %1014, %1102 : vector<16x32xf32>
    %cst_537 = arith.constant 1.000000e+00 : f32
    %1104 = vector.broadcast %cst_537 : f32 to vector<16x1xf32>
    %1105 = arith.subf %1104, %1054 : vector<16x1xf32>
    %1106 = vector.broadcast %1105 : vector<16x1xf32> to vector<16x32xf32>
    %1107 = arith.mulf %1106, %1019 : vector<16x32xf32>
    %1108 = arith.addf %1091, %1107 : vector<16x32xf32>
    %1109 = vector.broadcast %1054 : vector<16x1xf32> to vector<16x32xf32>
    %1110 = arith.mulf %1109, %1086 : vector<16x32xf32>
    %cst_538 = arith.constant 1.000000e+00 : f32
    %1111 = vector.broadcast %cst_538 : f32 to vector<16x1xf32>
    %1112 = arith.subf %1111, %1054 : vector<16x1xf32>
    %1113 = vector.broadcast %1112 : vector<16x1xf32> to vector<16x32xf32>
    %1114 = arith.mulf %1113, %1026 : vector<16x32xf32>
    %1115 = arith.addf %1110, %1114 : vector<16x32xf32>
    %c6_539 = arith.constant 6 : index
    %c0_540 = arith.constant 0 : index
    %1116 = vector.load %arg37[%c6_539, %c0_540] : memref<20x512xf32, #tpu.memory_space<vmem>>, vector<2x128xf32>
    %c6_541 = arith.constant 6 : index
    %c0_542 = arith.constant 0 : index
    %1117 = vector.load %arg38[%c6_541, %c0_542] : memref<16x512xf32, #tpu.memory_space<vmem>>, vector<2x128xf32>
    %c12_543 = arith.constant 12 : index
    %c128_544 = arith.constant 128 : index
    %1118 = vector.load %arg37[%c12_543, %c128_544] : memref<20x512xf32, #tpu.memory_space<vmem>>, vector<2x128xf32>
    %c8_545 = arith.constant 8 : index
    %c128_546 = arith.constant 128 : index
    %1119 = vector.load %arg38[%c8_545, %c128_546] : memref<16x512xf32, #tpu.memory_space<vmem>>, vector<2x128xf32>
    %c6_547 = arith.constant 6 : index
    %c256_548 = arith.constant 256 : index
    %1120 = vector.load %arg37[%c6_547, %c256_548] : memref<20x512xf32, #tpu.memory_space<vmem>>, vector<2x128xf32>
    %c6_549 = arith.constant 6 : index
    %c256_550 = arith.constant 256 : index
    %1121 = vector.load %arg38[%c6_549, %c256_550] : memref<16x512xf32, #tpu.memory_space<vmem>>, vector<2x128xf32>
    %c12_551 = arith.constant 12 : index
    %c384_552 = arith.constant 384 : index
    %1122 = vector.load %arg37[%c12_551, %c384_552] : memref<20x512xf32, #tpu.memory_space<vmem>>, vector<2x128xf32>
    %c8_553 = arith.constant 8 : index
    %c384_554 = arith.constant 384 : index
    %1123 = vector.load %arg38[%c8_553, %c384_554] : memref<16x512xf32, #tpu.memory_space<vmem>>, vector<2x128xf32>
    %1124 = tpu.concatenate %1116, %1117, %1118, %1119, %1120, %1121, %1122, %1123 in 0 : vector<2x128xf32>, vector<2x128xf32>, vector<2x128xf32>, vector<2x128xf32>, vector<2x128xf32>, vector<2x128xf32>, vector<2x128xf32>, vector<2x128xf32> -> vector<16x128xf32>
    %c3_555 = arith.constant 3 : index
    %c0_556 = arith.constant 0 : index
    %c0_557 = arith.constant 0 : index
    %1125 = vector.load %arg3[%c3_555, %c0_556, %c0_557] : memref<10x2x1xf32, #tpu.memory_space<vmem>>, vector<1x2x1xf32>
    %1126 = vector.shape_cast %1125 : vector<1x2x1xf32> to vector<2x1xf32>
    %c6_558 = arith.constant 6 : index
    %c0_559 = arith.constant 0 : index
    %c0_560 = arith.constant 0 : index
    %1127 = vector.load %arg3[%c6_558, %c0_559, %c0_560] : memref<10x2x1xf32, #tpu.memory_space<vmem>>, vector<1x2x1xf32>
    %1128 = vector.shape_cast %1127 : vector<1x2x1xf32> to vector<2x1xf32>
    %c3_561 = arith.constant 3 : index
    %c0_562 = arith.constant 0 : index
    %c0_563 = arith.constant 0 : index
    %1129 = vector.load %arg4[%c3_561, %c0_562, %c0_563] : memref<8x2x1xf32, #tpu.memory_space<vmem>>, vector<1x2x1xf32>
    %1130 = vector.shape_cast %1129 : vector<1x2x1xf32> to vector<2x1xf32>
    %c4_564 = arith.constant 4 : index
    %c0_565 = arith.constant 0 : index
    %c0_566 = arith.constant 0 : index
    %1131 = vector.load %arg4[%c4_564, %c0_565, %c0_566] : memref<8x2x1xf32, #tpu.memory_space<vmem>>, vector<1x2x1xf32>
    %1132 = vector.shape_cast %1131 : vector<1x2x1xf32> to vector<2x1xf32>
    %c3_567 = arith.constant 3 : index
    %c0_568 = arith.constant 0 : index
    %c0_569 = arith.constant 0 : index
    %1133 = vector.load %arg5[%c3_567, %c0_568, %c0_569] : memref<10x2x1xf32, #tpu.memory_space<vmem>>, vector<1x2x1xf32>
    %1134 = vector.shape_cast %1133 : vector<1x2x1xf32> to vector<2x1xf32>
    %c6_570 = arith.constant 6 : index
    %c0_571 = arith.constant 0 : index
    %c0_572 = arith.constant 0 : index
    %1135 = vector.load %arg5[%c6_570, %c0_571, %c0_572] : memref<10x2x1xf32, #tpu.memory_space<vmem>>, vector<1x2x1xf32>
    %1136 = vector.shape_cast %1135 : vector<1x2x1xf32> to vector<2x1xf32>
    %c3_573 = arith.constant 3 : index
    %c0_574 = arith.constant 0 : index
    %c0_575 = arith.constant 0 : index
    %1137 = vector.load %arg6[%c3_573, %c0_574, %c0_575] : memref<8x2x1xf32, #tpu.memory_space<vmem>>, vector<1x2x1xf32>
    %1138 = vector.shape_cast %1137 : vector<1x2x1xf32> to vector<2x1xf32>
    %c4_576 = arith.constant 4 : index
    %c0_577 = arith.constant 0 : index
    %c0_578 = arith.constant 0 : index
    %1139 = vector.load %arg6[%c4_576, %c0_577, %c0_578] : memref<8x2x1xf32, #tpu.memory_space<vmem>>, vector<1x2x1xf32>
    %1140 = vector.shape_cast %1139 : vector<1x2x1xf32> to vector<2x1xf32>
    %1141 = tpu.concatenate %1126, %1130 in 0 : vector<2x1xf32>, vector<2x1xf32> -> vector<4x1xf32>
    %1142 = tpu.concatenate %1128, %1132 in 0 : vector<2x1xf32>, vector<2x1xf32> -> vector<4x1xf32>
    %1143 = tpu.concatenate %1141, %1142, %1141, %1142 in 0 : vector<4x1xf32>, vector<4x1xf32>, vector<4x1xf32>, vector<4x1xf32> -> vector<16x1xf32>
    %1144 = tpu.concatenate %1134, %1138 in 0 : vector<2x1xf32>, vector<2x1xf32> -> vector<4x1xf32>
    %1145 = tpu.concatenate %1136, %1140 in 0 : vector<2x1xf32>, vector<2x1xf32> -> vector<4x1xf32>
    %1146 = tpu.concatenate %1144, %1145, %1144, %1145 in 0 : vector<4x1xf32>, vector<4x1xf32>, vector<4x1xf32>, vector<4x1xf32> -> vector<16x1xf32>
    %cst_579 = arith.constant dense<0.000000e+00> : vector<16x512xf32>
    %1147 = tpu.matmul %1108, %844, %cst_579 {dimension_numbers = #tpu.dot_dimension_numbers<[1], [0], [0], [1], [0, 0, 1, 1], [], []>} : vector<16x32xf32>, vector<32x512xf32>, vector<16x512xf32> -> vector<16x512xf32>
    %1148 = vector.extract_strided_slice %1147 {offsets = [0, 0], sizes = [16, 128], strides = [1, 1]} : vector<16x512xf32> to vector<16x128xf32>
    %1149 = vector.broadcast %13 : vector<16x1xf32> to vector<16x128xf32>
    %1150 = arith.mulf %1149, %1148 : vector<16x128xf32>
    %1151 = vector.extract_strided_slice %1147 {offsets = [0, 128], sizes = [16, 128], strides = [1, 1]} : vector<16x512xf32> to vector<16x128xf32>
    %1152 = vector.broadcast %20 : vector<16x1xf32> to vector<16x128xf32>
    %1153 = arith.mulf %1152, %1151 : vector<16x128xf32>
    %1154 = arith.addf %1150, %1153 : vector<16x128xf32>
    %1155 = vector.extract_strided_slice %1147 {offsets = [0, 256], sizes = [16, 128], strides = [1, 1]} : vector<16x512xf32> to vector<16x128xf32>
    %1156 = vector.broadcast %27 : vector<16x1xf32> to vector<16x128xf32>
    %1157 = arith.mulf %1156, %1155 : vector<16x128xf32>
    %1158 = arith.addf %1154, %1157 : vector<16x128xf32>
    %1159 = vector.extract_strided_slice %1147 {offsets = [0, 384], sizes = [16, 128], strides = [1, 1]} : vector<16x512xf32> to vector<16x128xf32>
    %1160 = vector.broadcast %34 : vector<16x1xf32> to vector<16x128xf32>
    %1161 = arith.mulf %1160, %1159 : vector<16x128xf32>
    %1162 = arith.addf %1158, %1161 : vector<16x128xf32>
    %1163 = arith.addf %1124, %1162 : vector<16x128xf32>
    %1164 = arith.negf %1163 : vector<16x128xf32>
    %1165 = math.exp %1164 : vector<16x128xf32>
    %cst_580 = arith.constant 1.000000e+00 : f32
    %1166 = vector.broadcast %cst_580 : f32 to vector<16x128xf32>
    %1167 = arith.addf %1166, %1165 : vector<16x128xf32>
    %1168 = arith.divf %1166, %1167 : vector<16x128xf32>
    %1169 = math.tanh %1163 : vector<16x128xf32>
    %1170 = vector.extract_strided_slice %1168 {offsets = [0, 32], sizes = [16, 32], strides = [1, 1]} : vector<16x128xf32> to vector<16x32xf32>
    %1171 = arith.mulf %1170, %1115 : vector<16x32xf32>
    %1172 = vector.extract_strided_slice %1168 {offsets = [0, 0], sizes = [16, 32], strides = [1, 1]} : vector<16x128xf32> to vector<16x32xf32>
    %1173 = vector.extract_strided_slice %1169 {offsets = [0, 64], sizes = [16, 32], strides = [1, 1]} : vector<16x128xf32> to vector<16x32xf32>
    %1174 = arith.mulf %1172, %1173 : vector<16x32xf32>
    %1175 = arith.addf %1171, %1174 : vector<16x32xf32>
    %1176 = vector.extract_strided_slice %1168 {offsets = [0, 96], sizes = [16, 32], strides = [1, 1]} : vector<16x128xf32> to vector<16x32xf32>
    %1177 = math.tanh %1175 : vector<16x32xf32>
    %1178 = arith.mulf %1176, %1177 : vector<16x32xf32>
    %1179 = vector.broadcast %1143 : vector<16x1xf32> to vector<16x32xf32>
    %1180 = arith.mulf %1179, %1178 : vector<16x32xf32>
    %1181 = vector.broadcast %1146 : vector<16x1xf32> to vector<16x32xf32>
    %1182 = arith.mulf %1181, %1180 : vector<16x32xf32>
    %1183 = arith.addf %1094, %1182 : vector<16x32xf32>
    %1184 = vector.broadcast %1146 : vector<16x1xf32> to vector<16x32xf32>
    %1185 = arith.mulf %1184, %1180 : vector<16x32xf32>
    %cst_581 = arith.constant 1.000000e+00 : f32
    %1186 = vector.broadcast %cst_581 : f32 to vector<16x1xf32>
    %1187 = arith.subf %1186, %1146 : vector<16x1xf32>
    %cst_582 = arith.constant -1.000000e+07 : f32
    %1188 = vector.broadcast %cst_582 : f32 to vector<16x1xf32>
    %1189 = arith.mulf %1187, %1188 : vector<16x1xf32>
    %1190 = vector.broadcast %1189 : vector<16x1xf32> to vector<16x32xf32>
    %1191 = arith.addf %1185, %1190 : vector<16x32xf32>
    %1192 = arith.maximumf %1103, %1191 : vector<16x32xf32>
    %cst_583 = arith.constant 1.000000e+00 : f32
    %1193 = vector.broadcast %cst_583 : f32 to vector<16x1xf32>
    %1194 = arith.subf %1193, %1143 : vector<16x1xf32>
    %1195 = vector.broadcast %1194 : vector<16x1xf32> to vector<16x32xf32>
    %1196 = arith.mulf %1195, %1108 : vector<16x32xf32>
    %1197 = arith.addf %1180, %1196 : vector<16x32xf32>
    %1198 = vector.broadcast %1143 : vector<16x1xf32> to vector<16x32xf32>
    %1199 = arith.mulf %1198, %1175 : vector<16x32xf32>
    %cst_584 = arith.constant 1.000000e+00 : f32
    %1200 = vector.broadcast %cst_584 : f32 to vector<16x1xf32>
    %1201 = arith.subf %1200, %1143 : vector<16x1xf32>
    %1202 = vector.broadcast %1201 : vector<16x1xf32> to vector<16x32xf32>
    %1203 = arith.mulf %1202, %1115 : vector<16x32xf32>
    %1204 = arith.addf %1199, %1203 : vector<16x32xf32>
    %c8_585 = arith.constant 8 : index
    %c0_586 = arith.constant 0 : index
    %1205 = vector.load %arg37[%c8_585, %c0_586] : memref<20x512xf32, #tpu.memory_space<vmem>>, vector<2x128xf32>
    %c8_587 = arith.constant 8 : index
    %c0_588 = arith.constant 0 : index
    %1206 = vector.load %arg38[%c8_587, %c0_588] : memref<16x512xf32, #tpu.memory_space<vmem>>, vector<2x128xf32>
    %c10_589 = arith.constant 10 : index
    %c128_590 = arith.constant 128 : index
    %1207 = vector.load %arg37[%c10_589, %c128_590] : memref<20x512xf32, #tpu.memory_space<vmem>>, vector<2x128xf32>
    %c6_591 = arith.constant 6 : index
    %c128_592 = arith.constant 128 : index
    %1208 = vector.load %arg38[%c6_591, %c128_592] : memref<16x512xf32, #tpu.memory_space<vmem>>, vector<2x128xf32>
    %c8_593 = arith.constant 8 : index
    %c256_594 = arith.constant 256 : index
    %1209 = vector.load %arg37[%c8_593, %c256_594] : memref<20x512xf32, #tpu.memory_space<vmem>>, vector<2x128xf32>
    %c8_595 = arith.constant 8 : index
    %c256_596 = arith.constant 256 : index
    %1210 = vector.load %arg38[%c8_595, %c256_596] : memref<16x512xf32, #tpu.memory_space<vmem>>, vector<2x128xf32>
    %c10_597 = arith.constant 10 : index
    %c384_598 = arith.constant 384 : index
    %1211 = vector.load %arg37[%c10_597, %c384_598] : memref<20x512xf32, #tpu.memory_space<vmem>>, vector<2x128xf32>
    %c6_599 = arith.constant 6 : index
    %c384_600 = arith.constant 384 : index
    %1212 = vector.load %arg38[%c6_599, %c384_600] : memref<16x512xf32, #tpu.memory_space<vmem>>, vector<2x128xf32>
    %1213 = tpu.concatenate %1205, %1206, %1207, %1208, %1209, %1210, %1211, %1212 in 0 : vector<2x128xf32>, vector<2x128xf32>, vector<2x128xf32>, vector<2x128xf32>, vector<2x128xf32>, vector<2x128xf32>, vector<2x128xf32>, vector<2x128xf32> -> vector<16x128xf32>
    %c4_601 = arith.constant 4 : index
    %c0_602 = arith.constant 0 : index
    %c0_603 = arith.constant 0 : index
    %1214 = vector.load %arg3[%c4_601, %c0_602, %c0_603] : memref<10x2x1xf32, #tpu.memory_space<vmem>>, vector<1x2x1xf32>
    %1215 = vector.shape_cast %1214 : vector<1x2x1xf32> to vector<2x1xf32>
    %c5_604 = arith.constant 5 : index
    %c0_605 = arith.constant 0 : index
    %c0_606 = arith.constant 0 : index
    %1216 = vector.load %arg3[%c5_604, %c0_605, %c0_606] : memref<10x2x1xf32, #tpu.memory_space<vmem>>, vector<1x2x1xf32>
    %1217 = vector.shape_cast %1216 : vector<1x2x1xf32> to vector<2x1xf32>
    %c4_607 = arith.constant 4 : index
    %c0_608 = arith.constant 0 : index
    %c0_609 = arith.constant 0 : index
    %1218 = vector.load %arg4[%c4_607, %c0_608, %c0_609] : memref<8x2x1xf32, #tpu.memory_space<vmem>>, vector<1x2x1xf32>
    %1219 = vector.shape_cast %1218 : vector<1x2x1xf32> to vector<2x1xf32>
    %c3_610 = arith.constant 3 : index
    %c0_611 = arith.constant 0 : index
    %c0_612 = arith.constant 0 : index
    %1220 = vector.load %arg4[%c3_610, %c0_611, %c0_612] : memref<8x2x1xf32, #tpu.memory_space<vmem>>, vector<1x2x1xf32>
    %1221 = vector.shape_cast %1220 : vector<1x2x1xf32> to vector<2x1xf32>
    %c4_613 = arith.constant 4 : index
    %c0_614 = arith.constant 0 : index
    %c0_615 = arith.constant 0 : index
    %1222 = vector.load %arg5[%c4_613, %c0_614, %c0_615] : memref<10x2x1xf32, #tpu.memory_space<vmem>>, vector<1x2x1xf32>
    %1223 = vector.shape_cast %1222 : vector<1x2x1xf32> to vector<2x1xf32>
    %c5_616 = arith.constant 5 : index
    %c0_617 = arith.constant 0 : index
    %c0_618 = arith.constant 0 : index
    %1224 = vector.load %arg5[%c5_616, %c0_617, %c0_618] : memref<10x2x1xf32, #tpu.memory_space<vmem>>, vector<1x2x1xf32>
    %1225 = vector.shape_cast %1224 : vector<1x2x1xf32> to vector<2x1xf32>
    %c4_619 = arith.constant 4 : index
    %c0_620 = arith.constant 0 : index
    %c0_621 = arith.constant 0 : index
    %1226 = vector.load %arg6[%c4_619, %c0_620, %c0_621] : memref<8x2x1xf32, #tpu.memory_space<vmem>>, vector<1x2x1xf32>
    %1227 = vector.shape_cast %1226 : vector<1x2x1xf32> to vector<2x1xf32>
    %c3_622 = arith.constant 3 : index
    %c0_623 = arith.constant 0 : index
    %c0_624 = arith.constant 0 : index
    %1228 = vector.load %arg6[%c3_622, %c0_623, %c0_624] : memref<8x2x1xf32, #tpu.memory_space<vmem>>, vector<1x2x1xf32>
    %1229 = vector.shape_cast %1228 : vector<1x2x1xf32> to vector<2x1xf32>
    %1230 = tpu.concatenate %1215, %1219 in 0 : vector<2x1xf32>, vector<2x1xf32> -> vector<4x1xf32>
    %1231 = tpu.concatenate %1217, %1221 in 0 : vector<2x1xf32>, vector<2x1xf32> -> vector<4x1xf32>
    %1232 = tpu.concatenate %1230, %1231, %1230, %1231 in 0 : vector<4x1xf32>, vector<4x1xf32>, vector<4x1xf32>, vector<4x1xf32> -> vector<16x1xf32>
    %1233 = tpu.concatenate %1223, %1227 in 0 : vector<2x1xf32>, vector<2x1xf32> -> vector<4x1xf32>
    %1234 = tpu.concatenate %1225, %1229 in 0 : vector<2x1xf32>, vector<2x1xf32> -> vector<4x1xf32>
    %1235 = tpu.concatenate %1233, %1234, %1233, %1234 in 0 : vector<4x1xf32>, vector<4x1xf32>, vector<4x1xf32>, vector<4x1xf32> -> vector<16x1xf32>
    %cst_625 = arith.constant dense<0.000000e+00> : vector<16x512xf32>
    %1236 = tpu.matmul %1197, %844, %cst_625 {dimension_numbers = #tpu.dot_dimension_numbers<[1], [0], [0], [1], [0, 0, 1, 1], [], []>} : vector<16x32xf32>, vector<32x512xf32>, vector<16x512xf32> -> vector<16x512xf32>
    %1237 = vector.extract_strided_slice %1236 {offsets = [0, 0], sizes = [16, 128], strides = [1, 1]} : vector<16x512xf32> to vector<16x128xf32>
    %1238 = vector.broadcast %13 : vector<16x1xf32> to vector<16x128xf32>
    %1239 = arith.mulf %1238, %1237 : vector<16x128xf32>
    %1240 = vector.extract_strided_slice %1236 {offsets = [0, 128], sizes = [16, 128], strides = [1, 1]} : vector<16x512xf32> to vector<16x128xf32>
    %1241 = vector.broadcast %20 : vector<16x1xf32> to vector<16x128xf32>
    %1242 = arith.mulf %1241, %1240 : vector<16x128xf32>
    %1243 = arith.addf %1239, %1242 : vector<16x128xf32>
    %1244 = vector.extract_strided_slice %1236 {offsets = [0, 256], sizes = [16, 128], strides = [1, 1]} : vector<16x512xf32> to vector<16x128xf32>
    %1245 = vector.broadcast %27 : vector<16x1xf32> to vector<16x128xf32>
    %1246 = arith.mulf %1245, %1244 : vector<16x128xf32>
    %1247 = arith.addf %1243, %1246 : vector<16x128xf32>
    %1248 = vector.extract_strided_slice %1236 {offsets = [0, 384], sizes = [16, 128], strides = [1, 1]} : vector<16x512xf32> to vector<16x128xf32>
    %1249 = vector.broadcast %34 : vector<16x1xf32> to vector<16x128xf32>
    %1250 = arith.mulf %1249, %1248 : vector<16x128xf32>
    %1251 = arith.addf %1247, %1250 : vector<16x128xf32>
    %1252 = arith.addf %1213, %1251 : vector<16x128xf32>
    %1253 = arith.negf %1252 : vector<16x128xf32>
    %1254 = math.exp %1253 : vector<16x128xf32>
    %cst_626 = arith.constant 1.000000e+00 : f32
    %1255 = vector.broadcast %cst_626 : f32 to vector<16x128xf32>
    %1256 = arith.addf %1255, %1254 : vector<16x128xf32>
    %1257 = arith.divf %1255, %1256 : vector<16x128xf32>
    %1258 = math.tanh %1252 : vector<16x128xf32>
    %1259 = vector.extract_strided_slice %1257 {offsets = [0, 32], sizes = [16, 32], strides = [1, 1]} : vector<16x128xf32> to vector<16x32xf32>
    %1260 = arith.mulf %1259, %1204 : vector<16x32xf32>
    %1261 = vector.extract_strided_slice %1257 {offsets = [0, 0], sizes = [16, 32], strides = [1, 1]} : vector<16x128xf32> to vector<16x32xf32>
    %1262 = vector.extract_strided_slice %1258 {offsets = [0, 64], sizes = [16, 32], strides = [1, 1]} : vector<16x128xf32> to vector<16x32xf32>
    %1263 = arith.mulf %1261, %1262 : vector<16x32xf32>
    %1264 = arith.addf %1260, %1263 : vector<16x32xf32>
    %1265 = vector.extract_strided_slice %1257 {offsets = [0, 96], sizes = [16, 32], strides = [1, 1]} : vector<16x128xf32> to vector<16x32xf32>
    %1266 = math.tanh %1264 : vector<16x32xf32>
    %1267 = arith.mulf %1265, %1266 : vector<16x32xf32>
    %1268 = vector.broadcast %1232 : vector<16x1xf32> to vector<16x32xf32>
    %1269 = arith.mulf %1268, %1267 : vector<16x32xf32>
    %1270 = vector.broadcast %1235 : vector<16x1xf32> to vector<16x32xf32>
    %1271 = arith.mulf %1270, %1269 : vector<16x32xf32>
    %1272 = arith.addf %1183, %1271 : vector<16x32xf32>
    %1273 = vector.broadcast %1235 : vector<16x1xf32> to vector<16x32xf32>
    %1274 = arith.mulf %1273, %1269 : vector<16x32xf32>
    %cst_627 = arith.constant 1.000000e+00 : f32
    %1275 = vector.broadcast %cst_627 : f32 to vector<16x1xf32>
    %1276 = arith.subf %1275, %1235 : vector<16x1xf32>
    %cst_628 = arith.constant -1.000000e+07 : f32
    %1277 = vector.broadcast %cst_628 : f32 to vector<16x1xf32>
    %1278 = arith.mulf %1276, %1277 : vector<16x1xf32>
    %1279 = vector.broadcast %1278 : vector<16x1xf32> to vector<16x32xf32>
    %1280 = arith.addf %1274, %1279 : vector<16x32xf32>
    %1281 = arith.maximumf %1192, %1280 : vector<16x32xf32>
    %cst_629 = arith.constant 1.000000e+00 : f32
    %1282 = vector.broadcast %cst_629 : f32 to vector<16x1xf32>
    %1283 = arith.subf %1282, %1232 : vector<16x1xf32>
    %1284 = vector.broadcast %1283 : vector<16x1xf32> to vector<16x32xf32>
    %1285 = arith.mulf %1284, %1197 : vector<16x32xf32>
    %1286 = arith.addf %1269, %1285 : vector<16x32xf32>
    %1287 = vector.broadcast %1232 : vector<16x1xf32> to vector<16x32xf32>
    %1288 = arith.mulf %1287, %1264 : vector<16x32xf32>
    %cst_630 = arith.constant 1.000000e+00 : f32
    %1289 = vector.broadcast %cst_630 : f32 to vector<16x1xf32>
    %1290 = arith.subf %1289, %1232 : vector<16x1xf32>
    %1291 = vector.broadcast %1290 : vector<16x1xf32> to vector<16x32xf32>
    %1292 = arith.mulf %1291, %1204 : vector<16x32xf32>
    %1293 = arith.addf %1288, %1292 : vector<16x32xf32>
    %c10_631 = arith.constant 10 : index
    %c0_632 = arith.constant 0 : index
    %1294 = vector.load %arg37[%c10_631, %c0_632] : memref<20x512xf32, #tpu.memory_space<vmem>>, vector<2x128xf32>
    %c10_633 = arith.constant 10 : index
    %c0_634 = arith.constant 0 : index
    %1295 = vector.load %arg38[%c10_633, %c0_634] : memref<16x512xf32, #tpu.memory_space<vmem>>, vector<2x128xf32>
    %c8_635 = arith.constant 8 : index
    %c128_636 = arith.constant 128 : index
    %1296 = vector.load %arg37[%c8_635, %c128_636] : memref<20x512xf32, #tpu.memory_space<vmem>>, vector<2x128xf32>
    %c4_637 = arith.constant 4 : index
    %c128_638 = arith.constant 128 : index
    %1297 = vector.load %arg38[%c4_637, %c128_638] : memref<16x512xf32, #tpu.memory_space<vmem>>, vector<2x128xf32>
    %c10_639 = arith.constant 10 : index
    %c256_640 = arith.constant 256 : index
    %1298 = vector.load %arg37[%c10_639, %c256_640] : memref<20x512xf32, #tpu.memory_space<vmem>>, vector<2x128xf32>
    %c10_641 = arith.constant 10 : index
    %c256_642 = arith.constant 256 : index
    %1299 = vector.load %arg38[%c10_641, %c256_642] : memref<16x512xf32, #tpu.memory_space<vmem>>, vector<2x128xf32>
    %c8_643 = arith.constant 8 : index
    %c384_644 = arith.constant 384 : index
    %1300 = vector.load %arg37[%c8_643, %c384_644] : memref<20x512xf32, #tpu.memory_space<vmem>>, vector<2x128xf32>
    %c4_645 = arith.constant 4 : index
    %c384_646 = arith.constant 384 : index
    %1301 = vector.load %arg38[%c4_645, %c384_646] : memref<16x512xf32, #tpu.memory_space<vmem>>, vector<2x128xf32>
    %1302 = tpu.concatenate %1294, %1295, %1296, %1297, %1298, %1299, %1300, %1301 in 0 : vector<2x128xf32>, vector<2x128xf32>, vector<2x128xf32>, vector<2x128xf32>, vector<2x128xf32>, vector<2x128xf32>, vector<2x128xf32>, vector<2x128xf32> -> vector<16x128xf32>
    %c5_647 = arith.constant 5 : index
    %c0_648 = arith.constant 0 : index
    %c0_649 = arith.constant 0 : index
    %1303 = vector.load %arg3[%c5_647, %c0_648, %c0_649] : memref<10x2x1xf32, #tpu.memory_space<vmem>>, vector<1x2x1xf32>
    %1304 = vector.shape_cast %1303 : vector<1x2x1xf32> to vector<2x1xf32>
    %c4_650 = arith.constant 4 : index
    %c0_651 = arith.constant 0 : index
    %c0_652 = arith.constant 0 : index
    %1305 = vector.load %arg3[%c4_650, %c0_651, %c0_652] : memref<10x2x1xf32, #tpu.memory_space<vmem>>, vector<1x2x1xf32>
    %1306 = vector.shape_cast %1305 : vector<1x2x1xf32> to vector<2x1xf32>
    %c5_653 = arith.constant 5 : index
    %c0_654 = arith.constant 0 : index
    %c0_655 = arith.constant 0 : index
    %1307 = vector.load %arg4[%c5_653, %c0_654, %c0_655] : memref<8x2x1xf32, #tpu.memory_space<vmem>>, vector<1x2x1xf32>
    %1308 = vector.shape_cast %1307 : vector<1x2x1xf32> to vector<2x1xf32>
    %c2_656 = arith.constant 2 : index
    %c0_657 = arith.constant 0 : index
    %c0_658 = arith.constant 0 : index
    %1309 = vector.load %arg4[%c2_656, %c0_657, %c0_658] : memref<8x2x1xf32, #tpu.memory_space<vmem>>, vector<1x2x1xf32>
    %1310 = vector.shape_cast %1309 : vector<1x2x1xf32> to vector<2x1xf32>
    %c5_659 = arith.constant 5 : index
    %c0_660 = arith.constant 0 : index
    %c0_661 = arith.constant 0 : index
    %1311 = vector.load %arg5[%c5_659, %c0_660, %c0_661] : memref<10x2x1xf32, #tpu.memory_space<vmem>>, vector<1x2x1xf32>
    %1312 = vector.shape_cast %1311 : vector<1x2x1xf32> to vector<2x1xf32>
    %c4_662 = arith.constant 4 : index
    %c0_663 = arith.constant 0 : index
    %c0_664 = arith.constant 0 : index
    %1313 = vector.load %arg5[%c4_662, %c0_663, %c0_664] : memref<10x2x1xf32, #tpu.memory_space<vmem>>, vector<1x2x1xf32>
    %1314 = vector.shape_cast %1313 : vector<1x2x1xf32> to vector<2x1xf32>
    %c5_665 = arith.constant 5 : index
    %c0_666 = arith.constant 0 : index
    %c0_667 = arith.constant 0 : index
    %1315 = vector.load %arg6[%c5_665, %c0_666, %c0_667] : memref<8x2x1xf32, #tpu.memory_space<vmem>>, vector<1x2x1xf32>
    %1316 = vector.shape_cast %1315 : vector<1x2x1xf32> to vector<2x1xf32>
    %c2_668 = arith.constant 2 : index
    %c0_669 = arith.constant 0 : index
    %c0_670 = arith.constant 0 : index
    %1317 = vector.load %arg6[%c2_668, %c0_669, %c0_670] : memref<8x2x1xf32, #tpu.memory_space<vmem>>, vector<1x2x1xf32>
    %1318 = vector.shape_cast %1317 : vector<1x2x1xf32> to vector<2x1xf32>
    %1319 = tpu.concatenate %1304, %1308 in 0 : vector<2x1xf32>, vector<2x1xf32> -> vector<4x1xf32>
    %1320 = tpu.concatenate %1306, %1310 in 0 : vector<2x1xf32>, vector<2x1xf32> -> vector<4x1xf32>
    %1321 = tpu.concatenate %1319, %1320, %1319, %1320 in 0 : vector<4x1xf32>, vector<4x1xf32>, vector<4x1xf32>, vector<4x1xf32> -> vector<16x1xf32>
    %1322 = tpu.concatenate %1312, %1316 in 0 : vector<2x1xf32>, vector<2x1xf32> -> vector<4x1xf32>
    %1323 = tpu.concatenate %1314, %1318 in 0 : vector<2x1xf32>, vector<2x1xf32> -> vector<4x1xf32>
    %1324 = tpu.concatenate %1322, %1323, %1322, %1323 in 0 : vector<4x1xf32>, vector<4x1xf32>, vector<4x1xf32>, vector<4x1xf32> -> vector<16x1xf32>
    %cst_671 = arith.constant dense<0.000000e+00> : vector<16x512xf32>
    %1325 = tpu.matmul %1286, %844, %cst_671 {dimension_numbers = #tpu.dot_dimension_numbers<[1], [0], [0], [1], [0, 0, 1, 1], [], []>} : vector<16x32xf32>, vector<32x512xf32>, vector<16x512xf32> -> vector<16x512xf32>
    %1326 = vector.extract_strided_slice %1325 {offsets = [0, 0], sizes = [16, 128], strides = [1, 1]} : vector<16x512xf32> to vector<16x128xf32>
    %1327 = vector.broadcast %13 : vector<16x1xf32> to vector<16x128xf32>
    %1328 = arith.mulf %1327, %1326 : vector<16x128xf32>
    %1329 = vector.extract_strided_slice %1325 {offsets = [0, 128], sizes = [16, 128], strides = [1, 1]} : vector<16x512xf32> to vector<16x128xf32>
    %1330 = vector.broadcast %20 : vector<16x1xf32> to vector<16x128xf32>
    %1331 = arith.mulf %1330, %1329 : vector<16x128xf32>
    %1332 = arith.addf %1328, %1331 : vector<16x128xf32>
    %1333 = vector.extract_strided_slice %1325 {offsets = [0, 256], sizes = [16, 128], strides = [1, 1]} : vector<16x512xf32> to vector<16x128xf32>
    %1334 = vector.broadcast %27 : vector<16x1xf32> to vector<16x128xf32>
    %1335 = arith.mulf %1334, %1333 : vector<16x128xf32>
    %1336 = arith.addf %1332, %1335 : vector<16x128xf32>
    %1337 = vector.extract_strided_slice %1325 {offsets = [0, 384], sizes = [16, 128], strides = [1, 1]} : vector<16x512xf32> to vector<16x128xf32>
    %1338 = vector.broadcast %34 : vector<16x1xf32> to vector<16x128xf32>
    %1339 = arith.mulf %1338, %1337 : vector<16x128xf32>
    %1340 = arith.addf %1336, %1339 : vector<16x128xf32>
    %1341 = arith.addf %1302, %1340 : vector<16x128xf32>
    %1342 = arith.negf %1341 : vector<16x128xf32>
    %1343 = math.exp %1342 : vector<16x128xf32>
    %cst_672 = arith.constant 1.000000e+00 : f32
    %1344 = vector.broadcast %cst_672 : f32 to vector<16x128xf32>
    %1345 = arith.addf %1344, %1343 : vector<16x128xf32>
    %1346 = arith.divf %1344, %1345 : vector<16x128xf32>
    %1347 = math.tanh %1341 : vector<16x128xf32>
    %1348 = vector.extract_strided_slice %1346 {offsets = [0, 32], sizes = [16, 32], strides = [1, 1]} : vector<16x128xf32> to vector<16x32xf32>
    %1349 = arith.mulf %1348, %1293 : vector<16x32xf32>
    %1350 = vector.extract_strided_slice %1346 {offsets = [0, 0], sizes = [16, 32], strides = [1, 1]} : vector<16x128xf32> to vector<16x32xf32>
    %1351 = vector.extract_strided_slice %1347 {offsets = [0, 64], sizes = [16, 32], strides = [1, 1]} : vector<16x128xf32> to vector<16x32xf32>
    %1352 = arith.mulf %1350, %1351 : vector<16x32xf32>
    %1353 = arith.addf %1349, %1352 : vector<16x32xf32>
    %1354 = vector.extract_strided_slice %1346 {offsets = [0, 96], sizes = [16, 32], strides = [1, 1]} : vector<16x128xf32> to vector<16x32xf32>
    %1355 = math.tanh %1353 : vector<16x32xf32>
    %1356 = arith.mulf %1354, %1355 : vector<16x32xf32>
    %1357 = vector.broadcast %1321 : vector<16x1xf32> to vector<16x32xf32>
    %1358 = arith.mulf %1357, %1356 : vector<16x32xf32>
    %1359 = vector.broadcast %1324 : vector<16x1xf32> to vector<16x32xf32>
    %1360 = arith.mulf %1359, %1358 : vector<16x32xf32>
    %1361 = arith.addf %1272, %1360 : vector<16x32xf32>
    %1362 = vector.broadcast %1324 : vector<16x1xf32> to vector<16x32xf32>
    %1363 = arith.mulf %1362, %1358 : vector<16x32xf32>
    %cst_673 = arith.constant 1.000000e+00 : f32
    %1364 = vector.broadcast %cst_673 : f32 to vector<16x1xf32>
    %1365 = arith.subf %1364, %1324 : vector<16x1xf32>
    %cst_674 = arith.constant -1.000000e+07 : f32
    %1366 = vector.broadcast %cst_674 : f32 to vector<16x1xf32>
    %1367 = arith.mulf %1365, %1366 : vector<16x1xf32>
    %1368 = vector.broadcast %1367 : vector<16x1xf32> to vector<16x32xf32>
    %1369 = arith.addf %1363, %1368 : vector<16x32xf32>
    %1370 = arith.maximumf %1281, %1369 : vector<16x32xf32>
    %cst_675 = arith.constant 1.000000e+00 : f32
    %1371 = vector.broadcast %cst_675 : f32 to vector<16x1xf32>
    %1372 = arith.subf %1371, %1321 : vector<16x1xf32>
    %1373 = vector.broadcast %1372 : vector<16x1xf32> to vector<16x32xf32>
    %1374 = arith.mulf %1373, %1286 : vector<16x32xf32>
    %1375 = arith.addf %1358, %1374 : vector<16x32xf32>
    %1376 = vector.broadcast %1321 : vector<16x1xf32> to vector<16x32xf32>
    %1377 = arith.mulf %1376, %1353 : vector<16x32xf32>
    %cst_676 = arith.constant 1.000000e+00 : f32
    %1378 = vector.broadcast %cst_676 : f32 to vector<16x1xf32>
    %1379 = arith.subf %1378, %1321 : vector<16x1xf32>
    %1380 = vector.broadcast %1379 : vector<16x1xf32> to vector<16x32xf32>
    %1381 = arith.mulf %1380, %1293 : vector<16x32xf32>
    %1382 = arith.addf %1377, %1381 : vector<16x32xf32>
    %c12_677 = arith.constant 12 : index
    %c0_678 = arith.constant 0 : index
    %1383 = vector.load %arg37[%c12_677, %c0_678] : memref<20x512xf32, #tpu.memory_space<vmem>>, vector<2x128xf32>
    %c12_679 = arith.constant 12 : index
    %c0_680 = arith.constant 0 : index
    %1384 = vector.load %arg38[%c12_679, %c0_680] : memref<16x512xf32, #tpu.memory_space<vmem>>, vector<2x128xf32>
    %c6_681 = arith.constant 6 : index
    %c128_682 = arith.constant 128 : index
    %1385 = vector.load %arg37[%c6_681, %c128_682] : memref<20x512xf32, #tpu.memory_space<vmem>>, vector<2x128xf32>
    %c2_683 = arith.constant 2 : index
    %c128_684 = arith.constant 128 : index
    %1386 = vector.load %arg38[%c2_683, %c128_684] : memref<16x512xf32, #tpu.memory_space<vmem>>, vector<2x128xf32>
    %c12_685 = arith.constant 12 : index
    %c256_686 = arith.constant 256 : index
    %1387 = vector.load %arg37[%c12_685, %c256_686] : memref<20x512xf32, #tpu.memory_space<vmem>>, vector<2x128xf32>
    %c12_687 = arith.constant 12 : index
    %c256_688 = arith.constant 256 : index
    %1388 = vector.load %arg38[%c12_687, %c256_688] : memref<16x512xf32, #tpu.memory_space<vmem>>, vector<2x128xf32>
    %c6_689 = arith.constant 6 : index
    %c384_690 = arith.constant 384 : index
    %1389 = vector.load %arg37[%c6_689, %c384_690] : memref<20x512xf32, #tpu.memory_space<vmem>>, vector<2x128xf32>
    %c2_691 = arith.constant 2 : index
    %c384_692 = arith.constant 384 : index
    %1390 = vector.load %arg38[%c2_691, %c384_692] : memref<16x512xf32, #tpu.memory_space<vmem>>, vector<2x128xf32>
    %1391 = tpu.concatenate %1383, %1384, %1385, %1386, %1387, %1388, %1389, %1390 in 0 : vector<2x128xf32>, vector<2x128xf32>, vector<2x128xf32>, vector<2x128xf32>, vector<2x128xf32>, vector<2x128xf32>, vector<2x128xf32>, vector<2x128xf32> -> vector<16x128xf32>
    %c6_693 = arith.constant 6 : index
    %c0_694 = arith.constant 0 : index
    %c0_695 = arith.constant 0 : index
    %1392 = vector.load %arg3[%c6_693, %c0_694, %c0_695] : memref<10x2x1xf32, #tpu.memory_space<vmem>>, vector<1x2x1xf32>
    %1393 = vector.shape_cast %1392 : vector<1x2x1xf32> to vector<2x1xf32>
    %c3_696 = arith.constant 3 : index
    %c0_697 = arith.constant 0 : index
    %c0_698 = arith.constant 0 : index
    %1394 = vector.load %arg3[%c3_696, %c0_697, %c0_698] : memref<10x2x1xf32, #tpu.memory_space<vmem>>, vector<1x2x1xf32>
    %1395 = vector.shape_cast %1394 : vector<1x2x1xf32> to vector<2x1xf32>
    %c6_699 = arith.constant 6 : index
    %c0_700 = arith.constant 0 : index
    %c0_701 = arith.constant 0 : index
    %1396 = vector.load %arg4[%c6_699, %c0_700, %c0_701] : memref<8x2x1xf32, #tpu.memory_space<vmem>>, vector<1x2x1xf32>
    %1397 = vector.shape_cast %1396 : vector<1x2x1xf32> to vector<2x1xf32>
    %c1_702 = arith.constant 1 : index
    %c0_703 = arith.constant 0 : index
    %c0_704 = arith.constant 0 : index
    %1398 = vector.load %arg4[%c1_702, %c0_703, %c0_704] : memref<8x2x1xf32, #tpu.memory_space<vmem>>, vector<1x2x1xf32>
    %1399 = vector.shape_cast %1398 : vector<1x2x1xf32> to vector<2x1xf32>
    %c6_705 = arith.constant 6 : index
    %c0_706 = arith.constant 0 : index
    %c0_707 = arith.constant 0 : index
    %1400 = vector.load %arg5[%c6_705, %c0_706, %c0_707] : memref<10x2x1xf32, #tpu.memory_space<vmem>>, vector<1x2x1xf32>
    %1401 = vector.shape_cast %1400 : vector<1x2x1xf32> to vector<2x1xf32>
    %c3_708 = arith.constant 3 : index
    %c0_709 = arith.constant 0 : index
    %c0_710 = arith.constant 0 : index
    %1402 = vector.load %arg5[%c3_708, %c0_709, %c0_710] : memref<10x2x1xf32, #tpu.memory_space<vmem>>, vector<1x2x1xf32>
    %1403 = vector.shape_cast %1402 : vector<1x2x1xf32> to vector<2x1xf32>
    %c6_711 = arith.constant 6 : index
    %c0_712 = arith.constant 0 : index
    %c0_713 = arith.constant 0 : index
    %1404 = vector.load %arg6[%c6_711, %c0_712, %c0_713] : memref<8x2x1xf32, #tpu.memory_space<vmem>>, vector<1x2x1xf32>
    %1405 = vector.shape_cast %1404 : vector<1x2x1xf32> to vector<2x1xf32>
    %c1_714 = arith.constant 1 : index
    %c0_715 = arith.constant 0 : index
    %c0_716 = arith.constant 0 : index
    %1406 = vector.load %arg6[%c1_714, %c0_715, %c0_716] : memref<8x2x1xf32, #tpu.memory_space<vmem>>, vector<1x2x1xf32>
    %1407 = vector.shape_cast %1406 : vector<1x2x1xf32> to vector<2x1xf32>
    %1408 = tpu.concatenate %1393, %1397 in 0 : vector<2x1xf32>, vector<2x1xf32> -> vector<4x1xf32>
    %1409 = tpu.concatenate %1395, %1399 in 0 : vector<2x1xf32>, vector<2x1xf32> -> vector<4x1xf32>
    %1410 = tpu.concatenate %1408, %1409, %1408, %1409 in 0 : vector<4x1xf32>, vector<4x1xf32>, vector<4x1xf32>, vector<4x1xf32> -> vector<16x1xf32>
    %1411 = tpu.concatenate %1401, %1405 in 0 : vector<2x1xf32>, vector<2x1xf32> -> vector<4x1xf32>
    %1412 = tpu.concatenate %1403, %1407 in 0 : vector<2x1xf32>, vector<2x1xf32> -> vector<4x1xf32>
    %1413 = tpu.concatenate %1411, %1412, %1411, %1412 in 0 : vector<4x1xf32>, vector<4x1xf32>, vector<4x1xf32>, vector<4x1xf32> -> vector<16x1xf32>
    %cst_717 = arith.constant dense<0.000000e+00> : vector<16x512xf32>
    %1414 = tpu.matmul %1375, %844, %cst_717 {dimension_numbers = #tpu.dot_dimension_numbers<[1], [0], [0], [1], [0, 0, 1, 1], [], []>} : vector<16x32xf32>, vector<32x512xf32>, vector<16x512xf32> -> vector<16x512xf32>
    %1415 = vector.extract_strided_slice %1414 {offsets = [0, 0], sizes = [16, 128], strides = [1, 1]} : vector<16x512xf32> to vector<16x128xf32>
    %1416 = vector.broadcast %13 : vector<16x1xf32> to vector<16x128xf32>
    %1417 = arith.mulf %1416, %1415 : vector<16x128xf32>
    %1418 = vector.extract_strided_slice %1414 {offsets = [0, 128], sizes = [16, 128], strides = [1, 1]} : vector<16x512xf32> to vector<16x128xf32>
    %1419 = vector.broadcast %20 : vector<16x1xf32> to vector<16x128xf32>
    %1420 = arith.mulf %1419, %1418 : vector<16x128xf32>
    %1421 = arith.addf %1417, %1420 : vector<16x128xf32>
    %1422 = vector.extract_strided_slice %1414 {offsets = [0, 256], sizes = [16, 128], strides = [1, 1]} : vector<16x512xf32> to vector<16x128xf32>
    %1423 = vector.broadcast %27 : vector<16x1xf32> to vector<16x128xf32>
    %1424 = arith.mulf %1423, %1422 : vector<16x128xf32>
    %1425 = arith.addf %1421, %1424 : vector<16x128xf32>
    %1426 = vector.extract_strided_slice %1414 {offsets = [0, 384], sizes = [16, 128], strides = [1, 1]} : vector<16x512xf32> to vector<16x128xf32>
    %1427 = vector.broadcast %34 : vector<16x1xf32> to vector<16x128xf32>
    %1428 = arith.mulf %1427, %1426 : vector<16x128xf32>
    %1429 = arith.addf %1425, %1428 : vector<16x128xf32>
    %1430 = arith.addf %1391, %1429 : vector<16x128xf32>
    %1431 = arith.negf %1430 : vector<16x128xf32>
    %1432 = math.exp %1431 : vector<16x128xf32>
    %cst_718 = arith.constant 1.000000e+00 : f32
    %1433 = vector.broadcast %cst_718 : f32 to vector<16x128xf32>
    %1434 = arith.addf %1433, %1432 : vector<16x128xf32>
    %1435 = arith.divf %1433, %1434 : vector<16x128xf32>
    %1436 = math.tanh %1430 : vector<16x128xf32>
    %1437 = vector.extract_strided_slice %1435 {offsets = [0, 32], sizes = [16, 32], strides = [1, 1]} : vector<16x128xf32> to vector<16x32xf32>
    %1438 = arith.mulf %1437, %1382 : vector<16x32xf32>
    %1439 = vector.extract_strided_slice %1435 {offsets = [0, 0], sizes = [16, 32], strides = [1, 1]} : vector<16x128xf32> to vector<16x32xf32>
    %1440 = vector.extract_strided_slice %1436 {offsets = [0, 64], sizes = [16, 32], strides = [1, 1]} : vector<16x128xf32> to vector<16x32xf32>
    %1441 = arith.mulf %1439, %1440 : vector<16x32xf32>
    %1442 = arith.addf %1438, %1441 : vector<16x32xf32>
    %1443 = vector.extract_strided_slice %1435 {offsets = [0, 96], sizes = [16, 32], strides = [1, 1]} : vector<16x128xf32> to vector<16x32xf32>
    %1444 = math.tanh %1442 : vector<16x32xf32>
    %1445 = arith.mulf %1443, %1444 : vector<16x32xf32>
    %1446 = vector.broadcast %1410 : vector<16x1xf32> to vector<16x32xf32>
    %1447 = arith.mulf %1446, %1445 : vector<16x32xf32>
    %1448 = vector.broadcast %1413 : vector<16x1xf32> to vector<16x32xf32>
    %1449 = arith.mulf %1448, %1447 : vector<16x32xf32>
    %1450 = arith.addf %1361, %1449 : vector<16x32xf32>
    %1451 = vector.broadcast %1413 : vector<16x1xf32> to vector<16x32xf32>
    %1452 = arith.mulf %1451, %1447 : vector<16x32xf32>
    %cst_719 = arith.constant 1.000000e+00 : f32
    %1453 = vector.broadcast %cst_719 : f32 to vector<16x1xf32>
    %1454 = arith.subf %1453, %1413 : vector<16x1xf32>
    %cst_720 = arith.constant -1.000000e+07 : f32
    %1455 = vector.broadcast %cst_720 : f32 to vector<16x1xf32>
    %1456 = arith.mulf %1454, %1455 : vector<16x1xf32>
    %1457 = vector.broadcast %1456 : vector<16x1xf32> to vector<16x32xf32>
    %1458 = arith.addf %1452, %1457 : vector<16x32xf32>
    %1459 = arith.maximumf %1370, %1458 : vector<16x32xf32>
    %cst_721 = arith.constant 1.000000e+00 : f32
    %1460 = vector.broadcast %cst_721 : f32 to vector<16x1xf32>
    %1461 = arith.subf %1460, %1410 : vector<16x1xf32>
    %1462 = vector.broadcast %1461 : vector<16x1xf32> to vector<16x32xf32>
    %1463 = arith.mulf %1462, %1375 : vector<16x32xf32>
    %1464 = arith.addf %1447, %1463 : vector<16x32xf32>
    %1465 = vector.broadcast %1410 : vector<16x1xf32> to vector<16x32xf32>
    %1466 = arith.mulf %1465, %1442 : vector<16x32xf32>
    %cst_722 = arith.constant 1.000000e+00 : f32
    %1467 = vector.broadcast %cst_722 : f32 to vector<16x1xf32>
    %1468 = arith.subf %1467, %1410 : vector<16x1xf32>
    %1469 = vector.broadcast %1468 : vector<16x1xf32> to vector<16x32xf32>
    %1470 = arith.mulf %1469, %1382 : vector<16x32xf32>
    %1471 = arith.addf %1466, %1470 : vector<16x32xf32>
    %c14_723 = arith.constant 14 : index
    %c0_724 = arith.constant 0 : index
    %1472 = vector.load %arg37[%c14_723, %c0_724] : memref<20x512xf32, #tpu.memory_space<vmem>>, vector<2x128xf32>
    %c14_725 = arith.constant 14 : index
    %c0_726 = arith.constant 0 : index
    %1473 = vector.load %arg38[%c14_725, %c0_726] : memref<16x512xf32, #tpu.memory_space<vmem>>, vector<2x128xf32>
    %c4_727 = arith.constant 4 : index
    %c128_728 = arith.constant 128 : index
    %1474 = vector.load %arg37[%c4_727, %c128_728] : memref<20x512xf32, #tpu.memory_space<vmem>>, vector<2x128xf32>
    %c0_729 = arith.constant 0 : index
    %c128_730 = arith.constant 128 : index
    %1475 = vector.load %arg38[%c0_729, %c128_730] : memref<16x512xf32, #tpu.memory_space<vmem>>, vector<2x128xf32>
    %c14_731 = arith.constant 14 : index
    %c256_732 = arith.constant 256 : index
    %1476 = vector.load %arg37[%c14_731, %c256_732] : memref<20x512xf32, #tpu.memory_space<vmem>>, vector<2x128xf32>
    %c14_733 = arith.constant 14 : index
    %c256_734 = arith.constant 256 : index
    %1477 = vector.load %arg38[%c14_733, %c256_734] : memref<16x512xf32, #tpu.memory_space<vmem>>, vector<2x128xf32>
    %c4_735 = arith.constant 4 : index
    %c384_736 = arith.constant 384 : index
    %1478 = vector.load %arg37[%c4_735, %c384_736] : memref<20x512xf32, #tpu.memory_space<vmem>>, vector<2x128xf32>
    %c0_737 = arith.constant 0 : index
    %c384_738 = arith.constant 384 : index
    %1479 = vector.load %arg38[%c0_737, %c384_738] : memref<16x512xf32, #tpu.memory_space<vmem>>, vector<2x128xf32>
    %1480 = tpu.concatenate %1472, %1473, %1474, %1475, %1476, %1477, %1478, %1479 in 0 : vector<2x128xf32>, vector<2x128xf32>, vector<2x128xf32>, vector<2x128xf32>, vector<2x128xf32>, vector<2x128xf32>, vector<2x128xf32>, vector<2x128xf32> -> vector<16x128xf32>
    %c7_739 = arith.constant 7 : index
    %c0_740 = arith.constant 0 : index
    %c0_741 = arith.constant 0 : index
    %1481 = vector.load %arg3[%c7_739, %c0_740, %c0_741] : memref<10x2x1xf32, #tpu.memory_space<vmem>>, vector<1x2x1xf32>
    %1482 = vector.shape_cast %1481 : vector<1x2x1xf32> to vector<2x1xf32>
    %c2_742 = arith.constant 2 : index
    %c0_743 = arith.constant 0 : index
    %c0_744 = arith.constant 0 : index
    %1483 = vector.load %arg3[%c2_742, %c0_743, %c0_744] : memref<10x2x1xf32, #tpu.memory_space<vmem>>, vector<1x2x1xf32>
    %1484 = vector.shape_cast %1483 : vector<1x2x1xf32> to vector<2x1xf32>
    %c7_745 = arith.constant 7 : index
    %c0_746 = arith.constant 0 : index
    %c0_747 = arith.constant 0 : index
    %1485 = vector.load %arg4[%c7_745, %c0_746, %c0_747] : memref<8x2x1xf32, #tpu.memory_space<vmem>>, vector<1x2x1xf32>
    %1486 = vector.shape_cast %1485 : vector<1x2x1xf32> to vector<2x1xf32>
    %c0_748 = arith.constant 0 : index
    %c0_749 = arith.constant 0 : index
    %c0_750 = arith.constant 0 : index
    %1487 = vector.load %arg4[%c0_748, %c0_749, %c0_750] : memref<8x2x1xf32, #tpu.memory_space<vmem>>, vector<1x2x1xf32>
    %1488 = vector.shape_cast %1487 : vector<1x2x1xf32> to vector<2x1xf32>
    %c7_751 = arith.constant 7 : index
    %c0_752 = arith.constant 0 : index
    %c0_753 = arith.constant 0 : index
    %1489 = vector.load %arg5[%c7_751, %c0_752, %c0_753] : memref<10x2x1xf32, #tpu.memory_space<vmem>>, vector<1x2x1xf32>
    %1490 = vector.shape_cast %1489 : vector<1x2x1xf32> to vector<2x1xf32>
    %c2_754 = arith.constant 2 : index
    %c0_755 = arith.constant 0 : index
    %c0_756 = arith.constant 0 : index
    %1491 = vector.load %arg5[%c2_754, %c0_755, %c0_756] : memref<10x2x1xf32, #tpu.memory_space<vmem>>, vector<1x2x1xf32>
    %1492 = vector.shape_cast %1491 : vector<1x2x1xf32> to vector<2x1xf32>
    %c7_757 = arith.constant 7 : index
    %c0_758 = arith.constant 0 : index
    %c0_759 = arith.constant 0 : index
    %1493 = vector.load %arg6[%c7_757, %c0_758, %c0_759] : memref<8x2x1xf32, #tpu.memory_space<vmem>>, vector<1x2x1xf32>
    %1494 = vector.shape_cast %1493 : vector<1x2x1xf32> to vector<2x1xf32>
    %c0_760 = arith.constant 0 : index
    %c0_761 = arith.constant 0 : index
    %c0_762 = arith.constant 0 : index
    %1495 = vector.load %arg6[%c0_760, %c0_761, %c0_762] : memref<8x2x1xf32, #tpu.memory_space<vmem>>, vector<1x2x1xf32>
    %1496 = vector.shape_cast %1495 : vector<1x2x1xf32> to vector<2x1xf32>
    %1497 = tpu.concatenate %1482, %1486 in 0 : vector<2x1xf32>, vector<2x1xf32> -> vector<4x1xf32>
    %1498 = tpu.concatenate %1484, %1488 in 0 : vector<2x1xf32>, vector<2x1xf32> -> vector<4x1xf32>
    %1499 = tpu.concatenate %1497, %1498, %1497, %1498 in 0 : vector<4x1xf32>, vector<4x1xf32>, vector<4x1xf32>, vector<4x1xf32> -> vector<16x1xf32>
    %1500 = tpu.concatenate %1490, %1494 in 0 : vector<2x1xf32>, vector<2x1xf32> -> vector<4x1xf32>
    %1501 = tpu.concatenate %1492, %1496 in 0 : vector<2x1xf32>, vector<2x1xf32> -> vector<4x1xf32>
    %1502 = tpu.concatenate %1500, %1501, %1500, %1501 in 0 : vector<4x1xf32>, vector<4x1xf32>, vector<4x1xf32>, vector<4x1xf32> -> vector<16x1xf32>
    %cst_763 = arith.constant dense<0.000000e+00> : vector<16x512xf32>
    %1503 = tpu.matmul %1464, %844, %cst_763 {dimension_numbers = #tpu.dot_dimension_numbers<[1], [0], [0], [1], [0, 0, 1, 1], [], []>} : vector<16x32xf32>, vector<32x512xf32>, vector<16x512xf32> -> vector<16x512xf32>
    %1504 = vector.extract_strided_slice %1503 {offsets = [0, 0], sizes = [16, 128], strides = [1, 1]} : vector<16x512xf32> to vector<16x128xf32>
    %1505 = vector.broadcast %13 : vector<16x1xf32> to vector<16x128xf32>
    %1506 = arith.mulf %1505, %1504 : vector<16x128xf32>
    %1507 = vector.extract_strided_slice %1503 {offsets = [0, 128], sizes = [16, 128], strides = [1, 1]} : vector<16x512xf32> to vector<16x128xf32>
    %1508 = vector.broadcast %20 : vector<16x1xf32> to vector<16x128xf32>
    %1509 = arith.mulf %1508, %1507 : vector<16x128xf32>
    %1510 = arith.addf %1506, %1509 : vector<16x128xf32>
    %1511 = vector.extract_strided_slice %1503 {offsets = [0, 256], sizes = [16, 128], strides = [1, 1]} : vector<16x512xf32> to vector<16x128xf32>
    %1512 = vector.broadcast %27 : vector<16x1xf32> to vector<16x128xf32>
    %1513 = arith.mulf %1512, %1511 : vector<16x128xf32>
    %1514 = arith.addf %1510, %1513 : vector<16x128xf32>
    %1515 = vector.extract_strided_slice %1503 {offsets = [0, 384], sizes = [16, 128], strides = [1, 1]} : vector<16x512xf32> to vector<16x128xf32>
    %1516 = vector.broadcast %34 : vector<16x1xf32> to vector<16x128xf32>
    %1517 = arith.mulf %1516, %1515 : vector<16x128xf32>
    %1518 = arith.addf %1514, %1517 : vector<16x128xf32>
    %1519 = arith.addf %1480, %1518 : vector<16x128xf32>
    %1520 = arith.negf %1519 : vector<16x128xf32>
    %1521 = math.exp %1520 : vector<16x128xf32>
    %cst_764 = arith.constant 1.000000e+00 : f32
    %1522 = vector.broadcast %cst_764 : f32 to vector<16x128xf32>
    %1523 = arith.addf %1522, %1521 : vector<16x128xf32>
    %1524 = arith.divf %1522, %1523 : vector<16x128xf32>
    %1525 = math.tanh %1519 : vector<16x128xf32>
    %1526 = vector.extract_strided_slice %1524 {offsets = [0, 32], sizes = [16, 32], strides = [1, 1]} : vector<16x128xf32> to vector<16x32xf32>
    %1527 = arith.mulf %1526, %1471 : vector<16x32xf32>
    %1528 = vector.extract_strided_slice %1524 {offsets = [0, 0], sizes = [16, 32], strides = [1, 1]} : vector<16x128xf32> to vector<16x32xf32>
    %1529 = vector.extract_strided_slice %1525 {offsets = [0, 64], sizes = [16, 32], strides = [1, 1]} : vector<16x128xf32> to vector<16x32xf32>
    %1530 = arith.mulf %1528, %1529 : vector<16x32xf32>
    %1531 = arith.addf %1527, %1530 : vector<16x32xf32>
    %1532 = vector.extract_strided_slice %1524 {offsets = [0, 96], sizes = [16, 32], strides = [1, 1]} : vector<16x128xf32> to vector<16x32xf32>
    %1533 = math.tanh %1531 : vector<16x32xf32>
    %1534 = arith.mulf %1532, %1533 : vector<16x32xf32>
    %1535 = vector.broadcast %1499 : vector<16x1xf32> to vector<16x32xf32>
    %1536 = arith.mulf %1535, %1534 : vector<16x32xf32>
    %1537 = vector.broadcast %1502 : vector<16x1xf32> to vector<16x32xf32>
    %1538 = arith.mulf %1537, %1536 : vector<16x32xf32>
    %1539 = arith.addf %1450, %1538 : vector<16x32xf32>
    %1540 = vector.broadcast %1502 : vector<16x1xf32> to vector<16x32xf32>
    %1541 = arith.mulf %1540, %1536 : vector<16x32xf32>
    %cst_765 = arith.constant 1.000000e+00 : f32
    %1542 = vector.broadcast %cst_765 : f32 to vector<16x1xf32>
    %1543 = arith.subf %1542, %1502 : vector<16x1xf32>
    %cst_766 = arith.constant -1.000000e+07 : f32
    %1544 = vector.broadcast %cst_766 : f32 to vector<16x1xf32>
    %1545 = arith.mulf %1543, %1544 : vector<16x1xf32>
    %1546 = vector.broadcast %1545 : vector<16x1xf32> to vector<16x32xf32>
    %1547 = arith.addf %1541, %1546 : vector<16x32xf32>
    %1548 = arith.maximumf %1459, %1547 : vector<16x32xf32>
    %cst_767 = arith.constant 1.000000e+00 : f32
    %1549 = vector.broadcast %cst_767 : f32 to vector<16x1xf32>
    %1550 = arith.subf %1549, %1499 : vector<16x1xf32>
    %1551 = vector.broadcast %1550 : vector<16x1xf32> to vector<16x32xf32>
    %1552 = arith.mulf %1551, %1464 : vector<16x32xf32>
    %1553 = arith.addf %1536, %1552 : vector<16x32xf32>
    %1554 = vector.broadcast %1499 : vector<16x1xf32> to vector<16x32xf32>
    %1555 = arith.mulf %1554, %1531 : vector<16x32xf32>
    %cst_768 = arith.constant 1.000000e+00 : f32
    %1556 = vector.broadcast %cst_768 : f32 to vector<16x1xf32>
    %1557 = arith.subf %1556, %1499 : vector<16x1xf32>
    %1558 = vector.broadcast %1557 : vector<16x1xf32> to vector<16x32xf32>
    %1559 = arith.mulf %1558, %1471 : vector<16x32xf32>
    %1560 = arith.addf %1555, %1559 : vector<16x32xf32>
    %c16_769 = arith.constant 16 : index
    %c0_770 = arith.constant 0 : index
    %1561 = vector.load %arg37[%c16_769, %c0_770] : memref<20x512xf32, #tpu.memory_space<vmem>>, vector<2x128xf32>
    %c14_771 = arith.constant 14 : index
    %c0_772 = arith.constant 0 : index
    %1562 = vector.load %arg38[%c14_771, %c0_772] : memref<16x512xf32, #tpu.memory_space<vmem>>, vector<2x128xf32>
    %c2_773 = arith.constant 2 : index
    %c128_774 = arith.constant 128 : index
    %1563 = vector.load %arg37[%c2_773, %c128_774] : memref<20x512xf32, #tpu.memory_space<vmem>>, vector<2x128xf32>
    %c0_775 = arith.constant 0 : index
    %c128_776 = arith.constant 128 : index
    %1564 = vector.load %arg38[%c0_775, %c128_776] : memref<16x512xf32, #tpu.memory_space<vmem>>, vector<2x128xf32>
    %c16_777 = arith.constant 16 : index
    %c256_778 = arith.constant 256 : index
    %1565 = vector.load %arg37[%c16_777, %c256_778] : memref<20x512xf32, #tpu.memory_space<vmem>>, vector<2x128xf32>
    %c14_779 = arith.constant 14 : index
    %c256_780 = arith.constant 256 : index
    %1566 = vector.load %arg38[%c14_779, %c256_780] : memref<16x512xf32, #tpu.memory_space<vmem>>, vector<2x128xf32>
    %c2_781 = arith.constant 2 : index
    %c384_782 = arith.constant 384 : index
    %1567 = vector.load %arg37[%c2_781, %c384_782] : memref<20x512xf32, #tpu.memory_space<vmem>>, vector<2x128xf32>
    %c0_783 = arith.constant 0 : index
    %c384_784 = arith.constant 384 : index
    %1568 = vector.load %arg38[%c0_783, %c384_784] : memref<16x512xf32, #tpu.memory_space<vmem>>, vector<2x128xf32>
    %1569 = tpu.concatenate %1561, %1562, %1563, %1564, %1565, %1566, %1567, %1568 in 0 : vector<2x128xf32>, vector<2x128xf32>, vector<2x128xf32>, vector<2x128xf32>, vector<2x128xf32>, vector<2x128xf32>, vector<2x128xf32>, vector<2x128xf32> -> vector<16x128xf32>
    %c8_785 = arith.constant 8 : index
    %c0_786 = arith.constant 0 : index
    %c0_787 = arith.constant 0 : index
    %1570 = vector.load %arg3[%c8_785, %c0_786, %c0_787] : memref<10x2x1xf32, #tpu.memory_space<vmem>>, vector<1x2x1xf32>
    %1571 = vector.shape_cast %1570 : vector<1x2x1xf32> to vector<2x1xf32>
    %c1_788 = arith.constant 1 : index
    %c0_789 = arith.constant 0 : index
    %c0_790 = arith.constant 0 : index
    %1572 = vector.load %arg3[%c1_788, %c0_789, %c0_790] : memref<10x2x1xf32, #tpu.memory_space<vmem>>, vector<1x2x1xf32>
    %1573 = vector.shape_cast %1572 : vector<1x2x1xf32> to vector<2x1xf32>
    %c8_791 = arith.constant 8 : index
    %c0_792 = arith.constant 0 : index
    %c0_793 = arith.constant 0 : index
    %1574 = vector.load %arg5[%c8_791, %c0_792, %c0_793] : memref<10x2x1xf32, #tpu.memory_space<vmem>>, vector<1x2x1xf32>
    %1575 = vector.shape_cast %1574 : vector<1x2x1xf32> to vector<2x1xf32>
    %c1_794 = arith.constant 1 : index
    %c0_795 = arith.constant 0 : index
    %c0_796 = arith.constant 0 : index
    %1576 = vector.load %arg5[%c1_794, %c0_795, %c0_796] : memref<10x2x1xf32, #tpu.memory_space<vmem>>, vector<1x2x1xf32>
    %1577 = vector.shape_cast %1576 : vector<1x2x1xf32> to vector<2x1xf32>
    %1578 = tpu.concatenate %1571, %0 in 0 : vector<2x1xf32>, vector<2x1xf32> -> vector<4x1xf32>
    %1579 = tpu.concatenate %1573, %0 in 0 : vector<2x1xf32>, vector<2x1xf32> -> vector<4x1xf32>
    %1580 = tpu.concatenate %1578, %1579, %1578, %1579 in 0 : vector<4x1xf32>, vector<4x1xf32>, vector<4x1xf32>, vector<4x1xf32> -> vector<16x1xf32>
    %1581 = tpu.concatenate %1575, %0 in 0 : vector<2x1xf32>, vector<2x1xf32> -> vector<4x1xf32>
    %1582 = tpu.concatenate %1577, %0 in 0 : vector<2x1xf32>, vector<2x1xf32> -> vector<4x1xf32>
    %1583 = tpu.concatenate %1581, %1582, %1581, %1582 in 0 : vector<4x1xf32>, vector<4x1xf32>, vector<4x1xf32>, vector<4x1xf32> -> vector<16x1xf32>
    %cst_797 = arith.constant dense<0.000000e+00> : vector<16x512xf32>
    %1584 = tpu.matmul %1553, %844, %cst_797 {dimension_numbers = #tpu.dot_dimension_numbers<[1], [0], [0], [1], [0, 0, 1, 1], [], []>} : vector<16x32xf32>, vector<32x512xf32>, vector<16x512xf32> -> vector<16x512xf32>
    %1585 = vector.extract_strided_slice %1584 {offsets = [0, 0], sizes = [16, 128], strides = [1, 1]} : vector<16x512xf32> to vector<16x128xf32>
    %1586 = vector.broadcast %13 : vector<16x1xf32> to vector<16x128xf32>
    %1587 = arith.mulf %1586, %1585 : vector<16x128xf32>
    %1588 = vector.extract_strided_slice %1584 {offsets = [0, 128], sizes = [16, 128], strides = [1, 1]} : vector<16x512xf32> to vector<16x128xf32>
    %1589 = vector.broadcast %20 : vector<16x1xf32> to vector<16x128xf32>
    %1590 = arith.mulf %1589, %1588 : vector<16x128xf32>
    %1591 = arith.addf %1587, %1590 : vector<16x128xf32>
    %1592 = vector.extract_strided_slice %1584 {offsets = [0, 256], sizes = [16, 128], strides = [1, 1]} : vector<16x512xf32> to vector<16x128xf32>
    %1593 = vector.broadcast %27 : vector<16x1xf32> to vector<16x128xf32>
    %1594 = arith.mulf %1593, %1592 : vector<16x128xf32>
    %1595 = arith.addf %1591, %1594 : vector<16x128xf32>
    %1596 = vector.extract_strided_slice %1584 {offsets = [0, 384], sizes = [16, 128], strides = [1, 1]} : vector<16x512xf32> to vector<16x128xf32>
    %1597 = vector.broadcast %34 : vector<16x1xf32> to vector<16x128xf32>
    %1598 = arith.mulf %1597, %1596 : vector<16x128xf32>
    %1599 = arith.addf %1595, %1598 : vector<16x128xf32>
    %1600 = arith.addf %1569, %1599 : vector<16x128xf32>
    %1601 = arith.negf %1600 : vector<16x128xf32>
    %1602 = math.exp %1601 : vector<16x128xf32>
    %cst_798 = arith.constant 1.000000e+00 : f32
    %1603 = vector.broadcast %cst_798 : f32 to vector<16x128xf32>
    %1604 = arith.addf %1603, %1602 : vector<16x128xf32>
    %1605 = arith.divf %1603, %1604 : vector<16x128xf32>
    %1606 = math.tanh %1600 : vector<16x128xf32>
    %1607 = vector.extract_strided_slice %1605 {offsets = [0, 32], sizes = [16, 32], strides = [1, 1]} : vector<16x128xf32> to vector<16x32xf32>
    %1608 = arith.mulf %1607, %1560 : vector<16x32xf32>
    %1609 = vector.extract_strided_slice %1605 {offsets = [0, 0], sizes = [16, 32], strides = [1, 1]} : vector<16x128xf32> to vector<16x32xf32>
    %1610 = vector.extract_strided_slice %1606 {offsets = [0, 64], sizes = [16, 32], strides = [1, 1]} : vector<16x128xf32> to vector<16x32xf32>
    %1611 = arith.mulf %1609, %1610 : vector<16x32xf32>
    %1612 = arith.addf %1608, %1611 : vector<16x32xf32>
    %1613 = vector.extract_strided_slice %1605 {offsets = [0, 96], sizes = [16, 32], strides = [1, 1]} : vector<16x128xf32> to vector<16x32xf32>
    %1614 = math.tanh %1612 : vector<16x32xf32>
    %1615 = arith.mulf %1613, %1614 : vector<16x32xf32>
    %1616 = vector.broadcast %1580 : vector<16x1xf32> to vector<16x32xf32>
    %1617 = arith.mulf %1616, %1615 : vector<16x32xf32>
    %1618 = vector.broadcast %1583 : vector<16x1xf32> to vector<16x32xf32>
    %1619 = arith.mulf %1618, %1617 : vector<16x32xf32>
    %1620 = arith.addf %1539, %1619 : vector<16x32xf32>
    %1621 = vector.broadcast %1583 : vector<16x1xf32> to vector<16x32xf32>
    %1622 = arith.mulf %1621, %1617 : vector<16x32xf32>
    %cst_799 = arith.constant 1.000000e+00 : f32
    %1623 = vector.broadcast %cst_799 : f32 to vector<16x1xf32>
    %1624 = arith.subf %1623, %1583 : vector<16x1xf32>
    %cst_800 = arith.constant -1.000000e+07 : f32
    %1625 = vector.broadcast %cst_800 : f32 to vector<16x1xf32>
    %1626 = arith.mulf %1624, %1625 : vector<16x1xf32>
    %1627 = vector.broadcast %1626 : vector<16x1xf32> to vector<16x32xf32>
    %1628 = arith.addf %1622, %1627 : vector<16x32xf32>
    %1629 = arith.maximumf %1548, %1628 : vector<16x32xf32>
    %cst_801 = arith.constant 1.000000e+00 : f32
    %1630 = vector.broadcast %cst_801 : f32 to vector<16x1xf32>
    %1631 = arith.subf %1630, %1580 : vector<16x1xf32>
    %1632 = vector.broadcast %1631 : vector<16x1xf32> to vector<16x32xf32>
    %1633 = arith.mulf %1632, %1553 : vector<16x32xf32>
    %1634 = arith.addf %1617, %1633 : vector<16x32xf32>
    %1635 = vector.broadcast %1580 : vector<16x1xf32> to vector<16x32xf32>
    %1636 = arith.mulf %1635, %1612 : vector<16x32xf32>
    %cst_802 = arith.constant 1.000000e+00 : f32
    %1637 = vector.broadcast %cst_802 : f32 to vector<16x1xf32>
    %1638 = arith.subf %1637, %1580 : vector<16x1xf32>
    %1639 = vector.broadcast %1638 : vector<16x1xf32> to vector<16x32xf32>
    %1640 = arith.mulf %1639, %1560 : vector<16x32xf32>
    %1641 = arith.addf %1636, %1640 : vector<16x32xf32>
    %c18_803 = arith.constant 18 : index
    %c0_804 = arith.constant 0 : index
    %1642 = vector.load %arg37[%c18_803, %c0_804] : memref<20x512xf32, #tpu.memory_space<vmem>>, vector<2x128xf32>
    %c14_805 = arith.constant 14 : index
    %c0_806 = arith.constant 0 : index
    %1643 = vector.load %arg38[%c14_805, %c0_806] : memref<16x512xf32, #tpu.memory_space<vmem>>, vector<2x128xf32>
    %c0_807 = arith.constant 0 : index
    %c128_808 = arith.constant 128 : index
    %1644 = vector.load %arg37[%c0_807, %c128_808] : memref<20x512xf32, #tpu.memory_space<vmem>>, vector<2x128xf32>
    %c0_809 = arith.constant 0 : index
    %c128_810 = arith.constant 128 : index
    %1645 = vector.load %arg38[%c0_809, %c128_810] : memref<16x512xf32, #tpu.memory_space<vmem>>, vector<2x128xf32>
    %c18_811 = arith.constant 18 : index
    %c256_812 = arith.constant 256 : index
    %1646 = vector.load %arg37[%c18_811, %c256_812] : memref<20x512xf32, #tpu.memory_space<vmem>>, vector<2x128xf32>
    %c14_813 = arith.constant 14 : index
    %c256_814 = arith.constant 256 : index
    %1647 = vector.load %arg38[%c14_813, %c256_814] : memref<16x512xf32, #tpu.memory_space<vmem>>, vector<2x128xf32>
    %c0_815 = arith.constant 0 : index
    %c384_816 = arith.constant 384 : index
    %1648 = vector.load %arg37[%c0_815, %c384_816] : memref<20x512xf32, #tpu.memory_space<vmem>>, vector<2x128xf32>
    %c0_817 = arith.constant 0 : index
    %c384_818 = arith.constant 384 : index
    %1649 = vector.load %arg38[%c0_817, %c384_818] : memref<16x512xf32, #tpu.memory_space<vmem>>, vector<2x128xf32>
    %1650 = tpu.concatenate %1642, %1643, %1644, %1645, %1646, %1647, %1648, %1649 in 0 : vector<2x128xf32>, vector<2x128xf32>, vector<2x128xf32>, vector<2x128xf32>, vector<2x128xf32>, vector<2x128xf32>, vector<2x128xf32>, vector<2x128xf32> -> vector<16x128xf32>
    %c9_819 = arith.constant 9 : index
    %c0_820 = arith.constant 0 : index
    %c0_821 = arith.constant 0 : index
    %1651 = vector.load %arg3[%c9_819, %c0_820, %c0_821] : memref<10x2x1xf32, #tpu.memory_space<vmem>>, vector<1x2x1xf32>
    %1652 = vector.shape_cast %1651 : vector<1x2x1xf32> to vector<2x1xf32>
    %c0_822 = arith.constant 0 : index
    %c0_823 = arith.constant 0 : index
    %c0_824 = arith.constant 0 : index
    %1653 = vector.load %arg3[%c0_822, %c0_823, %c0_824] : memref<10x2x1xf32, #tpu.memory_space<vmem>>, vector<1x2x1xf32>
    %1654 = vector.shape_cast %1653 : vector<1x2x1xf32> to vector<2x1xf32>
    %c9_825 = arith.constant 9 : index
    %c0_826 = arith.constant 0 : index
    %c0_827 = arith.constant 0 : index
    %1655 = vector.load %arg5[%c9_825, %c0_826, %c0_827] : memref<10x2x1xf32, #tpu.memory_space<vmem>>, vector<1x2x1xf32>
    %1656 = vector.shape_cast %1655 : vector<1x2x1xf32> to vector<2x1xf32>
    %c0_828 = arith.constant 0 : index
    %c0_829 = arith.constant 0 : index
    %c0_830 = arith.constant 0 : index
    %1657 = vector.load %arg5[%c0_828, %c0_829, %c0_830] : memref<10x2x1xf32, #tpu.memory_space<vmem>>, vector<1x2x1xf32>
    %1658 = vector.shape_cast %1657 : vector<1x2x1xf32> to vector<2x1xf32>
    %1659 = tpu.concatenate %1652, %0 in 0 : vector<2x1xf32>, vector<2x1xf32> -> vector<4x1xf32>
    %1660 = tpu.concatenate %1654, %0 in 0 : vector<2x1xf32>, vector<2x1xf32> -> vector<4x1xf32>
    %1661 = tpu.concatenate %1659, %1660, %1659, %1660 in 0 : vector<4x1xf32>, vector<4x1xf32>, vector<4x1xf32>, vector<4x1xf32> -> vector<16x1xf32>
    %1662 = tpu.concatenate %1656, %0 in 0 : vector<2x1xf32>, vector<2x1xf32> -> vector<4x1xf32>
    %1663 = tpu.concatenate %1658, %0 in 0 : vector<2x1xf32>, vector<2x1xf32> -> vector<4x1xf32>
    %1664 = tpu.concatenate %1662, %1663, %1662, %1663 in 0 : vector<4x1xf32>, vector<4x1xf32>, vector<4x1xf32>, vector<4x1xf32> -> vector<16x1xf32>
    %cst_831 = arith.constant dense<0.000000e+00> : vector<16x512xf32>
    %1665 = tpu.matmul %1634, %844, %cst_831 {dimension_numbers = #tpu.dot_dimension_numbers<[1], [0], [0], [1], [0, 0, 1, 1], [], []>} : vector<16x32xf32>, vector<32x512xf32>, vector<16x512xf32> -> vector<16x512xf32>
    %1666 = vector.extract_strided_slice %1665 {offsets = [0, 0], sizes = [16, 128], strides = [1, 1]} : vector<16x512xf32> to vector<16x128xf32>
    %1667 = vector.broadcast %13 : vector<16x1xf32> to vector<16x128xf32>
    %1668 = arith.mulf %1667, %1666 : vector<16x128xf32>
    %1669 = vector.extract_strided_slice %1665 {offsets = [0, 128], sizes = [16, 128], strides = [1, 1]} : vector<16x512xf32> to vector<16x128xf32>
    %1670 = vector.broadcast %20 : vector<16x1xf32> to vector<16x128xf32>
    %1671 = arith.mulf %1670, %1669 : vector<16x128xf32>
    %1672 = arith.addf %1668, %1671 : vector<16x128xf32>
    %1673 = vector.extract_strided_slice %1665 {offsets = [0, 256], sizes = [16, 128], strides = [1, 1]} : vector<16x512xf32> to vector<16x128xf32>
    %1674 = vector.broadcast %27 : vector<16x1xf32> to vector<16x128xf32>
    %1675 = arith.mulf %1674, %1673 : vector<16x128xf32>
    %1676 = arith.addf %1672, %1675 : vector<16x128xf32>
    %1677 = vector.extract_strided_slice %1665 {offsets = [0, 384], sizes = [16, 128], strides = [1, 1]} : vector<16x512xf32> to vector<16x128xf32>
    %1678 = vector.broadcast %34 : vector<16x1xf32> to vector<16x128xf32>
    %1679 = arith.mulf %1678, %1677 : vector<16x128xf32>
    %1680 = arith.addf %1676, %1679 : vector<16x128xf32>
    %1681 = arith.addf %1650, %1680 : vector<16x128xf32>
    %1682 = arith.negf %1681 : vector<16x128xf32>
    %1683 = math.exp %1682 : vector<16x128xf32>
    %cst_832 = arith.constant 1.000000e+00 : f32
    %1684 = vector.broadcast %cst_832 : f32 to vector<16x128xf32>
    %1685 = arith.addf %1684, %1683 : vector<16x128xf32>
    %1686 = arith.divf %1684, %1685 : vector<16x128xf32>
    %1687 = math.tanh %1681 : vector<16x128xf32>
    %1688 = vector.extract_strided_slice %1686 {offsets = [0, 32], sizes = [16, 32], strides = [1, 1]} : vector<16x128xf32> to vector<16x32xf32>
    %1689 = arith.mulf %1688, %1641 : vector<16x32xf32>
    %1690 = vector.extract_strided_slice %1686 {offsets = [0, 0], sizes = [16, 32], strides = [1, 1]} : vector<16x128xf32> to vector<16x32xf32>
    %1691 = vector.extract_strided_slice %1687 {offsets = [0, 64], sizes = [16, 32], strides = [1, 1]} : vector<16x128xf32> to vector<16x32xf32>
    %1692 = arith.mulf %1690, %1691 : vector<16x32xf32>
    %1693 = arith.addf %1689, %1692 : vector<16x32xf32>
    %1694 = vector.extract_strided_slice %1686 {offsets = [0, 96], sizes = [16, 32], strides = [1, 1]} : vector<16x128xf32> to vector<16x32xf32>
    %1695 = math.tanh %1693 : vector<16x32xf32>
    %1696 = arith.mulf %1694, %1695 : vector<16x32xf32>
    %1697 = vector.broadcast %1661 : vector<16x1xf32> to vector<16x32xf32>
    %1698 = arith.mulf %1697, %1696 : vector<16x32xf32>
    %1699 = vector.broadcast %1664 : vector<16x1xf32> to vector<16x32xf32>
    %1700 = arith.mulf %1699, %1698 : vector<16x32xf32>
    %1701 = arith.addf %1620, %1700 : vector<16x32xf32>
    %1702 = vector.broadcast %1664 : vector<16x1xf32> to vector<16x32xf32>
    %1703 = arith.mulf %1702, %1698 : vector<16x32xf32>
    %cst_833 = arith.constant 1.000000e+00 : f32
    %1704 = vector.broadcast %cst_833 : f32 to vector<16x1xf32>
    %1705 = arith.subf %1704, %1664 : vector<16x1xf32>
    %cst_834 = arith.constant -1.000000e+07 : f32
    %1706 = vector.broadcast %cst_834 : f32 to vector<16x1xf32>
    %1707 = arith.mulf %1705, %1706 : vector<16x1xf32>
    %1708 = vector.broadcast %1707 : vector<16x1xf32> to vector<16x32xf32>
    %1709 = arith.addf %1703, %1708 : vector<16x32xf32>
    %1710 = arith.maximumf %1629, %1709 : vector<16x32xf32>
    %c0_835 = arith.constant 0 : index
    %c0_836 = arith.constant 0 : index
    %1711 = vector.load %arg11[%c0_835, %c0_836] : memref<2x1xf32, #tpu.memory_space<vmem>>, vector<2x1xf32>
    %1712 = tpu.reciprocal %1711 {approx = true} : vector<2x1xf32> -> vector<2x1xf32>
    %c0_837 = arith.constant 0 : index
    %c0_838 = arith.constant 0 : index
    %1713 = vector.load %arg12[%c0_837, %c0_838] : memref<2x1xf32, #tpu.memory_space<vmem>>, vector<2x1xf32>
    %1714 = tpu.reciprocal %1713 {approx = true} : vector<2x1xf32> -> vector<2x1xf32>
    %1715 = vector.extract_strided_slice %1701 {offsets = [0, 0], sizes = [2, 32], strides = [1, 1]} : vector<16x32xf32> to vector<2x32xf32>
    %1716 = vector.broadcast %1712 : vector<2x1xf32> to vector<2x32xf32>
    %1717 = arith.mulf %1715, %1716 : vector<2x32xf32>
    %1718 = vector.extract_strided_slice %1701 {offsets = [4, 0], sizes = [2, 32], strides = [1, 1]} : vector<16x32xf32> to vector<2x32xf32>
    %1719 = vector.broadcast %1712 : vector<2x1xf32> to vector<2x32xf32>
    %1720 = arith.mulf %1718, %1719 : vector<2x32xf32>
    %1721 = vector.extract_strided_slice %1710 {offsets = [0, 0], sizes = [2, 32], strides = [1, 1]} : vector<16x32xf32> to vector<2x32xf32>
    %1722 = vector.extract_strided_slice %1710 {offsets = [4, 0], sizes = [2, 32], strides = [1, 1]} : vector<16x32xf32> to vector<2x32xf32>
    %1723 = vector.extract_strided_slice %1701 {offsets = [2, 0], sizes = [2, 32], strides = [1, 1]} : vector<16x32xf32> to vector<2x32xf32>
    %1724 = vector.broadcast %1714 : vector<2x1xf32> to vector<2x32xf32>
    %1725 = arith.mulf %1723, %1724 : vector<2x32xf32>
    %1726 = vector.extract_strided_slice %1701 {offsets = [6, 0], sizes = [2, 32], strides = [1, 1]} : vector<16x32xf32> to vector<2x32xf32>
    %1727 = vector.broadcast %1714 : vector<2x1xf32> to vector<2x32xf32>
    %1728 = arith.mulf %1726, %1727 : vector<2x32xf32>
    %1729 = vector.extract_strided_slice %1710 {offsets = [2, 0], sizes = [2, 32], strides = [1, 1]} : vector<16x32xf32> to vector<2x32xf32>
    %1730 = vector.extract_strided_slice %1710 {offsets = [6, 0], sizes = [2, 32], strides = [1, 1]} : vector<16x32xf32> to vector<2x32xf32>
    %1731 = tpu.concatenate %1717, %1720, %1721, %1722, %1725, %1728, %1729, %1730 in 1 : vector<2x32xf32>, vector<2x32xf32>, vector<2x32xf32>, vector<2x32xf32>, vector<2x32xf32>, vector<2x32xf32>, vector<2x32xf32>, vector<2x32xf32> -> vector<2x256xf32>
    %1732 = vector.extract_strided_slice %1701 {offsets = [8, 0], sizes = [2, 32], strides = [1, 1]} : vector<16x32xf32> to vector<2x32xf32>
    %1733 = vector.broadcast %1712 : vector<2x1xf32> to vector<2x32xf32>
    %1734 = arith.mulf %1732, %1733 : vector<2x32xf32>
    %1735 = vector.extract_strided_slice %1701 {offsets = [12, 0], sizes = [2, 32], strides = [1, 1]} : vector<16x32xf32> to vector<2x32xf32>
    %1736 = vector.broadcast %1712 : vector<2x1xf32> to vector<2x32xf32>
    %1737 = arith.mulf %1735, %1736 : vector<2x32xf32>
    %1738 = vector.extract_strided_slice %1710 {offsets = [8, 0], sizes = [2, 32], strides = [1, 1]} : vector<16x32xf32> to vector<2x32xf32>
    %1739 = vector.extract_strided_slice %1710 {offsets = [12, 0], sizes = [2, 32], strides = [1, 1]} : vector<16x32xf32> to vector<2x32xf32>
    %1740 = vector.extract_strided_slice %1701 {offsets = [10, 0], sizes = [2, 32], strides = [1, 1]} : vector<16x32xf32> to vector<2x32xf32>
    %1741 = vector.broadcast %1714 : vector<2x1xf32> to vector<2x32xf32>
    %1742 = arith.mulf %1740, %1741 : vector<2x32xf32>
    %1743 = vector.extract_strided_slice %1701 {offsets = [14, 0], sizes = [2, 32], strides = [1, 1]} : vector<16x32xf32> to vector<2x32xf32>
    %1744 = vector.broadcast %1714 : vector<2x1xf32> to vector<2x32xf32>
    %1745 = arith.mulf %1743, %1744 : vector<2x32xf32>
    %1746 = vector.extract_strided_slice %1710 {offsets = [10, 0], sizes = [2, 32], strides = [1, 1]} : vector<16x32xf32> to vector<2x32xf32>
    %1747 = vector.extract_strided_slice %1710 {offsets = [14, 0], sizes = [2, 32], strides = [1, 1]} : vector<16x32xf32> to vector<2x32xf32>
    %1748 = tpu.concatenate %1734, %1737, %1738, %1739, %1742, %1745, %1746, %1747 in 1 : vector<2x32xf32>, vector<2x32xf32>, vector<2x32xf32>, vector<2x32xf32>, vector<2x32xf32>, vector<2x32xf32>, vector<2x32xf32>, vector<2x32xf32> -> vector<2x256xf32>
    %1749 = tpu.concatenate %1731, %1748 in 1 : vector<2x256xf32>, vector<2x256xf32> -> vector<2x512xf32>
    %c0_839 = arith.constant 0 : index
    %c0_840 = arith.constant 0 : index
    %1750 = vector.load %arg25[%c0_839, %c0_840] : memref<512x256xf32, #tpu.memory_space<vmem>>, vector<512x256xf32>
    %cst_841 = arith.constant dense<0.000000e+00> : vector<2x256xf32>
    %1751 = tpu.matmul %1749, %1750, %cst_841 {dimension_numbers = #tpu.dot_dimension_numbers<[1], [0], [0], [1], [0, 0, 1, 1], [], []>} : vector<2x512xf32>, vector<512x256xf32>, vector<2x256xf32> -> vector<2x256xf32>
    %c0_842 = arith.constant 0 : index
    %c0_843 = arith.constant 0 : index
    %1752 = vector.load %arg26[%c0_842, %c0_843] : memref<1x256xf32, #tpu.memory_space<vmem>>, vector<1x256xf32>
    %1753 = vector.broadcast %1752 : vector<1x256xf32> to vector<2x256xf32>
    %1754 = arith.addf %1751, %1753 : vector<2x256xf32>
    %1755 = arith.negf %1754 : vector<2x256xf32>
    %1756 = math.exp %1755 : vector<2x256xf32>
    %cst_844 = arith.constant 1.000000e+00 : f32
    %1757 = vector.broadcast %cst_844 : f32 to vector<2x256xf32>
    %1758 = arith.addf %1757, %1756 : vector<2x256xf32>
    %1759 = arith.divf %1757, %1758 : vector<2x256xf32>
    %1760 = arith.mulf %1759, %1731 : vector<2x256xf32>
    %cst_845 = arith.constant 1.000000e+00 : f32
    %1761 = vector.broadcast %cst_845 : f32 to vector<2x256xf32>
    %1762 = arith.subf %1761, %1759 : vector<2x256xf32>
    %1763 = arith.mulf %1762, %1748 : vector<2x256xf32>
    %1764 = arith.addf %1760, %1763 : vector<2x256xf32>
    %c0_846 = arith.constant 0 : index
    %c0_847 = arith.constant 0 : index
    %1765 = vector.load %arg27[%c0_846, %c0_847] : memref<256x32xf32, #tpu.memory_space<vmem>>, vector<256x32xf32>
    %cst_848 = arith.constant dense<0.000000e+00> : vector<2x32xf32>
    %1766 = tpu.matmul %1764, %1765, %cst_848 {dimension_numbers = #tpu.dot_dimension_numbers<[1], [0], [0], [1], [0, 0, 1, 1], [], []>} : vector<2x256xf32>, vector<256x32xf32>, vector<2x32xf32> -> vector<2x32xf32>
    %c0_849 = arith.constant 0 : index
    %c0_850 = arith.constant 0 : index
    %1767 = vector.load %arg28[%c0_849, %c0_850] : memref<1x32xf32, #tpu.memory_space<vmem>>, vector<1x32xf32>
    %1768 = vector.broadcast %1767 : vector<1x32xf32> to vector<2x32xf32>
    %1769 = arith.addf %1766, %1768 : vector<2x32xf32>
    %1770 = math.tanh %1769 : vector<2x32xf32>
    %c0_851 = arith.constant 0 : index
    %c0_852 = arith.constant 0 : index
    %1771 = vector.load %arg29[%c0_851, %c0_852] : memref<32x3xf32, #tpu.memory_space<vmem>>, vector<32x3xf32>
    %cst_853 = arith.constant dense<0.000000e+00> : vector<2x3xf32>
    %1772 = tpu.matmul %1770, %1771, %cst_853 {dimension_numbers = #tpu.dot_dimension_numbers<[1], [0], [0], [1], [0, 0, 1, 1], [], []>} : vector<2x32xf32>, vector<32x3xf32>, vector<2x3xf32> -> vector<2x3xf32>
    %c0_854 = arith.constant 0 : index
    %c0_855 = arith.constant 0 : index
    %1773 = vector.load %arg30[%c0_854, %c0_855] : memref<1x3xf32, #tpu.memory_space<vmem>>, vector<1x3xf32>
    %1774 = vector.broadcast %1773 : vector<1x3xf32> to vector<2x3xf32>
    %1775 = arith.addf %1772, %1774 : vector<2x3xf32>
    %c0_856 = arith.constant 0 : index
    %c0_857 = arith.constant 0 : index
    %1776 = vector.load %arg31[%c0_856, %c0_857] : memref<2x3xf32, #tpu.memory_space<vmem>>, vector<2x3xf32>
    tpu.vector_store %arg31[%c0_856, %c0_857], %1775 {strides = array<i32>} : memref<2x3xf32, #tpu.memory_space<vmem>>, vector<2x3xf32>,
    %cst_858 = arith.constant dense<0xFF800000> : vector<2xf32>
    %1777 = vector.multi_reduction <maximumf>, %1775, %cst_858 [1] : vector<2x3xf32> to vector<2xf32>
    %1778 = vector.shape_cast %1777 : vector<2xf32> to vector<2x1xf32>
    %1779 = vector.broadcast %1778 : vector<2x1xf32> to vector<2x3xf32>
    %1780 = arith.subf %1775, %1779 : vector<2x3xf32>
    %1781 = math.exp %1780 : vector<2x3xf32>
    %cst_859 = arith.constant dense<0.000000e+00> : vector<2xf32>
    %1782 = vector.multi_reduction <add>, %1781, %cst_859 [1] : vector<2x3xf32> to vector<2xf32>
    %1783 = vector.shape_cast %1782 : vector<2xf32> to vector<2x1xf32>
    %1784 = vector.broadcast %1783 : vector<2x1xf32> to vector<2x3xf32>
    %1785 = arith.divf %1781, %1784 : vector<2x3xf32>
    %c0_860 = arith.constant 0 : index
    %c0_861 = arith.constant 0 : index
    %1786 = vector.load %arg32[%c0_860, %c0_861] : memref<2x3xf32, #tpu.memory_space<vmem>>, vector<2x3xf32>
    tpu.vector_store %arg32[%c0_860, %c0_861], %1785 {strides = array<i32>} : memref<2x3xf32, #tpu.memory_space<vmem>>, vector<2x3xf32>,
    return
  }
  func.func @transform_0(%arg0: i32) -> (i32, i32) {
    %c0_i32 = arith.constant 0 : i32
    %c0_i32_0 = arith.constant 0 : i32
    %c0_i32_1 = arith.constant 0 : i32
    return %c0_i32, %c0_i32_0 : i32, i32
  }
  func.func @transform_1(%arg0: i32) -> (i32, i32) {
    %c0_i32 = arith.constant 0 : i32
    %c0_i32_0 = arith.constant 0 : i32
    %c0_i32_1 = arith.constant 0 : i32
    return %c0_i32, %c0_i32_0 : i32, i32
  }
  func.func @transform_2(%arg0: i32) -> (i32, i32, i32) {
    %c0_i32 = arith.constant 0 : i32
    %c0_i32_0 = arith.constant 0 : i32
    %c0_i32_1 = arith.constant 0 : i32
    %c0_i32_2 = arith.constant 0 : i32
    return %c0_i32, %c0_i32_0, %c0_i32_1 : i32, i32, i32
  }
  func.func @transform_3(%arg0: i32) -> (i32, i32, i32) {
    %c0_i32 = arith.constant 0 : i32
    %c0_i32_0 = arith.constant 0 : i32
    %c0_i32_1 = arith.constant 0 : i32
    %c0_i32_2 = arith.constant 0 : i32
    return %c0_i32, %c0_i32_0, %c0_i32_1 : i32, i32, i32
  }
  func.func @transform_4(%arg0: i32) -> (i32, i32, i32) {
    %c0_i32 = arith.constant 0 : i32
    %c0_i32_0 = arith.constant 0 : i32
    %c0_i32_1 = arith.constant 0 : i32
    %c0_i32_2 = arith.constant 0 : i32
    return %c0_i32, %c0_i32_0, %c0_i32_1 : i32, i32, i32
  }
  func.func @transform_5(%arg0: i32) -> (i32, i32, i32) {
    %c0_i32 = arith.constant 0 : i32
    %c0_i32_0 = arith.constant 0 : i32
    %c0_i32_1 = arith.constant 0 : i32
    %c0_i32_2 = arith.constant 0 : i32
    return %c0_i32, %c0_i32_0, %c0_i32_1 : i32, i32, i32
  }
  func.func @transform_6(%arg0: i32) -> (i32, i32) {
    %c0_i32 = arith.constant 0 : i32
    %c0_i32_0 = arith.constant 0 : i32
    %c0_i32_1 = arith.constant 0 : i32
    return %c0_i32, %c0_i32_0 : i32, i32
  }
  func.func @transform_7(%arg0: i32) -> (i32, i32) {
    %c0_i32 = arith.constant 0 : i32
    %c0_i32_0 = arith.constant 0 : i32
    %c0_i32_1 = arith.constant 0 : i32
    return %c0_i32, %c0_i32_0 : i32, i32
  }
  func.func @transform_8(%arg0: i32) -> (i32, i32) {
    %c0_i32 = arith.constant 0 : i32
    %c0_i32_0 = arith.constant 0 : i32
    %c0_i32_1 = arith.constant 0 : i32
    return %c0_i32, %c0_i32_0 : i32, i32
  }
  func.func @transform_9(%arg0: i32) -> (i32, i32) {
    %c0_i32 = arith.constant 0 : i32
    %c0_i32_0 = arith.constant 0 : i32
    %c0_i32_1 = arith.constant 0 : i32
    return %c0_i32, %c0_i32_0 : i32, i32
  }
  func.func @transform_10(%arg0: i32) -> (i32, i32) {
    %c0_i32 = arith.constant 0 : i32
    %c0_i32_0 = arith.constant 0 : i32
    %c0_i32_1 = arith.constant 0 : i32
    return %c0_i32, %c0_i32_0 : i32, i32
  }
  func.func @transform_11(%arg0: i32) -> (i32, i32) {
    %c0_i32 = arith.constant 0 : i32
    %c0_i32_0 = arith.constant 0 : i32
    %c0_i32_1 = arith.constant 0 : i32
    return %c0_i32, %c0_i32_0 : i32, i32
  }
  func.func @transform_12(%arg0: i32) -> (i32, i32) {
    %c0_i32 = arith.constant 0 : i32
    %c0_i32_0 = arith.constant 0 : i32
    %c0_i32_1 = arith.constant 0 : i32
    return %c0_i32, %c0_i32_0 : i32, i32
  }
  func.func @transform_13(%arg0: i32) -> (i32, i32) {
    %c0_i32 = arith.constant 0 : i32
    %c0_i32_0 = arith.constant 0 : i32
    %c0_i32_1 = arith.constant 0 : i32
    return %c0_i32, %c0_i32_0 : i32, i32
  }
  func.func @transform_14(%arg0: i32) -> (i32, i32) {
    %c0_i32 = arith.constant 0 : i32
    %c0_i32_0 = arith.constant 0 : i32
    %c0_i32_1 = arith.constant 0 : i32
    return %c0_i32, %c0_i32_0 : i32, i32
  }
  func.func @transform_15(%arg0: i32) -> (i32, i32) {
    %c0_i32 = arith.constant 0 : i32
    %c0_i32_0 = arith.constant 0 : i32
    %c0_i32_1 = arith.constant 0 : i32
    return %c0_i32, %c0_i32_0 : i32, i32
  }
  func.func @transform_16(%arg0: i32) -> (i32, i32) {
    %c0_i32 = arith.constant 0 : i32
    %c0_i32_0 = arith.constant 0 : i32
    %c0_i32_1 = arith.constant 0 : i32
    return %c0_i32, %c0_i32_0 : i32, i32
  }
  func.func @transform_17(%arg0: i32) -> (i32, i32) {
    %c0_i32 = arith.constant 0 : i32
    %c0_i32_0 = arith.constant 0 : i32
    %c0_i32_1 = arith.constant 0 : i32
    return %c0_i32, %c0_i32_0 : i32, i32
  }
  func.func @transform_18(%arg0: i32) -> (i32, i32) {
    %c0_i32 = arith.constant 0 : i32
    %c0_i32_0 = arith.constant 0 : i32
    %c0_i32_1 = arith.constant 0 : i32
    return %c0_i32, %c0_i32_0 : i32, i32
  }
  func.func @transform_19(%arg0: i32) -> (i32, i32) {
    %c0_i32 = arith.constant 0 : i32
    %c0_i32_0 = arith.constant 0 : i32
    %c0_i32_1 = arith.constant 0 : i32
    return %c0_i32, %c0_i32_0 : i32, i32
  }
  func.func @transform_20(%arg0: i32) -> (i32, i32) {
    %c0_i32 = arith.constant 0 : i32
    %c0_i32_0 = arith.constant 0 : i32
    %c0_i32_1 = arith.constant 0 : i32
    return %c0_i32, %c0_i32_0 : i32, i32
  }
  func.func @transform_21(%arg0: i32) -> (i32, i32) {
    %c0_i32 = arith.constant 0 : i32
    %c0_i32_0 = arith.constant 0 : i32
    %c0_i32_1 = arith.constant 0 : i32
    return %c0_i32, %c0_i32_0 : i32, i32
  }
  func.func @transform_22(%arg0: i32) -> (i32, i32) {
    %c0_i32 = arith.constant 0 : i32
    %c0_i32_0 = arith.constant 0 : i32
    %c0_i32_1 = arith.constant 0 : i32
    return %c0_i32, %c0_i32_0 : i32, i32
  }
  func.func @transform_23(%arg0: i32) -> (i32, i32) {
    %c0_i32 = arith.constant 0 : i32
    %c0_i32_0 = arith.constant 0 : i32
    %c0_i32_1 = arith.constant 0 : i32
    return %c0_i32, %c0_i32_0 : i32, i32
  }
  func.func @transform_24(%arg0: i32) -> (i32, i32) {
    %c0_i32 = arith.constant 0 : i32
    %c0_i32_0 = arith.constant 0 : i32
    %c0_i32_1 = arith.constant 0 : i32
    return %c0_i32, %c0_i32_0 : i32, i32
  }
  func.func @transform_25(%arg0: i32) -> (i32, i32) {
    %c0_i32 = arith.constant 0 : i32
    %c0_i32_0 = arith.constant 0 : i32
    %c0_i32_1 = arith.constant 0 : i32
    return %c0_i32, %c0_i32_0 : i32, i32
  }
  func.func @transform_26(%arg0: i32) -> (i32, i32) {
    %c0_i32 = arith.constant 0 : i32
    %c0_i32_0 = arith.constant 0 : i32
    %c0_i32_1 = arith.constant 0 : i32
    return %c0_i32, %c0_i32_0 : i32, i32
  }
  func.func @transform_27(%arg0: i32) -> (i32, i32) {
    %c0_i32 = arith.constant 0 : i32
    %c0_i32_0 = arith.constant 0 : i32
    %c0_i32_1 = arith.constant 0 : i32
    return %c0_i32, %c0_i32_0 : i32, i32
  }
  func.func @transform_28(%arg0: i32) -> (i32, i32) {
    %c0_i32 = arith.constant 0 : i32
    %c0_i32_0 = arith.constant 0 : i32
    %c0_i32_1 = arith.constant 0 : i32
    return %c0_i32, %c0_i32_0 : i32, i32
  }
  func.func @transform_29(%arg0: i32) -> (i32, i32) {
    %c0_i32 = arith.constant 0 : i32
    %c0_i32_0 = arith.constant 0 : i32
    %c0_i32_1 = arith.constant 0 : i32
    return %c0_i32, %c0_i32_0 : i32, i32
  }
  func.func @transform_30(%arg0: i32) -> (i32, i32) {
    %c0_i32 = arith.constant 0 : i32
    %c0_i32_0 = arith.constant 0 : i32
    %c0_i32_1 = arith.constant 0 : i32
    return %c0_i32, %c0_i32_0 : i32, i32
  }
  func.func @transform_31(%arg0: i32) -> (i32, i32) {
    %c0_i32 = arith.constant 0 : i32
    %c0_i32_0 = arith.constant 0 : i32
    %c0_i32_1 = arith.constant 0 : i32
    return %c0_i32, %c0_i32_0 : i32, i32
  }
}

</mosaic_0001>

<llo_original>
// kernel: mul.9
$region0: #{mul.9}
  %s0 = inlined_call_operand.vmem [shape: f32[8,2], index: 0, kind: input, shape index: {}]
  %s1 = inlined_call_operand.vmem [shape: f32[16], index: 1, kind: output, shape index: {}]
  $region1: #{mul.9} parent=0
    #allocation0 [shape = 'u8[4096]{0}', space=vmem, size = 0x1000, scoped, tag = 'scoped mem for output reshape']
    %v2 = vld [vmem:[%s0] sm:$0x1]
    %vm3 = vcmask 15360
    %4 = vst.msk [vmem:[#allocation0] sm:$0x1] %vm3, %v2
    %s5 = scalar_lea.vmem %s0, 7
    %v6 = vld [vmem:[%s5] sm:$0x1]
    %7 = vrot.lane.b32.xlu0 %v6, 14
    %v8 = vpop.permute.xlu0 %7
    %vm9 = vcmask 130160
    %10 = vst.msk [vmem:[#allocation0] sm:$0x1] %vm9, %v8
    %s11 = scalar_lea.vmem %s0, 6
    %v12 = vld [vmem:[%s11] sm:$0x1]
    %13 = vrot.lane.b32.xlu0 %v12, 12
    %v14 = vpop.permute.xlu0 %13
    %vm15 = vcmask 113760
    %16 = vst.msk [vmem:[#allocation0] sm:$0x1] %vm15, %v14
    %s17 = scalar_lea.vmem %s0, 5
    %v18 = vld [vmem:[%s17] sm:$0x1]
    %19 = vrot.lane.b32.xlu0 %v18, 10
    %v20 = vpop.permute.xlu0 %19
    %vm21 = vcmask 97360
    %22 = vst.msk [vmem:[#allocation0] sm:$0x1] %vm21, %v20
    %s23 = scalar_lea.vmem %s0, 4
    %v24 = vld [vmem:[%s23] sm:$0x1]
    %25 = vrot.lane.b32.xlu0 %v24, 8
    %v26 = vpop.permute.xlu0 %25
    %vm27 = vcmask 80960
    %28 = vst.msk [vmem:[#allocation0] sm:$0x1] %vm27, %v26
    %s29 = scalar_lea.vmem %s0, 3
    %v30 = vld [vmem:[%s29] sm:$0x1]
    %31 = vrot.lane.b32.xlu0 %v30, 6
    %v32 = vpop.permute.xlu0 %31
    %vm33 = vcmask 64560
    %34 = vst.msk [vmem:[#allocation0] sm:$0x1] %vm33, %v32
    %s35 = scalar_lea.vmem %s0, 2
    %v36 = vld [vmem:[%s35] sm:$0x1]
    %37 = vrot.lane.b32.xlu0 %v36, 4
    %v38 = vpop.permute.xlu0 %37
    %vm39 = vcmask 48160
    %40 = vst.msk [vmem:[#allocation0] sm:$0x1] %vm39, %v38
    %s41 = scalar_lea.vmem %s0, 1
    %v42 = vld [vmem:[%s41] sm:$0x1]
    %43 = vrot.lane.b32.xlu0 %v42, 2
    %v44 = vpop.permute.xlu0 %43
    %vm45 = vcmask 31760
    %46 = vst.msk [vmem:[#allocation0] sm:$0x1] %vm45, %v44
    %s48 = ssub.s32 2, 1
    %v49 = vld [vmem:[#allocation0] sm:%s48]
    %s51 = ssub.s32 2, 1
    %52 = vst [vmem:[%s1] sm:%s51] %v49

// kernel: mul.13
$region0: #{mul.13}
  %s0 = inlined_call_operand.vmem [shape: f32[10,2], index: 0, kind: input, shape index: {}]
  %s1 = inlined_call_operand.vmem [shape: f32[20], index: 1, kind: output, shape index: {}]
  $region1: #{mul.13} parent=0
    #allocation0 [shape = 'u8[4096]{0}', space=vmem, size = 0x1000, scoped, tag = 'scoped mem for output reshape']
    %v2 = vld [vmem:[%s0] sm:$0x1]
    %vm3 = vcmask 15360
    %4 = vst.msk [vmem:[#allocation0] sm:$0x1] %vm3, %v2
    %s5 = scalar_lea.vmem %s0, 9
    %v6 = vld [vmem:[%s5] sm:$0x1]
    %7 = vrot.lane.b32.xlu0 %v6, 18
    %v8 = vpop.permute.xlu0 %7
    %vm9 = vcmask 162960
    %10 = vst.msk [vmem:[#allocation0] sm:$0x1] %vm9, %v8
    %s11 = scalar_lea.vmem %s0, 8
    %v12 = vld [vmem:[%s11] sm:$0x1]
    %13 = vrot.lane.b32.xlu0 %v12, 16
    %v14 = vpop.permute.xlu0 %13
    %vm15 = vcmask 146560
    %16 = vst.msk [vmem:[#allocation0] sm:$0x1] %vm15, %v14
    %s17 = scalar_lea.vmem %s0, 7
    %v18 = vld [vmem:[%s17] sm:$0x1]
    %19 = vrot.lane.b32.xlu0 %v18, 14
    %v20 = vpop.permute.xlu0 %19
    %vm21 = vcmask 130160
    %22 = vst.msk [vmem:[#allocation0] sm:$0x1] %vm21, %v20
    %s23 = scalar_lea.vmem %s0, 6
    %v24 = vld [vmem:[%s23] sm:$0x1]
    %25 = vrot.lane.b32.xlu0 %v24, 12
    %v26 = vpop.permute.xlu0 %25
    %vm27 = vcmask 113760
    %28 = vst.msk [vmem:[#allocation0] sm:$0x1] %vm27, %v26
    %s29 = scalar_lea.vmem %s0, 5
    %v30 = vld [vmem:[%s29] sm:$0x1]
    %31 = vrot.lane.b32.xlu0 %v30, 10
    %v32 = vpop.permute.xlu0 %31
    %vm33 = vcmask 97360
    %34 = vst.msk [vmem:[#allocation0] sm:$0x1] %vm33, %v32
    %s35 = scalar_lea.vmem %s0, 4
    %v36 = vld [vmem:[%s35] sm:$0x1]
    %37 = vrot.lane.b32.xlu0 %v36, 8
    %v38 = vpop.permute.xlu0 %37
    %vm39 = vcmask 80960
    %40 = vst.msk [vmem:[#allocation0] sm:$0x1] %vm39, %v38
    %s41 = scalar_lea.vmem %s0, 3
    %v42 = vld [vmem:[%s41] sm:$0x1]
    %43 = vrot.lane.b32.xlu0 %v42, 6
    %v44 = vpop.permute.xlu0 %43
    %vm45 = vcmask 64560
    %46 = vst.msk [vmem:[#allocation0] sm:$0x1] %vm45, %v44
    %s47 = scalar_lea.vmem %s0, 2
    %v48 = vld [vmem:[%s47] sm:$0x1]
    %49 = vrot.lane.b32.xlu0 %v48, 4
    %v50 = vpop.permute.xlu0 %49
    %vm51 = vcmask 48160
    %52 = vst.msk [vmem:[#allocation0] sm:$0x1] %vm51, %v50
    %s53 = scalar_lea.vmem %s0, 1
    %v54 = vld [vmem:[%s53] sm:$0x1]
    %55 = vrot.lane.b32.xlu0 %v54, 2
    %v56 = vpop.permute.xlu0 %55
    %vm57 = vcmask 31760
    %58 = vst.msk [vmem:[#allocation0] sm:$0x1] %vm57, %v56
    %s60 = ssub.s32 2, 1
    %v61 = vld [vmem:[#allocation0] sm:%s60]
    %s63 = ssub.s32 2, 1
    %64 = vst [vmem:[%s1] sm:%s63] %v61

// kernel: esim_f_forward.1
$region0: #{esim_f_forward.1}
  #allocation0 [shape = 'u32[]', space=smem, size = 0x4, offset = 0x4, fixed_abs, tag = 'smem constant byte address 0x4 - core index']
  #allocation1 [shape = 'u32[72,128]{1,0:T(1,128)}', space=vmem, size = 0x9000, scoped, tag = 'internal scratch']
  #allocation2 [shape = 'f32[20,320]{1,0:T(8,128)}', space=vmem, size = 0x9000, scoped, tag = 'scratch operand']
  #allocation3 [shape = 'f32[16,320]{1,0:T(8,128)}', space=vmem, size = 0x6000, scoped, tag = 'scratch operand']
  #allocation4 [shape = 'f32[20,64]{1,0:T(8,128)}', space=vmem, size = 0x3000, scoped, tag = 'scratch operand']
  #allocation5 [shape = 'f32[16,64]{1,0:T(8,128)}', space=vmem, size = 0x2000, scoped, tag = 'scratch operand']
  #allocation6 [shape = 'f32[20,512]{1,0:T(8,128)}', space=vmem, size = 0xc000, scoped, tag = 'scratch operand']
  #allocation7 [shape = 'f32[16,512]{1,0:T(8,128)}', space=vmem, size = 0x8000, scoped, tag = 'scratch operand']
  %s0 = inlined_call_operand.smem [shape: u32[32], index: -1, kind: input, shape index: {}]
  %s1 = sld [smem:[%s0]]
  %s2 = scalar_lea.smem %s0, 1
  %s3 = sld [smem:[%s2]]
  %s4 = scalar_lea.smem %s0, 2
  %s5 = sld [smem:[%s4]]
  %s6 = scalar_lea.smem %s0, 3
  %s7 = sld [smem:[%s6]]
  %s8 = scalar_lea.smem %s0, 4
  %s9 = sld [smem:[%s8]]
  %s10 = scalar_lea.smem %s0, 5
  %s11 = sld [smem:[%s10]]
  %s12 = scalar_lea.smem %s0, 6
  %s13 = sld [smem:[%s12]]
  %s14 = scalar_lea.smem %s0, 7
  %s15 = sld [smem:[%s14]]
  %s16 = scalar_lea.smem %s0, 8
  %s17 = sld [smem:[%s16]]
  %s18 = scalar_lea.smem %s0, 9
  %s19 = sld [smem:[%s18]]
  %s20 = scalar_lea.smem %s0, 10
  %s21 = sld [smem:[%s20]]
  %s22 = scalar_lea.smem %s0, 11
  %s23 = sld [smem:[%s22]]
  %s24 = scalar_lea.smem %s0, 12
  %s25 = sld [smem:[%s24]]
  %s26 = scalar_lea.smem %s0, 13
  %s27 = sld [smem:[%s26]]
  %s28 = scalar_lea.smem %s0, 14
  %s29 = sld [smem:[%s28]]
  %s30 = scalar_lea.smem %s0, 15
  %s31 = sld [smem:[%s30]]
  %s32 = scalar_lea.smem %s0, 16
  %s33 = sld [smem:[%s32]]
  %s34 = scalar_lea.smem %s0, 17
  %s35 = sld [smem:[%s34]]
  %s36 = scalar_lea.smem %s0, 18
  %s37 = sld [smem:[%s36]]
  %s38 = scalar_lea.smem %s0, 19
  %s39 = sld [smem:[%s38]]
  %s40 = scalar_lea.smem %s0, 20
  %s41 = sld [smem:[%s40]]
  %s42 = scalar_lea.smem %s0, 21
  %s43 = sld [smem:[%s42]]
  %s44 = scalar_lea.smem %s0, 22
  %s45 = sld [smem:[%s44]]
  %s46 = scalar_lea.smem %s0, 23
  %s47 = sld [smem:[%s46]]
  %s48 = scalar_lea.smem %s0, 24
  %s49 = sld [smem:[%s48]]
  %s50 = scalar_lea.smem %s0, 25
  %s51 = sld [smem:[%s50]]
  %s52 = scalar_lea.smem %s0, 26
  %s53 = sld [smem:[%s52]]
  %s54 = scalar_lea.smem %s0, 27
  %s55 = sld [smem:[%s54]]
  %s56 = scalar_lea.smem %s0, 28
  %s57 = sld [smem:[%s56]]
  %s58 = scalar_lea.smem %s0, 29
  %s59 = sld [smem:[%s58]]
  %s60 = scalar_lea.smem %s0, 30
  %s61 = sld [smem:[%s60]]
  %s62 = scalar_lea.smem %s0, 31
  %s63 = sld [smem:[%s62]]
  %64 = xla_tuple %s61, %s63
  %s65 = sld [smem:[#allocation0]]
  $region138: #{esim_f_forward.1} parent=0
    _
  %s67 = ssub.s32 1, %s65
  %s68 = scalar_select 0, %s67, %s65
  $region1: #{esim_f_forward.1} parent=0
    #allocation8 [shape = 'u8[1024]{0}', space=vmem, size = 0x400, scoped, tag = 'output window, operand 0, single buffered']
    #allocation9 [shape = 's32[1]{0}', space=sflag, size = 0x4, scoped, tag = 'scoped memory for esim_f_forward.1']
    #allocation10 [shape = 'u8[1024]{0}', space=vmem, size = 0x400, scoped, tag = 'output window, operand 1, single buffered']
    #allocation11 [shape = 's32[1]{0}', space=sflag, size = 0x4, scoped, tag = 'scoped memory for esim_f_forward.1']
    %69 = vsyncpa [#allocation9], 0
    %70 = vsyncpa [#allocation11], 0
    // Predicated region
    $region2: #{esim_f_forward.1} parent=1 // pred_check
      _
    $region3: #{esim_f_forward.1} parent=1 // pred_check_branch
      %72 = sbr.rel (0) target = $region5
    $region4: #{esim_f_forward.1} parent=1 // pred_region
      _
    $region5: #{esim_f_forward.1} parent=1 // pred_fallthru
      _
    // Predicated region
    $region6: #{esim_f_forward.1} parent=1 // pred_check
      _
    $region7: #{esim_f_forward.1} parent=1 // pred_check_branch
      %74 = sbr.rel (0) target = $region9
    $region8: #{esim_f_forward.1} parent=1 // pred_region
      _
    $region9: #{esim_f_forward.1} parent=1 // pred_fallthru
      _
    // Predicated region
    $region10: #{esim_f_forward.1} parent=1 // pred_check
      _
    $region11: #{esim_f_forward.1} parent=1 // pred_check_branch
      %76 = sbr.rel (0) target = $region13
    $region12: #{esim_f_forward.1} parent=1 // pred_region
      _
    $region13: #{esim_f_forward.1} parent=1 // pred_fallthru
      _
    // Predicated region
    $region14: #{esim_f_forward.1} parent=1 // pred_check
      _
    $region15: #{esim_f_forward.1} parent=1 // pred_check_branch
      %78 = sbr.rel (0) target = $region17
    $region16: #{esim_f_forward.1} parent=1 // pred_region
      _
    $region17: #{esim_f_forward.1} parent=1 // pred_fallthru
      _
    // Predicated region
    $region18: #{esim_f_forward.1} parent=1 // pred_check
      _
    $region19: #{esim_f_forward.1} parent=1 // pred_check_branch
      %80 = sbr.rel (0) target = $region21
    $region20: #{esim_f_forward.1} parent=1 // pred_region
      _
    $region21: #{esim_f_forward.1} parent=1 // pred_fallthru
      _
    // Predicated region
    $region22: #{esim_f_forward.1} parent=1 // pred_check
      _
    $region23: #{esim_f_forward.1} parent=1 // pred_check_branch
      %82 = sbr.rel (0) target = $region25
    $region24: #{esim_f_forward.1} parent=1 // pred_region
      _
    $region25: #{esim_f_forward.1} parent=1 // pred_fallthru
      _
    // Predicated region
    $region26: #{esim_f_forward.1} parent=1 // pred_check
      _
    $region27: #{esim_f_forward.1} parent=1 // pred_check_branch
      %84 = sbr.rel (0) target = $region29
    $region28: #{esim_f_forward.1} parent=1 // pred_region
      _
    $region29: #{esim_f_forward.1} parent=1 // pred_fallthru
      _
    // Predicated region
    $region30: #{esim_f_forward.1} parent=1 // pred_check
      _
    $region31: #{esim_f_forward.1} parent=1 // pred_check_branch
      %86 = sbr.rel (0) target = $region33
    $region32: #{esim_f_forward.1} parent=1 // pred_region
      _
    $region33: #{esim_f_forward.1} parent=1 // pred_fallthru
      _
    // Predicated region
    $region34: #{esim_f_forward.1} parent=1 // pred_check
      _
    $region35: #{esim_f_forward.1} parent=1 // pred_check_branch
      %88 = sbr.rel (0) target = $region37
    $region36: #{esim_f_forward.1} parent=1 // pred_region
      _
    $region37: #{esim_f_forward.1} parent=1 // pred_fallthru
      _
    // Predicated region
    $region38: #{esim_f_forward.1} parent=1 // pred_check
      _
    $region39: #{esim_f_forward.1} parent=1 // pred_check_branch
      %90 = sbr.rel (0) target = $region41
    $region40: #{esim_f_forward.1} parent=1 // pred_region
      _
    $region41: #{esim_f_forward.1} parent=1 // pred_fallthru
      _
    // Predicated region
    $region42: #{esim_f_forward.1} parent=1 // pred_check
      _
    $region43: #{esim_f_forward.1} parent=1 // pred_check_branch
      %92 = sbr.rel (0) target = $region45
    $region44: #{esim_f_forward.1} parent=1 // pred_region
      _
    $region45: #{esim_f_forward.1} parent=1 // pred_fallthru
      _
    // Predicated region
    $region46: #{esim_f_forward.1} parent=1 // pred_check
      _
    $region47: #{esim_f_forward.1} parent=1 // pred_check_branch
      %94 = sbr.rel (0) target = $region49
    $region48: #{esim_f_forward.1} parent=1 // pred_region
      _
    $region49: #{esim_f_forward.1} parent=1 // pred_fallthru
      _
    // Predicated region
    $region50: #{esim_f_forward.1} parent=1 // pred_check
      _
    $region51: #{esim_f_forward.1} parent=1 // pred_check_branch
      %96 = sbr.rel (0) target = $region53
    $region52: #{esim_f_forward.1} parent=1 // pred_region
      _
    $region53: #{esim_f_forward.1} parent=1 // pred_fallthru
      _
    // Predicated region
    $region54: #{esim_f_forward.1} parent=1 // pred_check
      _
    $region55: #{esim_f_forward.1} parent=1 // pred_check_branch
      %98 = sbr.rel (0) target = $region57
    $region56: #{esim_f_forward.1} parent=1 // pred_region
      _
    $region57: #{esim_f_forward.1} parent=1 // pred_fallthru
      _
    // Predicated region
    $region58: #{esim_f_forward.1} parent=1 // pred_check
      _
    $region59: #{esim_f_forward.1} parent=1 // pred_check_branch
      %100 = sbr.rel (0) target = $region61
    $region60: #{esim_f_forward.1} parent=1 // pred_region
      _
    $region61: #{esim_f_forward.1} parent=1 // pred_fallthru
      _
    // Predicated region
    $region62: #{esim_f_forward.1} parent=1 // pred_check
      _
    $region63: #{esim_f_forward.1} parent=1 // pred_check_branch
      %102 = sbr.rel (0) target = $region65
    $region64: #{esim_f_forward.1} parent=1 // pred_region
      _
    $region65: #{esim_f_forward.1} parent=1 // pred_fallthru
      _
    // Predicated region
    $region66: #{esim_f_forward.1} parent=1 // pred_check
      _
    $region67: #{esim_f_forward.1} parent=1 // pred_check_branch
      %104 = sbr.rel (0) target = $region69
    $region68: #{esim_f_forward.1} parent=1 // pred_region
      _
    $region69: #{esim_f_forward.1} parent=1 // pred_fallthru
      _
    // Predicated region
    $region70: #{esim_f_forward.1} parent=1 // pred_check
      _
    $region71: #{esim_f_forward.1} parent=1 // pred_check_branch
      %106 = sbr.rel (0) target = $region73
    $region72: #{esim_f_forward.1} parent=1 // pred_region
      _
    $region73: #{esim_f_forward.1} parent=1 // pred_fallthru
      _
    // Predicated region
    $region74: #{esim_f_forward.1} parent=1 // pred_check
      _
    $region75: #{esim_f_forward.1} parent=1 // pred_check_branch
      %108 = sbr.rel (0) target = $region77
    $region76: #{esim_f_forward.1} parent=1 // pred_region
      _
    $region77: #{esim_f_forward.1} parent=1 // pred_fallthru
      _
    // Predicated region
    $region78: #{esim_f_forward.1} parent=1 // pred_check
      _
    $region79: #{esim_f_forward.1} parent=1 // pred_check_branch
      %110 = sbr.rel (0) target = $region81
    $region80: #{esim_f_forward.1} parent=1 // pred_region
      _
    $region81: #{esim_f_forward.1} parent=1 // pred_fallthru
      _
    // Predicated region
    $region82: #{esim_f_forward.1} parent=1 // pred_check
      _
    $region83: #{esim_f_forward.1} parent=1 // pred_check_branch
      %112 = sbr.rel (0) target = $region85
    $region84: #{esim_f_forward.1} parent=1 // pred_region
      _
    $region85: #{esim_f_forward.1} parent=1 // pred_fallthru
      _
    // Predicated region
    $region86: #{esim_f_forward.1} parent=1 // pred_check
      _
    $region87: #{esim_f_forward.1} parent=1 // pred_check_branch
      %114 = sbr.rel (0) target = $region89
    $region88: #{esim_f_forward.1} parent=1 // pred_region
      _
    $region89: #{esim_f_forward.1} parent=1 // pred_fallthru
      _
    // Predicated region
    $region90: #{esim_f_forward.1} parent=1 // pred_check
      _
    $region91: #{esim_f_forward.1} parent=1 // pred_check_branch
      %116 = sbr.rel (0) target = $region93
    $region92: #{esim_f_forward.1} parent=1 // pred_region
      _
    $region93: #{esim_f_forward.1} parent=1 // pred_fallthru
      _
    // Predicated region
    $region94: #{esim_f_forward.1} parent=1 // pred_check
      _
    $region95: #{esim_f_forward.1} parent=1 // pred_check_branch
      %118 = sbr.rel (0) target = $region97
    $region96: #{esim_f_forward.1} parent=1 // pred_region
      _
    $region97: #{esim_f_forward.1} parent=1 // pred_fallthru
      _
    // Predicated region
    $region98: #{esim_f_forward.1} parent=1 // pred_check
      _
    $region99: #{esim_f_forward.1} parent=1 // pred_check_branch
      %120 = sbr.rel (0) target = $region101
    $region100: #{esim_f_forward.1} parent=1 // pred_region
      _
    $region101: #{esim_f_forward.1} parent=1 // pred_fallthru
      _
    // Predicated region
    $region102: #{esim_f_forward.1} parent=1 // pred_check
      _
    $region103: #{esim_f_forward.1} parent=1 // pred_check_branch
      %122 = sbr.rel (0) target = $region105
    $region104: #{esim_f_forward.1} parent=1 // pred_region
      _
    $region105: #{esim_f_forward.1} parent=1 // pred_fallthru
      _
    // Predicated region
    $region106: #{esim_f_forward.1} parent=1 // pred_check
      _
    $region107: #{esim_f_forward.1} parent=1 // pred_check_branch
      %124 = sbr.rel (0) target = $region109
    $region108: #{esim_f_forward.1} parent=1 // pred_region
      _
    $region109: #{esim_f_forward.1} parent=1 // pred_fallthru
      _
    // Predicated region
    $region110: #{esim_f_forward.1} parent=1 // pred_check
      _
    $region111: #{esim_f_forward.1} parent=1 // pred_check_branch
      %126 = sbr.rel (0) target = $region113
    $region112: #{esim_f_forward.1} parent=1 // pred_region
      _
    $region113: #{esim_f_forward.1} parent=1 // pred_fallthru
      _
    // Predicated region
    $region114: #{esim_f_forward.1} parent=1 // pred_check
      _
    $region115: #{esim_f_forward.1} parent=1 // pred_check_branch
      %128 = sbr.rel (0) target = $region117
    $region116: #{esim_f_forward.1} parent=1 // pred_region
      _
    $region117: #{esim_f_forward.1} parent=1 // pred_fallthru
      _
    // Predicated region
    $region118: #{esim_f_forward.1} parent=1 // pred_check
      _
    $region119: #{esim_f_forward.1} parent=1 // pred_check_branch
      %130 = sbr.rel (0) target = $region121
    $region120: #{esim_f_forward.1} parent=1 // pred_region
      _
    $region121: #{esim_f_forward.1} parent=1 // pred_fallthru
      _
    %v131 = vlaneseq
    %v132 = vshrl.u32 %v131, 7
    %vm133 = vcmp.lt.s32.totalorder %v132, 4
    %v134 = vsel %vm133, 1, 0
    %v135 = vcvt.s32.f32 %v134
    %v136 = vadd.s32 %v132, 8
    %vm137 = vcmp.ge.s32.totalorder %v132, 0
    %vm138 = vcmp.ge.s32.totalorder %v136, 0
    %vm139 = vcmp.lt.s32.totalorder %v136, 4
    %vm140 = vmand %vm137, %vm133
    %vm141 = vmand %vm138, %vm139
    %v142 = vsel %vm140, 1, 0
    %v143 = vsel %vm141, 1, 0
    %v144 = vcvt.s32.f32 %v142
    %v145 = vcvt.s32.f32 %v143
    %vm146 = vcmp.ge.s32.totalorder %v132, 4
    %vm147 = vcmp.ge.s32.totalorder %v136, 4
    %vm148 = vcmp.lt.s32.totalorder %v132, 8
    %vm149 = vcmp.lt.s32.totalorder %v136, 8
    %vm150 = vmand %vm146, %vm148
    %vm151 = vmand %vm147, %vm149
    %v152 = vsel %vm150, 1, 0
    %v153 = vsel %vm151, 1, 0
    %v154 = vcvt.s32.f32 %v152
    %v155 = vcvt.s32.f32 %v153
    %vm156 = vcmp.ge.s32.totalorder %v132, 8
    %vm157 = vcmp.ge.s32.totalorder %v136, 8
    %vm158 = vcmp.lt.s32.totalorder %v132, 12
    %vm159 = vcmp.lt.s32.totalorder %v136, 12
    %vm160 = vmand %vm156, %vm158
    %vm161 = vmand %vm157, %vm159
    %v162 = vsel %vm160, 1, 0
    %v163 = vsel %vm161, 1, 0
    %v164 = vcvt.s32.f32 %v162
    %v165 = vcvt.s32.f32 %v163
    %vm166 = vcmp.ge.s32.totalorder %v132, 12
    %vm167 = vcmp.ge.s32.totalorder %v136, 12
    %vm168 = vcmp.lt.s32.totalorder %v132, 16
    %vm169 = vcmp.lt.s32.totalorder %v136, 16
    %vm170 = vmand %vm166, %vm168
    %vm171 = vmand %vm167, %vm169
    %v172 = vsel %vm170, 1, 0
    %v173 = vsel %vm171, 1, 0
    %v174 = vcvt.s32.f32 %v172
    %v175 = vcvt.s32.f32 %v173
    %v176 = vld [vmem:[%s1] sm:$0xff]
    %v177 = vld [vmem:[%s1 + $0x8] sm:$0xff]
    %v178 = vld [vmem:[%s1 + $0x10] sm:$0xf]
    %v179 = vld [vmem:[%s25] sm:$0xff]
    %v180 = vld [vmem:[%s25 + $0x8] sm:$0xff]
    %v181 = vld [vmem:[%s25 + $0x10] sm:$0xff]
    %v182 = vld [vmem:[%s25 + $0x18] sm:$0xff]
    %v183 = vld [vmem:[%s25 + $0x20] sm:$0xff]
    %v184 = vld [vmem:[%s25 + $0x28] sm:$0xff]
    %v185 = vld [vmem:[%s25 + $0x30] sm:$0xff]
    %v186 = vld [vmem:[%s25 + $0x38] sm:$0xff]
    %v187 = vld [vmem:[%s25 + $0x40] sm:$0xff]
    %v188 = vld [vmem:[%s25 + $0x48] sm:$0xff]
    %v189 = vld [vmem:[%s25 + $0x50] sm:$0xff]
    %v190 = vld [vmem:[%s25 + $0x58] sm:$0xff]
    %v191 = vld [vmem:[%s25 + $0x60] sm:$0xff]
    %v192 = vld [vmem:[%s25 + $0x68] sm:$0xff]
    %v193 = vld [vmem:[%s25 + $0x70] sm:$0xff]
    %v194 = vld [vmem:[%s25 + $0x78] sm:$0xff]
    %v195 = vld [vmem:[%s25 + $0x80] sm:$0xff]
    %v196 = vld [vmem:[%s25 + $0x88] sm:$0xff]
    %v197 = vld [vmem:[%s25 + $0x90] sm:$0xff]
    %v198 = vld [vmem:[%s25 + $0x98] sm:$0xff]
    %v199 = vld [vmem:[%s25 + $0xa0] sm:$0xff]
    %v200 = vld [vmem:[%s25 + $0xa8] sm:$0xff]
    %v201 = vld [vmem:[%s25 + $0xb0] sm:$0xff]
    %v202 = vld [vmem:[%s25 + $0xb8] sm:$0xff]
    %v203 = vld [vmem:[%s25 + $0xc0] sm:$0xff]
    %v204 = vld [vmem:[%s25 + $0xc8] sm:$0xff]
    %v205 = vld [vmem:[%s25 + $0xd0] sm:$0xff]
    %v206 = vld [vmem:[%s25 + $0xd8] sm:$0xff]
    %v207 = vld [vmem:[%s25 + $0xe0] sm:$0xff]
    %v208 = vld [vmem:[%s25 + $0xe8] sm:$0xff]
    %v209 = vld [vmem:[%s25 + $0xf0] sm:$0xff]
    %v210 = vld [vmem:[%s25 + $0xf8] sm:$0xff]
    %v211 = vld [vmem:[%s25 + $0x100] sm:$0xff]
    %v212 = vld [vmem:[%s25 + $0x108] sm:$0xff]
    %v213 = vld [vmem:[%s25 + $0x110] sm:$0xff]
    %v214 = vld [vmem:[%s25 + $0x118] sm:$0xff]
    %v215 = vld [vmem:[%s25 + $0x120] sm:$0xff]
    %v216 = vld [vmem:[%s25 + $0x128] sm:$0xff]
    %v217 = vld [vmem:[%s25 + $0x130] sm:$0xff]
    %v218 = vld [vmem:[%s25 + $0x138] sm:$0xff]
    %v219 = vld [vmem:[%s25 + $0x140] sm:$0xff]
    %v220 = vld [vmem:[%s25 + $0x148] sm:$0xff]
    %v221 = vld [vmem:[%s25 + $0x150] sm:$0x3]
    %v222 = vld [vmem:[%s25 + $0x158] sm:$0x3]
    %v223 = vld [vmem:[%s25 + $0x160] sm:$0x3]
    %v224 = vld [vmem:[%s27] sm:$0x7]
    %v226 = vperm.slane %v224, 0
    %v227 = vperm.slane %v224, 1
    %v228 = vperm.slane %v224, 2
    %vm232 = vcmask 932864
    %v234 = vsel %vm232, %v176, 0
    %v237 = vsel %vm232, %v177, 0
    %v240 = vsel %vm232, %v178, 0
    %vm242 = vcmask 1041408
    %v244 = vsel %vm242, %v221, 0
    %v247 = vsel %vm242, %v222, 0
    %v250 = vsel %vm242, %v223, 0
    %252 = vmatpush.msra.mxu0 0.0
    %253 = vmatpush.msra.mxu0 %v244
    %254 = vmatpush.msra.mxu0 %v218
    %255 = vmatpush.msra.mxu0 %v215
    %256 = vmatpush.msra.mxu0 %v212
    %257 = vmatpush.msra.mxu0 %v209
    %258 = vmatpush.msra.mxu0 %v206
    %259 = vmatpush.msra.mxu0 %v203
    %260 = vmatpush.msra.mxu0 %v200
    %261 = vmatpush.msra.mxu0 %v197
    %262 = vmatpush.msra.mxu0 %v194
    %263 = vmatpush.msra.mxu0 %v191
    %264 = vmatpush.msra.mxu0 %v188
    %265 = vmatpush.msra.mxu0 %v185
    %266 = vmatpush.msra.mxu0 %v182
    %267 = vmatpush.msra.mxu0 %v179
    %268 = vmatmul.f32.gmra.mxu0 %v234
    %v269 = vpop.f32.mrf.mxu0
    %v270 = vadd.f32 %v226, %v269
    %271 = vmatmul.f32.gmra.mxu0 %v237
    %v272 = vpop.f32.mrf.mxu0
    %v273 = vadd.f32 %v226, %v272
    %274 = vmatmul.f32.gmra.mxu0 %v240
    %v275 = vpop.f32.mrf.mxu0
    %v276 = vadd.f32 %v226, %v275
    %277 = vdwg.mxu0
    %278 = vmatpush.msra.mxu0 0.0
    %279 = vmatpush.msra.mxu0 %v247
    %280 = vmatpush.msra.mxu0 %v219
    %281 = vmatpush.msra.mxu0 %v216
    %282 = vmatpush.msra.mxu0 %v213
    %283 = vmatpush.msra.mxu0 %v210
    %284 = vmatpush.msra.mxu0 %v207
    %285 = vmatpush.msra.mxu0 %v204
    %286 = vmatpush.msra.mxu0 %v201
    %287 = vmatpush.msra.mxu0 %v198
    %288 = vmatpush.msra.mxu0 %v195
    %289 = vmatpush.msra.mxu0 %v192
    %290 = vmatpush.msra.mxu0 %v189
    %291 = vmatpush.msra.mxu0 %v186
    %292 = vmatpush.msra.mxu0 %v183
    %293 = vmatpush.msra.mxu0 %v180
    %294 = vmatmul.f32.gmra.mxu0 %v234
    %v295 = vpop.f32.mrf.mxu0
    %v296 = vadd.f32 %v227, %v295
    %297 = vmatmul.f32.gmra.mxu0 %v237
    %v298 = vpop.f32.mrf.mxu0
    %v299 = vadd.f32 %v227, %v298
    %300 = vmatmul.f32.gmra.mxu0 %v240
    %v301 = vpop.f32.mrf.mxu0
    %v302 = vadd.f32 %v227, %v301
    %303 = vdwg.mxu0
    %304 = vmatpush.msra.mxu0 0.0
    %305 = vmatpush.msra.mxu0 %v250
    %306 = vmatpush.msra.mxu0 %v220
    %307 = vmatpush.msra.mxu0 %v217
    %308 = vmatpush.msra.mxu0 %v214
    %309 = vmatpush.msra.mxu0 %v211
    %310 = vmatpush.msra.mxu0 %v208
    %311 = vmatpush.msra.mxu0 %v205
    %312 = vmatpush.msra.mxu0 %v202
    %313 = vmatpush.msra.mxu0 %v199
    %314 = vmatpush.msra.mxu0 %v196
    %315 = vmatpush.msra.mxu0 %v193
    %316 = vmatpush.msra.mxu0 %v190
    %317 = vmatpush.msra.mxu0 %v187
    %318 = vmatpush.msra.mxu0 %v184
    %319 = vmatpush.msra.mxu0 %v181
    %320 = vmatmul.f32.gmra.mxu0 %v234
    %v321 = vpop.f32.mrf.mxu0
    %v322 = vadd.f32 %v228, %v321
    %323 = vmatmul.f32.gmra.mxu0 %v237
    %v324 = vpop.f32.mrf.mxu0
    %v325 = vadd.f32 %v228, %v324
    %326 = vmatmul.f32.gmra.mxu0 %v240
    %v327 = vpop.f32.mrf.mxu0
    %v328 = vadd.f32 %v228, %v327
    %329 = vdwg.mxu0
    %330 = vst [vmem:[#allocation2] sm:$0xff] %v270
    %331 = vst [vmem:[#allocation2 + $0x8] sm:$0xff] %v296
    %vm332 = vcmask 523264
    %333 = vst.msk [vmem:[#allocation2 + $0x10] sm:$0xff] %vm332, %v322
    %334 = vst [vmem:[#allocation2 + $0x18] sm:$0xff] %v273
    %335 = vst [vmem:[#allocation2 + $0x20] sm:$0xff] %v299
    %336 = vst.msk [vmem:[#allocation2 + $0x28] sm:$0xff] %vm332, %v325
    %337 = vst [vmem:[#allocation2 + $0x30] sm:$0xf] %v276
    %338 = vst [vmem:[#allocation2 + $0x38] sm:$0xf] %v302
    %vm339 = vcmask 519168
    %340 = vst.msk [vmem:[#allocation2 + $0x40] sm:$0xf] %vm339, %v328
    %v341 = vld [vmem:[%s3] sm:$0xff]
    %v342 = vld [vmem:[%s3 + $0x8] sm:$0xff]
    %v343 = vld [vmem:[%s25] sm:$0xff]
    %v344 = vld [vmem:[%s25 + $0x8] sm:$0xff]
    %v345 = vld [vmem:[%s25 + $0x10] sm:$0xff]
    %v346 = vld [vmem:[%s25 + $0x18] sm:$0xff]
    %v347 = vld [vmem:[%s25 + $0x20] sm:$0xff]
    %v348 = vld [vmem:[%s25 + $0x28] sm:$0xff]
    %v349 = vld [vmem:[%s25 + $0x30] sm:$0xff]
    %v350 = vld [vmem:[%s25 + $0x38] sm:$0xff]
    %v351 = vld [vmem:[%s25 + $0x40] sm:$0xff]
    %v352 = vld [vmem:[%s25 + $0x48] sm:$0xff]
    %v353 = vld [vmem:[%s25 + $0x50] sm:$0xff]
    %v354 = vld [vmem:[%s25 + $0x58] sm:$0xff]
    %v355 = vld [vmem:[%s25 + $0x60] sm:$0xff]
    %v356 = vld [vmem:[%s25 + $0x68] sm:$0xff]
    %v357 = vld [vmem:[%s25 + $0x70] sm:$0xff]
    %v358 = vld [vmem:[%s25 + $0x78] sm:$0xff]
    %v359 = vld [vmem:[%s25 + $0x80] sm:$0xff]
    %v360 = vld [vmem:[%s25 + $0x88] sm:$0xff]
    %v361 = vld [vmem:[%s25 + $0x90] sm:$0xff]
    %v362 = vld [vmem:[%s25 + $0x98] sm:$0xff]
    %v363 = vld [vmem:[%s25 + $0xa0] sm:$0xff]
    %v364 = vld [vmem:[%s25 + $0xa8] sm:$0xff]
    %v365 = vld [vmem:[%s25 + $0xb0] sm:$0xff]
    %v366 = vld [vmem:[%s25 + $0xb8] sm:$0xff]
    %v367 = vld [vmem:[%s25 + $0xc0] sm:$0xff]
    %v368 = vld [vmem:[%s25 + $0xc8] sm:$0xff]
    %v369 = vld [vmem:[%s25 + $0xd0] sm:$0xff]
    %v370 = vld [vmem:[%s25 + $0xd8] sm:$0xff]
    %v371 = vld [vmem:[%s25 + $0xe0] sm:$0xff]
    %v372 = vld [vmem:[%s25 + $0xe8] sm:$0xff]
    %v373 = vld [vmem:[%s25 + $0xf0] sm:$0xff]
    %v374 = vld [vmem:[%s25 + $0xf8] sm:$0xff]
    %v375 = vld [vmem:[%s25 + $0x100] sm:$0xff]
    %v376 = vld [vmem:[%s25 + $0x108] sm:$0xff]
    %v377 = vld [vmem:[%s25 + $0x110] sm:$0xff]
    %v378 = vld [vmem:[%s25 + $0x118] sm:$0xff]
    %v379 = vld [vmem:[%s25 + $0x120] sm:$0xff]
    %v380 = vld [vmem:[%s25 + $0x128] sm:$0xff]
    %v381 = vld [vmem:[%s25 + $0x130] sm:$0xff]
    %v382 = vld [vmem:[%s25 + $0x138] sm:$0xff]
    %v383 = vld [vmem:[%s25 + $0x140] sm:$0xff]
    %v384 = vld [vmem:[%s25 + $0x148] sm:$0xff]
    %v385 = vld [vmem:[%s25 + $0x150] sm:$0x3]
    %v386 = vld [vmem:[%s25 + $0x158] sm:$0x3]
    %v387 = vld [vmem:[%s25 + $0x160] sm:$0x3]
    %v388 = vld [vmem:[%s27] sm:$0x7]
    %v390 = vperm.slane %v388, 0
    %v391 = vperm.slane %v388, 1
    %v392 = vperm.slane %v388, 2
    %v397 = vsel %vm232, %v341, 0
    %v400 = vsel %vm232, %v342, 0
    %v403 = vsel %vm242, %v385, 0
    %v406 = vsel %vm242, %v386, 0
    %v409 = vsel %vm242, %v387, 0
    %411 = vmatpush.msra.mxu0 0.0
    %412 = vmatpush.msra.mxu0 %v403
    %413 = vmatpush.msra.mxu0 %v382
    %414 = vmatpush.msra.mxu0 %v379
    %415 = vmatpush.msra.mxu0 %v376
    %416 = vmatpush.msra.mxu0 %v373
    %417 = vmatpush.msra.mxu0 %v370
    %418 = vmatpush.msra.mxu0 %v367
    %419 = vmatpush.msra.mxu0 %v364
    %420 = vmatpush.msra.mxu0 %v361
    %421 = vmatpush.msra.mxu0 %v358
    %422 = vmatpush.msra.mxu0 %v355
    %423 = vmatpush.msra.mxu0 %v352
    %424 = vmatpush.msra.mxu0 %v349
    %425 = vmatpush.msra.mxu0 %v346
    %426 = vmatpush.msra.mxu0 %v343
    %427 = vmatmul.f32.gmra.mxu0 %v397
    %v428 = vpop.f32.mrf.mxu0
    %v429 = vadd.f32 %v390, %v428
    %430 = vmatmul.f32.gmra.mxu0 %v400
    %v431 = vpop.f32.mrf.mxu0
    %v432 = vadd.f32 %v390, %v431
    %433 = vdwg.mxu0
    %434 = vmatpush.msra.mxu0 0.0
    %435 = vmatpush.msra.mxu0 %v406
    %436 = vmatpush.msra.mxu0 %v383
    %437 = vmatpush.msra.mxu0 %v380
    %438 = vmatpush.msra.mxu0 %v377
    %439 = vmatpush.msra.mxu0 %v374
    %440 = vmatpush.msra.mxu0 %v371
    %441 = vmatpush.msra.mxu0 %v368
    %442 = vmatpush.msra.mxu0 %v365
    %443 = vmatpush.msra.mxu0 %v362
    %444 = vmatpush.msra.mxu0 %v359
    %445 = vmatpush.msra.mxu0 %v356
    %446 = vmatpush.msra.mxu0 %v353
    %447 = vmatpush.msra.mxu0 %v350
    %448 = vmatpush.msra.mxu0 %v347
    %449 = vmatpush.msra.mxu0 %v344
    %450 = vmatmul.f32.gmra.mxu0 %v397
    %v451 = vpop.f32.mrf.mxu0
    %v452 = vadd.f32 %v391, %v451
    %453 = vmatmul.f32.gmra.mxu0 %v400
    %v454 = vpop.f32.mrf.mxu0
    %v455 = vadd.f32 %v391, %v454
    %456 = vdwg.mxu0
    %457 = vmatpush.msra.mxu0 0.0
    %458 = vmatpush.msra.mxu0 %v409
    %459 = vmatpush.msra.mxu0 %v384
    %460 = vmatpush.msra.mxu0 %v381
    %461 = vmatpush.msra.mxu0 %v378
    %462 = vmatpush.msra.mxu0 %v375
    %463 = vmatpush.msra.mxu0 %v372
    %464 = vmatpush.msra.mxu0 %v369
    %465 = vmatpush.msra.mxu0 %v366
    %466 = vmatpush.msra.mxu0 %v363
    %467 = vmatpush.msra.mxu0 %v360
    %468 = vmatpush.msra.mxu0 %v357
    %469 = vmatpush.msra.mxu0 %v354
    %470 = vmatpush.msra.mxu0 %v351
    %471 = vmatpush.msra.mxu0 %v348
    %472 = vmatpush.msra.mxu0 %v345
    %473 = vmatmul.f32.gmra.mxu0 %v397
    %v474 = vpop.f32.mrf.mxu0
    %v475 = vadd.f32 %v392, %v474
    %476 = vmatmul.f32.gmra.mxu0 %v400
    %v477 = vpop.f32.mrf.mxu0
    %v478 = vadd.f32 %v392, %v477
    %479 = vdwg.mxu0
    %480 = vst [vmem:[#allocation3] sm:$0xff] %v429
    %481 = vst [vmem:[#allocation3 + $0x8] sm:$0xff] %v452
    %482 = vst.msk [vmem:[#allocation3 + $0x10] sm:$0xff] %vm332, %v475
    %483 = vst [vmem:[#allocation3 + $0x18] sm:$0xff] %v432
    %484 = vst [vmem:[#allocation3 + $0x20] sm:$0xff] %v455
    %485 = vst.msk [vmem:[#allocation3 + $0x28] sm:$0xff] %vm332, %v478
    %v486 = vld [vmem:[%s29] sm:$0xff]
    %v487 = vld [vmem:[%s29 + $0x8] sm:$0xff]
    %v488 = vld [vmem:[%s29 + $0x10] sm:$0xff]
    %v489 = vld [vmem:[%s29 + $0x18] sm:$0xff]
    %v490 = vld [vmem:[%s29 + $0x20] sm:$0xff]
    %v491 = vld [vmem:[%s29 + $0x28] sm:$0xff]
    %v492 = vld [vmem:[%s29 + $0x30] sm:$0xff]
    %v493 = vld [vmem:[%s29 + $0x38] sm:$0xff]
    %v494 = vld [vmem:[#allocation2] sm:$0x3]
    %v495 = vld [vmem:[#allocation3] sm:$0x3]
    %v496 = vld [vmem:[#allocation2 + $0x38] sm:$0xc]
    %v497 = vld [vmem:[#allocation3 + $0x20] sm:$0xc0]
    %v499 = vrot.slane %v495, 6
    %v502 = vrot.slane %v496, 6
    %v504 = vsel %vm242, %v494, %v499
    %vm505 = vcmask 1043456
    %v506 = vsel %vm505, %v504, %v502
    %vm507 = vcmask 1045504
    %v508 = vsel %vm507, %v506, %v497
    %v509 = vld [vmem:[%s5] sm:$0x3]
    %s510 = scalar_lea.vmem %s5, 18
    %v511 = vld [vmem:[%s510] sm:$0x3]
    %v512 = vld [vmem:[%s7] sm:$0x3]
    %s513 = scalar_lea.vmem %s7, 14
    %v514 = vld [vmem:[%s513] sm:$0x3]
    %v516 = vrot.slane %v512, 6
    %v519 = vrot.slane %v511, 4
    %v522 = vrot.slane %v514, 2
    %v524 = vsel %vm242, %v509, %v516
    %v525 = vsel %vm505, %v524, %v519
    %v526 = vsel %vm507, %v525, %v522
    %vm527 = vcmask 261120
    %v529 = vsel %vm527, 0.0, 0
    %531 = vmatpush.msra.mxu0 0.0
    %532 = vmatpush.msra.mxu0 0.0
    %533 = vmatpush.msra.mxu0 0.0
    %534 = vmatpush.msra.mxu0 0.0
    %535 = vmatpush.msra.mxu0 0.0
    %536 = vmatpush.msra.mxu0 0.0
    %537 = vmatpush.msra.mxu0 0.0
    %538 = vmatpush.msra.mxu0 0.0
    %539 = vmatpush.msra.mxu0 0.0
    %540 = vmatpush.msra.mxu0 0.0
    %541 = vmatpush.msra.mxu0 0.0
    %542 = vmatpush.msra.mxu0 0.0
    %543 = vmatpush.msra.mxu0 %v492
    %544 = vmatpush.msra.mxu0 %v490
    %545 = vmatpush.msra.mxu0 %v488
    %546 = vmatpush.msra.mxu0 %v486
    %547 = vmatmul.f32.gmra.mxu0 %v529
    %v548 = vpop.f32.mrf.mxu0
    %v549 = vadd.f32 0.0, %v548
    %550 = vdwg.mxu0
    %551 = vmatpush.msra.mxu0 0.0
    %552 = vmatpush.msra.mxu0 0.0
    %553 = vmatpush.msra.mxu0 0.0
    %554 = vmatpush.msra.mxu0 0.0
    %555 = vmatpush.msra.mxu0 0.0
    %556 = vmatpush.msra.mxu0 0.0
    %557 = vmatpush.msra.mxu0 0.0
    %558 = vmatpush.msra.mxu0 0.0
    %559 = vmatpush.msra.mxu0 0.0
    %560 = vmatpush.msra.mxu0 0.0
    %561 = vmatpush.msra.mxu0 0.0
    %562 = vmatpush.msra.mxu0 0.0
    %563 = vmatpush.msra.mxu0 %v493
    %564 = vmatpush.msra.mxu0 %v491
    %565 = vmatpush.msra.mxu0 %v489
    %566 = vmatpush.msra.mxu0 %v487
    %567 = vmatmul.f32.gmra.mxu0 %v529
    %v568 = vpop.f32.mrf.mxu0
    %v569 = vadd.f32 0.0, %v568
    %570 = vdwg.mxu0
    %v571 = vmul.f32 %v135, %v549
    %v572 = vsub.f32 1.0, %v135
    %v573 = vmul.f32 %v572, %v569
    %v574 = vadd.f32 %v571, %v573
    %v575 = vadd.f32 %v508, %v574
    %v576 = vxor.u32 %v575, 2147483648
    %v577 = vmul.f32 %v576, 1.442695
    %v578 = vpow.pop %v577
    %v579 = vadd.f32 %v578, 1.0
    %v580 = vrcp.pop %v579
    %v581 = vmul.f32 %v579, %v580
    %v582 = vsub.f32 1.0, %v581
    %v583 = vmul.f32 %v580, %v582
    %v584 = vadd.f32 %v580, %v583
    %vm585 = vweird.f32 %v579
    %vm586 = vweird.f32 %v580
    %vm587 = vmor %vm585, %vm586
    %v588 = vsel %vm587, %v580, %v584
    %v589 = vand.u32 2147483647, %v579
    %vm590 = vcmp.eq.f32.partialorder %v589, 8.507059e+37
    %v591 = vand.u32 %v579, 2147483648
    %v592 = vor.u32 1.1754944e-38, %v591
    %v593 = vsel %vm590, %v592, %v588
    %v594 = vmul.f32 1.0, %v593
    %v595 = vtanh.pop %v575
    %v596 = vmul.f32 %v594, 0.0
    %598 = vrot.lane.b32.xlu0 %v595, 64
    %v599 = vpop.permute.xlu0 %598
    %v601 = vmul.f32 %v594, %v599
    %603 = vrot.lane.b32.xlu0 %v601, 32
    %v604 = vpop.permute.xlu0 %603
    %v606 = vadd.f32 %v596, %v604
    %v607 = vtanh.pop %v606
    %609 = vrot.lane.b32.xlu0 %v607, 64
    %v610 = vpop.permute.xlu0 %609
    %v612 = vmul.f32 %v594, %v610
    %614 = vset.pattern.permute.xlu0 0
    %615 = vperm.xlu0 %614, %v526
    %v616 = vpop.permute.xlu0 %615
    %v618 = vmul.f32 %v616, %v612
    %620 = vrot.lane.b32.xlu0 %v618, 32
    %v621 = vpop.permute.xlu0 %620
    %vm623 = vcmask 254976
    %624 = vst.msk [vmem:[#allocation4] sm:$0x3] %vm623, %v621
    %625 = vrot.lane.b32.xlu0 %v618, 64
    %v626 = vpop.permute.xlu0 %625
    %vm628 = vcmask 521476
    %629 = vst.msk [vmem:[#allocation4 + $0xe] sm:$0x30] %vm628, %v626
    %vm630 = vcmask 257026
    %631 = vst.msk [vmem:[#allocation5 - $0x2] sm:$0xc] %vm630, %v621
    %vm632 = vcmask 523526
    %633 = vst.msk [vmem:[#allocation5 + $0x8] sm:$0xc0] %vm632, %v626
    %v634 = vsub.f32 1.0, %v526
    %636 = vset.pattern.permute.xlu0 0
    %637 = vperm.xlu0 %636, %v634
    %v638 = vpop.permute.xlu0 %637
    %v640 = vmul.f32 %v638, 0.0
    %v641 = vadd.f32 %v618, %v640
    %v642 = vmul.f32 %v616, %v606
    %v643 = vadd.f32 %v642, %v640
    %v644 = vld [vmem:[#allocation2] sm:$0xc]
    %v645 = vld [vmem:[#allocation3] sm:$0xc]
    %v646 = vld [vmem:[#allocation2 + $0x38] sm:$0x3]
    %v647 = vld [vmem:[#allocation3 + $0x20] sm:$0x30]
    %v649 = vrot.slane %v644, 2
    %v652 = vrot.slane %v646, 4
    %v655 = vrot.slane %v647, 6
    %v657 = vsel %vm242, %v649, %v645
    %v658 = vsel %vm505, %v657, %v652
    %v659 = vsel %vm507, %v658, %v655
    %s660 = scalar_lea.vmem %s5, 2
    %v661 = vld [vmem:[%s660] sm:$0x3]
    %s662 = scalar_lea.vmem %s5, 16
    %v663 = vld [vmem:[%s662] sm:$0x3]
    %s664 = scalar_lea.vmem %s7, 2
    %v665 = vld [vmem:[%s664] sm:$0x3]
    %s666 = scalar_lea.vmem %s7, 12
    %v667 = vld [vmem:[%s666] sm:$0x3]
    %v669 = vrot.slane %v665, 6
    %v672 = vrot.slane %v663, 4
    %v675 = vrot.slane %v667, 2
    %v677 = vsel %vm242, %v661, %v669
    %v678 = vsel %vm505, %v677, %v672
    %v679 = vsel %vm507, %v678, %v675
    %681 = vrot.lane.b32.xlu0 %v641, 32
    %v682 = vpop.permute.xlu0 %681
    %v683 = vsel %vm527, %v682, 0
    %685 = vmatpush.msra.mxu0 0.0
    %686 = vmatpush.msra.mxu0 0.0
    %687 = vmatpush.msra.mxu0 0.0
    %688 = vmatpush.msra.mxu0 0.0
    %689 = vmatpush.msra.mxu0 0.0
    %690 = vmatpush.msra.mxu0 0.0
    %691 = vmatpush.msra.mxu0 0.0
    %692 = vmatpush.msra.mxu0 0.0
    %693 = vmatpush.msra.mxu0 0.0
    %694 = vmatpush.msra.mxu0 0.0
    %695 = vmatpush.msra.mxu0 0.0
    %696 = vmatpush.msra.mxu0 0.0
    %697 = vmatpush.msra.mxu0 %v492
    %698 = vmatpush.msra.mxu0 %v490
    %699 = vmatpush.msra.mxu0 %v488
    %700 = vmatpush.msra.mxu0 %v486
    %701 = vmatmul.f32.gmra.mxu0 %v683
    %v702 = vpop.f32.mrf.mxu0
    %v703 = vadd.f32 0.0, %v702
    %704 = vdwg.mxu0
    %705 = vmatpush.msra.mxu0 0.0
    %706 = vmatpush.msra.mxu0 0.0
    %707 = vmatpush.msra.mxu0 0.0
    %708 = vmatpush.msra.mxu0 0.0
    %709 = vmatpush.msra.mxu0 0.0
    %710 = vmatpush.msra.mxu0 0.0
    %711 = vmatpush.msra.mxu0 0.0
    %712 = vmatpush.msra.mxu0 0.0
    %713 = vmatpush.msra.mxu0 0.0
    %714 = vmatpush.msra.mxu0 0.0
    %715 = vmatpush.msra.mxu0 0.0
    %716 = vmatpush.msra.mxu0 0.0
    %717 = vmatpush.msra.mxu0 %v493
    %718 = vmatpush.msra.mxu0 %v491
    %719 = vmatpush.msra.mxu0 %v489
    %720 = vmatpush.msra.mxu0 %v487
    %721 = vmatmul.f32.gmra.mxu0 %v683
    %v722 = vpop.f32.mrf.mxu0
    %v723 = vadd.f32 0.0, %v722
    %724 = vdwg.mxu0
    %v725 = vmul.f32 %v135, %v703
    %v726 = vmul.f32 %v572, %v723
    %v727 = vadd.f32 %v725, %v726
    %v728 = vadd.f32 %v659, %v727
    %v729 = vxor.u32 %v728, 2147483648
    %v730 = vmul.f32 %v729, 1.442695
    %v731 = vpow.pop %v730
    %v732 = vadd.f32 %v731, 1.0
    %v733 = vrcp.pop %v732
    %v734 = vmul.f32 %v732, %v733
    %v735 = vsub.f32 1.0, %v734
    %v736 = vmul.f32 %v733, %v735
    %v737 = vadd.f32 %v733, %v736
    %vm738 = vweird.f32 %v732
    %vm739 = vweird.f32 %v733
    %vm740 = vmor %vm738, %vm739
    %v741 = vsel %vm740, %v733, %v737
    %v742 = vand.u32 2147483647, %v732
    %vm743 = vcmp.eq.f32.partialorder %v742, 8.507059e+37
    %v744 = vand.u32 %v732, 2147483648
    %v745 = vor.u32 1.1754944e-38, %v744
    %v746 = vsel %vm743, %v745, %v741
    %v747 = vmul.f32 1.0, %v746
    %v748 = vtanh.pop %v728
    %v749 = vmul.f32 %v747, %v643
    %751 = vrot.lane.b32.xlu0 %v748, 64
    %v752 = vpop.permute.xlu0 %751
    %v754 = vmul.f32 %v747, %v752
    %756 = vrot.lane.b32.xlu0 %v754, 32
    %v757 = vpop.permute.xlu0 %756
    %v759 = vadd.f32 %v749, %v757
    %v760 = vtanh.pop %v759
    %762 = vrot.lane.b32.xlu0 %v760, 64
    %v763 = vpop.permute.xlu0 %762
    %v765 = vmul.f32 %v747, %v763
    %767 = vset.pattern.permute.xlu0 0
    %768 = vperm.xlu0 %767, %v679
    %v769 = vpop.permute.xlu0 %768
    %v771 = vmul.f32 %v769, %v765
    %773 = vrot.lane.b32.xlu0 %v771, 32
    %v774 = vpop.permute.xlu0 %773
    %776 = vst.msk [vmem:[#allocation4 + $0x2] sm:$0x3] %vm623, %v774
    %777 = vrot.lane.b32.xlu0 %v771, 64
    %v778 = vpop.permute.xlu0 %777
    %780 = vst.msk [vmem:[#allocation4 + $0xc] sm:$0x30] %vm628, %v778
    %781 = vst.msk [vmem:[#allocation5] sm:$0xc] %vm630, %v774
    %782 = vst.msk [vmem:[#allocation5 + $0x6] sm:$0xc0] %vm632, %v778
    %v783 = vsub.f32 1.0, %v679
    %785 = vset.pattern.permute.xlu0 0
    %786 = vperm.xlu0 %785, %v783
    %v787 = vpop.permute.xlu0 %786
    %v789 = vmul.f32 %v787, %v641
    %v790 = vadd.f32 %v771, %v789
    %v791 = vmul.f32 %v769, %v759
    %v792 = vmul.f32 %v787, %v643
    %v793 = vadd.f32 %v791, %v792
    %v794 = vld [vmem:[#allocation2] sm:$0x30]
    %v795 = vld [vmem:[#allocation3] sm:$0x30]
    %v796 = vld [vmem:[#allocation2 + $0x20] sm:$0xc0]
    %v797 = vld [vmem:[#allocation3 + $0x20] sm:$0xc]
    %v799 = vrot.slane %v794, 4
    %v802 = vrot.slane %v795, 2
    %v805 = vrot.slane %v796, 2
    %v808 = vrot.slane %v797, 4
    %v810 = vsel %vm242, %v799, %v802
    %v811 = vsel %vm505, %v810, %v805
    %v812 = vsel %vm507, %v811, %v808
    %s813 = scalar_lea.vmem %s5, 4
    %v814 = vld [vmem:[%s813] sm:$0x3]
    %s815 = scalar_lea.vmem %s5, 14
    %v816 = vld [vmem:[%s815] sm:$0x3]
    %s817 = scalar_lea.vmem %s7, 4
    %v818 = vld [vmem:[%s817] sm:$0x3]
    %s819 = scalar_lea.vmem %s7, 10
    %v820 = vld [vmem:[%s819] sm:$0x3]
    %v822 = vrot.slane %v818, 6
    %v825 = vrot.slane %v816, 4
    %v828 = vrot.slane %v820, 2
    %v830 = vsel %vm242, %v814, %v822
    %v831 = vsel %vm505, %v830, %v825
    %v832 = vsel %vm507, %v831, %v828
    %834 = vrot.lane.b32.xlu0 %v790, 32
    %v835 = vpop.permute.xlu0 %834
    %v836 = vsel %vm527, %v835, 0
    %838 = vmatpush.msra.mxu0 0.0
    %839 = vmatpush.msra.mxu0 0.0
    %840 = vmatpush.msra.mxu0 0.0
    %841 = vmatpush.msra.mxu0 0.0
    %842 = vmatpush.msra.mxu0 0.0
    %843 = vmatpush.msra.mxu0 0.0
    %844 = vmatpush.msra.mxu0 0.0
    %845 = vmatpush.msra.mxu0 0.0
    %846 = vmatpush.msra.mxu0 0.0
    %847 = vmatpush.msra.mxu0 0.0
    %848 = vmatpush.msra.mxu0 0.0
    %849 = vmatpush.msra.mxu0 0.0
    %850 = vmatpush.msra.mxu0 %v492
    %851 = vmatpush.msra.mxu0 %v490
    %852 = vmatpush.msra.mxu0 %v488
    %853 = vmatpush.msra.mxu0 %v486
    %854 = vmatmul.f32.gmra.mxu0 %v836
    %v855 = vpop.f32.mrf.mxu0
    %v856 = vadd.f32 0.0, %v855
    %857 = vdwg.mxu0
    %858 = vmatpush.msra.mxu0 0.0
    %859 = vmatpush.msra.mxu0 0.0
    %860 = vmatpush.msra.mxu0 0.0
    %861 = vmatpush.msra.mxu0 0.0
    %862 = vmatpush.msra.mxu0 0.0
    %863 = vmatpush.msra.mxu0 0.0
    %864 = vmatpush.msra.mxu0 0.0
    %865 = vmatpush.msra.mxu0 0.0
    %866 = vmatpush.msra.mxu0 0.0
    %867 = vmatpush.msra.mxu0 0.0
    %868 = vmatpush.msra.mxu0 0.0
    %869 = vmatpush.msra.mxu0 0.0
    %870 = vmatpush.msra.mxu0 %v493
    %871 = vmatpush.msra.mxu0 %v491
    %872 = vmatpush.msra.mxu0 %v489
    %873 = vmatpush.msra.mxu0 %v487
    %874 = vmatmul.f32.gmra.mxu0 %v836
    %v875 = vpop.f32.mrf.mxu0
    %v876 = vadd.f32 0.0, %v875
    %877 = vdwg.mxu0
    %v878 = vmul.f32 %v135, %v856
    %v879 = vmul.f32 %v572, %v876
    %v880 = vadd.f32 %v878, %v879
    %v881 = vadd.f32 %v812, %v880
    %v882 = vxor.u32 %v881, 2147483648
    %v883 = vmul.f32 %v882, 1.442695
    %v884 = vpow.pop %v883
    %v885 = vadd.f32 %v884, 1.0
    %v886 = vrcp.pop %v885
    %v887 = vmul.f32 %v885, %v886
    %v888 = vsub.f32 1.0, %v887
    %v889 = vmul.f32 %v886, %v888
    %v890 = vadd.f32 %v886, %v889
    %vm891 = vweird.f32 %v885
    %vm892 = vweird.f32 %v886
    %vm893 = vmor %vm891, %vm892
    %v894 = vsel %vm893, %v886, %v890
    %v895 = vand.u32 2147483647, %v885
    %vm896 = vcmp.eq.f32.partialorder %v895, 8.507059e+37
    %v897 = vand.u32 %v885, 2147483648
    %v898 = vor.u32 1.1754944e-38, %v897
    %v899 = vsel %vm896, %v898, %v894
    %v900 = vmul.f32 1.0, %v899
    %v901 = vtanh.pop %v881
    %v902 = vmul.f32 %v900, %v793
    %904 = vrot.lane.b32.xlu0 %v901, 64
    %v905 = vpop.permute.xlu0 %904
    %v907 = vmul.f32 %v900, %v905
    %909 = vrot.lane.b32.xlu0 %v907, 32
    %v910 = vpop.permute.xlu0 %909
    %v912 = vadd.f32 %v902, %v910
    %v913 = vtanh.pop %v912
    %915 = vrot.lane.b32.xlu0 %v913, 64
    %v916 = vpop.permute.xlu0 %915
    %v918 = vmul.f32 %v900, %v916
    %920 = vset.pattern.permute.xlu0 0
    %921 = vperm.xlu0 %920, %v832
    %v922 = vpop.permute.xlu0 %921
    %v924 = vmul.f32 %v922, %v918
    %926 = vrot.lane.b32.xlu0 %v924, 32
    %v927 = vpop.permute.xlu0 %926
    %929 = vst.msk [vmem:[#allocation4 + $0x4] sm:$0x3] %vm623, %v927
    %930 = vrot.lane.b32.xlu0 %v924, 64
    %v931 = vpop.permute.xlu0 %930
    %933 = vst.msk [vmem:[#allocation4 + $0xa] sm:$0x30] %vm628, %v931
    %934 = vst.msk [vmem:[#allocation5 + $0x2] sm:$0xc] %vm630, %v927
    %935 = vst.msk [vmem:[#allocation5 + $0x4] sm:$0xc0] %vm632, %v931
    %v936 = vsub.f32 1.0, %v832
    %938 = vset.pattern.permute.xlu0 0
    %939 = vperm.xlu0 %938, %v936
    %v940 = vpop.permute.xlu0 %939
    %v942 = vmul.f32 %v940, %v790
    %v943 = vadd.f32 %v924, %v942
    %v944 = vmul.f32 %v922, %v912
    %v945 = vmul.f32 %v940, %v793
    %v946 = vadd.f32 %v944, %v945
    %v947 = vld [vmem:[#allocation2] sm:$0xc0]
    %v948 = vld [vmem:[#allocation3] sm:$0xc0]
    %v949 = vld [vmem:[#allocation2 + $0x20] sm:$0x30]
    %v950 = vld [vmem:[#allocation3 + $0x20] sm:$0x3]
    %v952 = vrot.slane %v947, 6
    %v955 = vrot.slane %v948, 4
    %v958 = vrot.slane %v950, 2
    %v960 = vsel %vm242, %v952, %v955
    %v961 = vsel %vm505, %v960, %v949
    %v962 = vsel %vm507, %v961, %v958
    %s963 = scalar_lea.vmem %s5, 6
    %v964 = vld [vmem:[%s963] sm:$0x3]
    %s965 = scalar_lea.vmem %s5, 12
    %v966 = vld [vmem:[%s965] sm:$0x3]
    %s967 = scalar_lea.vmem %s7, 6
    %v968 = vld [vmem:[%s967] sm:$0x3]
    %s969 = scalar_lea.vmem %s7, 8
    %v970 = vld [vmem:[%s969] sm:$0x3]
    %v972 = vrot.slane %v968, 6
    %v975 = vrot.slane %v966, 4
    %v978 = vrot.slane %v970, 2
    %v980 = vsel %vm242, %v964, %v972
    %v981 = vsel %vm505, %v980, %v975
    %v982 = vsel %vm507, %v981, %v978
    %984 = vrot.lane.b32.xlu0 %v943, 32
    %v985 = vpop.permute.xlu0 %984
    %v986 = vsel %vm527, %v985, 0
    %988 = vmatpush.msra.mxu0 0.0
    %989 = vmatpush.msra.mxu0 0.0
    %990 = vmatpush.msra.mxu0 0.0
    %991 = vmatpush.msra.mxu0 0.0
    %992 = vmatpush.msra.mxu0 0.0
    %993 = vmatpush.msra.mxu0 0.0
    %994 = vmatpush.msra.mxu0 0.0
    %995 = vmatpush.msra.mxu0 0.0
    %996 = vmatpush.msra.mxu0 0.0
    %997 = vmatpush.msra.mxu0 0.0
    %998 = vmatpush.msra.mxu0 0.0
    %999 = vmatpush.msra.mxu0 0.0
    %1000 = vmatpush.msra.mxu0 %v492
    %1001 = vmatpush.msra.mxu0 %v490
    %1002 = vmatpush.msra.mxu0 %v488
    %1003 = vmatpush.msra.mxu0 %v486
    %1004 = vmatmul.f32.gmra.mxu0 %v986
    %v1005 = vpop.f32.mrf.mxu0
    %v1006 = vadd.f32 0.0, %v1005
    %1007 = vdwg.mxu0
    %1008 = vmatpush.msra.mxu0 0.0
    %1009 = vmatpush.msra.mxu0 0.0
    %1010 = vmatpush.msra.mxu0 0.0
    %1011 = vmatpush.msra.mxu0 0.0
    %1012 = vmatpush.msra.mxu0 0.0
    %1013 = vmatpush.msra.mxu0 0.0
    %1014 = vmatpush.msra.mxu0 0.0
    %1015 = vmatpush.msra.mxu0 0.0
    %1016 = vmatpush.msra.mxu0 0.0
    %1017 = vmatpush.msra.mxu0 0.0
    %1018 = vmatpush.msra.mxu0 0.0
    %1019 = vmatpush.msra.mxu0 0.0
    %1020 = vmatpush.msra.mxu0 %v493
    %1021 = vmatpush.msra.mxu0 %v491
    %1022 = vmatpush.msra.mxu0 %v489
    %1023 = vmatpush.msra.mxu0 %v487
    %1024 = vmatmul.f32.gmra.mxu0 %v986
    %v1025 = vpop.f32.mrf.mxu0
    %v1026 = vadd.f32 0.0, %v1025
    %1027 = vdwg.mxu0
    %v1028 = vmul.f32 %v135, %v1006
    %v1029 = vmul.f32 %v572, %v1026
    %v1030 = vadd.f32 %v1028, %v1029
    %v1031 = vadd.f32 %v962, %v1030
    %v1032 = vxor.u32 %v1031, 2147483648
    %v1033 = vmul.f32 %v1032, 1.442695
    %v1034 = vpow.pop %v1033
    %v1035 = vadd.f32 %v1034, 1.0
    %v1036 = vrcp.pop %v1035
    %v1037 = vmul.f32 %v1035, %v1036
    %v1038 = vsub.f32 1.0, %v1037
    %v1039 = vmul.f32 %v1036, %v1038
    %v1040 = vadd.f32 %v1036, %v1039
    %vm1041 = vweird.f32 %v1035
    %vm1042 = vweird.f32 %v1036
    %vm1043 = vmor %vm1041, %vm1042
    %v1044 = vsel %vm1043, %v1036, %v1040
    %v1045 = vand.u32 2147483647, %v1035
    %vm1046 = vcmp.eq.f32.partialorder %v1045, 8.507059e+37
    %v1047 = vand.u32 %v1035, 2147483648
    %v1048 = vor.u32 1.1754944e-38, %v1047
    %v1049 = vsel %vm1046, %v1048, %v1044
    %v1050 = vmul.f32 1.0, %v1049
    %v1051 = vtanh.pop %v1031
    %v1052 = vmul.f32 %v1050, %v946
    %1054 = vrot.lane.b32.xlu0 %v1051, 64
    %v1055 = vpop.permute.xlu0 %1054
    %v1057 = vmul.f32 %v1050, %v1055
    %1059 = vrot.lane.b32.xlu0 %v1057, 32
    %v1060 = vpop.permute.xlu0 %1059
    %v1062 = vadd.f32 %v1052, %v1060
    %v1063 = vtanh.pop %v1062
    %1065 = vrot.lane.b32.xlu0 %v1063, 64
    %v1066 = vpop.permute.xlu0 %1065
    %v1068 = vmul.f32 %v1050, %v1066
    %1070 = vset.pattern.permute.xlu0 0
    %1071 = vperm.xlu0 %1070, %v982
    %v1072 = vpop.permute.xlu0 %1071
    %v1074 = vmul.f32 %v1072, %v1068
    %1076 = vrot.lane.b32.xlu0 %v1074, 32
    %v1077 = vpop.permute.xlu0 %1076
    %1079 = vst.msk [vmem:[#allocation4 + $0x6] sm:$0x3] %vm623, %v1077
    %1080 = vrot.lane.b32.xlu0 %v1074, 64
    %v1081 = vpop.permute.xlu0 %1080
    %1083 = vst.msk [vmem:[#allocation4 + $0x8] sm:$0x30] %vm628, %v1081
    %1084 = vst.msk [vmem:[#allocation5 + $0x4] sm:$0xc] %vm630, %v1077
    %1085 = vst.msk [vmem:[#allocation5 + $0x2] sm:$0xc0] %vm632, %v1081
    %v1086 = vsub.f32 1.0, %v982
    %1088 = vset.pattern.permute.xlu0 0
    %1089 = vperm.xlu0 %1088, %v1086
    %v1090 = vpop.permute.xlu0 %1089
    %v1092 = vmul.f32 %v1090, %v943
    %v1093 = vadd.f32 %v1074, %v1092
    %v1094 = vmul.f32 %v1072, %v1062
    %v1095 = vmul.f32 %v1090, %v946
    %v1096 = vadd.f32 %v1094, %v1095
    %v1097 = vld [vmem:[#allocation2 + $0x18] sm:$0x3]
    %v1098 = vld [vmem:[#allocation3 + $0x18] sm:$0x3]
    %v1099 = vld [vmem:[#allocation2 + $0x20] sm:$0xc]
    %v1100 = vld [vmem:[#allocation3 + $0x8] sm:$0xc0]
    %v1102 = vrot.slane %v1098, 6
    %v1105 = vrot.slane %v1099, 6
    %v1107 = vsel %vm242, %v1097, %v1102
    %v1108 = vsel %vm505, %v1107, %v1105
    %v1109 = vsel %vm507, %v1108, %v1100
    %s1110 = scalar_lea.vmem %s5, 8
    %v1111 = vld [vmem:[%s1110] sm:$0x3]
    %s1112 = scalar_lea.vmem %s5, 10
    %v1113 = vld [vmem:[%s1112] sm:$0x3]
    %v1114 = vld [vmem:[%s969] sm:$0x3]
    %v1115 = vld [vmem:[%s967] sm:$0x3]
    %v1117 = vrot.slane %v1114, 6
    %v1120 = vrot.slane %v1113, 4
    %v1123 = vrot.slane %v1115, 2
    %v1125 = vsel %vm242, %v1111, %v1117
    %v1126 = vsel %vm505, %v1125, %v1120
    %v1127 = vsel %vm507, %v1126, %v1123
    %1129 = vrot.lane.b32.xlu0 %v1093, 32
    %v1130 = vpop.permute.xlu0 %1129
    %v1131 = vsel %vm527, %v1130, 0
    %1133 = vmatpush.msra.mxu0 0.0
    %1134 = vmatpush.msra.mxu0 0.0
    %1135 = vmatpush.msra.mxu0 0.0
    %1136 = vmatpush.msra.mxu0 0.0
    %1137 = vmatpush.msra.mxu0 0.0
    %1138 = vmatpush.msra.mxu0 0.0
    %1139 = vmatpush.msra.mxu0 0.0
    %1140 = vmatpush.msra.mxu0 0.0
    %1141 = vmatpush.msra.mxu0 0.0
    %1142 = vmatpush.msra.mxu0 0.0
    %1143 = vmatpush.msra.mxu0 0.0
    %1144 = vmatpush.msra.mxu0 0.0
    %1145 = vmatpush.msra.mxu0 %v492
    %1146 = vmatpush.msra.mxu0 %v490
    %1147 = vmatpush.msra.mxu0 %v488
    %1148 = vmatpush.msra.mxu0 %v486
    %1149 = vmatmul.f32.gmra.mxu0 %v1131
    %v1150 = vpop.f32.mrf.mxu0
    %v1151 = vadd.f32 0.0, %v1150
    %1152 = vdwg.mxu0
    %1153 = vmatpush.msra.mxu0 0.0
    %1154 = vmatpush.msra.mxu0 0.0
    %1155 = vmatpush.msra.mxu0 0.0
    %1156 = vmatpush.msra.mxu0 0.0
    %1157 = vmatpush.msra.mxu0 0.0
    %1158 = vmatpush.msra.mxu0 0.0
    %1159 = vmatpush.msra.mxu0 0.0
    %1160 = vmatpush.msra.mxu0 0.0
    %1161 = vmatpush.msra.mxu0 0.0
    %1162 = vmatpush.msra.mxu0 0.0
    %1163 = vmatpush.msra.mxu0 0.0
    %1164 = vmatpush.msra.mxu0 0.0
    %1165 = vmatpush.msra.mxu0 %v493
    %1166 = vmatpush.msra.mxu0 %v491
    %1167 = vmatpush.msra.mxu0 %v489
    %1168 = vmatpush.msra.mxu0 %v487
    %1169 = vmatmul.f32.gmra.mxu0 %v1131
    %v1170 = vpop.f32.mrf.mxu0
    %v1171 = vadd.f32 0.0, %v1170
    %1172 = vdwg.mxu0
    %v1173 = vmul.f32 %v135, %v1151
    %v1174 = vmul.f32 %v572, %v1171
    %v1175 = vadd.f32 %v1173, %v1174
    %v1176 = vadd.f32 %v1109, %v1175
    %v1177 = vxor.u32 %v1176, 2147483648
    %v1178 = vmul.f32 %v1177, 1.442695
    %v1179 = vpow.pop %v1178
    %v1180 = vadd.f32 %v1179, 1.0
    %v1181 = vrcp.pop %v1180
    %v1182 = vmul.f32 %v1180, %v1181
    %v1183 = vsub.f32 1.0, %v1182
    %v1184 = vmul.f32 %v1181, %v1183
    %v1185 = vadd.f32 %v1181, %v1184
    %vm1186 = vweird.f32 %v1180
    %vm1187 = vweird.f32 %v1181
    %vm1188 = vmor %vm1186, %vm1187
    %v1189 = vsel %vm1188, %v1181, %v1185
    %v1190 = vand.u32 2147483647, %v1180
    %vm1191 = vcmp.eq.f32.partialorder %v1190, 8.507059e+37
    %v1192 = vand.u32 %v1180, 2147483648
    %v1193 = vor.u32 1.1754944e-38, %v1192
    %v1194 = vsel %vm1191, %v1193, %v1189
    %v1195 = vmul.f32 1.0, %v1194
    %v1196 = vtanh.pop %v1176
    %v1197 = vmul.f32 %v1195, %v1096
    %1199 = vrot.lane.b32.xlu0 %v1196, 64
    %v1200 = vpop.permute.xlu0 %1199
    %v1202 = vmul.f32 %v1195, %v1200
    %1204 = vrot.lane.b32.xlu0 %v1202, 32
    %v1205 = vpop.permute.xlu0 %1204
    %v1207 = vadd.f32 %v1197, %v1205
    %v1208 = vtanh.pop %v1207
    %1210 = vrot.lane.b32.xlu0 %v1208, 64
    %v1211 = vpop.permute.xlu0 %1210
    %v1213 = vmul.f32 %v1195, %v1211
    %1215 = vset.pattern.permute.xlu0 0
    %1216 = vperm.xlu0 %1215, %v1127
    %v1217 = vpop.permute.xlu0 %1216
    %v1219 = vmul.f32 %v1217, %v1213
    %1221 = vrot.lane.b32.xlu0 %v1219, 32
    %v1222 = vpop.permute.xlu0 %1221
    %1224 = vst.msk [vmem:[#allocation4 + $0x8] sm:$0x3] %vm623, %v1222
    %1225 = vrot.lane.b32.xlu0 %v1219, 64
    %v1226 = vpop.permute.xlu0 %1225
    %1228 = vst.msk [vmem:[#allocation4 + $0x6] sm:$0x30] %vm628, %v1226
    %1229 = vst.msk [vmem:[#allocation5 + $0x6] sm:$0xc] %vm630, %v1222
    %1230 = vst.msk [vmem:[#allocation5] sm:$0xc0] %vm632, %v1226
    %v1231 = vsub.f32 1.0, %v1127
    %1233 = vset.pattern.permute.xlu0 0
    %1234 = vperm.xlu0 %1233, %v1231
    %v1235 = vpop.permute.xlu0 %1234
    %v1237 = vmul.f32 %v1235, %v1093
    %v1238 = vadd.f32 %v1219, %v1237
    %v1239 = vmul.f32 %v1217, %v1207
    %v1240 = vmul.f32 %v1235, %v1096
    %v1241 = vadd.f32 %v1239, %v1240
    %v1242 = vld [vmem:[#allocation2 + $0x18] sm:$0xc]
    %v1243 = vld [vmem:[#allocation3 + $0x18] sm:$0xc]
    %v1244 = vld [vmem:[#allocation2 + $0x20] sm:$0x3]
    %v1245 = vld [vmem:[#allocation3 + $0x8] sm:$0x30]
    %v1247 = vrot.slane %v1242, 2
    %v1250 = vrot.slane %v1244, 4
    %v1253 = vrot.slane %v1245, 6
    %v1255 = vsel %vm242, %v1247, %v1243
    %v1256 = vsel %vm505, %v1255, %v1250
    %v1257 = vsel %vm507, %v1256, %v1253
    %v1258 = vld [vmem:[%s1112] sm:$0x3]
    %v1259 = vld [vmem:[%s1110] sm:$0x3]
    %v1260 = vld [vmem:[%s819] sm:$0x3]
    %v1261 = vld [vmem:[%s817] sm:$0x3]
    %v1263 = vrot.slane %v1260, 6
    %v1266 = vrot.slane %v1259, 4
    %v1269 = vrot.slane %v1261, 2
    %v1271 = vsel %vm242, %v1258, %v1263
    %v1272 = vsel %vm505, %v1271, %v1266
    %v1273 = vsel %vm507, %v1272, %v1269
    %1275 = vrot.lane.b32.xlu0 %v1238, 32
    %v1276 = vpop.permute.xlu0 %1275
    %v1277 = vsel %vm527, %v1276, 0
    %1279 = vmatpush.msra.mxu0 0.0
    %1280 = vmatpush.msra.mxu0 0.0
    %1281 = vmatpush.msra.mxu0 0.0
    %1282 = vmatpush.msra.mxu0 0.0
    %1283 = vmatpush.msra.mxu0 0.0
    %1284 = vmatpush.msra.mxu0 0.0
    %1285 = vmatpush.msra.mxu0 0.0
    %1286 = vmatpush.msra.mxu0 0.0
    %1287 = vmatpush.msra.mxu0 0.0
    %1288 = vmatpush.msra.mxu0 0.0
    %1289 = vmatpush.msra.mxu0 0.0
    %1290 = vmatpush.msra.mxu0 0.0
    %1291 = vmatpush.msra.mxu0 %v492
    %1292 = vmatpush.msra.mxu0 %v490
    %1293 = vmatpush.msra.mxu0 %v488
    %1294 = vmatpush.msra.mxu0 %v486
    %1295 = vmatmul.f32.gmra.mxu0 %v1277
    %v1296 = vpop.f32.mrf.mxu0
    %v1297 = vadd.f32 0.0, %v1296
    %1298 = vdwg.mxu0
    %1299 = vmatpush.msra.mxu0 0.0
    %1300 = vmatpush.msra.mxu0 0.0
    %1301 = vmatpush.msra.mxu0 0.0
    %1302 = vmatpush.msra.mxu0 0.0
    %1303 = vmatpush.msra.mxu0 0.0
    %1304 = vmatpush.msra.mxu0 0.0
    %1305 = vmatpush.msra.mxu0 0.0
    %1306 = vmatpush.msra.mxu0 0.0
    %1307 = vmatpush.msra.mxu0 0.0
    %1308 = vmatpush.msra.mxu0 0.0
    %1309 = vmatpush.msra.mxu0 0.0
    %1310 = vmatpush.msra.mxu0 0.0
    %1311 = vmatpush.msra.mxu0 %v493
    %1312 = vmatpush.msra.mxu0 %v491
    %1313 = vmatpush.msra.mxu0 %v489
    %1314 = vmatpush.msra.mxu0 %v487
    %1315 = vmatmul.f32.gmra.mxu0 %v1277
    %v1316 = vpop.f32.mrf.mxu0
    %v1317 = vadd.f32 0.0, %v1316
    %1318 = vdwg.mxu0
    %v1319 = vmul.f32 %v135, %v1297
    %v1320 = vmul.f32 %v572, %v1317
    %v1321 = vadd.f32 %v1319, %v1320
    %v1322 = vadd.f32 %v1257, %v1321
    %v1323 = vxor.u32 %v1322, 2147483648
    %v1324 = vmul.f32 %v1323, 1.442695
    %v1325 = vpow.pop %v1324
    %v1326 = vadd.f32 %v1325, 1.0
    %v1327 = vrcp.pop %v1326
    %v1328 = vmul.f32 %v1326, %v1327
    %v1329 = vsub.f32 1.0, %v1328
    %v1330 = vmul.f32 %v1327, %v1329
    %v1331 = vadd.f32 %v1327, %v1330
    %vm1332 = vweird.f32 %v1326
    %vm1333 = vweird.f32 %v1327
    %vm1334 = vmor %vm1332, %vm1333
    %v1335 = vsel %vm1334, %v1327, %v1331
    %v1336 = vand.u32 2147483647, %v1326
    %vm1337 = vcmp.eq.f32.partialorder %v1336, 8.507059e+37
    %v1338 = vand.u32 %v1326, 2147483648
    %v1339 = vor.u32 1.1754944e-38, %v1338
    %v1340 = vsel %vm1337, %v1339, %v1335
    %v1341 = vmul.f32 1.0, %v1340
    %v1342 = vtanh.pop %v1322
    %v1343 = vmul.f32 %v1341, %v1241
    %1345 = vrot.lane.b32.xlu0 %v1342, 64
    %v1346 = vpop.permute.xlu0 %1345
    %v1348 = vmul.f32 %v1341, %v1346
    %1350 = vrot.lane.b32.xlu0 %v1348, 32
    %v1351 = vpop.permute.xlu0 %1350
    %v1353 = vadd.f32 %v1343, %v1351
    %v1354 = vtanh.pop %v1353
    %1356 = vrot.lane.b32.xlu0 %v1354, 64
    %v1357 = vpop.permute.xlu0 %1356
    %v1359 = vmul.f32 %v1341, %v1357
    %1361 = vset.pattern.permute.xlu0 0
    %1362 = vperm.xlu0 %1361, %v1273
    %v1363 = vpop.permute.xlu0 %1362
    %v1365 = vmul.f32 %v1363, %v1359
    %1367 = vrot.lane.b32.xlu0 %v1365, 32
    %v1368 = vpop.permute.xlu0 %1367
    %1370 = vst.msk [vmem:[#allocation4 + $0xa] sm:$0x3] %vm623, %v1368
    %1371 = vrot.lane.b32.xlu0 %v1365, 64
    %v1372 = vpop.permute.xlu0 %1371
    %1374 = vst.msk [vmem:[#allocation4 + $0x4] sm:$0x30] %vm628, %v1372
    %1375 = vst.msk [vmem:[#allocation5 + $0x8] sm:$0xc] %vm630, %v1368
    %1376 = vst.msk [vmem:[#allocation5 - $0x2] sm:$0xc0] %vm632, %v1372
    %v1377 = vsub.f32 1.0, %v1273
    %1379 = vset.pattern.permute.xlu0 0
    %1380 = vperm.xlu0 %1379, %v1377
    %v1381 = vpop.permute.xlu0 %1380
    %v1383 = vmul.f32 %v1381, %v1238
    %v1384 = vadd.f32 %v1365, %v1383
    %v1385 = vmul.f32 %v1363, %v1353
    %v1386 = vmul.f32 %v1381, %v1241
    %v1387 = vadd.f32 %v1385, %v1386
    %v1388 = vld [vmem:[#allocation2 + $0x18] sm:$0x30]
    %v1389 = vld [vmem:[#allocation3 + $0x18] sm:$0x30]
    %v1390 = vld [vmem:[#allocation2 + $0x8] sm:$0xc0]
    %v1391 = vld [vmem:[#allocation3 + $0x8] sm:$0xc]
    %v1393 = vrot.slane %v1388, 4
    %v1396 = vrot.slane %v1389, 2
    %v1399 = vrot.slane %v1390, 2
    %v1402 = vrot.slane %v1391, 4
    %v1404 = vsel %vm242, %v1393, %v1396
    %v1405 = vsel %vm505, %v1404, %v1399
    %v1406 = vsel %vm507, %v1405, %v1402
    %v1407 = vld [vmem:[%s965] sm:$0x3]
    %v1408 = vld [vmem:[%s963] sm:$0x3]
    %v1409 = vld [vmem:[%s666] sm:$0x3]
    %v1410 = vld [vmem:[%s664] sm:$0x3]
    %v1412 = vrot.slane %v1409, 6
    %v1415 = vrot.slane %v1408, 4
    %v1418 = vrot.slane %v1410, 2
    %v1420 = vsel %vm242, %v1407, %v1412
    %v1421 = vsel %vm505, %v1420, %v1415
    %v1422 = vsel %vm507, %v1421, %v1418
    %1424 = vrot.lane.b32.xlu0 %v1384, 32
    %v1425 = vpop.permute.xlu0 %1424
    %v1426 = vsel %vm527, %v1425, 0
    %1428 = vmatpush.msra.mxu0 0.0
    %1429 = vmatpush.msra.mxu0 0.0
    %1430 = vmatpush.msra.mxu0 0.0
    %1431 = vmatpush.msra.mxu0 0.0
    %1432 = vmatpush.msra.mxu0 0.0
    %1433 = vmatpush.msra.mxu0 0.0
    %1434 = vmatpush.msra.mxu0 0.0
    %1435 = vmatpush.msra.mxu0 0.0
    %1436 = vmatpush.msra.mxu0 0.0
    %1437 = vmatpush.msra.mxu0 0.0
    %1438 = vmatpush.msra.mxu0 0.0
    %1439 = vmatpush.msra.mxu0 0.0
    %1440 = vmatpush.msra.mxu0 %v492
    %1441 = vmatpush.msra.mxu0 %v490
    %1442 = vmatpush.msra.mxu0 %v488
    %1443 = vmatpush.msra.mxu0 %v486
    %1444 = vmatmul.f32.gmra.mxu0 %v1426
    %v1445 = vpop.f32.mrf.mxu0
    %v1446 = vadd.f32 0.0, %v1445
    %1447 = vdwg.mxu0
    %1448 = vmatpush.msra.mxu0 0.0
    %1449 = vmatpush.msra.mxu0 0.0
    %1450 = vmatpush.msra.mxu0 0.0
    %1451 = vmatpush.msra.mxu0 0.0
    %1452 = vmatpush.msra.mxu0 0.0
    %1453 = vmatpush.msra.mxu0 0.0
    %1454 = vmatpush.msra.mxu0 0.0
    %1455 = vmatpush.msra.mxu0 0.0
    %1456 = vmatpush.msra.mxu0 0.0
    %1457 = vmatpush.msra.mxu0 0.0
    %1458 = vmatpush.msra.mxu0 0.0
    %1459 = vmatpush.msra.mxu0 0.0
    %1460 = vmatpush.msra.mxu0 %v493
    %1461 = vmatpush.msra.mxu0 %v491
    %1462 = vmatpush.msra.mxu0 %v489
    %1463 = vmatpush.msra.mxu0 %v487
    %1464 = vmatmul.f32.gmra.mxu0 %v1426
    %v1465 = vpop.f32.mrf.mxu0
    %v1466 = vadd.f32 0.0, %v1465
    %1467 = vdwg.mxu0
    %v1468 = vmul.f32 %v135, %v1446
    %v1469 = vmul.f32 %v572, %v1466
    %v1470 = vadd.f32 %v1468, %v1469
    %v1471 = vadd.f32 %v1406, %v1470
    %v1472 = vxor.u32 %v1471, 2147483648
    %v1473 = vmul.f32 %v1472, 1.442695
    %v1474 = vpow.pop %v1473
    %v1475 = vadd.f32 %v1474, 1.0
    %v1476 = vrcp.pop %v1475
    %v1477 = vmul.f32 %v1475, %v1476
    %v1478 = vsub.f32 1.0, %v1477
    %v1479 = vmul.f32 %v1476, %v1478
    %v1480 = vadd.f32 %v1476, %v1479
    %vm1481 = vweird.f32 %v1475
    %vm1482 = vweird.f32 %v1476
    %vm1483 = vmor %vm1481, %vm1482
    %v1484 = vsel %vm1483, %v1476, %v1480
    %v1485 = vand.u32 2147483647, %v1475
    %vm1486 = vcmp.eq.f32.partialorder %v1485, 8.507059e+37
    %v1487 = vand.u32 %v1475, 2147483648
    %v1488 = vor.u32 1.1754944e-38, %v1487
    %v1489 = vsel %vm1486, %v1488, %v1484
    %v1490 = vmul.f32 1.0, %v1489
    %v1491 = vtanh.pop %v1471
    %v1492 = vmul.f32 %v1490, %v1387
    %1494 = vrot.lane.b32.xlu0 %v1491, 64
    %v1495 = vpop.permute.xlu0 %1494
    %v1497 = vmul.f32 %v1490, %v1495
    %1499 = vrot.lane.b32.xlu0 %v1497, 32
    %v1500 = vpop.permute.xlu0 %1499
    %v1502 = vadd.f32 %v1492, %v1500
    %v1503 = vtanh.pop %v1502
    %1505 = vrot.lane.b32.xlu0 %v1503, 64
    %v1506 = vpop.permute.xlu0 %1505
    %v1508 = vmul.f32 %v1490, %v1506
    %1510 = vset.pattern.permute.xlu0 0
    %1511 = vperm.xlu0 %1510, %v1422
    %v1512 = vpop.permute.xlu0 %1511
    %v1514 = vmul.f32 %v1512, %v1508
    %1516 = vrot.lane.b32.xlu0 %v1514, 32
    %v1517 = vpop.permute.xlu0 %1516
    %1519 = vst.msk [vmem:[#allocation4 + $0xc] sm:$0x3] %vm623, %v1517
    %1520 = vrot.lane.b32.xlu0 %v1514, 64
    %v1521 = vpop.permute.xlu0 %1520
    %1523 = vst.msk [vmem:[#allocation4 + $0x2] sm:$0x30] %vm628, %v1521
    %1524 = vst.msk [vmem:[#allocation5 + $0xa] sm:$0xc] %vm630, %v1517
    %1525 = vst.msk [vmem:[#allocation5 - $0x4] sm:$0xc0] %vm632, %v1521
    %v1526 = vsub.f32 1.0, %v1422
    %1528 = vset.pattern.permute.xlu0 0
    %1529 = vperm.xlu0 %1528, %v1526
    %v1530 = vpop.permute.xlu0 %1529
    %v1532 = vmul.f32 %v1530, %v1384
    %v1533 = vadd.f32 %v1514, %v1532
    %v1534 = vmul.f32 %v1512, %v1502
    %v1535 = vmul.f32 %v1530, %v1387
    %v1536 = vadd.f32 %v1534, %v1535
    %v1537 = vld [vmem:[#allocation2 + $0x18] sm:$0xc0]
    %v1538 = vld [vmem:[#allocation3 + $0x18] sm:$0xc0]
    %v1539 = vld [vmem:[#allocation2 + $0x8] sm:$0x30]
    %v1540 = vld [vmem:[#allocation3 + $0x8] sm:$0x3]
    %v1542 = vrot.slane %v1537, 6
    %v1545 = vrot.slane %v1538, 4
    %v1548 = vrot.slane %v1540, 2
    %v1550 = vsel %vm242, %v1542, %v1545
    %v1551 = vsel %vm505, %v1550, %v1539
    %v1552 = vsel %vm507, %v1551, %v1548
    %v1553 = vld [vmem:[%s815] sm:$0x3]
    %v1554 = vld [vmem:[%s813] sm:$0x3]
    %v1555 = vld [vmem:[%s513] sm:$0x3]
    %v1556 = vld [vmem:[%s7] sm:$0x3]
    %v1558 = vrot.slane %v1555, 6
    %v1561 = vrot.slane %v1554, 4
    %v1564 = vrot.slane %v1556, 2
    %v1566 = vsel %vm242, %v1553, %v1558
    %v1567 = vsel %vm505, %v1566, %v1561
    %v1568 = vsel %vm507, %v1567, %v1564
    %1570 = vrot.lane.b32.xlu0 %v1533, 32
    %v1571 = vpop.permute.xlu0 %1570
    %v1572 = vsel %vm527, %v1571, 0
    %1574 = vmatpush.msra.mxu0 0.0
    %1575 = vmatpush.msra.mxu0 0.0
    %1576 = vmatpush.msra.mxu0 0.0
    %1577 = vmatpush.msra.mxu0 0.0
    %1578 = vmatpush.msra.mxu0 0.0
    %1579 = vmatpush.msra.mxu0 0.0
    %1580 = vmatpush.msra.mxu0 0.0
    %1581 = vmatpush.msra.mxu0 0.0
    %1582 = vmatpush.msra.mxu0 0.0
    %1583 = vmatpush.msra.mxu0 0.0
    %1584 = vmatpush.msra.mxu0 0.0
    %1585 = vmatpush.msra.mxu0 0.0
    %1586 = vmatpush.msra.mxu0 %v492
    %1587 = vmatpush.msra.mxu0 %v490
    %1588 = vmatpush.msra.mxu0 %v488
    %1589 = vmatpush.msra.mxu0 %v486
    %1590 = vmatmul.f32.gmra.mxu0 %v1572
    %v1591 = vpop.f32.mrf.mxu0
    %v1592 = vadd.f32 0.0, %v1591
    %1593 = vdwg.mxu0
    %1594 = vmatpush.msra.mxu0 0.0
    %1595 = vmatpush.msra.mxu0 0.0
    %1596 = vmatpush.msra.mxu0 0.0
    %1597 = vmatpush.msra.mxu0 0.0
    %1598 = vmatpush.msra.mxu0 0.0
    %1599 = vmatpush.msra.mxu0 0.0
    %1600 = vmatpush.msra.mxu0 0.0
    %1601 = vmatpush.msra.mxu0 0.0
    %1602 = vmatpush.msra.mxu0 0.0
    %1603 = vmatpush.msra.mxu0 0.0
    %1604 = vmatpush.msra.mxu0 0.0
    %1605 = vmatpush.msra.mxu0 0.0
    %1606 = vmatpush.msra.mxu0 %v493
    %1607 = vmatpush.msra.mxu0 %v491
    %1608 = vmatpush.msra.mxu0 %v489
    %1609 = vmatpush.msra.mxu0 %v487
    %1610 = vmatmul.f32.gmra.mxu0 %v1572
    %v1611 = vpop.f32.mrf.mxu0
    %v1612 = vadd.f32 0.0, %v1611
    %1613 = vdwg.mxu0
    %v1614 = vmul.f32 %v135, %v1592
    %v1615 = vmul.f32 %v572, %v1612
    %v1616 = vadd.f32 %v1614, %v1615
    %v1617 = vadd.f32 %v1552, %v1616
    %v1618 = vxor.u32 %v1617, 2147483648
    %v1619 = vmul.f32 %v1618, 1.442695
    %v1620 = vpow.pop %v1619
    %v1621 = vadd.f32 %v1620, 1.0
    %v1622 = vrcp.pop %v1621
    %v1623 = vmul.f32 %v1621, %v1622
    %v1624 = vsub.f32 1.0, %v1623
    %v1625 = vmul.f32 %v1622, %v1624
    %v1626 = vadd.f32 %v1622, %v1625
    %vm1627 = vweird.f32 %v1621
    %vm1628 = vweird.f32 %v1622
    %vm1629 = vmor %vm1627, %vm1628
    %v1630 = vsel %vm1629, %v1622, %v1626
    %v1631 = vand.u32 2147483647, %v1621
    %vm1632 = vcmp.eq.f32.partialorder %v1631, 8.507059e+37
    %v1633 = vand.u32 %v1621, 2147483648
    %v1634 = vor.u32 1.1754944e-38, %v1633
    %v1635 = vsel %vm1632, %v1634, %v1630
    %v1636 = vmul.f32 1.0, %v1635
    %v1637 = vtanh.pop %v1617
    %v1638 = vmul.f32 %v1636, %v1536
    %1640 = vrot.lane.b32.xlu0 %v1637, 64
    %v1641 = vpop.permute.xlu0 %1640
    %v1643 = vmul.f32 %v1636, %v1641
    %1645 = vrot.lane.b32.xlu0 %v1643, 32
    %v1646 = vpop.permute.xlu0 %1645
    %v1648 = vadd.f32 %v1638, %v1646
    %v1649 = vtanh.pop %v1648
    %1651 = vrot.lane.b32.xlu0 %v1649, 64
    %v1652 = vpop.permute.xlu0 %1651
    %v1654 = vmul.f32 %v1636, %v1652
    %1656 = vset.pattern.permute.xlu0 0
    %1657 = vperm.xlu0 %1656, %v1568
    %v1658 = vpop.permute.xlu0 %1657
    %v1660 = vmul.f32 %v1658, %v1654
    %1662 = vrot.lane.b32.xlu0 %v1660, 32
    %v1663 = vpop.permute.xlu0 %1662
    %1665 = vst.msk [vmem:[#allocation4 + $0xe] sm:$0x3] %vm623, %v1663
    %1666 = vrot.lane.b32.xlu0 %v1660, 64
    %v1667 = vpop.permute.xlu0 %1666
    %1669 = vst.msk [vmem:[#allocation4] sm:$0x30] %vm628, %v1667
    %1670 = vst.msk [vmem:[#allocation5 + $0xc] sm:$0xc] %vm630, %v1663
    %1671 = vst.msk [vmem:[#allocation5 - $0x6] sm:$0xc0] %vm632, %v1667
    %v1672 = vsub.f32 1.0, %v1568
    %1674 = vset.pattern.permute.xlu0 0
    %1675 = vperm.xlu0 %1674, %v1672
    %v1676 = vpop.permute.xlu0 %1675
    %v1678 = vmul.f32 %v1676, %v1533
    %v1679 = vadd.f32 %v1660, %v1678
    %v1680 = vmul.f32 %v1658, %v1648
    %v1681 = vmul.f32 %v1676, %v1536
    %v1682 = vadd.f32 %v1680, %v1681
    %v1683 = vld [vmem:[#allocation2 + $0x30] sm:$0x3]
    %v1684 = vld [vmem:[#allocation3 + $0x18] sm:$0xc0]
    %v1685 = vld [vmem:[#allocation2 + $0x8] sm:$0xc]
    %v1686 = vld [vmem:[#allocation3 + $0x8] sm:$0x3]
    %v1688 = vrot.slane %v1684, 4
    %v1691 = vrot.slane %v1685, 6
    %v1694 = vrot.slane %v1686, 2
    %v1696 = vsel %vm242, %v1683, %v1688
    %v1697 = vsel %vm505, %v1696, %v1691
    %v1698 = vsel %vm507, %v1697, %v1694
    %v1699 = vld [vmem:[%s662] sm:$0x3]
    %v1700 = vld [vmem:[%s660] sm:$0x3]
    %v1702 = vrot.slane %v1700, 4
    %v1704 = vsel %vm242, %v1699, 0.0
    %v1705 = vsel %vm505, %v1704, %v1702
    %v1706 = vsel %vm507, %v1705, 0.0
    %1708 = vrot.lane.b32.xlu0 %v1679, 32
    %v1709 = vpop.permute.xlu0 %1708
    %v1710 = vsel %vm527, %v1709, 0
    %1712 = vmatpush.msra.mxu0 0.0
    %1713 = vmatpush.msra.mxu0 0.0
    %1714 = vmatpush.msra.mxu0 0.0
    %1715 = vmatpush.msra.mxu0 0.0
    %1716 = vmatpush.msra.mxu0 0.0
    %1717 = vmatpush.msra.mxu0 0.0
    %1718 = vmatpush.msra.mxu0 0.0
    %1719 = vmatpush.msra.mxu0 0.0
    %1720 = vmatpush.msra.mxu0 0.0
    %1721 = vmatpush.msra.mxu0 0.0
    %1722 = vmatpush.msra.mxu0 0.0
    %1723 = vmatpush.msra.mxu0 0.0
    %1724 = vmatpush.msra.mxu0 %v492
    %1725 = vmatpush.msra.mxu0 %v490
    %1726 = vmatpush.msra.mxu0 %v488
    %1727 = vmatpush.msra.mxu0 %v486
    %1728 = vmatmul.f32.gmra.mxu0 %v1710
    %v1729 = vpop.f32.mrf.mxu0
    %v1730 = vadd.f32 0.0, %v1729
    %1731 = vdwg.mxu0
    %1732 = vmatpush.msra.mxu0 0.0
    %1733 = vmatpush.msra.mxu0 0.0
    %1734 = vmatpush.msra.mxu0 0.0
    %1735 = vmatpush.msra.mxu0 0.0
    %1736 = vmatpush.msra.mxu0 0.0
    %1737 = vmatpush.msra.mxu0 0.0
    %1738 = vmatpush.msra.mxu0 0.0
    %1739 = vmatpush.msra.mxu0 0.0
    %1740 = vmatpush.msra.mxu0 0.0
    %1741 = vmatpush.msra.mxu0 0.0
    %1742 = vmatpush.msra.mxu0 0.0
    %1743 = vmatpush.msra.mxu0 0.0
    %1744 = vmatpush.msra.mxu0 %v493
    %1745 = vmatpush.msra.mxu0 %v491
    %1746 = vmatpush.msra.mxu0 %v489
    %1747 = vmatpush.msra.mxu0 %v487
    %1748 = vmatmul.f32.gmra.mxu0 %v1710
    %v1749 = vpop.f32.mrf.mxu0
    %v1750 = vadd.f32 0.0, %v1749
    %1751 = vdwg.mxu0
    %v1752 = vmul.f32 %v135, %v1730
    %v1753 = vmul.f32 %v572, %v1750
    %v1754 = vadd.f32 %v1752, %v1753
    %v1755 = vadd.f32 %v1698, %v1754
    %v1756 = vxor.u32 %v1755, 2147483648
    %v1757 = vmul.f32 %v1756, 1.442695
    %v1758 = vpow.pop %v1757
    %v1759 = vadd.f32 %v1758, 1.0
    %v1760 = vrcp.pop %v1759
    %v1761 = vmul.f32 %v1759, %v1760
    %v1762 = vsub.f32 1.0, %v1761
    %v1763 = vmul.f32 %v1760, %v1762
    %v1764 = vadd.f32 %v1760, %v1763
    %vm1765 = vweird.f32 %v1759
    %vm1766 = vweird.f32 %v1760
    %vm1767 = vmor %vm1765, %vm1766
    %v1768 = vsel %vm1767, %v1760, %v1764
    %v1769 = vand.u32 2147483647, %v1759
    %vm1770 = vcmp.eq.f32.partialorder %v1769, 8.507059e+37
    %v1771 = vand.u32 %v1759, 2147483648
    %v1772 = vor.u32 1.1754944e-38, %v1771
    %v1773 = vsel %vm1770, %v1772, %v1768
    %v1774 = vmul.f32 1.0, %v1773
    %v1775 = vtanh.pop %v1755
    %v1776 = vmul.f32 %v1774, %v1682
    %1778 = vrot.lane.b32.xlu0 %v1775, 64
    %v1779 = vpop.permute.xlu0 %1778
    %v1781 = vmul.f32 %v1774, %v1779
    %1783 = vrot.lane.b32.xlu0 %v1781, 32
    %v1784 = vpop.permute.xlu0 %1783
    %v1786 = vadd.f32 %v1776, %v1784
    %v1787 = vtanh.pop %v1786
    %1789 = vrot.lane.b32.xlu0 %v1787, 64
    %v1790 = vpop.permute.xlu0 %1789
    %v1792 = vmul.f32 %v1774, %v1790
    %1794 = vset.pattern.permute.xlu0 0
    %1795 = vperm.xlu0 %1794, %v1706
    %v1796 = vpop.permute.xlu0 %1795
    %v1798 = vmul.f32 %v1796, %v1792
    %1800 = vrot.lane.b32.xlu0 %v1798, 32
    %v1801 = vpop.permute.xlu0 %1800
    %1803 = vst.msk [vmem:[#allocation4 + $0x10] sm:$0x3] %vm623, %v1801
    %1804 = vrot.lane.b32.xlu0 %v1798, 64
    %v1805 = vpop.permute.xlu0 %1804
    %1807 = vst.msk [vmem:[#allocation4 - $0x2] sm:$0x30] %vm628, %v1805
    %v1808 = vsub.f32 1.0, %v1706
    %1810 = vset.pattern.permute.xlu0 0
    %1811 = vperm.xlu0 %1810, %v1808
    %v1812 = vpop.permute.xlu0 %1811
    %v1814 = vmul.f32 %v1812, %v1679
    %v1815 = vadd.f32 %v1798, %v1814
    %v1816 = vmul.f32 %v1796, %v1786
    %v1817 = vmul.f32 %v1812, %v1682
    %v1818 = vadd.f32 %v1816, %v1817
    %v1819 = vld [vmem:[#allocation2 + $0x30] sm:$0xc]
    %v1820 = vld [vmem:[#allocation3 + $0x18] sm:$0xc0]
    %v1821 = vld [vmem:[#allocation2 + $0x8] sm:$0x3]
    %v1822 = vld [vmem:[#allocation3 + $0x8] sm:$0x3]
    %v1824 = vrot.slane %v1819, 2
    %v1827 = vrot.slane %v1820, 4
    %v1830 = vrot.slane %v1821, 4
    %v1833 = vrot.slane %v1822, 2
    %v1835 = vsel %vm242, %v1824, %v1827
    %v1836 = vsel %vm505, %v1835, %v1830
    %v1837 = vsel %vm507, %v1836, %v1833
    %v1838 = vld [vmem:[%s510] sm:$0x3]
    %v1839 = vld [vmem:[%s5] sm:$0x3]
    %v1841 = vrot.slane %v1839, 4
    %v1843 = vsel %vm242, %v1838, 0.0
    %v1844 = vsel %vm505, %v1843, %v1841
    %v1845 = vsel %vm507, %v1844, 0.0
    %1847 = vrot.lane.b32.xlu0 %v1815, 32
    %v1848 = vpop.permute.xlu0 %1847
    %v1849 = vsel %vm527, %v1848, 0
    %1851 = vmatpush.msra.mxu0 0.0
    %1852 = vmatpush.msra.mxu0 0.0
    %1853 = vmatpush.msra.mxu0 0.0
    %1854 = vmatpush.msra.mxu0 0.0
    %1855 = vmatpush.msra.mxu0 0.0
    %1856 = vmatpush.msra.mxu0 0.0
    %1857 = vmatpush.msra.mxu0 0.0
    %1858 = vmatpush.msra.mxu0 0.0
    %1859 = vmatpush.msra.mxu0 0.0
    %1860 = vmatpush.msra.mxu0 0.0
    %1861 = vmatpush.msra.mxu0 0.0
    %1862 = vmatpush.msra.mxu0 0.0
    %1863 = vmatpush.msra.mxu0 %v492
    %1864 = vmatpush.msra.mxu0 %v490
    %1865 = vmatpush.msra.mxu0 %v488
    %1866 = vmatpush.msra.mxu0 %v486
    %1867 = vmatmul.f32.gmra.mxu0 %v1849
    %v1868 = vpop.f32.mrf.mxu0
    %v1869 = vadd.f32 0.0, %v1868
    %1870 = vdwg.mxu0
    %1871 = vmatpush.msra.mxu0 0.0
    %1872 = vmatpush.msra.mxu0 0.0
    %1873 = vmatpush.msra.mxu0 0.0
    %1874 = vmatpush.msra.mxu0 0.0
    %1875 = vmatpush.msra.mxu0 0.0
    %1876 = vmatpush.msra.mxu0 0.0
    %1877 = vmatpush.msra.mxu0 0.0
    %1878 = vmatpush.msra.mxu0 0.0
    %1879 = vmatpush.msra.mxu0 0.0
    %1880 = vmatpush.msra.mxu0 0.0
    %1881 = vmatpush.msra.mxu0 0.0
    %1882 = vmatpush.msra.mxu0 0.0
    %1883 = vmatpush.msra.mxu0 %v493
    %1884 = vmatpush.msra.mxu0 %v491
    %1885 = vmatpush.msra.mxu0 %v489
    %1886 = vmatpush.msra.mxu0 %v487
    %1887 = vmatmul.f32.gmra.mxu0 %v1849
    %v1888 = vpop.f32.mrf.mxu0
    %v1889 = vadd.f32 0.0, %v1888
    %1890 = vdwg.mxu0
    %v1891 = vmul.f32 %v135, %v1869
    %v1892 = vmul.f32 %v572, %v1889
    %v1893 = vadd.f32 %v1891, %v1892
    %v1894 = vadd.f32 %v1837, %v1893
    %v1895 = vxor.u32 %v1894, 2147483648
    %v1896 = vmul.f32 %v1895, 1.442695
    %v1897 = vpow.pop %v1896
    %v1898 = vadd.f32 %v1897, 1.0
    %v1899 = vrcp.pop %v1898
    %v1900 = vmul.f32 %v1898, %v1899
    %v1901 = vsub.f32 1.0, %v1900
    %v1902 = vmul.f32 %v1899, %v1901
    %v1903 = vadd.f32 %v1899, %v1902
    %vm1904 = vweird.f32 %v1898
    %vm1905 = vweird.f32 %v1899
    %vm1906 = vmor %vm1904, %vm1905
    %v1907 = vsel %vm1906, %v1899, %v1903
    %v1908 = vand.u32 2147483647, %v1898
    %vm1909 = vcmp.eq.f32.partialorder %v1908, 8.507059e+37
    %v1910 = vand.u32 %v1898, 2147483648
    %v1911 = vor.u32 1.1754944e-38, %v1910
    %v1912 = vsel %vm1909, %v1911, %v1907
    %v1913 = vmul.f32 1.0, %v1912
    %v1914 = vtanh.pop %v1894
    %v1915 = vmul.f32 %v1913, %v1818
    %1917 = vrot.lane.b32.xlu0 %v1914, 64
    %v1918 = vpop.permute.xlu0 %1917
    %v1920 = vmul.f32 %v1913, %v1918
    %1922 = vrot.lane.b32.xlu0 %v1920, 32
    %v1923 = vpop.permute.xlu0 %1922
    %v1925 = vadd.f32 %v1915, %v1923
    %v1926 = vtanh.pop %v1925
    %1928 = vrot.lane.b32.xlu0 %v1926, 64
    %v1929 = vpop.permute.xlu0 %1928
    %v1931 = vmul.f32 %v1913, %v1929
    %1933 = vset.pattern.permute.xlu0 0
    %1934 = vperm.xlu0 %1933, %v1845
    %v1935 = vpop.permute.xlu0 %1934
    %v1937 = vmul.f32 %v1935, %v1931
    %1939 = vrot.lane.b32.xlu0 %v1937, 32
    %v1940 = vpop.permute.xlu0 %1939
    %1942 = vst.msk [vmem:[#allocation4 + $0x12] sm:$0x3] %vm623, %v1940
    %1943 = vrot.lane.b32.xlu0 %v1937, 64
    %v1944 = vpop.permute.xlu0 %1943
    %1946 = vst.msk [vmem:[#allocation4 - $0x4] sm:$0x30] %vm628, %v1944
    %v1947 = vld [vmem:[%s31] sm:$0xff]
    %v1948 = vld [vmem:[%s31 + $0x8] sm:$0xff]
    %v1949 = vld [vmem:[%s31 + $0x10] sm:$0xff]
    %v1950 = vld [vmem:[%s31 + $0x18] sm:$0xff]
    %v1951 = vld [vmem:[%s31 + $0x20] sm:$0xff]
    %v1952 = vld [vmem:[%s31 + $0x28] sm:$0xff]
    %v1953 = vld [vmem:[%s31 + $0x30] sm:$0xff]
    %v1954 = vld [vmem:[%s31 + $0x38] sm:$0xff]
    %v1955 = vld [vmem:[%s33] sm:$0x1]
    %v1956 = vld [vmem:[#allocation2 + $0x10] sm:$0xff]
    %v1957 = vld [vmem:[#allocation2 + $0x28] sm:$0xff]
    %v1958 = vld [vmem:[#allocation2 + $0x40] sm:$0xf]
    %v1959 = vld [vmem:[#allocation4] sm:$0xff]
    %v1960 = vld [vmem:[#allocation4 + $0x8] sm:$0xff]
    %v1961 = vld [vmem:[#allocation4 + $0x10] sm:$0xf]
    %v1963 = vperm.slane %v1955, 0
    %v1966 = vsel %vm332, %v1959, 0
    %v1969 = vsel %vm332, %v1960, 0
    %v1972 = vsel %vm332, %v1961, 0
    %1974 = vmatpush.msra.mxu0 0.0
    %1975 = vmatpush.msra.mxu0 0.0
    %1976 = vmatpush.msra.mxu0 0.0
    %1977 = vmatpush.msra.mxu0 0.0
    %1978 = vmatpush.msra.mxu0 0.0
    %1979 = vmatpush.msra.mxu0 0.0
    %1980 = vmatpush.msra.mxu0 0.0
    %1981 = vmatpush.msra.mxu0 0.0
    %1982 = vmatpush.msra.mxu0 %v1954
    %1983 = vmatpush.msra.mxu0 %v1953
    %1984 = vmatpush.msra.mxu0 %v1952
    %1985 = vmatpush.msra.mxu0 %v1951
    %1986 = vmatpush.msra.mxu0 %v1950
    %1987 = vmatpush.msra.mxu0 %v1949
    %1988 = vmatpush.msra.mxu0 %v1948
    %1989 = vmatpush.msra.mxu0 %v1947
    %1990 = vmatmul.f32.gmra.mxu0 %v1966
    %v1991 = vpop.f32.mrf.mxu0
    %v1992 = vadd.f32 %v1963, %v1991
    %1993 = vmatmul.f32.gmra.mxu0 %v1969
    %v1994 = vpop.f32.mrf.mxu0
    %v1995 = vadd.f32 %v1963, %v1994
    %1996 = vmatmul.f32.gmra.mxu0 %v1972
    %v1997 = vpop.f32.mrf.mxu0
    %v1998 = vadd.f32 %v1963, %v1997
    %1999 = vdwg.mxu0
    %v2000 = vadd.f32 %v1956, %v1992
    %v2001 = vadd.f32 %v1957, %v1995
    %v2002 = vadd.f32 %v1958, %v1998
    %v2003 = vxor.u32 %v2000, 2147483648
    %v2004 = vxor.u32 %v2001, 2147483648
    %v2005 = vxor.u32 %v2002, 2147483648
    %v2006 = vmul.f32 %v2003, 1.442695
    %v2007 = vpow.pop %v2006
    %v2008 = vmul.f32 %v2004, 1.442695
    %v2009 = vpow.pop %v2008
    %v2010 = vmul.f32 %v2005, 1.442695
    %v2011 = vpow.pop %v2010
    %v2012 = vadd.f32 %v2007, 1.0
    %v2013 = vadd.f32 %v2009, 1.0
    %v2014 = vadd.f32 %v2011, 1.0
    %v2015 = vrcp.pop %v2012
    %v2016 = vmul.f32 %v2012, %v2015
    %v2017 = vsub.f32 1.0, %v2016
    %v2018 = vmul.f32 %v2015, %v2017
    %v2019 = vadd.f32 %v2015, %v2018
    %vm2020 = vweird.f32 %v2012
    %vm2021 = vweird.f32 %v2015
    %vm2022 = vmor %vm2020, %vm2021
    %v2023 = vsel %vm2022, %v2015, %v2019
    %v2024 = vand.u32 2147483647, %v2012
    %vm2025 = vcmp.eq.f32.partialorder %v2024, 8.507059e+37
    %v2026 = vand.u32 %v2012, 2147483648
    %v2027 = vor.u32 1.1754944e-38, %v2026
    %v2028 = vsel %vm2025, %v2027, %v2023
    %v2029 = vmul.f32 1.0, %v2028
    %v2030 = vrcp.pop %v2013
    %v2031 = vmul.f32 %v2013, %v2030
    %v2032 = vsub.f32 1.0, %v2031
    %v2033 = vmul.f32 %v2030, %v2032
    %v2034 = vadd.f32 %v2030, %v2033
    %vm2035 = vweird.f32 %v2013
    %vm2036 = vweird.f32 %v2030
    %vm2037 = vmor %vm2035, %vm2036
    %v2038 = vsel %vm2037, %v2030, %v2034
    %v2039 = vand.u32 2147483647, %v2013
    %vm2040 = vcmp.eq.f32.partialorder %v2039, 8.507059e+37
    %v2041 = vand.u32 %v2013, 2147483648
    %v2042 = vor.u32 1.1754944e-38, %v2041
    %v2043 = vsel %vm2040, %v2042, %v2038
    %v2044 = vmul.f32 1.0, %v2043
    %v2045 = vrcp.pop %v2014
    %v2046 = vmul.f32 %v2014, %v2045
    %v2047 = vsub.f32 1.0, %v2046
    %v2048 = vmul.f32 %v2045, %v2047
    %v2049 = vadd.f32 %v2045, %v2048
    %vm2050 = vweird.f32 %v2014
    %vm2051 = vweird.f32 %v2045
    %vm2052 = vmor %vm2050, %vm2051
    %v2053 = vsel %vm2052, %v2045, %v2049
    %v2054 = vand.u32 2147483647, %v2014
    %vm2055 = vcmp.eq.f32.partialorder %v2054, 8.507059e+37
    %v2056 = vand.u32 %v2014, 2147483648
    %v2057 = vor.u32 1.1754944e-38, %v2056
    %v2058 = vsel %vm2055, %v2057, %v2053
    %v2059 = vmul.f32 1.0, %v2058
    %v2060 = vmul.f32 %v2029, %v1956
    %v2061 = vmul.f32 %v2044, %v1957
    %v2062 = vmul.f32 %v2059, %v1958
    %v2063 = vsub.f32 1.0, %v2029
    %v2064 = vsub.f32 1.0, %v2044
    %v2065 = vsub.f32 1.0, %v2059
    %v2066 = vmul.f32 %v2063, %v1992
    %v2067 = vmul.f32 %v2064, %v1995
    %v2068 = vmul.f32 %v2065, %v1998
    %v2069 = vadd.f32 %v2060, %v2066
    %v2070 = vadd.f32 %v2061, %v2067
    %v2071 = vadd.f32 %v2062, %v2068
    %v2072 = vld [vmem:[#allocation3 + $0x10] sm:$0xff]
    %v2073 = vld [vmem:[#allocation3 + $0x28] sm:$0xff]
    %v2074 = vld [vmem:[#allocation5] sm:$0xff]
    %v2075 = vld [vmem:[#allocation5 + $0x8] sm:$0xff]
    %v2077 = vsel %vm332, %v2074, 0
    %v2080 = vsel %vm332, %v2075, 0
    %2082 = vmatpush.msra.mxu0 0.0
    %2083 = vmatpush.msra.mxu0 0.0
    %2084 = vmatpush.msra.mxu0 0.0
    %2085 = vmatpush.msra.mxu0 0.0
    %2086 = vmatpush.msra.mxu0 0.0
    %2087 = vmatpush.msra.mxu0 0.0
    %2088 = vmatpush.msra.mxu0 0.0
    %2089 = vmatpush.msra.mxu0 0.0
    %2090 = vmatpush.msra.mxu0 %v1954
    %2091 = vmatpush.msra.mxu0 %v1953
    %2092 = vmatpush.msra.mxu0 %v1952
    %2093 = vmatpush.msra.mxu0 %v1951
    %2094 = vmatpush.msra.mxu0 %v1950
    %2095 = vmatpush.msra.mxu0 %v1949
    %2096 = vmatpush.msra.mxu0 %v1948
    %2097 = vmatpush.msra.mxu0 %v1947
    %2098 = vmatmul.f32.gmra.mxu0 %v2077
    %v2099 = vpop.f32.mrf.mxu0
    %v2100 = vadd.f32 %v1963, %v2099
    %2101 = vmatmul.f32.gmra.mxu0 %v2080
    %v2102 = vpop.f32.mrf.mxu0
    %v2103 = vadd.f32 %v1963, %v2102
    %2104 = vdwg.mxu0
    %v2105 = vadd.f32 %v2072, %v2100
    %v2106 = vadd.f32 %v2073, %v2103
    %v2107 = vxor.u32 %v2105, 2147483648
    %v2108 = vxor.u32 %v2106, 2147483648
    %v2109 = vmul.f32 %v2107, 1.442695
    %v2110 = vpow.pop %v2109
    %v2111 = vmul.f32 %v2108, 1.442695
    %v2112 = vpow.pop %v2111
    %v2113 = vadd.f32 %v2110, 1.0
    %v2114 = vadd.f32 %v2112, 1.0
    %v2115 = vrcp.pop %v2113
    %v2116 = vmul.f32 %v2113, %v2115
    %v2117 = vsub.f32 1.0, %v2116
    %v2118 = vmul.f32 %v2115, %v2117
    %v2119 = vadd.f32 %v2115, %v2118
    %vm2120 = vweird.f32 %v2113
    %vm2121 = vweird.f32 %v2115
    %vm2122 = vmor %vm2120, %vm2121
    %v2123 = vsel %vm2122, %v2115, %v2119
    %v2124 = vand.u32 2147483647, %v2113
    %vm2125 = vcmp.eq.f32.partialorder %v2124, 8.507059e+37
    %v2126 = vand.u32 %v2113, 2147483648
    %v2127 = vor.u32 1.1754944e-38, %v2126
    %v2128 = vsel %vm2125, %v2127, %v2123
    %v2129 = vmul.f32 1.0, %v2128
    %v2130 = vrcp.pop %v2114
    %v2131 = vmul.f32 %v2114, %v2130
    %v2132 = vsub.f32 1.0, %v2131
    %v2133 = vmul.f32 %v2130, %v2132
    %v2134 = vadd.f32 %v2130, %v2133
    %vm2135 = vweird.f32 %v2114
    %vm2136 = vweird.f32 %v2130
    %vm2137 = vmor %vm2135, %vm2136
    %v2138 = vsel %vm2137, %v2130, %v2134
    %v2139 = vand.u32 2147483647, %v2114
    %vm2140 = vcmp.eq.f32.partialorder %v2139, 8.507059e+37
    %v2141 = vand.u32 %v2114, 2147483648
    %v2142 = vor.u32 1.1754944e-38, %v2141
    %v2143 = vsel %vm2140, %v2142, %v2138
    %v2144 = vmul.f32 1.0, %v2143
    %v2145 = vmul.f32 %v2129, %v2072
    %v2146 = vmul.f32 %v2144, %v2073
    %v2147 = vsub.f32 1.0, %v2129
    %v2148 = vsub.f32 1.0, %v2144
    %v2149 = vmul.f32 %v2147, %v2100
    %v2150 = vmul.f32 %v2148, %v2103
    %v2151 = vadd.f32 %v2145, %v2149
    %v2152 = vadd.f32 %v2146, %v2150
    %v2154 = vsel %vm332, %v2069, 0
    %v2157 = vsel %vm332, %v2070, 0
    %v2160 = vsel %vm332, %v2071, 0
    %v2163 = vsel %vm332, %v2151, 0
    %v2166 = vsel %vm332, %v2152, 0
    %2168 = vmatpush.xpose.msra.mxu0 0.0
    %2169 = vmatpush.xpose.msra.mxu0 0.0
    %2170 = vmatpush.xpose.msra.mxu0 0.0
    %2171 = vmatpush.xpose.msra.mxu0 0.0
    %2172 = vmatpush.xpose.msra.mxu0 0.0
    %2173 = vmatpush.xpose.msra.mxu0 0.0
    %2174 = vmatpush.xpose.msra.mxu0 0.0
    %2175 = vmatpush.xpose.msra.mxu0 0.0
    %2176 = vmatpush.xpose.msra.mxu0 0.0
    %2177 = vmatpush.xpose.msra.mxu0 0.0
    %2178 = vmatpush.xpose.msra.mxu0 0.0
    %2179 = vmatpush.xpose.msra.mxu0 0.0
    %2180 = vmatpush.xpose.msra.mxu0 0.0
    %2181 = vmatpush.xpose.msra.mxu0 0.0
    %2182 = vmatpush.xpose.msra.mxu0 %v2166
    %2183 = vmatpush.xpose.msra.mxu0 %v2163
    %2184 = vmatmul.f32.gmra.mxu0 %v2154
    %v2185 = vpop.f32.mrf.mxu0
    %v2186 = vadd.f32 0.0, %v2185
    %2187 = vmatmul.f32.gmra.mxu0 %v2157
    %v2188 = vpop.f32.mrf.mxu0
    %v2189 = vadd.f32 0.0, %v2188
    %2190 = vmatmul.f32.gmra.mxu0 %v2160
    %v2191 = vpop.f32.mrf.mxu0
    %v2192 = vadd.f32 0.0, %v2191
    %2193 = vdwg.mxu0
    %2194 = vmatpush.xpose.msra.mxu0 0.0
    %2195 = vmatpush.xpose.msra.mxu0 0.0
    %2196 = vmatpush.xpose.msra.mxu0 0.0
    %2197 = vmatpush.xpose.msra.mxu0 0.0
    %2198 = vmatpush.xpose.msra.mxu0 0.0
    %2199 = vmatpush.xpose.msra.mxu0 0.0
    %2200 = vmatpush.xpose.msra.mxu0 0.0
    %2201 = vmatpush.xpose.msra.mxu0 0.0
    %2202 = vmatpush.xpose.msra.mxu0 0.0
    %2203 = vmatpush.xpose.msra.mxu0 0.0
    %2204 = vmatpush.xpose.msra.mxu0 0.0
    %2205 = vmatpush.xpose.msra.mxu0 0.0
    %2206 = vmatpush.xpose.msra.mxu0 0.0
    %2207 = vmatpush.xpose.msra.mxu0 %v2160
    %2208 = vmatpush.xpose.msra.mxu0 %v2157
    %2209 = vmatpush.xpose.msra.mxu0 %v2154
    %2210 = vmatmul.f32.gmra.mxu0 %v2163
    %v2211 = vpop.f32.mrf.mxu0
    %v2212 = vadd.f32 0.0, %v2211
    %2213 = vmatmul.f32.gmra.mxu0 %v2166
    %v2214 = vpop.f32.mrf.mxu0
    %v2215 = vadd.f32 0.0, %v2214
    %2216 = vdwg.mxu0
    %v2217 = vld [vmem:[%s13] sm:$0xff]
    %v2218 = vld [vmem:[%s13 + $0x8] sm:$0xff]
    %v2219 = vld [vmem:[%s13 + $0x10] sm:$0xf]
    %v2220 = vld [vmem:[%s15] sm:$0xff]
    %v2221 = vld [vmem:[%s15 + $0x8] sm:$0xff]
    %v2222 = vld [vmem:[%s17] sm:$0xff]
    %v2223 = vld [vmem:[%s17 + $0x8] sm:$0xff]
    %v2224 = vld [vmem:[%s17 + $0x10] sm:$0xf]
    %v2225 = vld [vmem:[%s19] sm:$0xff]
    %v2226 = vld [vmem:[%s19 + $0x8] sm:$0xff]
    %v2227 = vmul.f32 %v2186, %v2217
    %v2228 = vmul.f32 %v2189, %v2218
    %v2229 = vmul.f32 %v2192, %v2219
    %vm2230 = vcmask 130048
    %v2231 = vsel %vm2230, %v2227, -inf
    %2232 = vmax.xlane.f32.xlu0 %v2231
    %v2233 = vpop.xlane.xlu0 %2232
    %v2234 = vsel %vm2230, %v2228, -inf
    %2235 = vmax.xlane.f32.xlu0 %v2234
    %v2236 = vpop.xlane.xlu0 %2235
    %vm2237 = vcmask 125952
    %v2238 = vsel %vm2237, %v2229, -inf
    %2239 = vmax.xlane.f32.xlu0 %v2238
    %v2240 = vpop.xlane.xlu0 %2239
    %v2241 = vsub.f32 %v2227, %v2233
    %v2242 = vsub.f32 %v2228, %v2236
    %v2243 = vsub.f32 %v2229, %v2240
    %v2244 = vmul.f32 %v2241, 1.442695
    %v2245 = vpow.pop %v2244
    %v2246 = vmul.f32 %v2242, 1.442695
    %v2247 = vpow.pop %v2246
    %v2248 = vmul.f32 %v2243, 1.442695
    %v2249 = vpow.pop %v2248
    %v2250 = vsel %vm2230, %v2245, 0.0
    %2251 = vadd.xlane.f32.xlu0 %v2250
    %v2252 = vpop.xlane.xlu0 %2251
    %v2253 = vsel %vm2230, %v2247, 0.0
    %2254 = vadd.xlane.f32.xlu0 %v2253
    %v2255 = vpop.xlane.xlu0 %2254
    %v2256 = vsel %vm2237, %v2249, 0.0
    %2257 = vadd.xlane.f32.xlu0 %v2256
    %v2258 = vpop.xlane.xlu0 %2257
    %v2259 = vrcp.pop %v2252
    %v2260 = vrcp.pop %v2255
    %v2261 = vrcp.pop %v2258
    %v2262 = vmul.f32 %v2245, %v2259
    %v2263 = vmul.f32 %v2247, %v2260
    %v2264 = vmul.f32 %v2249, %v2261
    %v2265 = vmul.f32 %v2262, %v2217
    %v2266 = vmul.f32 %v2263, %v2218
    %v2267 = vmul.f32 %v2264, %v2219
    %v2268 = vsel %vm2230, %v2265, 0.0
    %2269 = vadd.xlane.f32.xlu0 %v2268
    %v2270 = vpop.xlane.xlu0 %2269
    %v2271 = vsel %vm2230, %v2266, 0.0
    %2272 = vadd.xlane.f32.xlu0 %v2271
    %v2273 = vpop.xlane.xlu0 %2272
    %v2274 = vsel %vm2237, %v2267, 0.0
    %2275 = vadd.xlane.f32.xlu0 %v2274
    %v2276 = vpop.xlane.xlu0 %2275
    %v2277 = vadd.f32 %v2270, 1e-13
    %v2278 = vadd.f32 %v2273, 1e-13
    %v2279 = vadd.f32 %v2276, 1e-13
    %v2280 = vrcp.pop %v2277
    %v2281 = vrcp.pop %v2278
    %v2282 = vrcp.pop %v2279
    %v2283 = vmul.f32 %v2265, %v2280
    %v2284 = vmul.f32 %v2266, %v2281
    %v2285 = vmul.f32 %v2267, %v2282
    %v2287 = vsel %vm2230, %v2283, 0
    %v2290 = vsel %vm2230, %v2284, 0
    %v2293 = vsel %vm2230, %v2285, 0
    %2295 = vmatpush.msra.mxu0 0.0
    %2296 = vmatpush.msra.mxu0 0.0
    %2297 = vmatpush.msra.mxu0 0.0
    %2298 = vmatpush.msra.mxu0 0.0
    %2299 = vmatpush.msra.mxu0 0.0
    %2300 = vmatpush.msra.mxu0 0.0
    %2301 = vmatpush.msra.mxu0 0.0
    %2302 = vmatpush.msra.mxu0 0.0
    %2303 = vmatpush.msra.mxu0 0.0
    %2304 = vmatpush.msra.mxu0 0.0
    %2305 = vmatpush.msra.mxu0 0.0
    %2306 = vmatpush.msra.mxu0 0.0
    %2307 = vmatpush.msra.mxu0 0.0
    %2308 = vmatpush.msra.mxu0 0.0
    %2309 = vmatpush.msra.mxu0 %v2152
    %2310 = vmatpush.msra.mxu0 %v2151
    %2311 = vmatmul.f32.gmra.mxu0 %v2287
    %v2312 = vpop.f32.mrf.mxu0
    %v2313 = vadd.f32 0.0, %v2312
    %2314 = vmatmul.f32.gmra.mxu0 %v2290
    %v2315 = vpop.f32.mrf.mxu0
    %v2316 = vadd.f32 0.0, %v2315
    %2317 = vmatmul.f32.gmra.mxu0 %v2293
    %v2318 = vpop.f32.mrf.mxu0
    %v2319 = vadd.f32 0.0, %v2318
    %2320 = vdwg.mxu0
    %2322 = vset.pattern.permute.xlu0 0
    %2323 = vperm.xlu0 %2322, %v2222
    %v2324 = vpop.permute.xlu0 %2323
    %2327 = vset.pattern.permute.xlu0 0
    %2328 = vperm.xlu0 %2327, %v2223
    %v2329 = vpop.permute.xlu0 %2328
    %2332 = vset.pattern.permute.xlu0 0
    %2333 = vperm.xlu0 %2332, %v2224
    %v2334 = vpop.permute.xlu0 %2333
    %v2336 = vmul.f32 %v2313, %v2324
    %v2337 = vmul.f32 %v2316, %v2329
    %v2338 = vmul.f32 %v2319, %v2334
    %v2339 = vsub.f32 0.0, %v2186
    %v2340 = vsub.f32 0.0, %v2189
    %v2341 = vsub.f32 0.0, %v2192
    %v2342 = vmul.f32 %v2339, %v2217
    %v2343 = vmul.f32 %v2340, %v2218
    %v2344 = vmul.f32 %v2341, %v2219
    %v2345 = vsel %vm2230, %v2342, -inf
    %2346 = vmax.xlane.f32.xlu0 %v2345
    %v2347 = vpop.xlane.xlu0 %2346
    %v2348 = vsel %vm2230, %v2343, -inf
    %2349 = vmax.xlane.f32.xlu0 %v2348
    %v2350 = vpop.xlane.xlu0 %2349
    %v2351 = vsel %vm2237, %v2344, -inf
    %2352 = vmax.xlane.f32.xlu0 %v2351
    %v2353 = vpop.xlane.xlu0 %2352
    %v2354 = vsub.f32 %v2342, %v2347
    %v2355 = vsub.f32 %v2343, %v2350
    %v2356 = vsub.f32 %v2344, %v2353
    %v2357 = vmul.f32 %v2354, 1.442695
    %v2358 = vpow.pop %v2357
    %v2359 = vmul.f32 %v2355, 1.442695
    %v2360 = vpow.pop %v2359
    %v2361 = vmul.f32 %v2356, 1.442695
    %v2362 = vpow.pop %v2361
    %v2363 = vsel %vm2230, %v2358, 0.0
    %2364 = vadd.xlane.f32.xlu0 %v2363
    %v2365 = vpop.xlane.xlu0 %2364
    %v2366 = vsel %vm2230, %v2360, 0.0
    %2367 = vadd.xlane.f32.xlu0 %v2366
    %v2368 = vpop.xlane.xlu0 %2367
    %v2369 = vsel %vm2237, %v2362, 0.0
    %2370 = vadd.xlane.f32.xlu0 %v2369
    %v2371 = vpop.xlane.xlu0 %2370
    %v2372 = vrcp.pop %v2365
    %v2373 = vrcp.pop %v2368
    %v2374 = vrcp.pop %v2371
    %v2375 = vmul.f32 %v2358, %v2372
    %v2376 = vmul.f32 %v2360, %v2373
    %v2377 = vmul.f32 %v2362, %v2374
    %v2378 = vmul.f32 %v2375, %v2217
    %v2379 = vmul.f32 %v2376, %v2218
    %v2380 = vmul.f32 %v2377, %v2219
    %v2381 = vsel %vm2230, %v2378, 0.0
    %2382 = vadd.xlane.f32.xlu0 %v2381
    %v2383 = vpop.xlane.xlu0 %2382
    %v2384 = vsel %vm2230, %v2379, 0.0
    %2385 = vadd.xlane.f32.xlu0 %v2384
    %v2386 = vpop.xlane.xlu0 %2385
    %v2387 = vsel %vm2237, %v2380, 0.0
    %2388 = vadd.xlane.f32.xlu0 %v2387
    %v2389 = vpop.xlane.xlu0 %2388
    %v2390 = vadd.f32 %v2383, 1e-13
    %v2391 = vadd.f32 %v2386, 1e-13
    %v2392 = vadd.f32 %v2389, 1e-13
    %v2393 = vrcp.pop %v2390
    %v2394 = vrcp.pop %v2391
    %v2395 = vrcp.pop %v2392
    %v2396 = vmul.f32 %v2378, %v2393
    %v2397 = vmul.f32 %v2379, %v2394
    %v2398 = vmul.f32 %v2380, %v2395
    %v2400 = vsel %vm2230, %v2396, 0
    %v2403 = vsel %vm2230, %v2397, 0
    %v2406 = vsel %vm2230, %v2398, 0
    %2408 = vmatpush.msra.mxu0 0.0
    %2409 = vmatpush.msra.mxu0 0.0
    %2410 = vmatpush.msra.mxu0 0.0
    %2411 = vmatpush.msra.mxu0 0.0
    %2412 = vmatpush.msra.mxu0 0.0
    %2413 = vmatpush.msra.mxu0 0.0
    %2414 = vmatpush.msra.mxu0 0.0
    %2415 = vmatpush.msra.mxu0 0.0
    %2416 = vmatpush.msra.mxu0 0.0
    %2417 = vmatpush.msra.mxu0 0.0
    %2418 = vmatpush.msra.mxu0 0.0
    %2419 = vmatpush.msra.mxu0 0.0
    %2420 = vmatpush.msra.mxu0 0.0
    %2421 = vmatpush.msra.mxu0 0.0
    %2422 = vmatpush.msra.mxu0 %v2152
    %2423 = vmatpush.msra.mxu0 %v2151
    %2424 = vmatmul.f32.gmra.mxu0 %v2400
    %v2425 = vpop.f32.mrf.mxu0
    %v2426 = vadd.f32 0.0, %v2425
    %2427 = vmatmul.f32.gmra.mxu0 %v2403
    %v2428 = vpop.f32.mrf.mxu0
    %v2429 = vadd.f32 0.0, %v2428
    %2430 = vmatmul.f32.gmra.mxu0 %v2406
    %v2431 = vpop.f32.mrf.mxu0
    %v2432 = vadd.f32 0.0, %v2431
    %2433 = vdwg.mxu0
    %v2434 = vmul.f32 %v2426, %v2324
    %v2435 = vmul.f32 %v2429, %v2329
    %v2436 = vmul.f32 %v2432, %v2334
    %v2437 = vmul.f32 %v2212, %v2220
    %v2438 = vmul.f32 %v2215, %v2221
    %vm2439 = vcmask 162816
    %v2440 = vsel %vm2439, %v2437, -inf
    %2441 = vmax.xlane.f32.xlu0 %v2440
    %v2442 = vpop.xlane.xlu0 %2441
    %v2443 = vsel %vm2439, %v2438, -inf
    %2444 = vmax.xlane.f32.xlu0 %v2443
    %v2445 = vpop.xlane.xlu0 %2444
    %v2446 = vsub.f32 %v2437, %v2442
    %v2447 = vsub.f32 %v2438, %v2445
    %v2448 = vmul.f32 %v2446, 1.442695
    %v2449 = vpow.pop %v2448
    %v2450 = vmul.f32 %v2447, 1.442695
    %v2451 = vpow.pop %v2450
    %v2452 = vsel %vm2439, %v2449, 0.0
    %2453 = vadd.xlane.f32.xlu0 %v2452
    %v2454 = vpop.xlane.xlu0 %2453
    %v2455 = vsel %vm2439, %v2451, 0.0
    %2456 = vadd.xlane.f32.xlu0 %v2455
    %v2457 = vpop.xlane.xlu0 %2456
    %v2458 = vrcp.pop %v2454
    %v2459 = vrcp.pop %v2457
    %v2460 = vmul.f32 %v2449, %v2458
    %v2461 = vmul.f32 %v2451, %v2459
    %v2462 = vmul.f32 %v2460, %v2220
    %v2463 = vmul.f32 %v2461, %v2221
    %v2464 = vsel %vm2439, %v2462, 0.0
    %2465 = vadd.xlane.f32.xlu0 %v2464
    %v2466 = vpop.xlane.xlu0 %2465
    %v2467 = vsel %vm2439, %v2463, 0.0
    %2468 = vadd.xlane.f32.xlu0 %v2467
    %v2469 = vpop.xlane.xlu0 %2468
    %v2470 = vadd.f32 %v2466, 1e-13
    %v2471 = vadd.f32 %v2469, 1e-13
    %v2472 = vrcp.pop %v2470
    %v2473 = vrcp.pop %v2471
    %v2474 = vmul.f32 %v2462, %v2472
    %v2475 = vmul.f32 %v2463, %v2473
    %v2477 = vsel %vm2439, %v2474, 0
    %v2480 = vsel %vm2439, %v2475, 0
    %v2482 = vsel %vm505, %v2071, 0
    %2484 = vmatpush.msra.mxu0 0.0
    %2485 = vmatpush.msra.mxu0 0.0
    %2486 = vmatpush.msra.mxu0 0.0
    %2487 = vmatpush.msra.mxu0 0.0
    %2488 = vmatpush.msra.mxu0 0.0
    %2489 = vmatpush.msra.mxu0 0.0
    %2490 = vmatpush.msra.mxu0 0.0
    %2491 = vmatpush.msra.mxu0 0.0
    %2492 = vmatpush.msra.mxu0 0.0
    %2493 = vmatpush.msra.mxu0 0.0
    %2494 = vmatpush.msra.mxu0 0.0
    %2495 = vmatpush.msra.mxu0 0.0
    %2496 = vmatpush.msra.mxu0 0.0
    %2497 = vmatpush.msra.mxu0 %v2482
    %2498 = vmatpush.msra.mxu0 %v2070
    %2499 = vmatpush.msra.mxu0 %v2069
    %2500 = vmatmul.f32.gmra.mxu0 %v2477
    %v2501 = vpop.f32.mrf.mxu0
    %v2502 = vadd.f32 0.0, %v2501
    %2503 = vmatmul.f32.gmra.mxu0 %v2480
    %v2504 = vpop.f32.mrf.mxu0
    %v2505 = vadd.f32 0.0, %v2504
    %2506 = vdwg.mxu0
    %2508 = vset.pattern.permute.xlu0 0
    %2509 = vperm.xlu0 %2508, %v2225
    %v2510 = vpop.permute.xlu0 %2509
    %2513 = vset.pattern.permute.xlu0 0
    %2514 = vperm.xlu0 %2513, %v2226
    %v2515 = vpop.permute.xlu0 %2514
    %v2517 = vmul.f32 %v2502, %v2510
    %v2518 = vmul.f32 %v2505, %v2515
    %v2519 = vsub.f32 0.0, %v2212
    %v2520 = vsub.f32 0.0, %v2215
    %v2521 = vmul.f32 %v2519, %v2220
    %v2522 = vmul.f32 %v2520, %v2221
    %v2523 = vsel %vm2439, %v2521, -inf
    %2524 = vmax.xlane.f32.xlu0 %v2523
    %v2525 = vpop.xlane.xlu0 %2524
    %v2526 = vsel %vm2439, %v2522, -inf
    %2527 = vmax.xlane.f32.xlu0 %v2526
    %v2528 = vpop.xlane.xlu0 %2527
    %v2529 = vsub.f32 %v2521, %v2525
    %v2530 = vsub.f32 %v2522, %v2528
    %v2531 = vmul.f32 %v2529, 1.442695
    %v2532 = vpow.pop %v2531
    %v2533 = vmul.f32 %v2530, 1.442695
    %v2534 = vpow.pop %v2533
    %v2535 = vsel %vm2439, %v2532, 0.0
    %2536 = vadd.xlane.f32.xlu0 %v2535
    %v2537 = vpop.xlane.xlu0 %2536
    %v2538 = vsel %vm2439, %v2534, 0.0
    %2539 = vadd.xlane.f32.xlu0 %v2538
    %v2540 = vpop.xlane.xlu0 %2539
    %v2541 = vrcp.pop %v2537
    %v2542 = vrcp.pop %v2540
    %v2543 = vmul.f32 %v2532, %v2541
    %v2544 = vmul.f32 %v2534, %v2542
    %v2545 = vmul.f32 %v2543, %v2220
    %v2546 = vmul.f32 %v2544, %v2221
    %v2547 = vsel %vm2439, %v2545, 0.0
    %2548 = vadd.xlane.f32.xlu0 %v2547
    %v2549 = vpop.xlane.xlu0 %2548
    %v2550 = vsel %vm2439, %v2546, 0.0
    %2551 = vadd.xlane.f32.xlu0 %v2550
    %v2552 = vpop.xlane.xlu0 %2551
    %v2553 = vadd.f32 %v2549, 1e-13
    %v2554 = vadd.f32 %v2552, 1e-13
    %v2555 = vrcp.pop %v2553
    %v2556 = vrcp.pop %v2554
    %v2557 = vmul.f32 %v2545, %v2555
    %v2558 = vmul.f32 %v2546, %v2556
    %v2560 = vsel %vm2439, %v2557, 0
    %v2563 = vsel %vm2439, %v2558, 0
    %2565 = vmatpush.msra.mxu0 0.0
    %2566 = vmatpush.msra.mxu0 0.0
    %2567 = vmatpush.msra.mxu0 0.0
    %2568 = vmatpush.msra.mxu0 0.0
    %2569 = vmatpush.msra.mxu0 0.0
    %2570 = vmatpush.msra.mxu0 0.0
    %2571 = vmatpush.msra.mxu0 0.0
    %2572 = vmatpush.msra.mxu0 0.0
    %2573 = vmatpush.msra.mxu0 0.0
    %2574 = vmatpush.msra.mxu0 0.0
    %2575 = vmatpush.msra.mxu0 0.0
    %2576 = vmatpush.msra.mxu0 0.0
    %2577 = vmatpush.msra.mxu0 0.0
    %2578 = vmatpush.msra.mxu0 %v2482
    %2579 = vmatpush.msra.mxu0 %v2070
    %2580 = vmatpush.msra.mxu0 %v2069
    %2581 = vmatmul.f32.gmra.mxu0 %v2560
    %v2582 = vpop.f32.mrf.mxu0
    %v2583 = vadd.f32 0.0, %v2582
    %2584 = vmatmul.f32.gmra.mxu0 %v2563
    %v2585 = vpop.f32.mrf.mxu0
    %v2586 = vadd.f32 0.0, %v2585
    %2587 = vdwg.mxu0
    %v2588 = vmul.f32 %v2583, %v2510
    %v2589 = vmul.f32 %v2586, %v2515
    %v2590 = vld [vmem:[%s35] sm:$0xff]
    %v2591 = vld [vmem:[%s35 + $0x8] sm:$0xff]
    %v2592 = vld [vmem:[%s35 + $0x10] sm:$0xff]
    %v2593 = vld [vmem:[%s35 + $0x18] sm:$0xff]
    %v2594 = vld [vmem:[%s35 + $0x20] sm:$0xff]
    %v2595 = vld [vmem:[%s35 + $0x28] sm:$0xff]
    %v2596 = vld [vmem:[%s35 + $0x30] sm:$0xff]
    %v2597 = vld [vmem:[%s35 + $0x38] sm:$0xff]
    %v2598 = vld [vmem:[%s35 + $0x40] sm:$0xff]
    %v2599 = vld [vmem:[%s35 + $0x48] sm:$0xff]
    %v2600 = vld [vmem:[%s35 + $0x50] sm:$0xff]
    %v2601 = vld [vmem:[%s35 + $0x58] sm:$0xff]
    %v2602 = vld [vmem:[%s35 + $0x60] sm:$0xff]
    %v2603 = vld [vmem:[%s35 + $0x68] sm:$0xff]
    %v2604 = vld [vmem:[%s35 + $0x70] sm:$0xff]
    %v2605 = vld [vmem:[%s35 + $0x78] sm:$0xff]
    %v2606 = vld [vmem:[%s35 + $0x80] sm:$0xff]
    %v2607 = vld [vmem:[%s35 + $0x88] sm:$0xff]
    %v2608 = vld [vmem:[%s35 + $0x90] sm:$0xff]
    %v2609 = vld [vmem:[%s35 + $0x98] sm:$0xff]
    %v2610 = vld [vmem:[%s35 + $0xa0] sm:$0xff]
    %v2611 = vld [vmem:[%s35 + $0xa8] sm:$0xff]
    %v2612 = vld [vmem:[%s35 + $0xb0] sm:$0xff]
    %v2613 = vld [vmem:[%s35 + $0xb8] sm:$0xff]
    %v2614 = vld [vmem:[%s37] sm:$0x1]
    %v2615 = vld [vmem:[%s39] sm:$0xff]
    %v2616 = vld [vmem:[%s39 + $0x8] sm:$0xff]
    %v2617 = vld [vmem:[%s39 + $0x10] sm:$0xff]
    %v2618 = vld [vmem:[%s39 + $0x18] sm:$0xff]
    %v2619 = vld [vmem:[%s39 + $0x20] sm:$0xff]
    %v2620 = vld [vmem:[%s39 + $0x28] sm:$0xff]
    %v2621 = vld [vmem:[%s39 + $0x30] sm:$0xff]
    %v2622 = vld [vmem:[%s39 + $0x38] sm:$0xff]
    %v2623 = vld [vmem:[%s39 + $0x40] sm:$0xff]
    %v2624 = vld [vmem:[%s39 + $0x48] sm:$0xff]
    %v2625 = vld [vmem:[%s39 + $0x50] sm:$0xff]
    %v2626 = vld [vmem:[%s39 + $0x58] sm:$0xff]
    %v2627 = vld [vmem:[%s39 + $0x60] sm:$0xff]
    %v2628 = vld [vmem:[%s39 + $0x68] sm:$0xff]
    %v2629 = vld [vmem:[%s39 + $0x70] sm:$0xff]
    %v2630 = vld [vmem:[%s39 + $0x78] sm:$0xff]
    %v2631 = vld [vmem:[%s41] sm:$0x1]
    %v2632 = vld [vmem:[%s43] sm:$0xff]
    %v2633 = vld [vmem:[%s43 + $0x8] sm:$0xff]
    %v2634 = vld [vmem:[%s43 + $0x10] sm:$0xff]
    %v2635 = vld [vmem:[%s43 + $0x18] sm:$0xff]
    %v2636 = vld [vmem:[%s43 + $0x20] sm:$0xff]
    %v2637 = vld [vmem:[%s43 + $0x28] sm:$0xff]
    %v2638 = vld [vmem:[%s43 + $0x30] sm:$0xff]
    %v2639 = vld [vmem:[%s43 + $0x38] sm:$0xff]
    %v2640 = vld [vmem:[%s43 + $0x40] sm:$0xff]
    %v2641 = vld [vmem:[%s43 + $0x48] sm:$0xff]
    %v2642 = vld [vmem:[%s43 + $0x50] sm:$0xff]
    %v2643 = vld [vmem:[%s43 + $0x58] sm:$0xff]
    %v2644 = vld [vmem:[%s43 + $0x60] sm:$0xff]
    %v2645 = vld [vmem:[%s43 + $0x68] sm:$0xff]
    %v2646 = vld [vmem:[%s43 + $0x70] sm:$0xff]
    %v2647 = vld [vmem:[%s43 + $0x78] sm:$0xff]
    %v2648 = vld [vmem:[%s43 + $0x80] sm:$0xff]
    %v2649 = vld [vmem:[%s43 + $0x88] sm:$0xff]
    %v2650 = vld [vmem:[%s43 + $0x90] sm:$0xff]
    %v2651 = vld [vmem:[%s43 + $0x98] sm:$0xff]
    %v2652 = vld [vmem:[%s43 + $0xa0] sm:$0xff]
    %v2653 = vld [vmem:[%s43 + $0xa8] sm:$0xff]
    %v2654 = vld [vmem:[%s43 + $0xb0] sm:$0xff]
    %v2655 = vld [vmem:[%s43 + $0xb8] sm:$0xff]
    %v2656 = vld [vmem:[%s43 + $0xc0] sm:$0xff]
    %v2657 = vld [vmem:[%s43 + $0xc8] sm:$0xff]
    %v2658 = vld [vmem:[%s43 + $0xd0] sm:$0xff]
    %v2659 = vld [vmem:[%s43 + $0xd8] sm:$0xff]
    %v2660 = vld [vmem:[%s43 + $0xe0] sm:$0xff]
    %v2661 = vld [vmem:[%s43 + $0xe8] sm:$0xff]
    %v2662 = vld [vmem:[%s43 + $0xf0] sm:$0xff]
    %v2663 = vld [vmem:[%s43 + $0xf8] sm:$0xff]
    %v2664 = vld [vmem:[%s45] sm:$0xf]
    %2668 = vrot.lane.b32.xlu0 %v2336, 64
    %v2669 = vpop.permute.xlu0 %2668
    %2670 = vrot.lane.b32.xlu0 %v2337, 64
    %v2671 = vpop.permute.xlu0 %2670
    %2672 = vrot.lane.b32.xlu0 %v2338, 64
    %v2673 = vpop.permute.xlu0 %2672
    %v2677 = vsel %vm332, %v2069, %v2669
    %v2678 = vsel %vm332, %v2070, %v2671
    %v2679 = vsel %vm332, %v2071, %v2673
    %v2681 = vperm.slane %v2614, 0
    %v2684 = vsel %vm332, %v2434, 0
    %v2687 = vsel %vm332, %v2435, 0
    %v2690 = vsel %vm332, %v2436, 0
    %2692 = vmatpush.msra.mxu0 %v2605
    %2693 = vmatpush.msra.mxu0 %v2604
    %2694 = vmatpush.msra.mxu0 %v2603
    %2695 = vmatpush.msra.mxu0 %v2602
    %2696 = vmatpush.msra.mxu0 %v2601
    %2697 = vmatpush.msra.mxu0 %v2600
    %2698 = vmatpush.msra.mxu0 %v2599
    %2699 = vmatpush.msra.mxu0 %v2598
    %2700 = vmatpush.msra.mxu0 %v2597
    %2701 = vmatpush.msra.mxu0 %v2596
    %2702 = vmatpush.msra.mxu0 %v2595
    %2703 = vmatpush.msra.mxu0 %v2594
    %2704 = vmatpush.msra.mxu0 %v2593
    %2705 = vmatpush.msra.mxu0 %v2592
    %2706 = vmatpush.msra.mxu0 %v2591
    %2707 = vmatpush.msra.mxu0 %v2590
    %2708 = vmatmul.f32.gmra.mxu0 %v2677
    %v2709 = vpop.f32.mrf.mxu0
    %v2710 = vadd.f32 %v2681, %v2709
    %2711 = vmatmul.f32.gmra.mxu0 %v2678
    %v2712 = vpop.f32.mrf.mxu0
    %v2713 = vadd.f32 %v2681, %v2712
    %2714 = vmatmul.f32.gmra.mxu0 %v2679
    %v2715 = vpop.f32.mrf.mxu0
    %v2716 = vadd.f32 %v2681, %v2715
    %2717 = vdwg.mxu0
    %2718 = vmatpush.msra.mxu0 0.0
    %2719 = vmatpush.msra.mxu0 0.0
    %2720 = vmatpush.msra.mxu0 0.0
    %2721 = vmatpush.msra.mxu0 0.0
    %2722 = vmatpush.msra.mxu0 0.0
    %2723 = vmatpush.msra.mxu0 0.0
    %2724 = vmatpush.msra.mxu0 0.0
    %2725 = vmatpush.msra.mxu0 0.0
    %2726 = vmatpush.msra.mxu0 %v2613
    %2727 = vmatpush.msra.mxu0 %v2612
    %2728 = vmatpush.msra.mxu0 %v2611
    %2729 = vmatpush.msra.mxu0 %v2610
    %2730 = vmatpush.msra.mxu0 %v2609
    %2731 = vmatpush.msra.mxu0 %v2608
    %2732 = vmatpush.msra.mxu0 %v2607
    %2733 = vmatpush.msra.mxu0 %v2606
    %2734 = vmatmul.f32.gmra.mxu0 %v2684
    %v2735 = vpop.f32.mrf.mxu0
    %v2736 = vadd.f32 %v2710, %v2735
    %2737 = vmatmul.f32.gmra.mxu0 %v2687
    %v2738 = vpop.f32.mrf.mxu0
    %v2739 = vadd.f32 %v2713, %v2738
    %2740 = vmatmul.f32.gmra.mxu0 %v2690
    %v2741 = vpop.f32.mrf.mxu0
    %v2742 = vadd.f32 %v2716, %v2741
    %2743 = vdwg.mxu0
    %v2744 = vxor.u32 %v2736, 2147483648
    %v2745 = vxor.u32 %v2739, 2147483648
    %v2746 = vxor.u32 %v2742, 2147483648
    %v2747 = vmul.f32 %v2744, 1.442695
    %v2748 = vpow.pop %v2747
    %v2749 = vmul.f32 %v2745, 1.442695
    %v2750 = vpow.pop %v2749
    %v2751 = vmul.f32 %v2746, 1.442695
    %v2752 = vpow.pop %v2751
    %v2753 = vadd.f32 %v2748, 1.0
    %v2754 = vadd.f32 %v2750, 1.0
    %v2755 = vadd.f32 %v2752, 1.0
    %v2756 = vrcp.pop %v2753
    %v2757 = vmul.f32 %v2753, %v2756
    %v2758 = vsub.f32 1.0, %v2757
    %v2759 = vmul.f32 %v2756, %v2758
    %v2760 = vadd.f32 %v2756, %v2759
    %vm2761 = vweird.f32 %v2753
    %vm2762 = vweird.f32 %v2756
    %vm2763 = vmor %vm2761, %vm2762
    %v2764 = vsel %vm2763, %v2756, %v2760
    %v2765 = vand.u32 2147483647, %v2753
    %vm2766 = vcmp.eq.f32.partialorder %v2765, 8.507059e+37
    %v2767 = vand.u32 %v2753, 2147483648
    %v2768 = vor.u32 1.1754944e-38, %v2767
    %v2769 = vsel %vm2766, %v2768, %v2764
    %v2770 = vmul.f32 1.0, %v2769
    %v2771 = vrcp.pop %v2754
    %v2772 = vmul.f32 %v2754, %v2771
    %v2773 = vsub.f32 1.0, %v2772
    %v2774 = vmul.f32 %v2771, %v2773
    %v2775 = vadd.f32 %v2771, %v2774
    %vm2776 = vweird.f32 %v2754
    %vm2777 = vweird.f32 %v2771
    %vm2778 = vmor %vm2776, %vm2777
    %v2779 = vsel %vm2778, %v2771, %v2775
    %v2780 = vand.u32 2147483647, %v2754
    %vm2781 = vcmp.eq.f32.partialorder %v2780, 8.507059e+37
    %v2782 = vand.u32 %v2754, 2147483648
    %v2783 = vor.u32 1.1754944e-38, %v2782
    %v2784 = vsel %vm2781, %v2783, %v2779
    %v2785 = vmul.f32 1.0, %v2784
    %v2786 = vrcp.pop %v2755
    %v2787 = vmul.f32 %v2755, %v2786
    %v2788 = vsub.f32 1.0, %v2787
    %v2789 = vmul.f32 %v2786, %v2788
    %v2790 = vadd.f32 %v2786, %v2789
    %vm2791 = vweird.f32 %v2755
    %vm2792 = vweird.f32 %v2786
    %vm2793 = vmor %vm2791, %vm2792
    %v2794 = vsel %vm2793, %v2786, %v2790
    %v2795 = vand.u32 2147483647, %v2755
    %vm2796 = vcmp.eq.f32.partialorder %v2795, 8.507059e+37
    %v2797 = vand.u32 %v2755, 2147483648
    %v2798 = vor.u32 1.1754944e-38, %v2797
    %v2799 = vsel %vm2796, %v2798, %v2794
    %v2800 = vmul.f32 1.0, %v2799
    %v2801 = vmul.f32 %v2770, %v2336
    %v2802 = vmul.f32 %v2785, %v2337
    %v2803 = vmul.f32 %v2800, %v2338
    %v2804 = vsub.f32 1.0, %v2770
    %v2805 = vsub.f32 1.0, %v2785
    %v2806 = vsub.f32 1.0, %v2800
    %v2807 = vmul.f32 %v2804, %v2069
    %v2808 = vmul.f32 %v2805, %v2070
    %v2809 = vmul.f32 %v2806, %v2071
    %v2810 = vadd.f32 %v2801, %v2807
    %v2811 = vadd.f32 %v2802, %v2808
    %v2812 = vadd.f32 %v2803, %v2809
    %2813 = vrot.lane.b32.xlu0 %v2434, 64
    %v2814 = vpop.permute.xlu0 %2813
    %2815 = vrot.lane.b32.xlu0 %v2435, 64
    %v2816 = vpop.permute.xlu0 %2815
    %2817 = vrot.lane.b32.xlu0 %v2436, 64
    %v2818 = vpop.permute.xlu0 %2817
    %v2822 = vmul.f32 %v2770, %v2814
    %v2823 = vmul.f32 %v2785, %v2816
    %v2824 = vmul.f32 %v2800, %v2818
    %2825 = vrot.lane.b32.xlu0 %v2069, 64
    %v2826 = vpop.permute.xlu0 %2825
    %2827 = vrot.lane.b32.xlu0 %v2070, 64
    %v2828 = vpop.permute.xlu0 %2827
    %2829 = vrot.lane.b32.xlu0 %v2071, 64
    %v2830 = vpop.permute.xlu0 %2829
    %v2834 = vmul.f32 %v2804, %v2826
    %v2835 = vmul.f32 %v2805, %v2828
    %v2836 = vmul.f32 %v2806, %v2830
    %v2837 = vadd.f32 %v2822, %v2834
    %v2838 = vadd.f32 %v2823, %v2835
    %v2839 = vadd.f32 %v2824, %v2836
    %v2840 = vsel %vm332, %v2810, %v2837
    %v2841 = vsel %vm332, %v2811, %v2838
    %v2842 = vsel %vm332, %v2812, %v2839
    %v2844 = vperm.slane %v2631, 0
    %2846 = vmatpush.msra.mxu0 %v2630
    %2847 = vmatpush.msra.mxu0 %v2629
    %2848 = vmatpush.msra.mxu0 %v2628
    %2849 = vmatpush.msra.mxu0 %v2627
    %2850 = vmatpush.msra.mxu0 %v2626
    %2851 = vmatpush.msra.mxu0 %v2625
    %2852 = vmatpush.msra.mxu0 %v2624
    %2853 = vmatpush.msra.mxu0 %v2623
    %2854 = vmatpush.msra.mxu0 %v2622
    %2855 = vmatpush.msra.mxu0 %v2621
    %2856 = vmatpush.msra.mxu0 %v2620
    %2857 = vmatpush.msra.mxu0 %v2619
    %2858 = vmatpush.msra.mxu0 %v2618
    %2859 = vmatpush.msra.mxu0 %v2617
    %2860 = vmatpush.msra.mxu0 %v2616
    %2861 = vmatpush.msra.mxu0 %v2615
    %2862 = vmatmul.f32.gmra.mxu0 %v2840
    %v2863 = vpop.f32.mrf.mxu0
    %v2864 = vadd.f32 %v2844, %v2863
    %2865 = vmatmul.f32.gmra.mxu0 %v2841
    %v2866 = vpop.f32.mrf.mxu0
    %v2867 = vadd.f32 %v2844, %v2866
    %2868 = vmatmul.f32.gmra.mxu0 %v2842
    %v2869 = vpop.f32.mrf.mxu0
    %v2870 = vadd.f32 %v2844, %v2869
    %2871 = vdwg.mxu0
    %v2872 = vmax.f32 %v2864, 0.0
    %v2873 = vmax.f32 %v2867, 0.0
    %v2874 = vmax.f32 %v2870, 0.0
    %v2876 = vperm.slane %v2664, 0
    %v2877 = vperm.slane %v2664, 1
    %v2878 = vperm.slane %v2664, 2
    %v2879 = vperm.slane %v2664, 3
    %v2885 = vsel %vm332, %v2872, 0
    %v2888 = vsel %vm332, %v2873, 0
    %v2891 = vsel %vm332, %v2874, 0
    %2893 = vmatpush.msra.mxu0 0.0
    %2894 = vmatpush.msra.mxu0 0.0
    %2895 = vmatpush.msra.mxu0 0.0
    %2896 = vmatpush.msra.mxu0 0.0
    %2897 = vmatpush.msra.mxu0 0.0
    %2898 = vmatpush.msra.mxu0 0.0
    %2899 = vmatpush.msra.mxu0 0.0
    %2900 = vmatpush.msra.mxu0 0.0
    %2901 = vmatpush.msra.mxu0 %v2660
    %2902 = vmatpush.msra.mxu0 %v2656
    %2903 = vmatpush.msra.mxu0 %v2652
    %2904 = vmatpush.msra.mxu0 %v2648
    %2905 = vmatpush.msra.mxu0 %v2644
    %2906 = vmatpush.msra.mxu0 %v2640
    %2907 = vmatpush.msra.mxu0 %v2636
    %2908 = vmatpush.msra.mxu0 %v2632
    %2909 = vmatmul.f32.gmra.mxu0 %v2885
    %v2910 = vpop.f32.mrf.mxu0
    %v2911 = vadd.f32 %v2876, %v2910
    %2912 = vmatmul.f32.gmra.mxu0 %v2888
    %v2913 = vpop.f32.mrf.mxu0
    %v2914 = vadd.f32 %v2876, %v2913
    %2915 = vmatmul.f32.gmra.mxu0 %v2891
    %v2916 = vpop.f32.mrf.mxu0
    %v2917 = vadd.f32 %v2876, %v2916
    %2918 = vdwg.mxu0
    %2919 = vmatpush.msra.mxu0 0.0
    %2920 = vmatpush.msra.mxu0 0.0
    %2921 = vmatpush.msra.mxu0 0.0
    %2922 = vmatpush.msra.mxu0 0.0
    %2923 = vmatpush.msra.mxu0 0.0
    %2924 = vmatpush.msra.mxu0 0.0
    %2925 = vmatpush.msra.mxu0 0.0
    %2926 = vmatpush.msra.mxu0 0.0
    %2927 = vmatpush.msra.mxu0 %v2661
    %2928 = vmatpush.msra.mxu0 %v2657
    %2929 = vmatpush.msra.mxu0 %v2653
    %2930 = vmatpush.msra.mxu0 %v2649
    %2931 = vmatpush.msra.mxu0 %v2645
    %2932 = vmatpush.msra.mxu0 %v2641
    %2933 = vmatpush.msra.mxu0 %v2637
    %2934 = vmatpush.msra.mxu0 %v2633
    %2935 = vmatmul.f32.gmra.mxu0 %v2885
    %v2936 = vpop.f32.mrf.mxu0
    %v2937 = vadd.f32 %v2877, %v2936
    %2938 = vmatmul.f32.gmra.mxu0 %v2888
    %v2939 = vpop.f32.mrf.mxu0
    %v2940 = vadd.f32 %v2877, %v2939
    %2941 = vmatmul.f32.gmra.mxu0 %v2891
    %v2942 = vpop.f32.mrf.mxu0
    %v2943 = vadd.f32 %v2877, %v2942
    %2944 = vdwg.mxu0
    %2945 = vmatpush.msra.mxu0 0.0
    %2946 = vmatpush.msra.mxu0 0.0
    %2947 = vmatpush.msra.mxu0 0.0
    %2948 = vmatpush.msra.mxu0 0.0
    %2949 = vmatpush.msra.mxu0 0.0
    %2950 = vmatpush.msra.mxu0 0.0
    %2951 = vmatpush.msra.mxu0 0.0
    %2952 = vmatpush.msra.mxu0 0.0
    %2953 = vmatpush.msra.mxu0 %v2662
    %2954 = vmatpush.msra.mxu0 %v2658
    %2955 = vmatpush.msra.mxu0 %v2654
    %2956 = vmatpush.msra.mxu0 %v2650
    %2957 = vmatpush.msra.mxu0 %v2646
    %2958 = vmatpush.msra.mxu0 %v2642
    %2959 = vmatpush.msra.mxu0 %v2638
    %2960 = vmatpush.msra.mxu0 %v2634
    %2961 = vmatmul.f32.gmra.mxu0 %v2885
    %v2962 = vpop.f32.mrf.mxu0
    %v2963 = vadd.f32 %v2878, %v2962
    %2964 = vmatmul.f32.gmra.mxu0 %v2888
    %v2965 = vpop.f32.mrf.mxu0
    %v2966 = vadd.f32 %v2878, %v2965
    %2967 = vmatmul.f32.gmra.mxu0 %v2891
    %v2968 = vpop.f32.mrf.mxu0
    %v2969 = vadd.f32 %v2878, %v2968
    %2970 = vdwg.mxu0
    %2971 = vmatpush.msra.mxu0 0.0
    %2972 = vmatpush.msra.mxu0 0.0
    %2973 = vmatpush.msra.mxu0 0.0
    %2974 = vmatpush.msra.mxu0 0.0
    %2975 = vmatpush.msra.mxu0 0.0
    %2976 = vmatpush.msra.mxu0 0.0
    %2977 = vmatpush.msra.mxu0 0.0
    %2978 = vmatpush.msra.mxu0 0.0
    %2979 = vmatpush.msra.mxu0 %v2663
    %2980 = vmatpush.msra.mxu0 %v2659
    %2981 = vmatpush.msra.mxu0 %v2655
    %2982 = vmatpush.msra.mxu0 %v2651
    %2983 = vmatpush.msra.mxu0 %v2647
    %2984 = vmatpush.msra.mxu0 %v2643
    %2985 = vmatpush.msra.mxu0 %v2639
    %2986 = vmatpush.msra.mxu0 %v2635
    %2987 = vmatmul.f32.gmra.mxu0 %v2885
    %v2988 = vpop.f32.mrf.mxu0
    %v2989 = vadd.f32 %v2879, %v2988
    %2990 = vmatmul.f32.gmra.mxu0 %v2888
    %v2991 = vpop.f32.mrf.mxu0
    %v2992 = vadd.f32 %v2879, %v2991
    %2993 = vmatmul.f32.gmra.mxu0 %v2891
    %v2994 = vpop.f32.mrf.mxu0
    %v2995 = vadd.f32 %v2879, %v2994
    %2996 = vdwg.mxu0
    %2997 = vst [vmem:[#allocation6] sm:$0xff] %v2911
    %2998 = vst [vmem:[#allocation6 + $0x8] sm:$0xff] %v2937
    %2999 = vst [vmem:[#allocation6 + $0x10] sm:$0xff] %v2963
    %3000 = vst [vmem:[#allocation6 + $0x18] sm:$0xff] %v2989
    %3001 = vst [vmem:[#allocation6 + $0x20] sm:$0xff] %v2914
    %3002 = vst [vmem:[#allocation6 + $0x28] sm:$0xff] %v2940
    %3003 = vst [vmem:[#allocation6 + $0x30] sm:$0xff] %v2966
    %3004 = vst [vmem:[#allocation6 + $0x38] sm:$0xff] %v2992
    %3005 = vst [vmem:[#allocation6 + $0x40] sm:$0xf] %v2917
    %3006 = vst [vmem:[#allocation6 + $0x48] sm:$0xf] %v2943
    %3007 = vst [vmem:[#allocation6 + $0x50] sm:$0xf] %v2969
    %3008 = vst [vmem:[#allocation6 + $0x58] sm:$0xf] %v2995
    %3011 = vrot.lane.b32.xlu0 %v2517, 64
    %v3012 = vpop.permute.xlu0 %3011
    %3013 = vrot.lane.b32.xlu0 %v2518, 64
    %v3014 = vpop.permute.xlu0 %3013
    %v3017 = vsel %vm332, %v2151, %v3012
    %v3018 = vsel %vm332, %v2152, %v3014
    %v3020 = vsel %vm332, %v2588, 0
    %v3023 = vsel %vm332, %v2589, 0
    %3025 = vmatpush.msra.mxu0 %v2605
    %3026 = vmatpush.msra.mxu0 %v2604
    %3027 = vmatpush.msra.mxu0 %v2603
    %3028 = vmatpush.msra.mxu0 %v2602
    %3029 = vmatpush.msra.mxu0 %v2601
    %3030 = vmatpush.msra.mxu0 %v2600
    %3031 = vmatpush.msra.mxu0 %v2599
    %3032 = vmatpush.msra.mxu0 %v2598
    %3033 = vmatpush.msra.mxu0 %v2597
    %3034 = vmatpush.msra.mxu0 %v2596
    %3035 = vmatpush.msra.mxu0 %v2595
    %3036 = vmatpush.msra.mxu0 %v2594
    %3037 = vmatpush.msra.mxu0 %v2593
    %3038 = vmatpush.msra.mxu0 %v2592
    %3039 = vmatpush.msra.mxu0 %v2591
    %3040 = vmatpush.msra.mxu0 %v2590
    %3041 = vmatmul.f32.gmra.mxu0 %v3017
    %v3042 = vpop.f32.mrf.mxu0
    %v3043 = vadd.f32 %v2681, %v3042
    %3044 = vmatmul.f32.gmra.mxu0 %v3018
    %v3045 = vpop.f32.mrf.mxu0
    %v3046 = vadd.f32 %v2681, %v3045
    %3047 = vdwg.mxu0
    %3048 = vmatpush.msra.mxu0 0.0
    %3049 = vmatpush.msra.mxu0 0.0
    %3050 = vmatpush.msra.mxu0 0.0
    %3051 = vmatpush.msra.mxu0 0.0
    %3052 = vmatpush.msra.mxu0 0.0
    %3053 = vmatpush.msra.mxu0 0.0
    %3054 = vmatpush.msra.mxu0 0.0
    %3055 = vmatpush.msra.mxu0 0.0
    %3056 = vmatpush.msra.mxu0 %v2613
    %3057 = vmatpush.msra.mxu0 %v2612
    %3058 = vmatpush.msra.mxu0 %v2611
    %3059 = vmatpush.msra.mxu0 %v2610
    %3060 = vmatpush.msra.mxu0 %v2609
    %3061 = vmatpush.msra.mxu0 %v2608
    %3062 = vmatpush.msra.mxu0 %v2607
    %3063 = vmatpush.msra.mxu0 %v2606
    %3064 = vmatmul.f32.gmra.mxu0 %v3020
    %v3065 = vpop.f32.mrf.mxu0
    %v3066 = vadd.f32 %v3043, %v3065
    %3067 = vmatmul.f32.gmra.mxu0 %v3023
    %v3068 = vpop.f32.mrf.mxu0
    %v3069 = vadd.f32 %v3046, %v3068
    %3070 = vdwg.mxu0
    %v3071 = vxor.u32 %v3066, 2147483648
    %v3072 = vxor.u32 %v3069, 2147483648
    %v3073 = vmul.f32 %v3071, 1.442695
    %v3074 = vpow.pop %v3073
    %v3075 = vmul.f32 %v3072, 1.442695
    %v3076 = vpow.pop %v3075
    %v3077 = vadd.f32 %v3074, 1.0
    %v3078 = vadd.f32 %v3076, 1.0
    %v3079 = vrcp.pop %v3077
    %v3080 = vmul.f32 %v3077, %v3079
    %v3081 = vsub.f32 1.0, %v3080
    %v3082 = vmul.f32 %v3079, %v3081
    %v3083 = vadd.f32 %v3079, %v3082
    %vm3084 = vweird.f32 %v3077
    %vm3085 = vweird.f32 %v3079
    %vm3086 = vmor %vm3084, %vm3085
    %v3087 = vsel %vm3086, %v3079, %v3083
    %v3088 = vand.u32 2147483647, %v3077
    %vm3089 = vcmp.eq.f32.partialorder %v3088, 8.507059e+37
    %v3090 = vand.u32 %v3077, 2147483648
    %v3091 = vor.u32 1.1754944e-38, %v3090
    %v3092 = vsel %vm3089, %v3091, %v3087
    %v3093 = vmul.f32 1.0, %v3092
    %v3094 = vrcp.pop %v3078
    %v3095 = vmul.f32 %v3078, %v3094
    %v3096 = vsub.f32 1.0, %v3095
    %v3097 = vmul.f32 %v3094, %v3096
    %v3098 = vadd.f32 %v3094, %v3097
    %vm3099 = vweird.f32 %v3078
    %vm3100 = vweird.f32 %v3094
    %vm3101 = vmor %vm3099, %vm3100
    %v3102 = vsel %vm3101, %v3094, %v3098
    %v3103 = vand.u32 2147483647, %v3078
    %vm3104 = vcmp.eq.f32.partialorder %v3103, 8.507059e+37
    %v3105 = vand.u32 %v3078, 2147483648
    %v3106 = vor.u32 1.1754944e-38, %v3105
    %v3107 = vsel %vm3104, %v3106, %v3102
    %v3108 = vmul.f32 1.0, %v3107
    %v3109 = vmul.f32 %v3093, %v2517
    %v3110 = vmul.f32 %v3108, %v2518
    %v3111 = vsub.f32 1.0, %v3093
    %v3112 = vsub.f32 1.0, %v3108
    %v3113 = vmul.f32 %v3111, %v2151
    %v3114 = vmul.f32 %v3112, %v2152
    %v3115 = vadd.f32 %v3109, %v3113
    %v3116 = vadd.f32 %v3110, %v3114
    %3117 = vrot.lane.b32.xlu0 %v2588, 64
    %v3118 = vpop.permute.xlu0 %3117
    %3119 = vrot.lane.b32.xlu0 %v2589, 64
    %v3120 = vpop.permute.xlu0 %3119
    %v3123 = vmul.f32 %v3093, %v3118
    %v3124 = vmul.f32 %v3108, %v3120
    %3125 = vrot.lane.b32.xlu0 %v2151, 64
    %v3126 = vpop.permute.xlu0 %3125
    %3127 = vrot.lane.b32.xlu0 %v2152, 64
    %v3128 = vpop.permute.xlu0 %3127
    %v3131 = vmul.f32 %v3111, %v3126
    %v3132 = vmul.f32 %v3112, %v3128
    %v3133 = vadd.f32 %v3123, %v3131
    %v3134 = vadd.f32 %v3124, %v3132
    %v3135 = vsel %vm332, %v3115, %v3133
    %v3136 = vsel %vm332, %v3116, %v3134
    %3137 = vmatpush.msra.mxu0 %v2630
    %3138 = vmatpush.msra.mxu0 %v2629
    %3139 = vmatpush.msra.mxu0 %v2628
    %3140 = vmatpush.msra.mxu0 %v2627
    %3141 = vmatpush.msra.mxu0 %v2626
    %3142 = vmatpush.msra.mxu0 %v2625
    %3143 = vmatpush.msra.mxu0 %v2624
    %3144 = vmatpush.msra.mxu0 %v2623
    %3145 = vmatpush.msra.mxu0 %v2622
    %3146 = vmatpush.msra.mxu0 %v2621
    %3147 = vmatpush.msra.mxu0 %v2620
    %3148 = vmatpush.msra.mxu0 %v2619
    %3149 = vmatpush.msra.mxu0 %v2618
    %3150 = vmatpush.msra.mxu0 %v2617
    %3151 = vmatpush.msra.mxu0 %v2616
    %3152 = vmatpush.msra.mxu0 %v2615
    %3153 = vmatmul.f32.gmra.mxu0 %v3135
    %v3154 = vpop.f32.mrf.mxu0
    %v3155 = vadd.f32 %v2844, %v3154
    %3156 = vmatmul.f32.gmra.mxu0 %v3136
    %v3157 = vpop.f32.mrf.mxu0
    %v3158 = vadd.f32 %v2844, %v3157
    %3159 = vdwg.mxu0
    %v3160 = vmax.f32 %v3155, 0.0
    %v3161 = vmax.f32 %v3158, 0.0
    %v3163 = vsel %vm332, %v3160, 0
    %v3166 = vsel %vm332, %v3161, 0
    %3168 = vmatpush.msra.mxu0 0.0
    %3169 = vmatpush.msra.mxu0 0.0
    %3170 = vmatpush.msra.mxu0 0.0
    %3171 = vmatpush.msra.mxu0 0.0
    %3172 = vmatpush.msra.mxu0 0.0
    %3173 = vmatpush.msra.mxu0 0.0
    %3174 = vmatpush.msra.mxu0 0.0
    %3175 = vmatpush.msra.mxu0 0.0
    %3176 = vmatpush.msra.mxu0 %v2660
    %3177 = vmatpush.msra.mxu0 %v2656
    %3178 = vmatpush.msra.mxu0 %v2652
    %3179 = vmatpush.msra.mxu0 %v2648
    %3180 = vmatpush.msra.mxu0 %v2644
    %3181 = vmatpush.msra.mxu0 %v2640
    %3182 = vmatpush.msra.mxu0 %v2636
    %3183 = vmatpush.msra.mxu0 %v2632
    %3184 = vmatmul.f32.gmra.mxu0 %v3163
    %v3185 = vpop.f32.mrf.mxu0
    %v3186 = vadd.f32 %v2876, %v3185
    %3187 = vmatmul.f32.gmra.mxu0 %v3166
    %v3188 = vpop.f32.mrf.mxu0
    %v3189 = vadd.f32 %v2876, %v3188
    %3190 = vdwg.mxu0
    %3191 = vmatpush.msra.mxu0 0.0
    %3192 = vmatpush.msra.mxu0 0.0
    %3193 = vmatpush.msra.mxu0 0.0
    %3194 = vmatpush.msra.mxu0 0.0
    %3195 = vmatpush.msra.mxu0 0.0
    %3196 = vmatpush.msra.mxu0 0.0
    %3197 = vmatpush.msra.mxu0 0.0
    %3198 = vmatpush.msra.mxu0 0.0
    %3199 = vmatpush.msra.mxu0 %v2661
    %3200 = vmatpush.msra.mxu0 %v2657
    %3201 = vmatpush.msra.mxu0 %v2653
    %3202 = vmatpush.msra.mxu0 %v2649
    %3203 = vmatpush.msra.mxu0 %v2645
    %3204 = vmatpush.msra.mxu0 %v2641
    %3205 = vmatpush.msra.mxu0 %v2637
    %3206 = vmatpush.msra.mxu0 %v2633
    %3207 = vmatmul.f32.gmra.mxu0 %v3163
    %v3208 = vpop.f32.mrf.mxu0
    %v3209 = vadd.f32 %v2877, %v3208
    %3210 = vmatmul.f32.gmra.mxu0 %v3166
    %v3211 = vpop.f32.mrf.mxu0
    %v3212 = vadd.f32 %v2877, %v3211
    %3213 = vdwg.mxu0
    %3214 = vmatpush.msra.mxu0 0.0
    %3215 = vmatpush.msra.mxu0 0.0
    %3216 = vmatpush.msra.mxu0 0.0
    %3217 = vmatpush.msra.mxu0 0.0
    %3218 = vmatpush.msra.mxu0 0.0
    %3219 = vmatpush.msra.mxu0 0.0
    %3220 = vmatpush.msra.mxu0 0.0
    %3221 = vmatpush.msra.mxu0 0.0
    %3222 = vmatpush.msra.mxu0 %v2662
    %3223 = vmatpush.msra.mxu0 %v2658
    %3224 = vmatpush.msra.mxu0 %v2654
    %3225 = vmatpush.msra.mxu0 %v2650
    %3226 = vmatpush.msra.mxu0 %v2646
    %3227 = vmatpush.msra.mxu0 %v2642
    %3228 = vmatpush.msra.mxu0 %v2638
    %3229 = vmatpush.msra.mxu0 %v2634
    %3230 = vmatmul.f32.gmra.mxu0 %v3163
    %v3231 = vpop.f32.mrf.mxu0
    %v3232 = vadd.f32 %v2878, %v3231
    %3233 = vmatmul.f32.gmra.mxu0 %v3166
    %v3234 = vpop.f32.mrf.mxu0
    %v3235 = vadd.f32 %v2878, %v3234
    %3236 = vdwg.mxu0
    %3237 = vmatpush.msra.mxu0 0.0
    %3238 = vmatpush.msra.mxu0 0.0
    %3239 = vmatpush.msra.mxu0 0.0
    %3240 = vmatpush.msra.mxu0 0.0
    %3241 = vmatpush.msra.mxu0 0.0
    %3242 = vmatpush.msra.mxu0 0.0
    %3243 = vmatpush.msra.mxu0 0.0
    %3244 = vmatpush.msra.mxu0 0.0
    %3245 = vmatpush.msra.mxu0 %v2663
    %3246 = vmatpush.msra.mxu0 %v2659
    %3247 = vmatpush.msra.mxu0 %v2655
    %3248 = vmatpush.msra.mxu0 %v2651
    %3249 = vmatpush.msra.mxu0 %v2647
    %3250 = vmatpush.msra.mxu0 %v2643
    %3251 = vmatpush.msra.mxu0 %v2639
    %3252 = vmatpush.msra.mxu0 %v2635
    %3253 = vmatmul.f32.gmra.mxu0 %v3163
    %v3254 = vpop.f32.mrf.mxu0
    %v3255 = vadd.f32 %v2879, %v3254
    %3256 = vmatmul.f32.gmra.mxu0 %v3166
    %v3257 = vpop.f32.mrf.mxu0
    %v3258 = vadd.f32 %v2879, %v3257
    %3259 = vdwg.mxu0
    %3260 = vst [vmem:[#allocation7] sm:$0xff] %v3186
    %3261 = vst [vmem:[#allocation7 + $0x8] sm:$0xff] %v3209
    %3262 = vst [vmem:[#allocation7 + $0x10] sm:$0xff] %v3232
    %3263 = vst [vmem:[#allocation7 + $0x18] sm:$0xff] %v3255
    %3264 = vst [vmem:[#allocation7 + $0x20] sm:$0xff] %v3189
    %3265 = vst [vmem:[#allocation7 + $0x28] sm:$0xff] %v3212
    %3266 = vst [vmem:[#allocation7 + $0x30] sm:$0xff] %v3235
    %3267 = vst [vmem:[#allocation7 + $0x38] sm:$0xff] %v3258
    %v3268 = vld [vmem:[%s47] sm:$0xff]
    %v3269 = vld [vmem:[%s47 + $0x8] sm:$0xff]
    %v3270 = vld [vmem:[%s47 + $0x10] sm:$0xff]
    %v3271 = vld [vmem:[%s47 + $0x18] sm:$0xff]
    %v3272 = vld [vmem:[%s47 + $0x20] sm:$0xff]
    %v3273 = vld [vmem:[%s47 + $0x28] sm:$0xff]
    %v3274 = vld [vmem:[%s47 + $0x30] sm:$0xff]
    %v3275 = vld [vmem:[%s47 + $0x38] sm:$0xff]
    %v3276 = vld [vmem:[%s47 + $0x40] sm:$0xff]
    %v3277 = vld [vmem:[%s47 + $0x48] sm:$0xff]
    %v3278 = vld [vmem:[%s47 + $0x50] sm:$0xff]
    %v3279 = vld [vmem:[%s47 + $0x58] sm:$0xff]
    %v3280 = vld [vmem:[%s47 + $0x60] sm:$0xff]
    %v3281 = vld [vmem:[%s47 + $0x68] sm:$0xff]
    %v3282 = vld [vmem:[%s47 + $0x70] sm:$0xff]
    %v3283 = vld [vmem:[%s47 + $0x78] sm:$0xff]
    %v3284 = vld [vmem:[#allocation6] sm:$0x3]
    %v3285 = vld [vmem:[#allocation7] sm:$0x3]
    %v3286 = vld [vmem:[#allocation6 + $0x48] sm:$0xc]
    %v3287 = vld [vmem:[#allocation7 + $0x28] sm:$0xc0]
    %v3288 = vld [vmem:[#allocation6 + $0x10] sm:$0x3]
    %v3289 = vld [vmem:[#allocation7 + $0x10] sm:$0x3]
    %v3290 = vld [vmem:[#allocation6 + $0x58] sm:$0xc]
    %v3291 = vld [vmem:[#allocation7 + $0x38] sm:$0xc0]
    %v3293 = vrot.slane %v3285, 6
    %v3296 = vrot.slane %v3286, 6
    %v3299 = vrot.slane %v3289, 6
    %v3302 = vrot.slane %v3290, 6
    %v3304 = vsel %vm242, %v3284, %v3293
    %v3305 = vsel %vm505, %v3304, %v3296
    %v3306 = vsel %vm507, %v3305, %v3287
    %v3307 = vsel %vm242, %v3288, %v3299
    %v3308 = vsel %vm505, %v3307, %v3302
    %v3309 = vsel %vm507, %v3308, %v3291
    %v3310 = vld [vmem:[%s5] sm:$0x3]
    %v3311 = vld [vmem:[%s510] sm:$0x3]
    %v3312 = vld [vmem:[%s7] sm:$0x3]
    %v3313 = vld [vmem:[%s513] sm:$0x3]
    %v3314 = vld [vmem:[%s9] sm:$0x3]
    %s3315 = scalar_lea.vmem %s9, 18
    %v3316 = vld [vmem:[%s3315] sm:$0x3]
    %v3317 = vld [vmem:[%s11] sm:$0x3]
    %s3318 = scalar_lea.vmem %s11, 14
    %v3319 = vld [vmem:[%s3318] sm:$0x3]
    %v3321 = vrot.slane %v3312, 6
    %v3323 = vsel %vm242, %v3310, %v3321
    %v3325 = vrot.slane %v3313, 6
    %v3327 = vsel %vm242, %v3311, %v3325
    %v3329 = vrot.slane %v3327, 4
    %v3331 = vsel %vm505, %v3323, %v3329
    %v3333 = vrot.slane %v3317, 6
    %v3335 = vsel %vm242, %v3314, %v3333
    %v3337 = vrot.slane %v3319, 6
    %v3339 = vsel %vm242, %v3316, %v3337
    %v3341 = vrot.slane %v3339, 4
    %v3343 = vsel %vm505, %v3335, %v3341
    %3344 = vmatpush.msra.mxu0 0.0
    %3345 = vmatpush.msra.mxu0 0.0
    %3346 = vmatpush.msra.mxu0 0.0
    %3347 = vmatpush.msra.mxu0 0.0
    %3348 = vmatpush.msra.mxu0 0.0
    %3349 = vmatpush.msra.mxu0 0.0
    %3350 = vmatpush.msra.mxu0 0.0
    %3351 = vmatpush.msra.mxu0 0.0
    %3352 = vmatpush.msra.mxu0 0.0
    %3353 = vmatpush.msra.mxu0 0.0
    %3354 = vmatpush.msra.mxu0 0.0
    %3355 = vmatpush.msra.mxu0 0.0
    %3356 = vmatpush.msra.mxu0 %v3280
    %3357 = vmatpush.msra.mxu0 %v3276
    %3358 = vmatpush.msra.mxu0 %v3272
    %3359 = vmatpush.msra.mxu0 %v3268
    %3360 = vmatmul.f32.gmra.mxu0 %v529
    %v3361 = vpop.f32.mrf.mxu0
    %v3362 = vadd.f32 0.0, %v3361
    %3363 = vmatmul.f32.gmra.mxu0 %v529
    %v3364 = vpop.f32.mrf.mxu0
    %v3365 = vadd.f32 0.0, %v3364
    %3366 = vdwg.mxu0
    %3367 = vmatpush.msra.mxu0 0.0
    %3368 = vmatpush.msra.mxu0 0.0
    %3369 = vmatpush.msra.mxu0 0.0
    %3370 = vmatpush.msra.mxu0 0.0
    %3371 = vmatpush.msra.mxu0 0.0
    %3372 = vmatpush.msra.mxu0 0.0
    %3373 = vmatpush.msra.mxu0 0.0
    %3374 = vmatpush.msra.mxu0 0.0
    %3375 = vmatpush.msra.mxu0 0.0
    %3376 = vmatpush.msra.mxu0 0.0
    %3377 = vmatpush.msra.mxu0 0.0
    %3378 = vmatpush.msra.mxu0 0.0
    %3379 = vmatpush.msra.mxu0 %v3281
    %3380 = vmatpush.msra.mxu0 %v3277
    %3381 = vmatpush.msra.mxu0 %v3273
    %3382 = vmatpush.msra.mxu0 %v3269
    %3383 = vmatmul.f32.gmra.mxu0 %v529
    %v3384 = vpop.f32.mrf.mxu0
    %v3385 = vadd.f32 0.0, %v3384
    %3386 = vmatmul.f32.gmra.mxu0 %v529
    %v3387 = vpop.f32.mrf.mxu0
    %v3388 = vadd.f32 0.0, %v3387
    %3389 = vdwg.mxu0
    %3390 = vmatpush.msra.mxu0 0.0
    %3391 = vmatpush.msra.mxu0 0.0
    %3392 = vmatpush.msra.mxu0 0.0
    %3393 = vmatpush.msra.mxu0 0.0
    %3394 = vmatpush.msra.mxu0 0.0
    %3395 = vmatpush.msra.mxu0 0.0
    %3396 = vmatpush.msra.mxu0 0.0
    %3397 = vmatpush.msra.mxu0 0.0
    %3398 = vmatpush.msra.mxu0 0.0
    %3399 = vmatpush.msra.mxu0 0.0
    %3400 = vmatpush.msra.mxu0 0.0
    %3401 = vmatpush.msra.mxu0 0.0
    %3402 = vmatpush.msra.mxu0 %v3282
    %3403 = vmatpush.msra.mxu0 %v3278
    %3404 = vmatpush.msra.mxu0 %v3274
    %3405 = vmatpush.msra.mxu0 %v3270
    %3406 = vmatmul.f32.gmra.mxu0 %v529
    %v3407 = vpop.f32.mrf.mxu0
    %v3408 = vadd.f32 0.0, %v3407
    %3409 = vmatmul.f32.gmra.mxu0 %v529
    %v3410 = vpop.f32.mrf.mxu0
    %v3411 = vadd.f32 0.0, %v3410
    %3412 = vdwg.mxu0
    %3413 = vmatpush.msra.mxu0 0.0
    %3414 = vmatpush.msra.mxu0 0.0
    %3415 = vmatpush.msra.mxu0 0.0
    %3416 = vmatpush.msra.mxu0 0.0
    %3417 = vmatpush.msra.mxu0 0.0
    %3418 = vmatpush.msra.mxu0 0.0
    %3419 = vmatpush.msra.mxu0 0.0
    %3420 = vmatpush.msra.mxu0 0.0
    %3421 = vmatpush.msra.mxu0 0.0
    %3422 = vmatpush.msra.mxu0 0.0
    %3423 = vmatpush.msra.mxu0 0.0
    %3424 = vmatpush.msra.mxu0 0.0
    %3425 = vmatpush.msra.mxu0 %v3283
    %3426 = vmatpush.msra.mxu0 %v3279
    %3427 = vmatpush.msra.mxu0 %v3275
    %3428 = vmatpush.msra.mxu0 %v3271
    %3429 = vmatmul.f32.gmra.mxu0 %v529
    %v3430 = vpop.f32.mrf.mxu0
    %v3431 = vadd.f32 0.0, %v3430
    %3432 = vmatmul.f32.gmra.mxu0 %v529
    %v3433 = vpop.f32.mrf.mxu0
    %v3434 = vadd.f32 0.0, %v3433
    %3435 = vdwg.mxu0
    %v3436 = vmul.f32 %v144, %v3362
    %v3437 = vmul.f32 %v145, %v3365
    %v3438 = vmul.f32 %v154, %v3385
    %v3439 = vmul.f32 %v155, %v3388
    %v3440 = vadd.f32 %v3436, %v3438
    %v3441 = vadd.f32 %v3437, %v3439
    %v3442 = vmul.f32 %v164, %v3408
    %v3443 = vmul.f32 %v165, %v3411
    %v3444 = vadd.f32 %v3440, %v3442
    %v3445 = vadd.f32 %v3441, %v3443
    %v3446 = vmul.f32 %v174, %v3431
    %v3447 = vmul.f32 %v175, %v3434
    %v3448 = vadd.f32 %v3444, %v3446
    %v3449 = vadd.f32 %v3445, %v3447
    %v3450 = vadd.f32 %v3306, %v3448
    %v3451 = vadd.f32 %v3309, %v3449
    %v3452 = vxor.u32 %v3450, 2147483648
    %v3453 = vxor.u32 %v3451, 2147483648
    %v3454 = vmul.f32 %v3452, 1.442695
    %v3455 = vpow.pop %v3454
    %v3456 = vmul.f32 %v3453, 1.442695
    %v3457 = vpow.pop %v3456
    %v3458 = vadd.f32 %v3455, 1.0
    %v3459 = vadd.f32 %v3457, 1.0
    %v3460 = vrcp.pop %v3458
    %v3461 = vmul.f32 %v3458, %v3460
    %v3462 = vsub.f32 1.0, %v3461
    %v3463 = vmul.f32 %v3460, %v3462
    %v3464 = vadd.f32 %v3460, %v3463
    %vm3465 = vweird.f32 %v3458
    %vm3466 = vweird.f32 %v3460
    %vm3467 = vmor %vm3465, %vm3466
    %v3468 = vsel %vm3467, %v3460, %v3464
    %v3469 = vand.u32 2147483647, %v3458
    %vm3470 = vcmp.eq.f32.partialorder %v3469, 8.507059e+37
    %v3471 = vand.u32 %v3458, 2147483648
    %v3472 = vor.u32 1.1754944e-38, %v3471
    %v3473 = vsel %vm3470, %v3472, %v3468
    %v3474 = vmul.f32 1.0, %v3473
    %v3475 = vrcp.pop %v3459
    %v3476 = vmul.f32 %v3459, %v3475
    %v3477 = vsub.f32 1.0, %v3476
    %v3478 = vmul.f32 %v3475, %v3477
    %v3479 = vadd.f32 %v3475, %v3478
    %vm3480 = vweird.f32 %v3459
    %vm3481 = vweird.f32 %v3475
    %vm3482 = vmor %vm3480, %vm3481
    %v3483 = vsel %vm3482, %v3475, %v3479
    %v3484 = vand.u32 2147483647, %v3459
    %vm3485 = vcmp.eq.f32.partialorder %v3484, 8.507059e+37
    %v3486 = vand.u32 %v3459, 2147483648
    %v3487 = vor.u32 1.1754944e-38, %v3486
    %v3488 = vsel %vm3485, %v3487, %v3483
    %v3489 = vmul.f32 1.0, %v3488
    %v3490 = vtanh.pop %v3450
    %v3491 = vtanh.pop %v3451
    %v3492 = vmul.f32 %v3474, 0.0
    %v3493 = vmul.f32 %v3489, 0.0
    %3496 = vrot.lane.b32.xlu0 %v3490, 64
    %v3497 = vpop.permute.xlu0 %3496
    %3498 = vrot.lane.b32.xlu0 %v3491, 64
    %v3499 = vpop.permute.xlu0 %3498
    %v3502 = vmul.f32 %v3474, %v3497
    %v3503 = vmul.f32 %v3489, %v3499
    %3506 = vrot.lane.b32.xlu0 %v3502, 32
    %v3507 = vpop.permute.xlu0 %3506
    %3508 = vrot.lane.b32.xlu0 %v3503, 32
    %v3509 = vpop.permute.xlu0 %3508
    %v3512 = vadd.f32 %v3492, %v3507
    %v3513 = vadd.f32 %v3493, %v3509
    %v3514 = vtanh.pop %v3512
    %v3515 = vtanh.pop %v3513
    %3518 = vrot.lane.b32.xlu0 %v3514, 64
    %v3519 = vpop.permute.xlu0 %3518
    %3520 = vrot.lane.b32.xlu0 %v3515, 64
    %v3521 = vpop.permute.xlu0 %3520
    %v3524 = vmul.f32 %v3474, %v3519
    %v3525 = vmul.f32 %v3489, %v3521
    %3527 = vset.pattern.permute.xlu0 0
    %3528 = vperm.xlu0 %3527, %v3331
    %v3529 = vpop.permute.xlu0 %3528
    %v3531 = vmul.f32 %v3529, %v3524
    %v3532 = vmul.f32 %v3529, %v3525
    %3534 = vset.pattern.permute.xlu0 0
    %3535 = vperm.xlu0 %3534, %v3343
    %v3536 = vpop.permute.xlu0 %3535
    %v3538 = vmul.f32 %v3536, %v3531
    %v3539 = vmul.f32 %v3536, %v3532
    %v3540 = vadd.f32 %v3538, 0.0
    %v3541 = vadd.f32 %v3539, 0.0
    %v3542 = vsub.f32 1.0, %v3343
    %v3543 = vmul.f32 %v3542, -10000000.0
    %3545 = vset.pattern.permute.xlu0 0
    %3546 = vperm.xlu0 %3545, %v3543
    %v3547 = vpop.permute.xlu0 %3546
    %v3549 = vadd.f32 %v3538, %v3547
    %v3550 = vadd.f32 %v3539, %v3547
    %v3551 = vmax.f32 %v3549, -10000000.0
    %v3552 = vmax.f32 %v3550, -10000000.0
    %v3553 = vsub.f32 1.0, %v3331
    %3555 = vset.pattern.permute.xlu0 0
    %3556 = vperm.xlu0 %3555, %v3553
    %v3557 = vpop.permute.xlu0 %3556
    %v3559 = vmul.f32 %v3557, 0.0
    %v3560 = vadd.f32 %v3531, %v3559
    %v3561 = vadd.f32 %v3532, %v3559
    %v3562 = vmul.f32 %v3529, %v3512
    %v3563 = vmul.f32 %v3529, %v3513
    %v3564 = vadd.f32 %v3562, %v3559
    %v3565 = vadd.f32 %v3563, %v3559
    %v3566 = vld [vmem:[#allocation6] sm:$0xc]
    %v3567 = vld [vmem:[#allocation7] sm:$0xc]
    %v3568 = vld [vmem:[#allocation6 + $0x48] sm:$0x3]
    %v3569 = vld [vmem:[#allocation7 + $0x28] sm:$0x30]
    %v3570 = vld [vmem:[#allocation6 + $0x10] sm:$0xc]
    %v3571 = vld [vmem:[#allocation7 + $0x10] sm:$0xc]
    %v3572 = vld [vmem:[#allocation6 + $0x58] sm:$0x3]
    %v3573 = vld [vmem:[#allocation7 + $0x38] sm:$0x30]
    %v3575 = vrot.slane %v3566, 2
    %v3578 = vrot.slane %v3568, 4
    %v3581 = vrot.slane %v3569, 6
    %v3584 = vrot.slane %v3570, 2
    %v3587 = vrot.slane %v3572, 4
    %v3590 = vrot.slane %v3573, 6
    %v3592 = vsel %vm242, %v3575, %v3567
    %v3593 = vsel %vm505, %v3592, %v3578
    %v3594 = vsel %vm507, %v3593, %v3581
    %v3595 = vsel %vm242, %v3584, %v3571
    %v3596 = vsel %vm505, %v3595, %v3587
    %v3597 = vsel %vm507, %v3596, %v3590
    %v3598 = vld [vmem:[%s660] sm:$0x3]
    %v3599 = vld [vmem:[%s662] sm:$0x3]
    %v3600 = vld [vmem:[%s664] sm:$0x3]
    %v3601 = vld [vmem:[%s666] sm:$0x3]
    %s3602 = scalar_lea.vmem %s9, 2
    %v3603 = vld [vmem:[%s3602] sm:$0x3]
    %s3604 = scalar_lea.vmem %s9, 16
    %v3605 = vld [vmem:[%s3604] sm:$0x3]
    %s3606 = scalar_lea.vmem %s11, 2
    %v3607 = vld [vmem:[%s3606] sm:$0x3]
    %s3608 = scalar_lea.vmem %s11, 12
    %v3609 = vld [vmem:[%s3608] sm:$0x3]
    %v3611 = vrot.slane %v3600, 6
    %v3613 = vsel %vm242, %v3598, %v3611
    %v3615 = vrot.slane %v3601, 6
    %v3617 = vsel %vm242, %v3599, %v3615
    %v3619 = vrot.slane %v3617, 4
    %v3621 = vsel %vm505, %v3613, %v3619
    %v3623 = vrot.slane %v3607, 6
    %v3625 = vsel %vm242, %v3603, %v3623
    %v3627 = vrot.slane %v3609, 6
    %v3629 = vsel %vm242, %v3605, %v3627
    %v3631 = vrot.slane %v3629, 4
    %v3633 = vsel %vm505, %v3625, %v3631
    %3636 = vrot.lane.b32.xlu0 %v3560, 32
    %v3637 = vpop.permute.xlu0 %3636
    %3638 = vrot.lane.b32.xlu0 %v3561, 32
    %v3639 = vpop.permute.xlu0 %3638
    %v3640 = vsel %vm527, %v3637, 0
    %v3642 = vsel %vm527, %v3639, 0
    %3644 = vmatpush.msra.mxu0 0.0
    %3645 = vmatpush.msra.mxu0 0.0
    %3646 = vmatpush.msra.mxu0 0.0
    %3647 = vmatpush.msra.mxu0 0.0
    %3648 = vmatpush.msra.mxu0 0.0
    %3649 = vmatpush.msra.mxu0 0.0
    %3650 = vmatpush.msra.mxu0 0.0
    %3651 = vmatpush.msra.mxu0 0.0
    %3652 = vmatpush.msra.mxu0 0.0
    %3653 = vmatpush.msra.mxu0 0.0
    %3654 = vmatpush.msra.mxu0 0.0
    %3655 = vmatpush.msra.mxu0 0.0
    %3656 = vmatpush.msra.mxu0 %v3280
    %3657 = vmatpush.msra.mxu0 %v3276
    %3658 = vmatpush.msra.mxu0 %v3272
    %3659 = vmatpush.msra.mxu0 %v3268
    %3660 = vmatmul.f32.gmra.mxu0 %v3640
    %v3661 = vpop.f32.mrf.mxu0
    %v3662 = vadd.f32 0.0, %v3661
    %3663 = vmatmul.f32.gmra.mxu0 %v3642
    %v3664 = vpop.f32.mrf.mxu0
    %v3665 = vadd.f32 0.0, %v3664
    %3666 = vdwg.mxu0
    %3667 = vmatpush.msra.mxu0 0.0
    %3668 = vmatpush.msra.mxu0 0.0
    %3669 = vmatpush.msra.mxu0 0.0
    %3670 = vmatpush.msra.mxu0 0.0
    %3671 = vmatpush.msra.mxu0 0.0
    %3672 = vmatpush.msra.mxu0 0.0
    %3673 = vmatpush.msra.mxu0 0.0
    %3674 = vmatpush.msra.mxu0 0.0
    %3675 = vmatpush.msra.mxu0 0.0
    %3676 = vmatpush.msra.mxu0 0.0
    %3677 = vmatpush.msra.mxu0 0.0
    %3678 = vmatpush.msra.mxu0 0.0
    %3679 = vmatpush.msra.mxu0 %v3281
    %3680 = vmatpush.msra.mxu0 %v3277
    %3681 = vmatpush.msra.mxu0 %v3273
    %3682 = vmatpush.msra.mxu0 %v3269
    %3683 = vmatmul.f32.gmra.mxu0 %v3640
    %v3684 = vpop.f32.mrf.mxu0
    %v3685 = vadd.f32 0.0, %v3684
    %3686 = vmatmul.f32.gmra.mxu0 %v3642
    %v3687 = vpop.f32.mrf.mxu0
    %v3688 = vadd.f32 0.0, %v3687
    %3689 = vdwg.mxu0
    %3690 = vmatpush.msra.mxu0 0.0
    %3691 = vmatpush.msra.mxu0 0.0
    %3692 = vmatpush.msra.mxu0 0.0
    %3693 = vmatpush.msra.mxu0 0.0
    %3694 = vmatpush.msra.mxu0 0.0
    %3695 = vmatpush.msra.mxu0 0.0
    %3696 = vmatpush.msra.mxu0 0.0
    %3697 = vmatpush.msra.mxu0 0.0
    %3698 = vmatpush.msra.mxu0 0.0
    %3699 = vmatpush.msra.mxu0 0.0
    %3700 = vmatpush.msra.mxu0 0.0
    %3701 = vmatpush.msra.mxu0 0.0
    %3702 = vmatpush.msra.mxu0 %v3282
    %3703 = vmatpush.msra.mxu0 %v3278
    %3704 = vmatpush.msra.mxu0 %v3274
    %3705 = vmatpush.msra.mxu0 %v3270
    %3706 = vmatmul.f32.gmra.mxu0 %v3640
    %v3707 = vpop.f32.mrf.mxu0
    %v3708 = vadd.f32 0.0, %v3707
    %3709 = vmatmul.f32.gmra.mxu0 %v3642
    %v3710 = vpop.f32.mrf.mxu0
    %v3711 = vadd.f32 0.0, %v3710
    %3712 = vdwg.mxu0
    %3713 = vmatpush.msra.mxu0 0.0
    %3714 = vmatpush.msra.mxu0 0.0
    %3715 = vmatpush.msra.mxu0 0.0
    %3716 = vmatpush.msra.mxu0 0.0
    %3717 = vmatpush.msra.mxu0 0.0
    %3718 = vmatpush.msra.mxu0 0.0
    %3719 = vmatpush.msra.mxu0 0.0
    %3720 = vmatpush.msra.mxu0 0.0
    %3721 = vmatpush.msra.mxu0 0.0
    %3722 = vmatpush.msra.mxu0 0.0
    %3723 = vmatpush.msra.mxu0 0.0
    %3724 = vmatpush.msra.mxu0 0.0
    %3725 = vmatpush.msra.mxu0 %v3283
    %3726 = vmatpush.msra.mxu0 %v3279
    %3727 = vmatpush.msra.mxu0 %v3275
    %3728 = vmatpush.msra.mxu0 %v3271
    %3729 = vmatmul.f32.gmra.mxu0 %v3640
    %v3730 = vpop.f32.mrf.mxu0
    %v3731 = vadd.f32 0.0, %v3730
    %3732 = vmatmul.f32.gmra.mxu0 %v3642
    %v3733 = vpop.f32.mrf.mxu0
    %v3734 = vadd.f32 0.0, %v3733
    %3735 = vdwg.mxu0
    %v3736 = vmul.f32 %v144, %v3662
    %v3737 = vmul.f32 %v145, %v3665
    %v3738 = vmul.f32 %v154, %v3685
    %v3739 = vmul.f32 %v155, %v3688
    %v3740 = vadd.f32 %v3736, %v3738
    %v3741 = vadd.f32 %v3737, %v3739
    %v3742 = vmul.f32 %v164, %v3708
    %v3743 = vmul.f32 %v165, %v3711
    %v3744 = vadd.f32 %v3740, %v3742
    %v3745 = vadd.f32 %v3741, %v3743
    %v3746 = vmul.f32 %v174, %v3731
    %v3747 = vmul.f32 %v175, %v3734
    %v3748 = vadd.f32 %v3744, %v3746
    %v3749 = vadd.f32 %v3745, %v3747
    %v3750 = vadd.f32 %v3594, %v3748
    %v3751 = vadd.f32 %v3597, %v3749
    %v3752 = vxor.u32 %v3750, 2147483648
    %v3753 = vxor.u32 %v3751, 2147483648
    %v3754 = vmul.f32 %v3752, 1.442695
    %v3755 = vpow.pop %v3754
    %v3756 = vmul.f32 %v3753, 1.442695
    %v3757 = vpow.pop %v3756
    %v3758 = vadd.f32 %v3755, 1.0
    %v3759 = vadd.f32 %v3757, 1.0
    %v3760 = vrcp.pop %v3758
    %v3761 = vmul.f32 %v3758, %v3760
    %v3762 = vsub.f32 1.0, %v3761
    %v3763 = vmul.f32 %v3760, %v3762
    %v3764 = vadd.f32 %v3760, %v3763
    %vm3765 = vweird.f32 %v3758
    %vm3766 = vweird.f32 %v3760
    %vm3767 = vmor %vm3765, %vm3766
    %v3768 = vsel %vm3767, %v3760, %v3764
    %v3769 = vand.u32 2147483647, %v3758
    %vm3770 = vcmp.eq.f32.partialorder %v3769, 8.507059e+37
    %v3771 = vand.u32 %v3758, 2147483648
    %v3772 = vor.u32 1.1754944e-38, %v3771
    %v3773 = vsel %vm3770, %v3772, %v3768
    %v3774 = vmul.f32 1.0, %v3773
    %v3775 = vrcp.pop %v3759
    %v3776 = vmul.f32 %v3759, %v3775
    %v3777 = vsub.f32 1.0, %v3776
    %v3778 = vmul.f32 %v3775, %v3777
    %v3779 = vadd.f32 %v3775, %v3778
    %vm3780 = vweird.f32 %v3759
    %vm3781 = vweird.f32 %v3775
    %vm3782 = vmor %vm3780, %vm3781
    %v3783 = vsel %vm3782, %v3775, %v3779
    %v3784 = vand.u32 2147483647, %v3759
    %vm3785 = vcmp.eq.f32.partialorder %v3784, 8.507059e+37
    %v3786 = vand.u32 %v3759, 2147483648
    %v3787 = vor.u32 1.1754944e-38, %v3786
    %v3788 = vsel %vm3785, %v3787, %v3783
    %v3789 = vmul.f32 1.0, %v3788
    %v3790 = vtanh.pop %v3750
    %v3791 = vtanh.pop %v3751
    %v3792 = vmul.f32 %v3774, %v3564
    %v3793 = vmul.f32 %v3789, %v3565
    %3796 = vrot.lane.b32.xlu0 %v3790, 64
    %v3797 = vpop.permute.xlu0 %3796
    %3798 = vrot.lane.b32.xlu0 %v3791, 64
    %v3799 = vpop.permute.xlu0 %3798
    %v3802 = vmul.f32 %v3774, %v3797
    %v3803 = vmul.f32 %v3789, %v3799
    %3806 = vrot.lane.b32.xlu0 %v3802, 32
    %v3807 = vpop.permute.xlu0 %3806
    %3808 = vrot.lane.b32.xlu0 %v3803, 32
    %v3809 = vpop.permute.xlu0 %3808
    %v3812 = vadd.f32 %v3792, %v3807
    %v3813 = vadd.f32 %v3793, %v3809
    %v3814 = vtanh.pop %v3812
    %v3815 = vtanh.pop %v3813
    %3818 = vrot.lane.b32.xlu0 %v3814, 64
    %v3819 = vpop.permute.xlu0 %3818
    %3820 = vrot.lane.b32.xlu0 %v3815, 64
    %v3821 = vpop.permute.xlu0 %3820
    %v3824 = vmul.f32 %v3774, %v3819
    %v3825 = vmul.f32 %v3789, %v3821
    %3827 = vset.pattern.permute.xlu0 0
    %3828 = vperm.xlu0 %3827, %v3621
    %v3829 = vpop.permute.xlu0 %3828
    %v3831 = vmul.f32 %v3829, %v3824
    %v3832 = vmul.f32 %v3829, %v3825
    %3834 = vset.pattern.permute.xlu0 0
    %3835 = vperm.xlu0 %3834, %v3633
    %v3836 = vpop.permute.xlu0 %3835
    %v3838 = vmul.f32 %v3836, %v3831
    %v3839 = vmul.f32 %v3836, %v3832
    %v3840 = vadd.f32 %v3540, %v3838
    %v3841 = vadd.f32 %v3541, %v3839
    %v3842 = vsub.f32 1.0, %v3633
    %v3843 = vmul.f32 %v3842, -10000000.0
    %3845 = vset.pattern.permute.xlu0 0
    %3846 = vperm.xlu0 %3845, %v3843
    %v3847 = vpop.permute.xlu0 %3846
    %v3849 = vadd.f32 %v3838, %v3847
    %v3850 = vadd.f32 %v3839, %v3847
    %v3851 = vmax.f32 %v3551, %v3849
    %v3852 = vmax.f32 %v3552, %v3850
    %v3853 = vsub.f32 1.0, %v3621
    %3855 = vset.pattern.permute.xlu0 0
    %3856 = vperm.xlu0 %3855, %v3853
    %v3857 = vpop.permute.xlu0 %3856
    %v3859 = vmul.f32 %v3857, %v3560
    %v3860 = vmul.f32 %v3857, %v3561
    %v3861 = vadd.f32 %v3831, %v3859
    %v3862 = vadd.f32 %v3832, %v3860
    %v3863 = vmul.f32 %v3829, %v3812
    %v3864 = vmul.f32 %v3829, %v3813
    %v3865 = vmul.f32 %v3857, %v3564
    %v3866 = vmul.f32 %v3857, %v3565
    %v3867 = vadd.f32 %v3863, %v3865
    %v3868 = vadd.f32 %v3864, %v3866
    %v3869 = vld [vmem:[#allocation6] sm:$0x30]
    %v3870 = vld [vmem:[#allocation7] sm:$0x30]
    %v3871 = vld [vmem:[#allocation6 + $0x28] sm:$0xc0]
    %v3872 = vld [vmem:[#allocation7 + $0x28] sm:$0xc]
    %v3873 = vld [vmem:[#allocation6 + $0x10] sm:$0x30]
    %v3874 = vld [vmem:[#allocation7 + $0x10] sm:$0x30]
    %v3875 = vld [vmem:[#allocation6 + $0x38] sm:$0xc0]
    %v3876 = vld [vmem:[#allocation7 + $0x38] sm:$0xc]
    %v3878 = vrot.slane %v3869, 4
    %v3881 = vrot.slane %v3870, 2
    %v3884 = vrot.slane %v3871, 2
    %v3887 = vrot.slane %v3872, 4
    %v3890 = vrot.slane %v3873, 4
    %v3893 = vrot.slane %v3874, 2
    %v3896 = vrot.slane %v3875, 2
    %v3899 = vrot.slane %v3876, 4
    %v3901 = vsel %vm242, %v3878, %v3881
    %v3902 = vsel %vm505, %v3901, %v3884
    %v3903 = vsel %vm507, %v3902, %v3887
    %v3904 = vsel %vm242, %v3890, %v3893
    %v3905 = vsel %vm505, %v3904, %v3896
    %v3906 = vsel %vm507, %v3905, %v3899
    %v3907 = vld [vmem:[%s813] sm:$0x3]
    %v3908 = vld [vmem:[%s815] sm:$0x3]
    %v3909 = vld [vmem:[%s817] sm:$0x3]
    %v3910 = vld [vmem:[%s819] sm:$0x3]
    %s3911 = scalar_lea.vmem %s9, 4
    %v3912 = vld [vmem:[%s3911] sm:$0x3]
    %s3913 = scalar_lea.vmem %s9, 14
    %v3914 = vld [vmem:[%s3913] sm:$0x3]
    %s3915 = scalar_lea.vmem %s11, 4
    %v3916 = vld [vmem:[%s3915] sm:$0x3]
    %s3917 = scalar_lea.vmem %s11, 10
    %v3918 = vld [vmem:[%s3917] sm:$0x3]
    %v3920 = vrot.slane %v3909, 6
    %v3922 = vsel %vm242, %v3907, %v3920
    %v3924 = vrot.slane %v3910, 6
    %v3926 = vsel %vm242, %v3908, %v3924
    %v3928 = vrot.slane %v3926, 4
    %v3930 = vsel %vm505, %v3922, %v3928
    %v3932 = vrot.slane %v3916, 6
    %v3934 = vsel %vm242, %v3912, %v3932
    %v3936 = vrot.slane %v3918, 6
    %v3938 = vsel %vm242, %v3914, %v3936
    %v3940 = vrot.slane %v3938, 4
    %v3942 = vsel %vm505, %v3934, %v3940
    %3945 = vrot.lane.b32.xlu0 %v3861, 32
    %v3946 = vpop.permute.xlu0 %3945
    %3947 = vrot.lane.b32.xlu0 %v3862, 32
    %v3948 = vpop.permute.xlu0 %3947
    %v3949 = vsel %vm527, %v3946, 0
    %v3951 = vsel %vm527, %v3948, 0
    %3953 = vmatpush.msra.mxu0 0.0
    %3954 = vmatpush.msra.mxu0 0.0
    %3955 = vmatpush.msra.mxu0 0.0
    %3956 = vmatpush.msra.mxu0 0.0
    %3957 = vmatpush.msra.mxu0 0.0
    %3958 = vmatpush.msra.mxu0 0.0
    %3959 = vmatpush.msra.mxu0 0.0
    %3960 = vmatpush.msra.mxu0 0.0
    %3961 = vmatpush.msra.mxu0 0.0
    %3962 = vmatpush.msra.mxu0 0.0
    %3963 = vmatpush.msra.mxu0 0.0
    %3964 = vmatpush.msra.mxu0 0.0
    %3965 = vmatpush.msra.mxu0 %v3280
    %3966 = vmatpush.msra.mxu0 %v3276
    %3967 = vmatpush.msra.mxu0 %v3272
    %3968 = vmatpush.msra.mxu0 %v3268
    %3969 = vmatmul.f32.gmra.mxu0 %v3949
    %v3970 = vpop.f32.mrf.mxu0
    %v3971 = vadd.f32 0.0, %v3970
    %3972 = vmatmul.f32.gmra.mxu0 %v3951
    %v3973 = vpop.f32.mrf.mxu0
    %v3974 = vadd.f32 0.0, %v3973
    %3975 = vdwg.mxu0
    %3976 = vmatpush.msra.mxu0 0.0
    %3977 = vmatpush.msra.mxu0 0.0
    %3978 = vmatpush.msra.mxu0 0.0
    %3979 = vmatpush.msra.mxu0 0.0
    %3980 = vmatpush.msra.mxu0 0.0
    %3981 = vmatpush.msra.mxu0 0.0
    %3982 = vmatpush.msra.mxu0 0.0
    %3983 = vmatpush.msra.mxu0 0.0
    %3984 = vmatpush.msra.mxu0 0.0
    %3985 = vmatpush.msra.mxu0 0.0
    %3986 = vmatpush.msra.mxu0 0.0
    %3987 = vmatpush.msra.mxu0 0.0
    %3988 = vmatpush.msra.mxu0 %v3281
    %3989 = vmatpush.msra.mxu0 %v3277
    %3990 = vmatpush.msra.mxu0 %v3273
    %3991 = vmatpush.msra.mxu0 %v3269
    %3992 = vmatmul.f32.gmra.mxu0 %v3949
    %v3993 = vpop.f32.mrf.mxu0
    %v3994 = vadd.f32 0.0, %v3993
    %3995 = vmatmul.f32.gmra.mxu0 %v3951
    %v3996 = vpop.f32.mrf.mxu0
    %v3997 = vadd.f32 0.0, %v3996
    %3998 = vdwg.mxu0
    %3999 = vmatpush.msra.mxu0 0.0
    %4000 = vmatpush.msra.mxu0 0.0
    %4001 = vmatpush.msra.mxu0 0.0
    %4002 = vmatpush.msra.mxu0 0.0
    %4003 = vmatpush.msra.mxu0 0.0
    %4004 = vmatpush.msra.mxu0 0.0
    %4005 = vmatpush.msra.mxu0 0.0
    %4006 = vmatpush.msra.mxu0 0.0
    %4007 = vmatpush.msra.mxu0 0.0
    %4008 = vmatpush.msra.mxu0 0.0
    %4009 = vmatpush.msra.mxu0 0.0
    %4010 = vmatpush.msra.mxu0 0.0
    %4011 = vmatpush.msra.mxu0 %v3282
    %4012 = vmatpush.msra.mxu0 %v3278
    %4013 = vmatpush.msra.mxu0 %v3274
    %4014 = vmatpush.msra.mxu0 %v3270
    %4015 = vmatmul.f32.gmra.mxu0 %v3949
    %v4016 = vpop.f32.mrf.mxu0
    %v4017 = vadd.f32 0.0, %v4016
    %4018 = vmatmul.f32.gmra.mxu0 %v3951
    %v4019 = vpop.f32.mrf.mxu0
    %v4020 = vadd.f32 0.0, %v4019
    %4021 = vdwg.mxu0
    %4022 = vmatpush.msra.mxu0 0.0
    %4023 = vmatpush.msra.mxu0 0.0
    %4024 = vmatpush.msra.mxu0 0.0
    %4025 = vmatpush.msra.mxu0 0.0
    %4026 = vmatpush.msra.mxu0 0.0
    %4027 = vmatpush.msra.mxu0 0.0
    %4028 = vmatpush.msra.mxu0 0.0
    %4029 = vmatpush.msra.mxu0 0.0
    %4030 = vmatpush.msra.mxu0 0.0
    %4031 = vmatpush.msra.mxu0 0.0
    %4032 = vmatpush.msra.mxu0 0.0
    %4033 = vmatpush.msra.mxu0 0.0
    %4034 = vmatpush.msra.mxu0 %v3283
    %4035 = vmatpush.msra.mxu0 %v3279
    %4036 = vmatpush.msra.mxu0 %v3275
    %4037 = vmatpush.msra.mxu0 %v3271
    %4038 = vmatmul.f32.gmra.mxu0 %v3949
    %v4039 = vpop.f32.mrf.mxu0
    %v4040 = vadd.f32 0.0, %v4039
    %4041 = vmatmul.f32.gmra.mxu0 %v3951
    %v4042 = vpop.f32.mrf.mxu0
    %v4043 = vadd.f32 0.0, %v4042
    %4044 = vdwg.mxu0
    %v4045 = vmul.f32 %v144, %v3971
    %v4046 = vmul.f32 %v145, %v3974
    %v4047 = vmul.f32 %v154, %v3994
    %v4048 = vmul.f32 %v155, %v3997
    %v4049 = vadd.f32 %v4045, %v4047
    %v4050 = vadd.f32 %v4046, %v4048
    %v4051 = vmul.f32 %v164, %v4017
    %v4052 = vmul.f32 %v165, %v4020
    %v4053 = vadd.f32 %v4049, %v4051
    %v4054 = vadd.f32 %v4050, %v4052
    %v4055 = vmul.f32 %v174, %v4040
    %v4056 = vmul.f32 %v175, %v4043
    %v4057 = vadd.f32 %v4053, %v4055
    %v4058 = vadd.f32 %v4054, %v4056
    %v4059 = vadd.f32 %v3903, %v4057
    %v4060 = vadd.f32 %v3906, %v4058
    %v4061 = vxor.u32 %v4059, 2147483648
    %v4062 = vxor.u32 %v4060, 2147483648
    %v4063 = vmul.f32 %v4061, 1.442695
    %v4064 = vpow.pop %v4063
    %v4065 = vmul.f32 %v4062, 1.442695
    %v4066 = vpow.pop %v4065
    %v4067 = vadd.f32 %v4064, 1.0
    %v4068 = vadd.f32 %v4066, 1.0
    %v4069 = vrcp.pop %v4067
    %v4070 = vmul.f32 %v4067, %v4069
    %v4071 = vsub.f32 1.0, %v4070
    %v4072 = vmul.f32 %v4069, %v4071
    %v4073 = vadd.f32 %v4069, %v4072
    %vm4074 = vweird.f32 %v4067
    %vm4075 = vweird.f32 %v4069
    %vm4076 = vmor %vm4074, %vm4075
    %v4077 = vsel %vm4076, %v4069, %v4073
    %v4078 = vand.u32 2147483647, %v4067
    %vm4079 = vcmp.eq.f32.partialorder %v4078, 8.507059e+37
    %v4080 = vand.u32 %v4067, 2147483648
    %v4081 = vor.u32 1.1754944e-38, %v4080
    %v4082 = vsel %vm4079, %v4081, %v4077
    %v4083 = vmul.f32 1.0, %v4082
    %v4084 = vrcp.pop %v4068
    %v4085 = vmul.f32 %v4068, %v4084
    %v4086 = vsub.f32 1.0, %v4085
    %v4087 = vmul.f32 %v4084, %v4086
    %v4088 = vadd.f32 %v4084, %v4087
    %vm4089 = vweird.f32 %v4068
    %vm4090 = vweird.f32 %v4084
    %vm4091 = vmor %vm4089, %vm4090
    %v4092 = vsel %vm4091, %v4084, %v4088
    %v4093 = vand.u32 2147483647, %v4068
    %vm4094 = vcmp.eq.f32.partialorder %v4093, 8.507059e+37
    %v4095 = vand.u32 %v4068, 2147483648
    %v4096 = vor.u32 1.1754944e-38, %v4095
    %v4097 = vsel %vm4094, %v4096, %v4092
    %v4098 = vmul.f32 1.0, %v4097
    %v4099 = vtanh.pop %v4059
    %v4100 = vtanh.pop %v4060
    %v4101 = vmul.f32 %v4083, %v3867
    %v4102 = vmul.f32 %v4098, %v3868
    %4105 = vrot.lane.b32.xlu0 %v4099, 64
    %v4106 = vpop.permute.xlu0 %4105
    %4107 = vrot.lane.b32.xlu0 %v4100, 64
    %v4108 = vpop.permute.xlu0 %4107
    %v4111 = vmul.f32 %v4083, %v4106
    %v4112 = vmul.f32 %v4098, %v4108
    %4115 = vrot.lane.b32.xlu0 %v4111, 32
    %v4116 = vpop.permute.xlu0 %4115
    %4117 = vrot.lane.b32.xlu0 %v4112, 32
    %v4118 = vpop.permute.xlu0 %4117
    %v4121 = vadd.f32 %v4101, %v4116
    %v4122 = vadd.f32 %v4102, %v4118
    %v4123 = vtanh.pop %v4121
    %v4124 = vtanh.pop %v4122
    %4127 = vrot.lane.b32.xlu0 %v4123, 64
    %v4128 = vpop.permute.xlu0 %4127
    %4129 = vrot.lane.b32.xlu0 %v4124, 64
    %v4130 = vpop.permute.xlu0 %4129
    %v4133 = vmul.f32 %v4083, %v4128
    %v4134 = vmul.f32 %v4098, %v4130
    %4136 = vset.pattern.permute.xlu0 0
    %4137 = vperm.xlu0 %4136, %v3930
    %v4138 = vpop.permute.xlu0 %4137
    %v4140 = vmul.f32 %v4138, %v4133
    %v4141 = vmul.f32 %v4138, %v4134
    %4143 = vset.pattern.permute.xlu0 0
    %4144 = vperm.xlu0 %4143, %v3942
    %v4145 = vpop.permute.xlu0 %4144
    %v4147 = vmul.f32 %v4145, %v4140
    %v4148 = vmul.f32 %v4145, %v4141
    %v4149 = vadd.f32 %v3840, %v4147
    %v4150 = vadd.f32 %v3841, %v4148
    %v4151 = vsub.f32 1.0, %v3942
    %v4152 = vmul.f32 %v4151, -10000000.0
    %4154 = vset.pattern.permute.xlu0 0
    %4155 = vperm.xlu0 %4154, %v4152
    %v4156 = vpop.permute.xlu0 %4155
    %v4158 = vadd.f32 %v4147, %v4156
    %v4159 = vadd.f32 %v4148, %v4156
    %v4160 = vmax.f32 %v3851, %v4158
    %v4161 = vmax.f32 %v3852, %v4159
    %v4162 = vsub.f32 1.0, %v3930
    %4164 = vset.pattern.permute.xlu0 0
    %4165 = vperm.xlu0 %4164, %v4162
    %v4166 = vpop.permute.xlu0 %4165
    %v4168 = vmul.f32 %v4166, %v3861
    %v4169 = vmul.f32 %v4166, %v3862
    %v4170 = vadd.f32 %v4140, %v4168
    %v4171 = vadd.f32 %v4141, %v4169
    %v4172 = vmul.f32 %v4138, %v4121
    %v4173 = vmul.f32 %v4138, %v4122
    %v4174 = vmul.f32 %v4166, %v3867
    %v4175 = vmul.f32 %v4166, %v3868
    %v4176 = vadd.f32 %v4172, %v4174
    %v4177 = vadd.f32 %v4173, %v4175
    %v4178 = vld [vmem:[#allocation6] sm:$0xc0]
    %v4179 = vld [vmem:[#allocation7] sm:$0xc0]
    %v4180 = vld [vmem:[#allocation6 + $0x28] sm:$0x30]
    %v4181 = vld [vmem:[#allocation7 + $0x28] sm:$0x3]
    %v4182 = vld [vmem:[#allocation6 + $0x10] sm:$0xc0]
    %v4183 = vld [vmem:[#allocation7 + $0x10] sm:$0xc0]
    %v4184 = vld [vmem:[#allocation6 + $0x38] sm:$0x30]
    %v4185 = vld [vmem:[#allocation7 + $0x38] sm:$0x3]
    %v4187 = vrot.slane %v4178, 6
    %v4190 = vrot.slane %v4179, 4
    %v4193 = vrot.slane %v4181, 2
    %v4196 = vrot.slane %v4182, 6
    %v4199 = vrot.slane %v4183, 4
    %v4202 = vrot.slane %v4185, 2
    %v4204 = vsel %vm242, %v4187, %v4190
    %v4205 = vsel %vm505, %v4204, %v4180
    %v4206 = vsel %vm507, %v4205, %v4193
    %v4207 = vsel %vm242, %v4196, %v4199
    %v4208 = vsel %vm505, %v4207, %v4184
    %v4209 = vsel %vm507, %v4208, %v4202
    %v4210 = vld [vmem:[%s963] sm:$0x3]
    %v4211 = vld [vmem:[%s965] sm:$0x3]
    %v4212 = vld [vmem:[%s967] sm:$0x3]
    %v4213 = vld [vmem:[%s969] sm:$0x3]
    %s4214 = scalar_lea.vmem %s9, 6
    %v4215 = vld [vmem:[%s4214] sm:$0x3]
    %s4216 = scalar_lea.vmem %s9, 12
    %v4217 = vld [vmem:[%s4216] sm:$0x3]
    %s4218 = scalar_lea.vmem %s11, 6
    %v4219 = vld [vmem:[%s4218] sm:$0x3]
    %s4220 = scalar_lea.vmem %s11, 8
    %v4221 = vld [vmem:[%s4220] sm:$0x3]
    %v4223 = vrot.slane %v4212, 6
    %v4225 = vsel %vm242, %v4210, %v4223
    %v4227 = vrot.slane %v4213, 6
    %v4229 = vsel %vm242, %v4211, %v4227
    %v4231 = vrot.slane %v4229, 4
    %v4233 = vsel %vm505, %v4225, %v4231
    %v4235 = vrot.slane %v4219, 6
    %v4237 = vsel %vm242, %v4215, %v4235
    %v4239 = vrot.slane %v4221, 6
    %v4241 = vsel %vm242, %v4217, %v4239
    %v4243 = vrot.slane %v4241, 4
    %v4245 = vsel %vm505, %v4237, %v4243
    %4248 = vrot.lane.b32.xlu0 %v4170, 32
    %v4249 = vpop.permute.xlu0 %4248
    %4250 = vrot.lane.b32.xlu0 %v4171, 32
    %v4251 = vpop.permute.xlu0 %4250
    %v4252 = vsel %vm527, %v4249, 0
    %v4254 = vsel %vm527, %v4251, 0
    %4256 = vmatpush.msra.mxu0 0.0
    %4257 = vmatpush.msra.mxu0 0.0
    %4258 = vmatpush.msra.mxu0 0.0
    %4259 = vmatpush.msra.mxu0 0.0
    %4260 = vmatpush.msra.mxu0 0.0
    %4261 = vmatpush.msra.mxu0 0.0
    %4262 = vmatpush.msra.mxu0 0.0
    %4263 = vmatpush.msra.mxu0 0.0
    %4264 = vmatpush.msra.mxu0 0.0
    %4265 = vmatpush.msra.mxu0 0.0
    %4266 = vmatpush.msra.mxu0 0.0
    %4267 = vmatpush.msra.mxu0 0.0
    %4268 = vmatpush.msra.mxu0 %v3280
    %4269 = vmatpush.msra.mxu0 %v3276
    %4270 = vmatpush.msra.mxu0 %v3272
    %4271 = vmatpush.msra.mxu0 %v3268
    %4272 = vmatmul.f32.gmra.mxu0 %v4252
    %v4273 = vpop.f32.mrf.mxu0
    %v4274 = vadd.f32 0.0, %v4273
    %4275 = vmatmul.f32.gmra.mxu0 %v4254
    %v4276 = vpop.f32.mrf.mxu0
    %v4277 = vadd.f32 0.0, %v4276
    %4278 = vdwg.mxu0
    %4279 = vmatpush.msra.mxu0 0.0
    %4280 = vmatpush.msra.mxu0 0.0
    %4281 = vmatpush.msra.mxu0 0.0
    %4282 = vmatpush.msra.mxu0 0.0
    %4283 = vmatpush.msra.mxu0 0.0
    %4284 = vmatpush.msra.mxu0 0.0
    %4285 = vmatpush.msra.mxu0 0.0
    %4286 = vmatpush.msra.mxu0 0.0
    %4287 = vmatpush.msra.mxu0 0.0
    %4288 = vmatpush.msra.mxu0 0.0
    %4289 = vmatpush.msra.mxu0 0.0
    %4290 = vmatpush.msra.mxu0 0.0
    %4291 = vmatpush.msra.mxu0 %v3281
    %4292 = vmatpush.msra.mxu0 %v3277
    %4293 = vmatpush.msra.mxu0 %v3273
    %4294 = vmatpush.msra.mxu0 %v3269
    %4295 = vmatmul.f32.gmra.mxu0 %v4252
    %v4296 = vpop.f32.mrf.mxu0
    %v4297 = vadd.f32 0.0, %v4296
    %4298 = vmatmul.f32.gmra.mxu0 %v4254
    %v4299 = vpop.f32.mrf.mxu0
    %v4300 = vadd.f32 0.0, %v4299
    %4301 = vdwg.mxu0
    %4302 = vmatpush.msra.mxu0 0.0
    %4303 = vmatpush.msra.mxu0 0.0
    %4304 = vmatpush.msra.mxu0 0.0
    %4305 = vmatpush.msra.mxu0 0.0
    %4306 = vmatpush.msra.mxu0 0.0
    %4307 = vmatpush.msra.mxu0 0.0
    %4308 = vmatpush.msra.mxu0 0.0
    %4309 = vmatpush.msra.mxu0 0.0
    %4310 = vmatpush.msra.mxu0 0.0
    %4311 = vmatpush.msra.mxu0 0.0
    %4312 = vmatpush.msra.mxu0 0.0
    %4313 = vmatpush.msra.mxu0 0.0
    %4314 = vmatpush.msra.mxu0 %v3282
    %4315 = vmatpush.msra.mxu0 %v3278
    %4316 = vmatpush.msra.mxu0 %v3274
    %4317 = vmatpush.msra.mxu0 %v3270
    %4318 = vmatmul.f32.gmra.mxu0 %v4252
    %v4319 = vpop.f32.mrf.mxu0
    %v4320 = vadd.f32 0.0, %v4319
    %4321 = vmatmul.f32.gmra.mxu0 %v4254
    %v4322 = vpop.f32.mrf.mxu0
    %v4323 = vadd.f32 0.0, %v4322
    %4324 = vdwg.mxu0
    %4325 = vmatpush.msra.mxu0 0.0
    %4326 = vmatpush.msra.mxu0 0.0
    %4327 = vmatpush.msra.mxu0 0.0
    %4328 = vmatpush.msra.mxu0 0.0
    %4329 = vmatpush.msra.mxu0 0.0
    %4330 = vmatpush.msra.mxu0 0.0
    %4331 = vmatpush.msra.mxu0 0.0
    %4332 = vmatpush.msra.mxu0 0.0
    %4333 = vmatpush.msra.mxu0 0.0
    %4334 = vmatpush.msra.mxu0 0.0
    %4335 = vmatpush.msra.mxu0 0.0
    %4336 = vmatpush.msra.mxu0 0.0
    %4337 = vmatpush.msra.mxu0 %v3283
    %4338 = vmatpush.msra.mxu0 %v3279
    %4339 = vmatpush.msra.mxu0 %v3275
    %4340 = vmatpush.msra.mxu0 %v3271
    %4341 = vmatmul.f32.gmra.mxu0 %v4252
    %v4342 = vpop.f32.mrf.mxu0
    %v4343 = vadd.f32 0.0, %v4342
    %4344 = vmatmul.f32.gmra.mxu0 %v4254
    %v4345 = vpop.f32.mrf.mxu0
    %v4346 = vadd.f32 0.0, %v4345
    %4347 = vdwg.mxu0
    %v4348 = vmul.f32 %v144, %v4274
    %v4349 = vmul.f32 %v145, %v4277
    %v4350 = vmul.f32 %v154, %v4297
    %v4351 = vmul.f32 %v155, %v4300
    %v4352 = vadd.f32 %v4348, %v4350
    %v4353 = vadd.f32 %v4349, %v4351
    %v4354 = vmul.f32 %v164, %v4320
    %v4355 = vmul.f32 %v165, %v4323
    %v4356 = vadd.f32 %v4352, %v4354
    %v4357 = vadd.f32 %v4353, %v4355
    %v4358 = vmul.f32 %v174, %v4343
    %v4359 = vmul.f32 %v175, %v4346
    %v4360 = vadd.f32 %v4356, %v4358
    %v4361 = vadd.f32 %v4357, %v4359
    %v4362 = vadd.f32 %v4206, %v4360
    %v4363 = vadd.f32 %v4209, %v4361
    %v4364 = vxor.u32 %v4362, 2147483648
    %v4365 = vxor.u32 %v4363, 2147483648
    %v4366 = vmul.f32 %v4364, 1.442695
    %v4367 = vpow.pop %v4366
    %v4368 = vmul.f32 %v4365, 1.442695
    %v4369 = vpow.pop %v4368
    %v4370 = vadd.f32 %v4367, 1.0
    %v4371 = vadd.f32 %v4369, 1.0
    %v4372 = vrcp.pop %v4370
    %v4373 = vmul.f32 %v4370, %v4372
    %v4374 = vsub.f32 1.0, %v4373
    %v4375 = vmul.f32 %v4372, %v4374
    %v4376 = vadd.f32 %v4372, %v4375
    %vm4377 = vweird.f32 %v4370
    %vm4378 = vweird.f32 %v4372
    %vm4379 = vmor %vm4377, %vm4378
    %v4380 = vsel %vm4379, %v4372, %v4376
    %v4381 = vand.u32 2147483647, %v4370
    %vm4382 = vcmp.eq.f32.partialorder %v4381, 8.507059e+37
    %v4383 = vand.u32 %v4370, 2147483648
    %v4384 = vor.u32 1.1754944e-38, %v4383
    %v4385 = vsel %vm4382, %v4384, %v4380
    %v4386 = vmul.f32 1.0, %v4385
    %v4387 = vrcp.pop %v4371
    %v4388 = vmul.f32 %v4371, %v4387
    %v4389 = vsub.f32 1.0, %v4388
    %v4390 = vmul.f32 %v4387, %v4389
    %v4391 = vadd.f32 %v4387, %v4390
    %vm4392 = vweird.f32 %v4371
    %vm4393 = vweird.f32 %v4387
    %vm4394 = vmor %vm4392, %vm4393
    %v4395 = vsel %vm4394, %v4387, %v4391
    %v4396 = vand.u32 2147483647, %v4371
    %vm4397 = vcmp.eq.f32.partialorder %v4396, 8.507059e+37
    %v4398 = vand.u32 %v4371, 2147483648
    %v4399 = vor.u32 1.1754944e-38, %v4398
    %v4400 = vsel %vm4397, %v4399, %v4395
    %v4401 = vmul.f32 1.0, %v4400
    %v4402 = vtanh.pop %v4362
    %v4403 = vtanh.pop %v4363
    %v4404 = vmul.f32 %v4386, %v4176
    %v4405 = vmul.f32 %v4401, %v4177
    %4408 = vrot.lane.b32.xlu0 %v4402, 64
    %v4409 = vpop.permute.xlu0 %4408
    %4410 = vrot.lane.b32.xlu0 %v4403, 64
    %v4411 = vpop.permute.xlu0 %4410
    %v4414 = vmul.f32 %v4386, %v4409
    %v4415 = vmul.f32 %v4401, %v4411
    %4418 = vrot.lane.b32.xlu0 %v4414, 32
    %v4419 = vpop.permute.xlu0 %4418
    %4420 = vrot.lane.b32.xlu0 %v4415, 32
    %v4421 = vpop.permute.xlu0 %4420
    %v4424 = vadd.f32 %v4404, %v4419
    %v4425 = vadd.f32 %v4405, %v4421
    %v4426 = vtanh.pop %v4424
    %v4427 = vtanh.pop %v4425
    %4430 = vrot.lane.b32.xlu0 %v4426, 64
    %v4431 = vpop.permute.xlu0 %4430
    %4432 = vrot.lane.b32.xlu0 %v4427, 64
    %v4433 = vpop.permute.xlu0 %4432
    %v4436 = vmul.f32 %v4386, %v4431
    %v4437 = vmul.f32 %v4401, %v4433
    %4439 = vset.pattern.permute.xlu0 0
    %4440 = vperm.xlu0 %4439, %v4233
    %v4441 = vpop.permute.xlu0 %4440
    %v4443 = vmul.f32 %v4441, %v4436
    %v4444 = vmul.f32 %v4441, %v4437
    %4446 = vset.pattern.permute.xlu0 0
    %4447 = vperm.xlu0 %4446, %v4245
    %v4448 = vpop.permute.xlu0 %4447
    %v4450 = vmul.f32 %v4448, %v4443
    %v4451 = vmul.f32 %v4448, %v4444
    %v4452 = vadd.f32 %v4149, %v4450
    %v4453 = vadd.f32 %v4150, %v4451
    %v4454 = vsub.f32 1.0, %v4245
    %v4455 = vmul.f32 %v4454, -10000000.0
    %4457 = vset.pattern.permute.xlu0 0
    %4458 = vperm.xlu0 %4457, %v4455
    %v4459 = vpop.permute.xlu0 %4458
    %v4461 = vadd.f32 %v4450, %v4459
    %v4462 = vadd.f32 %v4451, %v4459
    %v4463 = vmax.f32 %v4160, %v4461
    %v4464 = vmax.f32 %v4161, %v4462
    %v4465 = vsub.f32 1.0, %v4233
    %4467 = vset.pattern.permute.xlu0 0
    %4468 = vperm.xlu0 %4467, %v4465
    %v4469 = vpop.permute.xlu0 %4468
    %v4471 = vmul.f32 %v4469, %v4170
    %v4472 = vmul.f32 %v4469, %v4171
    %v4473 = vadd.f32 %v4443, %v4471
    %v4474 = vadd.f32 %v4444, %v4472
    %v4475 = vmul.f32 %v4441, %v4424
    %v4476 = vmul.f32 %v4441, %v4425
    %v4477 = vmul.f32 %v4469, %v4176
    %v4478 = vmul.f32 %v4469, %v4177
    %v4479 = vadd.f32 %v4475, %v4477
    %v4480 = vadd.f32 %v4476, %v4478
    %v4481 = vld [vmem:[#allocation6 + $0x20] sm:$0x3]
    %v4482 = vld [vmem:[#allocation7 + $0x20] sm:$0x3]
    %v4483 = vld [vmem:[#allocation6 + $0x28] sm:$0xc]
    %v4484 = vld [vmem:[#allocation7 + $0x8] sm:$0xc0]
    %v4485 = vld [vmem:[#allocation6 + $0x30] sm:$0x3]
    %v4486 = vld [vmem:[#allocation7 + $0x30] sm:$0x3]
    %v4487 = vld [vmem:[#allocation6 + $0x38] sm:$0xc]
    %v4488 = vld [vmem:[#allocation7 + $0x18] sm:$0xc0]
    %v4490 = vrot.slane %v4482, 6
    %v4493 = vrot.slane %v4483, 6
    %v4496 = vrot.slane %v4486, 6
    %v4499 = vrot.slane %v4487, 6
    %v4501 = vsel %vm242, %v4481, %v4490
    %v4502 = vsel %vm505, %v4501, %v4493
    %v4503 = vsel %vm507, %v4502, %v4484
    %v4504 = vsel %vm242, %v4485, %v4496
    %v4505 = vsel %vm505, %v4504, %v4499
    %v4506 = vsel %vm507, %v4505, %v4488
    %v4507 = vld [vmem:[%s1110] sm:$0x3]
    %v4508 = vld [vmem:[%s1112] sm:$0x3]
    %s4509 = scalar_lea.vmem %s9, 8
    %v4510 = vld [vmem:[%s4509] sm:$0x3]
    %s4511 = scalar_lea.vmem %s9, 10
    %v4512 = vld [vmem:[%s4511] sm:$0x3]
    %v4513 = vsel %vm242, %v4507, %v4227
    %v4514 = vsel %vm242, %v4508, %v4223
    %v4516 = vrot.slane %v4514, 4
    %v4518 = vsel %vm505, %v4513, %v4516
    %v4519 = vsel %vm242, %v4510, %v4239
    %v4520 = vsel %vm242, %v4512, %v4235
    %v4522 = vrot.slane %v4520, 4
    %v4524 = vsel %vm505, %v4519, %v4522
    %4527 = vrot.lane.b32.xlu0 %v4473, 32
    %v4528 = vpop.permute.xlu0 %4527
    %4529 = vrot.lane.b32.xlu0 %v4474, 32
    %v4530 = vpop.permute.xlu0 %4529
    %v4531 = vsel %vm527, %v4528, 0
    %v4533 = vsel %vm527, %v4530, 0
    %4535 = vmatpush.msra.mxu0 0.0
    %4536 = vmatpush.msra.mxu0 0.0
    %4537 = vmatpush.msra.mxu0 0.0
    %4538 = vmatpush.msra.mxu0 0.0
    %4539 = vmatpush.msra.mxu0 0.0
    %4540 = vmatpush.msra.mxu0 0.0
    %4541 = vmatpush.msra.mxu0 0.0
    %4542 = vmatpush.msra.mxu0 0.0
    %4543 = vmatpush.msra.mxu0 0.0
    %4544 = vmatpush.msra.mxu0 0.0
    %4545 = vmatpush.msra.mxu0 0.0
    %4546 = vmatpush.msra.mxu0 0.0
    %4547 = vmatpush.msra.mxu0 %v3280
    %4548 = vmatpush.msra.mxu0 %v3276
    %4549 = vmatpush.msra.mxu0 %v3272
    %4550 = vmatpush.msra.mxu0 %v3268
    %4551 = vmatmul.f32.gmra.mxu0 %v4531
    %v4552 = vpop.f32.mrf.mxu0
    %v4553 = vadd.f32 0.0, %v4552
    %4554 = vmatmul.f32.gmra.mxu0 %v4533
    %v4555 = vpop.f32.mrf.mxu0
    %v4556 = vadd.f32 0.0, %v4555
    %4557 = vdwg.mxu0
    %4558 = vmatpush.msra.mxu0 0.0
    %4559 = vmatpush.msra.mxu0 0.0
    %4560 = vmatpush.msra.mxu0 0.0
    %4561 = vmatpush.msra.mxu0 0.0
    %4562 = vmatpush.msra.mxu0 0.0
    %4563 = vmatpush.msra.mxu0 0.0
    %4564 = vmatpush.msra.mxu0 0.0
    %4565 = vmatpush.msra.mxu0 0.0
    %4566 = vmatpush.msra.mxu0 0.0
    %4567 = vmatpush.msra.mxu0 0.0
    %4568 = vmatpush.msra.mxu0 0.0
    %4569 = vmatpush.msra.mxu0 0.0
    %4570 = vmatpush.msra.mxu0 %v3281
    %4571 = vmatpush.msra.mxu0 %v3277
    %4572 = vmatpush.msra.mxu0 %v3273
    %4573 = vmatpush.msra.mxu0 %v3269
    %4574 = vmatmul.f32.gmra.mxu0 %v4531
    %v4575 = vpop.f32.mrf.mxu0
    %v4576 = vadd.f32 0.0, %v4575
    %4577 = vmatmul.f32.gmra.mxu0 %v4533
    %v4578 = vpop.f32.mrf.mxu0
    %v4579 = vadd.f32 0.0, %v4578
    %4580 = vdwg.mxu0
    %4581 = vmatpush.msra.mxu0 0.0
    %4582 = vmatpush.msra.mxu0 0.0
    %4583 = vmatpush.msra.mxu0 0.0
    %4584 = vmatpush.msra.mxu0 0.0
    %4585 = vmatpush.msra.mxu0 0.0
    %4586 = vmatpush.msra.mxu0 0.0
    %4587 = vmatpush.msra.mxu0 0.0
    %4588 = vmatpush.msra.mxu0 0.0
    %4589 = vmatpush.msra.mxu0 0.0
    %4590 = vmatpush.msra.mxu0 0.0
    %4591 = vmatpush.msra.mxu0 0.0
    %4592 = vmatpush.msra.mxu0 0.0
    %4593 = vmatpush.msra.mxu0 %v3282
    %4594 = vmatpush.msra.mxu0 %v3278
    %4595 = vmatpush.msra.mxu0 %v3274
    %4596 = vmatpush.msra.mxu0 %v3270
    %4597 = vmatmul.f32.gmra.mxu0 %v4531
    %v4598 = vpop.f32.mrf.mxu0
    %v4599 = vadd.f32 0.0, %v4598
    %4600 = vmatmul.f32.gmra.mxu0 %v4533
    %v4601 = vpop.f32.mrf.mxu0
    %v4602 = vadd.f32 0.0, %v4601
    %4603 = vdwg.mxu0
    %4604 = vmatpush.msra.mxu0 0.0
    %4605 = vmatpush.msra.mxu0 0.0
    %4606 = vmatpush.msra.mxu0 0.0
    %4607 = vmatpush.msra.mxu0 0.0
    %4608 = vmatpush.msra.mxu0 0.0
    %4609 = vmatpush.msra.mxu0 0.0
    %4610 = vmatpush.msra.mxu0 0.0
    %4611 = vmatpush.msra.mxu0 0.0
    %4612 = vmatpush.msra.mxu0 0.0
    %4613 = vmatpush.msra.mxu0 0.0
    %4614 = vmatpush.msra.mxu0 0.0
    %4615 = vmatpush.msra.mxu0 0.0
    %4616 = vmatpush.msra.mxu0 %v3283
    %4617 = vmatpush.msra.mxu0 %v3279
    %4618 = vmatpush.msra.mxu0 %v3275
    %4619 = vmatpush.msra.mxu0 %v3271
    %4620 = vmatmul.f32.gmra.mxu0 %v4531
    %v4621 = vpop.f32.mrf.mxu0
    %v4622 = vadd.f32 0.0, %v4621
    %4623 = vmatmul.f32.gmra.mxu0 %v4533
    %v4624 = vpop.f32.mrf.mxu0
    %v4625 = vadd.f32 0.0, %v4624
    %4626 = vdwg.mxu0
    %v4627 = vmul.f32 %v144, %v4553
    %v4628 = vmul.f32 %v145, %v4556
    %v4629 = vmul.f32 %v154, %v4576
    %v4630 = vmul.f32 %v155, %v4579
    %v4631 = vadd.f32 %v4627, %v4629
    %v4632 = vadd.f32 %v4628, %v4630
    %v4633 = vmul.f32 %v164, %v4599
    %v4634 = vmul.f32 %v165, %v4602
    %v4635 = vadd.f32 %v4631, %v4633
    %v4636 = vadd.f32 %v4632, %v4634
    %v4637 = vmul.f32 %v174, %v4622
    %v4638 = vmul.f32 %v175, %v4625
    %v4639 = vadd.f32 %v4635, %v4637
    %v4640 = vadd.f32 %v4636, %v4638
    %v4641 = vadd.f32 %v4503, %v4639
    %v4642 = vadd.f32 %v4506, %v4640
    %v4643 = vxor.u32 %v4641, 2147483648
    %v4644 = vxor.u32 %v4642, 2147483648
    %v4645 = vmul.f32 %v4643, 1.442695
    %v4646 = vpow.pop %v4645
    %v4647 = vmul.f32 %v4644, 1.442695
    %v4648 = vpow.pop %v4647
    %v4649 = vadd.f32 %v4646, 1.0
    %v4650 = vadd.f32 %v4648, 1.0
    %v4651 = vrcp.pop %v4649
    %v4652 = vmul.f32 %v4649, %v4651
    %v4653 = vsub.f32 1.0, %v4652
    %v4654 = vmul.f32 %v4651, %v4653
    %v4655 = vadd.f32 %v4651, %v4654
    %vm4656 = vweird.f32 %v4649
    %vm4657 = vweird.f32 %v4651
    %vm4658 = vmor %vm4656, %vm4657
    %v4659 = vsel %vm4658, %v4651, %v4655
    %v4660 = vand.u32 2147483647, %v4649
    %vm4661 = vcmp.eq.f32.partialorder %v4660, 8.507059e+37
    %v4662 = vand.u32 %v4649, 2147483648
    %v4663 = vor.u32 1.1754944e-38, %v4662
    %v4664 = vsel %vm4661, %v4663, %v4659
    %v4665 = vmul.f32 1.0, %v4664
    %v4666 = vrcp.pop %v4650
    %v4667 = vmul.f32 %v4650, %v4666
    %v4668 = vsub.f32 1.0, %v4667
    %v4669 = vmul.f32 %v4666, %v4668
    %v4670 = vadd.f32 %v4666, %v4669
    %vm4671 = vweird.f32 %v4650
    %vm4672 = vweird.f32 %v4666
    %vm4673 = vmor %vm4671, %vm4672
    %v4674 = vsel %vm4673, %v4666, %v4670
    %v4675 = vand.u32 2147483647, %v4650
    %vm4676 = vcmp.eq.f32.partialorder %v4675, 8.507059e+37
    %v4677 = vand.u32 %v4650, 2147483648
    %v4678 = vor.u32 1.1754944e-38, %v4677
    %v4679 = vsel %vm4676, %v4678, %v4674
    %v4680 = vmul.f32 1.0, %v4679
    %v4681 = vtanh.pop %v4641
    %v4682 = vtanh.pop %v4642
    %v4683 = vmul.f32 %v4665, %v4479
    %v4684 = vmul.f32 %v4680, %v4480
    %4687 = vrot.lane.b32.xlu0 %v4681, 64
    %v4688 = vpop.permute.xlu0 %4687
    %4689 = vrot.lane.b32.xlu0 %v4682, 64
    %v4690 = vpop.permute.xlu0 %4689
    %v4693 = vmul.f32 %v4665, %v4688
    %v4694 = vmul.f32 %v4680, %v4690
    %4697 = vrot.lane.b32.xlu0 %v4693, 32
    %v4698 = vpop.permute.xlu0 %4697
    %4699 = vrot.lane.b32.xlu0 %v4694, 32
    %v4700 = vpop.permute.xlu0 %4699
    %v4703 = vadd.f32 %v4683, %v4698
    %v4704 = vadd.f32 %v4684, %v4700
    %v4705 = vtanh.pop %v4703
    %v4706 = vtanh.pop %v4704
    %4709 = vrot.lane.b32.xlu0 %v4705, 64
    %v4710 = vpop.permute.xlu0 %4709
    %4711 = vrot.lane.b32.xlu0 %v4706, 64
    %v4712 = vpop.permute.xlu0 %4711
    %v4715 = vmul.f32 %v4665, %v4710
    %v4716 = vmul.f32 %v4680, %v4712
    %4718 = vset.pattern.permute.xlu0 0
    %4719 = vperm.xlu0 %4718, %v4518
    %v4720 = vpop.permute.xlu0 %4719
    %v4722 = vmul.f32 %v4720, %v4715
    %v4723 = vmul.f32 %v4720, %v4716
    %4725 = vset.pattern.permute.xlu0 0
    %4726 = vperm.xlu0 %4725, %v4524
    %v4727 = vpop.permute.xlu0 %4726
    %v4729 = vmul.f32 %v4727, %v4722
    %v4730 = vmul.f32 %v4727, %v4723
    %v4731 = vadd.f32 %v4452, %v4729
    %v4732 = vadd.f32 %v4453, %v4730
    %v4733 = vsub.f32 1.0, %v4524
    %v4734 = vmul.f32 %v4733, -10000000.0
    %4736 = vset.pattern.permute.xlu0 0
    %4737 = vperm.xlu0 %4736, %v4734
    %v4738 = vpop.permute.xlu0 %4737
    %v4740 = vadd.f32 %v4729, %v4738
    %v4741 = vadd.f32 %v4730, %v4738
    %v4742 = vmax.f32 %v4463, %v4740
    %v4743 = vmax.f32 %v4464, %v4741
    %v4744 = vsub.f32 1.0, %v4518
    %4746 = vset.pattern.permute.xlu0 0
    %4747 = vperm.xlu0 %4746, %v4744
    %v4748 = vpop.permute.xlu0 %4747
    %v4750 = vmul.f32 %v4748, %v4473
    %v4751 = vmul.f32 %v4748, %v4474
    %v4752 = vadd.f32 %v4722, %v4750
    %v4753 = vadd.f32 %v4723, %v4751
    %v4754 = vmul.f32 %v4720, %v4703
    %v4755 = vmul.f32 %v4720, %v4704
    %v4756 = vmul.f32 %v4748, %v4479
    %v4757 = vmul.f32 %v4748, %v4480
    %v4758 = vadd.f32 %v4754, %v4756
    %v4759 = vadd.f32 %v4755, %v4757
    %v4760 = vld [vmem:[#allocation6 + $0x20] sm:$0xc]
    %v4761 = vld [vmem:[#allocation7 + $0x20] sm:$0xc]
    %v4762 = vld [vmem:[#allocation6 + $0x28] sm:$0x3]
    %v4763 = vld [vmem:[#allocation7 + $0x8] sm:$0x30]
    %v4764 = vld [vmem:[#allocation6 + $0x30] sm:$0xc]
    %v4765 = vld [vmem:[#allocation7 + $0x30] sm:$0xc]
    %v4766 = vld [vmem:[#allocation6 + $0x38] sm:$0x3]
    %v4767 = vld [vmem:[#allocation7 + $0x18] sm:$0x30]
    %v4769 = vrot.slane %v4760, 2
    %v4772 = vrot.slane %v4762, 4
    %v4775 = vrot.slane %v4763, 6
    %v4778 = vrot.slane %v4764, 2
    %v4781 = vrot.slane %v4766, 4
    %v4784 = vrot.slane %v4767, 6
    %v4786 = vsel %vm242, %v4769, %v4761
    %v4787 = vsel %vm505, %v4786, %v4772
    %v4788 = vsel %vm507, %v4787, %v4775
    %v4789 = vsel %vm242, %v4778, %v4765
    %v4790 = vsel %vm505, %v4789, %v4781
    %v4791 = vsel %vm507, %v4790, %v4784
    %v4792 = vsel %vm242, %v4508, %v3924
    %v4793 = vsel %vm242, %v4507, %v3920
    %v4795 = vrot.slane %v4793, 4
    %v4797 = vsel %vm505, %v4792, %v4795
    %v4798 = vsel %vm242, %v4512, %v3936
    %v4799 = vsel %vm242, %v4510, %v3932
    %v4801 = vrot.slane %v4799, 4
    %v4803 = vsel %vm505, %v4798, %v4801
    %4806 = vrot.lane.b32.xlu0 %v4752, 32
    %v4807 = vpop.permute.xlu0 %4806
    %4808 = vrot.lane.b32.xlu0 %v4753, 32
    %v4809 = vpop.permute.xlu0 %4808
    %v4810 = vsel %vm527, %v4807, 0
    %v4812 = vsel %vm527, %v4809, 0
    %4814 = vmatpush.msra.mxu0 0.0
    %4815 = vmatpush.msra.mxu0 0.0
    %4816 = vmatpush.msra.mxu0 0.0
    %4817 = vmatpush.msra.mxu0 0.0
    %4818 = vmatpush.msra.mxu0 0.0
    %4819 = vmatpush.msra.mxu0 0.0
    %4820 = vmatpush.msra.mxu0 0.0
    %4821 = vmatpush.msra.mxu0 0.0
    %4822 = vmatpush.msra.mxu0 0.0
    %4823 = vmatpush.msra.mxu0 0.0
    %4824 = vmatpush.msra.mxu0 0.0
    %4825 = vmatpush.msra.mxu0 0.0
    %4826 = vmatpush.msra.mxu0 %v3280
    %4827 = vmatpush.msra.mxu0 %v3276
    %4828 = vmatpush.msra.mxu0 %v3272
    %4829 = vmatpush.msra.mxu0 %v3268
    %4830 = vmatmul.f32.gmra.mxu0 %v4810
    %v4831 = vpop.f32.mrf.mxu0
    %v4832 = vadd.f32 0.0, %v4831
    %4833 = vmatmul.f32.gmra.mxu0 %v4812
    %v4834 = vpop.f32.mrf.mxu0
    %v4835 = vadd.f32 0.0, %v4834
    %4836 = vdwg.mxu0
    %4837 = vmatpush.msra.mxu0 0.0
    %4838 = vmatpush.msra.mxu0 0.0
    %4839 = vmatpush.msra.mxu0 0.0
    %4840 = vmatpush.msra.mxu0 0.0
    %4841 = vmatpush.msra.mxu0 0.0
    %4842 = vmatpush.msra.mxu0 0.0
    %4843 = vmatpush.msra.mxu0 0.0
    %4844 = vmatpush.msra.mxu0 0.0
    %4845 = vmatpush.msra.mxu0 0.0
    %4846 = vmatpush.msra.mxu0 0.0
    %4847 = vmatpush.msra.mxu0 0.0
    %4848 = vmatpush.msra.mxu0 0.0
    %4849 = vmatpush.msra.mxu0 %v3281
    %4850 = vmatpush.msra.mxu0 %v3277
    %4851 = vmatpush.msra.mxu0 %v3273
    %4852 = vmatpush.msra.mxu0 %v3269
    %4853 = vmatmul.f32.gmra.mxu0 %v4810
    %v4854 = vpop.f32.mrf.mxu0
    %v4855 = vadd.f32 0.0, %v4854
    %4856 = vmatmul.f32.gmra.mxu0 %v4812
    %v4857 = vpop.f32.mrf.mxu0
    %v4858 = vadd.f32 0.0, %v4857
    %4859 = vdwg.mxu0
    %4860 = vmatpush.msra.mxu0 0.0
    %4861 = vmatpush.msra.mxu0 0.0
    %4862 = vmatpush.msra.mxu0 0.0
    %4863 = vmatpush.msra.mxu0 0.0
    %4864 = vmatpush.msra.mxu0 0.0
    %4865 = vmatpush.msra.mxu0 0.0
    %4866 = vmatpush.msra.mxu0 0.0
    %4867 = vmatpush.msra.mxu0 0.0
    %4868 = vmatpush.msra.mxu0 0.0
    %4869 = vmatpush.msra.mxu0 0.0
    %4870 = vmatpush.msra.mxu0 0.0
    %4871 = vmatpush.msra.mxu0 0.0
    %4872 = vmatpush.msra.mxu0 %v3282
    %4873 = vmatpush.msra.mxu0 %v3278
    %4874 = vmatpush.msra.mxu0 %v3274
    %4875 = vmatpush.msra.mxu0 %v3270
    %4876 = vmatmul.f32.gmra.mxu0 %v4810
    %v4877 = vpop.f32.mrf.mxu0
    %v4878 = vadd.f32 0.0, %v4877
    %4879 = vmatmul.f32.gmra.mxu0 %v4812
    %v4880 = vpop.f32.mrf.mxu0
    %v4881 = vadd.f32 0.0, %v4880
    %4882 = vdwg.mxu0
    %4883 = vmatpush.msra.mxu0 0.0
    %4884 = vmatpush.msra.mxu0 0.0
    %4885 = vmatpush.msra.mxu0 0.0
    %4886 = vmatpush.msra.mxu0 0.0
    %4887 = vmatpush.msra.mxu0 0.0
    %4888 = vmatpush.msra.mxu0 0.0
    %4889 = vmatpush.msra.mxu0 0.0
    %4890 = vmatpush.msra.mxu0 0.0
    %4891 = vmatpush.msra.mxu0 0.0
    %4892 = vmatpush.msra.mxu0 0.0
    %4893 = vmatpush.msra.mxu0 0.0
    %4894 = vmatpush.msra.mxu0 0.0
    %4895 = vmatpush.msra.mxu0 %v3283
    %4896 = vmatpush.msra.mxu0 %v3279
    %4897 = vmatpush.msra.mxu0 %v3275
    %4898 = vmatpush.msra.mxu0 %v3271
    %4899 = vmatmul.f32.gmra.mxu0 %v4810
    %v4900 = vpop.f32.mrf.mxu0
    %v4901 = vadd.f32 0.0, %v4900
    %4902 = vmatmul.f32.gmra.mxu0 %v4812
    %v4903 = vpop.f32.mrf.mxu0
    %v4904 = vadd.f32 0.0, %v4903
    %4905 = vdwg.mxu0
    %v4906 = vmul.f32 %v144, %v4832
    %v4907 = vmul.f32 %v145, %v4835
    %v4908 = vmul.f32 %v154, %v4855
    %v4909 = vmul.f32 %v155, %v4858
    %v4910 = vadd.f32 %v4906, %v4908
    %v4911 = vadd.f32 %v4907, %v4909
    %v4912 = vmul.f32 %v164, %v4878
    %v4913 = vmul.f32 %v165, %v4881
    %v4914 = vadd.f32 %v4910, %v4912
    %v4915 = vadd.f32 %v4911, %v4913
    %v4916 = vmul.f32 %v174, %v4901
    %v4917 = vmul.f32 %v175, %v4904
    %v4918 = vadd.f32 %v4914, %v4916
    %v4919 = vadd.f32 %v4915, %v4917
    %v4920 = vadd.f32 %v4788, %v4918
    %v4921 = vadd.f32 %v4791, %v4919
    %v4922 = vxor.u32 %v4920, 2147483648
    %v4923 = vxor.u32 %v4921, 2147483648
    %v4924 = vmul.f32 %v4922, 1.442695
    %v4925 = vpow.pop %v4924
    %v4926 = vmul.f32 %v4923, 1.442695
    %v4927 = vpow.pop %v4926
    %v4928 = vadd.f32 %v4925, 1.0
    %v4929 = vadd.f32 %v4927, 1.0
    %v4930 = vrcp.pop %v4928
    %v4931 = vmul.f32 %v4928, %v4930
    %v4932 = vsub.f32 1.0, %v4931
    %v4933 = vmul.f32 %v4930, %v4932
    %v4934 = vadd.f32 %v4930, %v4933
    %vm4935 = vweird.f32 %v4928
    %vm4936 = vweird.f32 %v4930
    %vm4937 = vmor %vm4935, %vm4936
    %v4938 = vsel %vm4937, %v4930, %v4934
    %v4939 = vand.u32 2147483647, %v4928
    %vm4940 = vcmp.eq.f32.partialorder %v4939, 8.507059e+37
    %v4941 = vand.u32 %v4928, 2147483648
    %v4942 = vor.u32 1.1754944e-38, %v4941
    %v4943 = vsel %vm4940, %v4942, %v4938
    %v4944 = vmul.f32 1.0, %v4943
    %v4945 = vrcp.pop %v4929
    %v4946 = vmul.f32 %v4929, %v4945
    %v4947 = vsub.f32 1.0, %v4946
    %v4948 = vmul.f32 %v4945, %v4947
    %v4949 = vadd.f32 %v4945, %v4948
    %vm4950 = vweird.f32 %v4929
    %vm4951 = vweird.f32 %v4945
    %vm4952 = vmor %vm4950, %vm4951
    %v4953 = vsel %vm4952, %v4945, %v4949
    %v4954 = vand.u32 2147483647, %v4929
    %vm4955 = vcmp.eq.f32.partialorder %v4954, 8.507059e+37
    %v4956 = vand.u32 %v4929, 2147483648
    %v4957 = vor.u32 1.1754944e-38, %v4956
    %v4958 = vsel %vm4955, %v4957, %v4953
    %v4959 = vmul.f32 1.0, %v4958
    %v4960 = vtanh.pop %v4920
    %v4961 = vtanh.pop %v4921
    %v4962 = vmul.f32 %v4944, %v4758
    %v4963 = vmul.f32 %v4959, %v4759
    %4966 = vrot.lane.b32.xlu0 %v4960, 64
    %v4967 = vpop.permute.xlu0 %4966
    %4968 = vrot.lane.b32.xlu0 %v4961, 64
    %v4969 = vpop.permute.xlu0 %4968
    %v4972 = vmul.f32 %v4944, %v4967
    %v4973 = vmul.f32 %v4959, %v4969
    %4976 = vrot.lane.b32.xlu0 %v4972, 32
    %v4977 = vpop.permute.xlu0 %4976
    %4978 = vrot.lane.b32.xlu0 %v4973, 32
    %v4979 = vpop.permute.xlu0 %4978
    %v4982 = vadd.f32 %v4962, %v4977
    %v4983 = vadd.f32 %v4963, %v4979
    %v4984 = vtanh.pop %v4982
    %v4985 = vtanh.pop %v4983
    %4988 = vrot.lane.b32.xlu0 %v4984, 64
    %v4989 = vpop.permute.xlu0 %4988
    %4990 = vrot.lane.b32.xlu0 %v4985, 64
    %v4991 = vpop.permute.xlu0 %4990
    %v4994 = vmul.f32 %v4944, %v4989
    %v4995 = vmul.f32 %v4959, %v4991
    %4997 = vset.pattern.permute.xlu0 0
    %4998 = vperm.xlu0 %4997, %v4797
    %v4999 = vpop.permute.xlu0 %4998
    %v5001 = vmul.f32 %v4999, %v4994
    %v5002 = vmul.f32 %v4999, %v4995
    %5004 = vset.pattern.permute.xlu0 0
    %5005 = vperm.xlu0 %5004, %v4803
    %v5006 = vpop.permute.xlu0 %5005
    %v5008 = vmul.f32 %v5006, %v5001
    %v5009 = vmul.f32 %v5006, %v5002
    %v5010 = vadd.f32 %v4731, %v5008
    %v5011 = vadd.f32 %v4732, %v5009
    %v5012 = vsub.f32 1.0, %v4803
    %v5013 = vmul.f32 %v5012, -10000000.0
    %5015 = vset.pattern.permute.xlu0 0
    %5016 = vperm.xlu0 %5015, %v5013
    %v5017 = vpop.permute.xlu0 %5016
    %v5019 = vadd.f32 %v5008, %v5017
    %v5020 = vadd.f32 %v5009, %v5017
    %v5021 = vmax.f32 %v4742, %v5019
    %v5022 = vmax.f32 %v4743, %v5020
    %v5023 = vsub.f32 1.0, %v4797
    %5025 = vset.pattern.permute.xlu0 0
    %5026 = vperm.xlu0 %5025, %v5023
    %v5027 = vpop.permute.xlu0 %5026
    %v5029 = vmul.f32 %v5027, %v4752
    %v5030 = vmul.f32 %v5027, %v4753
    %v5031 = vadd.f32 %v5001, %v5029
    %v5032 = vadd.f32 %v5002, %v5030
    %v5033 = vmul.f32 %v4999, %v4982
    %v5034 = vmul.f32 %v4999, %v4983
    %v5035 = vmul.f32 %v5027, %v4758
    %v5036 = vmul.f32 %v5027, %v4759
    %v5037 = vadd.f32 %v5033, %v5035
    %v5038 = vadd.f32 %v5034, %v5036
    %v5039 = vld [vmem:[#allocation6 + $0x20] sm:$0x30]
    %v5040 = vld [vmem:[#allocation7 + $0x20] sm:$0x30]
    %v5041 = vld [vmem:[#allocation6 + $0x8] sm:$0xc0]
    %v5042 = vld [vmem:[#allocation7 + $0x8] sm:$0xc]
    %v5043 = vld [vmem:[#allocation6 + $0x30] sm:$0x30]
    %v5044 = vld [vmem:[#allocation7 + $0x30] sm:$0x30]
    %v5045 = vld [vmem:[#allocation6 + $0x18] sm:$0xc0]
    %v5046 = vld [vmem:[#allocation7 + $0x18] sm:$0xc]
    %v5048 = vrot.slane %v5039, 4
    %v5051 = vrot.slane %v5040, 2
    %v5054 = vrot.slane %v5041, 2
    %v5057 = vrot.slane %v5042, 4
    %v5060 = vrot.slane %v5043, 4
    %v5063 = vrot.slane %v5044, 2
    %v5066 = vrot.slane %v5045, 2
    %v5069 = vrot.slane %v5046, 4
    %v5071 = vsel %vm242, %v5048, %v5051
    %v5072 = vsel %vm505, %v5071, %v5054
    %v5073 = vsel %vm507, %v5072, %v5057
    %v5074 = vsel %vm242, %v5060, %v5063
    %v5075 = vsel %vm505, %v5074, %v5066
    %v5076 = vsel %vm507, %v5075, %v5069
    %v5077 = vsel %vm242, %v4211, %v3615
    %v5078 = vsel %vm242, %v4210, %v3611
    %v5080 = vrot.slane %v5078, 4
    %v5082 = vsel %vm505, %v5077, %v5080
    %v5083 = vsel %vm242, %v4217, %v3627
    %v5084 = vsel %vm242, %v4215, %v3623
    %v5086 = vrot.slane %v5084, 4
    %v5088 = vsel %vm505, %v5083, %v5086
    %5091 = vrot.lane.b32.xlu0 %v5031, 32
    %v5092 = vpop.permute.xlu0 %5091
    %5093 = vrot.lane.b32.xlu0 %v5032, 32
    %v5094 = vpop.permute.xlu0 %5093
    %v5095 = vsel %vm527, %v5092, 0
    %v5097 = vsel %vm527, %v5094, 0
    %5099 = vmatpush.msra.mxu0 0.0
    %5100 = vmatpush.msra.mxu0 0.0
    %5101 = vmatpush.msra.mxu0 0.0
    %5102 = vmatpush.msra.mxu0 0.0
    %5103 = vmatpush.msra.mxu0 0.0
    %5104 = vmatpush.msra.mxu0 0.0
    %5105 = vmatpush.msra.mxu0 0.0
    %5106 = vmatpush.msra.mxu0 0.0
    %5107 = vmatpush.msra.mxu0 0.0
    %5108 = vmatpush.msra.mxu0 0.0
    %5109 = vmatpush.msra.mxu0 0.0
    %5110 = vmatpush.msra.mxu0 0.0
    %5111 = vmatpush.msra.mxu0 %v3280
    %5112 = vmatpush.msra.mxu0 %v3276
    %5113 = vmatpush.msra.mxu0 %v3272
    %5114 = vmatpush.msra.mxu0 %v3268
    %5115 = vmatmul.f32.gmra.mxu0 %v5095
    %v5116 = vpop.f32.mrf.mxu0
    %v5117 = vadd.f32 0.0, %v5116
    %5118 = vmatmul.f32.gmra.mxu0 %v5097
    %v5119 = vpop.f32.mrf.mxu0
    %v5120 = vadd.f32 0.0, %v5119
    %5121 = vdwg.mxu0
    %5122 = vmatpush.msra.mxu0 0.0
    %5123 = vmatpush.msra.mxu0 0.0
    %5124 = vmatpush.msra.mxu0 0.0
    %5125 = vmatpush.msra.mxu0 0.0
    %5126 = vmatpush.msra.mxu0 0.0
    %5127 = vmatpush.msra.mxu0 0.0
    %5128 = vmatpush.msra.mxu0 0.0
    %5129 = vmatpush.msra.mxu0 0.0
    %5130 = vmatpush.msra.mxu0 0.0
    %5131 = vmatpush.msra.mxu0 0.0
    %5132 = vmatpush.msra.mxu0 0.0
    %5133 = vmatpush.msra.mxu0 0.0
    %5134 = vmatpush.msra.mxu0 %v3281
    %5135 = vmatpush.msra.mxu0 %v3277
    %5136 = vmatpush.msra.mxu0 %v3273
    %5137 = vmatpush.msra.mxu0 %v3269
    %5138 = vmatmul.f32.gmra.mxu0 %v5095
    %v5139 = vpop.f32.mrf.mxu0
    %v5140 = vadd.f32 0.0, %v5139
    %5141 = vmatmul.f32.gmra.mxu0 %v5097
    %v5142 = vpop.f32.mrf.mxu0
    %v5143 = vadd.f32 0.0, %v5142
    %5144 = vdwg.mxu0
    %5145 = vmatpush.msra.mxu0 0.0
    %5146 = vmatpush.msra.mxu0 0.0
    %5147 = vmatpush.msra.mxu0 0.0
    %5148 = vmatpush.msra.mxu0 0.0
    %5149 = vmatpush.msra.mxu0 0.0
    %5150 = vmatpush.msra.mxu0 0.0
    %5151 = vmatpush.msra.mxu0 0.0
    %5152 = vmatpush.msra.mxu0 0.0
    %5153 = vmatpush.msra.mxu0 0.0
    %5154 = vmatpush.msra.mxu0 0.0
    %5155 = vmatpush.msra.mxu0 0.0
    %5156 = vmatpush.msra.mxu0 0.0
    %5157 = vmatpush.msra.mxu0 %v3282
    %5158 = vmatpush.msra.mxu0 %v3278
    %5159 = vmatpush.msra.mxu0 %v3274
    %5160 = vmatpush.msra.mxu0 %v3270
    %5161 = vmatmul.f32.gmra.mxu0 %v5095
    %v5162 = vpop.f32.mrf.mxu0
    %v5163 = vadd.f32 0.0, %v5162
    %5164 = vmatmul.f32.gmra.mxu0 %v5097
    %v5165 = vpop.f32.mrf.mxu0
    %v5166 = vadd.f32 0.0, %v5165
    %5167 = vdwg.mxu0
    %5168 = vmatpush.msra.mxu0 0.0
    %5169 = vmatpush.msra.mxu0 0.0
    %5170 = vmatpush.msra.mxu0 0.0
    %5171 = vmatpush.msra.mxu0 0.0
    %5172 = vmatpush.msra.mxu0 0.0
    %5173 = vmatpush.msra.mxu0 0.0
    %5174 = vmatpush.msra.mxu0 0.0
    %5175 = vmatpush.msra.mxu0 0.0
    %5176 = vmatpush.msra.mxu0 0.0
    %5177 = vmatpush.msra.mxu0 0.0
    %5178 = vmatpush.msra.mxu0 0.0
    %5179 = vmatpush.msra.mxu0 0.0
    %5180 = vmatpush.msra.mxu0 %v3283
    %5181 = vmatpush.msra.mxu0 %v3279
    %5182 = vmatpush.msra.mxu0 %v3275
    %5183 = vmatpush.msra.mxu0 %v3271
    %5184 = vmatmul.f32.gmra.mxu0 %v5095
    %v5185 = vpop.f32.mrf.mxu0
    %v5186 = vadd.f32 0.0, %v5185
    %5187 = vmatmul.f32.gmra.mxu0 %v5097
    %v5188 = vpop.f32.mrf.mxu0
    %v5189 = vadd.f32 0.0, %v5188
    %5190 = vdwg.mxu0
    %v5191 = vmul.f32 %v144, %v5117
    %v5192 = vmul.f32 %v145, %v5120
    %v5193 = vmul.f32 %v154, %v5140
    %v5194 = vmul.f32 %v155, %v5143
    %v5195 = vadd.f32 %v5191, %v5193
    %v5196 = vadd.f32 %v5192, %v5194
    %v5197 = vmul.f32 %v164, %v5163
    %v5198 = vmul.f32 %v165, %v5166
    %v5199 = vadd.f32 %v5195, %v5197
    %v5200 = vadd.f32 %v5196, %v5198
    %v5201 = vmul.f32 %v174, %v5186
    %v5202 = vmul.f32 %v175, %v5189
    %v5203 = vadd.f32 %v5199, %v5201
    %v5204 = vadd.f32 %v5200, %v5202
    %v5205 = vadd.f32 %v5073, %v5203
    %v5206 = vadd.f32 %v5076, %v5204
    %v5207 = vxor.u32 %v5205, 2147483648
    %v5208 = vxor.u32 %v5206, 2147483648
    %v5209 = vmul.f32 %v5207, 1.442695
    %v5210 = vpow.pop %v5209
    %v5211 = vmul.f32 %v5208, 1.442695
    %v5212 = vpow.pop %v5211
    %v5213 = vadd.f32 %v5210, 1.0
    %v5214 = vadd.f32 %v5212, 1.0
    %v5215 = vrcp.pop %v5213
    %v5216 = vmul.f32 %v5213, %v5215
    %v5217 = vsub.f32 1.0, %v5216
    %v5218 = vmul.f32 %v5215, %v5217
    %v5219 = vadd.f32 %v5215, %v5218
    %vm5220 = vweird.f32 %v5213
    %vm5221 = vweird.f32 %v5215
    %vm5222 = vmor %vm5220, %vm5221
    %v5223 = vsel %vm5222, %v5215, %v5219
    %v5224 = vand.u32 2147483647, %v5213
    %vm5225 = vcmp.eq.f32.partialorder %v5224, 8.507059e+37
    %v5226 = vand.u32 %v5213, 2147483648
    %v5227 = vor.u32 1.1754944e-38, %v5226
    %v5228 = vsel %vm5225, %v5227, %v5223
    %v5229 = vmul.f32 1.0, %v5228
    %v5230 = vrcp.pop %v5214
    %v5231 = vmul.f32 %v5214, %v5230
    %v5232 = vsub.f32 1.0, %v5231
    %v5233 = vmul.f32 %v5230, %v5232
    %v5234 = vadd.f32 %v5230, %v5233
    %vm5235 = vweird.f32 %v5214
    %vm5236 = vweird.f32 %v5230
    %vm5237 = vmor %vm5235, %vm5236
    %v5238 = vsel %vm5237, %v5230, %v5234
    %v5239 = vand.u32 2147483647, %v5214
    %vm5240 = vcmp.eq.f32.partialorder %v5239, 8.507059e+37
    %v5241 = vand.u32 %v5214, 2147483648
    %v5242 = vor.u32 1.1754944e-38, %v5241
    %v5243 = vsel %vm5240, %v5242, %v5238
    %v5244 = vmul.f32 1.0, %v5243
    %v5245 = vtanh.pop %v5205
    %v5246 = vtanh.pop %v5206
    %v5247 = vmul.f32 %v5229, %v5037
    %v5248 = vmul.f32 %v5244, %v5038
    %5251 = vrot.lane.b32.xlu0 %v5245, 64
    %v5252 = vpop.permute.xlu0 %5251
    %5253 = vrot.lane.b32.xlu0 %v5246, 64
    %v5254 = vpop.permute.xlu0 %5253
    %v5257 = vmul.f32 %v5229, %v5252
    %v5258 = vmul.f32 %v5244, %v5254
    %5261 = vrot.lane.b32.xlu0 %v5257, 32
    %v5262 = vpop.permute.xlu0 %5261
    %5263 = vrot.lane.b32.xlu0 %v5258, 32
    %v5264 = vpop.permute.xlu0 %5263
    %v5267 = vadd.f32 %v5247, %v5262
    %v5268 = vadd.f32 %v5248, %v5264
    %v5269 = vtanh.pop %v5267
    %v5270 = vtanh.pop %v5268
    %5273 = vrot.lane.b32.xlu0 %v5269, 64
    %v5274 = vpop.permute.xlu0 %5273
    %5275 = vrot.lane.b32.xlu0 %v5270, 64
    %v5276 = vpop.permute.xlu0 %5275
    %v5279 = vmul.f32 %v5229, %v5274
    %v5280 = vmul.f32 %v5244, %v5276
    %5282 = vset.pattern.permute.xlu0 0
    %5283 = vperm.xlu0 %5282, %v5082
    %v5284 = vpop.permute.xlu0 %5283
    %v5286 = vmul.f32 %v5284, %v5279
    %v5287 = vmul.f32 %v5284, %v5280
    %5289 = vset.pattern.permute.xlu0 0
    %5290 = vperm.xlu0 %5289, %v5088
    %v5291 = vpop.permute.xlu0 %5290
    %v5293 = vmul.f32 %v5291, %v5286
    %v5294 = vmul.f32 %v5291, %v5287
    %v5295 = vadd.f32 %v5010, %v5293
    %v5296 = vadd.f32 %v5011, %v5294
    %v5297 = vsub.f32 1.0, %v5088
    %v5298 = vmul.f32 %v5297, -10000000.0
    %5300 = vset.pattern.permute.xlu0 0
    %5301 = vperm.xlu0 %5300, %v5298
    %v5302 = vpop.permute.xlu0 %5301
    %v5304 = vadd.f32 %v5293, %v5302
    %v5305 = vadd.f32 %v5294, %v5302
    %v5306 = vmax.f32 %v5021, %v5304
    %v5307 = vmax.f32 %v5022, %v5305
    %v5308 = vsub.f32 1.0, %v5082
    %5310 = vset.pattern.permute.xlu0 0
    %5311 = vperm.xlu0 %5310, %v5308
    %v5312 = vpop.permute.xlu0 %5311
    %v5314 = vmul.f32 %v5312, %v5031
    %v5315 = vmul.f32 %v5312, %v5032
    %v5316 = vadd.f32 %v5286, %v5314
    %v5317 = vadd.f32 %v5287, %v5315
    %v5318 = vmul.f32 %v5284, %v5267
    %v5319 = vmul.f32 %v5284, %v5268
    %v5320 = vmul.f32 %v5312, %v5037
    %v5321 = vmul.f32 %v5312, %v5038
    %v5322 = vadd.f32 %v5318, %v5320
    %v5323 = vadd.f32 %v5319, %v5321
    %v5324 = vld [vmem:[#allocation6 + $0x20] sm:$0xc0]
    %v5325 = vld [vmem:[#allocation7 + $0x20] sm:$0xc0]
    %v5326 = vld [vmem:[#allocation6 + $0x8] sm:$0x30]
    %v5327 = vld [vmem:[#allocation7 + $0x8] sm:$0x3]
    %v5328 = vld [vmem:[#allocation6 + $0x30] sm:$0xc0]
    %v5329 = vld [vmem:[#allocation7 + $0x30] sm:$0xc0]
    %v5330 = vld [vmem:[#allocation6 + $0x18] sm:$0x30]
    %v5331 = vld [vmem:[#allocation7 + $0x18] sm:$0x3]
    %v5333 = vrot.slane %v5324, 6
    %v5336 = vrot.slane %v5325, 4
    %v5339 = vrot.slane %v5327, 2
    %v5342 = vrot.slane %v5328, 6
    %v5345 = vrot.slane %v5329, 4
    %v5348 = vrot.slane %v5331, 2
    %v5350 = vsel %vm242, %v5333, %v5336
    %v5351 = vsel %vm505, %v5350, %v5326
    %v5352 = vsel %vm507, %v5351, %v5339
    %v5353 = vsel %vm242, %v5342, %v5345
    %v5354 = vsel %vm505, %v5353, %v5330
    %v5355 = vsel %vm507, %v5354, %v5348
    %v5356 = vsel %vm242, %v3908, %v3325
    %v5357 = vsel %vm242, %v3907, %v3321
    %v5359 = vrot.slane %v5357, 4
    %v5361 = vsel %vm505, %v5356, %v5359
    %v5362 = vsel %vm242, %v3914, %v3337
    %v5363 = vsel %vm242, %v3912, %v3333
    %v5365 = vrot.slane %v5363, 4
    %v5367 = vsel %vm505, %v5362, %v5365
    %5370 = vrot.lane.b32.xlu0 %v5316, 32
    %v5371 = vpop.permute.xlu0 %5370
    %5372 = vrot.lane.b32.xlu0 %v5317, 32
    %v5373 = vpop.permute.xlu0 %5372
    %v5374 = vsel %vm527, %v5371, 0
    %v5376 = vsel %vm527, %v5373, 0
    %5378 = vmatpush.msra.mxu0 0.0
    %5379 = vmatpush.msra.mxu0 0.0
    %5380 = vmatpush.msra.mxu0 0.0
    %5381 = vmatpush.msra.mxu0 0.0
    %5382 = vmatpush.msra.mxu0 0.0
    %5383 = vmatpush.msra.mxu0 0.0
    %5384 = vmatpush.msra.mxu0 0.0
    %5385 = vmatpush.msra.mxu0 0.0
    %5386 = vmatpush.msra.mxu0 0.0
    %5387 = vmatpush.msra.mxu0 0.0
    %5388 = vmatpush.msra.mxu0 0.0
    %5389 = vmatpush.msra.mxu0 0.0
    %5390 = vmatpush.msra.mxu0 %v3280
    %5391 = vmatpush.msra.mxu0 %v3276
    %5392 = vmatpush.msra.mxu0 %v3272
    %5393 = vmatpush.msra.mxu0 %v3268
    %5394 = vmatmul.f32.gmra.mxu0 %v5374
    %v5395 = vpop.f32.mrf.mxu0
    %v5396 = vadd.f32 0.0, %v5395
    %5397 = vmatmul.f32.gmra.mxu0 %v5376
    %v5398 = vpop.f32.mrf.mxu0
    %v5399 = vadd.f32 0.0, %v5398
    %5400 = vdwg.mxu0
    %5401 = vmatpush.msra.mxu0 0.0
    %5402 = vmatpush.msra.mxu0 0.0
    %5403 = vmatpush.msra.mxu0 0.0
    %5404 = vmatpush.msra.mxu0 0.0
    %5405 = vmatpush.msra.mxu0 0.0
    %5406 = vmatpush.msra.mxu0 0.0
    %5407 = vmatpush.msra.mxu0 0.0
    %5408 = vmatpush.msra.mxu0 0.0
    %5409 = vmatpush.msra.mxu0 0.0
    %5410 = vmatpush.msra.mxu0 0.0
    %5411 = vmatpush.msra.mxu0 0.0
    %5412 = vmatpush.msra.mxu0 0.0
    %5413 = vmatpush.msra.mxu0 %v3281
    %5414 = vmatpush.msra.mxu0 %v3277
    %5415 = vmatpush.msra.mxu0 %v3273
    %5416 = vmatpush.msra.mxu0 %v3269
    %5417 = vmatmul.f32.gmra.mxu0 %v5374
    %v5418 = vpop.f32.mrf.mxu0
    %v5419 = vadd.f32 0.0, %v5418
    %5420 = vmatmul.f32.gmra.mxu0 %v5376
    %v5421 = vpop.f32.mrf.mxu0
    %v5422 = vadd.f32 0.0, %v5421
    %5423 = vdwg.mxu0
    %5424 = vmatpush.msra.mxu0 0.0
    %5425 = vmatpush.msra.mxu0 0.0
    %5426 = vmatpush.msra.mxu0 0.0
    %5427 = vmatpush.msra.mxu0 0.0
    %5428 = vmatpush.msra.mxu0 0.0
    %5429 = vmatpush.msra.mxu0 0.0
    %5430 = vmatpush.msra.mxu0 0.0
    %5431 = vmatpush.msra.mxu0 0.0
    %5432 = vmatpush.msra.mxu0 0.0
    %5433 = vmatpush.msra.mxu0 0.0
    %5434 = vmatpush.msra.mxu0 0.0
    %5435 = vmatpush.msra.mxu0 0.0
    %5436 = vmatpush.msra.mxu0 %v3282
    %5437 = vmatpush.msra.mxu0 %v3278
    %5438 = vmatpush.msra.mxu0 %v3274
    %5439 = vmatpush.msra.mxu0 %v3270
    %5440 = vmatmul.f32.gmra.mxu0 %v5374
    %v5441 = vpop.f32.mrf.mxu0
    %v5442 = vadd.f32 0.0, %v5441
    %5443 = vmatmul.f32.gmra.mxu0 %v5376
    %v5444 = vpop.f32.mrf.mxu0
    %v5445 = vadd.f32 0.0, %v5444
    %5446 = vdwg.mxu0
    %5447 = vmatpush.msra.mxu0 0.0
    %5448 = vmatpush.msra.mxu0 0.0
    %5449 = vmatpush.msra.mxu0 0.0
    %5450 = vmatpush.msra.mxu0 0.0
    %5451 = vmatpush.msra.mxu0 0.0
    %5452 = vmatpush.msra.mxu0 0.0
    %5453 = vmatpush.msra.mxu0 0.0
    %5454 = vmatpush.msra.mxu0 0.0
    %5455 = vmatpush.msra.mxu0 0.0
    %5456 = vmatpush.msra.mxu0 0.0
    %5457 = vmatpush.msra.mxu0 0.0
    %5458 = vmatpush.msra.mxu0 0.0
    %5459 = vmatpush.msra.mxu0 %v3283
    %5460 = vmatpush.msra.mxu0 %v3279
    %5461 = vmatpush.msra.mxu0 %v3275
    %5462 = vmatpush.msra.mxu0 %v3271
    %5463 = vmatmul.f32.gmra.mxu0 %v5374
    %v5464 = vpop.f32.mrf.mxu0
    %v5465 = vadd.f32 0.0, %v5464
    %5466 = vmatmul.f32.gmra.mxu0 %v5376
    %v5467 = vpop.f32.mrf.mxu0
    %v5468 = vadd.f32 0.0, %v5467
    %5469 = vdwg.mxu0
    %v5470 = vmul.f32 %v144, %v5396
    %v5471 = vmul.f32 %v145, %v5399
    %v5472 = vmul.f32 %v154, %v5419
    %v5473 = vmul.f32 %v155, %v5422
    %v5474 = vadd.f32 %v5470, %v5472
    %v5475 = vadd.f32 %v5471, %v5473
    %v5476 = vmul.f32 %v164, %v5442
    %v5477 = vmul.f32 %v165, %v5445
    %v5478 = vadd.f32 %v5474, %v5476
    %v5479 = vadd.f32 %v5475, %v5477
    %v5480 = vmul.f32 %v174, %v5465
    %v5481 = vmul.f32 %v175, %v5468
    %v5482 = vadd.f32 %v5478, %v5480
    %v5483 = vadd.f32 %v5479, %v5481
    %v5484 = vadd.f32 %v5352, %v5482
    %v5485 = vadd.f32 %v5355, %v5483
    %v5486 = vxor.u32 %v5484, 2147483648
    %v5487 = vxor.u32 %v5485, 2147483648
    %v5488 = vmul.f32 %v5486, 1.442695
    %v5489 = vpow.pop %v5488
    %v5490 = vmul.f32 %v5487, 1.442695
    %v5491 = vpow.pop %v5490
    %v5492 = vadd.f32 %v5489, 1.0
    %v5493 = vadd.f32 %v5491, 1.0
    %v5494 = vrcp.pop %v5492
    %v5495 = vmul.f32 %v5492, %v5494
    %v5496 = vsub.f32 1.0, %v5495
    %v5497 = vmul.f32 %v5494, %v5496
    %v5498 = vadd.f32 %v5494, %v5497
    %vm5499 = vweird.f32 %v5492
    %vm5500 = vweird.f32 %v5494
    %vm5501 = vmor %vm5499, %vm5500
    %v5502 = vsel %vm5501, %v5494, %v5498
    %v5503 = vand.u32 2147483647, %v5492
    %vm5504 = vcmp.eq.f32.partialorder %v5503, 8.507059e+37
    %v5505 = vand.u32 %v5492, 2147483648
    %v5506 = vor.u32 1.1754944e-38, %v5505
    %v5507 = vsel %vm5504, %v5506, %v5502
    %v5508 = vmul.f32 1.0, %v5507
    %v5509 = vrcp.pop %v5493
    %v5510 = vmul.f32 %v5493, %v5509
    %v5511 = vsub.f32 1.0, %v5510
    %v5512 = vmul.f32 %v5509, %v5511
    %v5513 = vadd.f32 %v5509, %v5512
    %vm5514 = vweird.f32 %v5493
    %vm5515 = vweird.f32 %v5509
    %vm5516 = vmor %vm5514, %vm5515
    %v5517 = vsel %vm5516, %v5509, %v5513
    %v5518 = vand.u32 2147483647, %v5493
    %vm5519 = vcmp.eq.f32.partialorder %v5518, 8.507059e+37
    %v5520 = vand.u32 %v5493, 2147483648
    %v5521 = vor.u32 1.1754944e-38, %v5520
    %v5522 = vsel %vm5519, %v5521, %v5517
    %v5523 = vmul.f32 1.0, %v5522
    %v5524 = vtanh.pop %v5484
    %v5525 = vtanh.pop %v5485
    %v5526 = vmul.f32 %v5508, %v5322
    %v5527 = vmul.f32 %v5523, %v5323
    %5530 = vrot.lane.b32.xlu0 %v5524, 64
    %v5531 = vpop.permute.xlu0 %5530
    %5532 = vrot.lane.b32.xlu0 %v5525, 64
    %v5533 = vpop.permute.xlu0 %5532
    %v5536 = vmul.f32 %v5508, %v5531
    %v5537 = vmul.f32 %v5523, %v5533
    %5540 = vrot.lane.b32.xlu0 %v5536, 32
    %v5541 = vpop.permute.xlu0 %5540
    %5542 = vrot.lane.b32.xlu0 %v5537, 32
    %v5543 = vpop.permute.xlu0 %5542
    %v5546 = vadd.f32 %v5526, %v5541
    %v5547 = vadd.f32 %v5527, %v5543
    %v5548 = vtanh.pop %v5546
    %v5549 = vtanh.pop %v5547
    %5552 = vrot.lane.b32.xlu0 %v5548, 64
    %v5553 = vpop.permute.xlu0 %5552
    %5554 = vrot.lane.b32.xlu0 %v5549, 64
    %v5555 = vpop.permute.xlu0 %5554
    %v5558 = vmul.f32 %v5508, %v5553
    %v5559 = vmul.f32 %v5523, %v5555
    %5561 = vset.pattern.permute.xlu0 0
    %5562 = vperm.xlu0 %5561, %v5361
    %v5563 = vpop.permute.xlu0 %5562
    %v5565 = vmul.f32 %v5563, %v5558
    %v5566 = vmul.f32 %v5563, %v5559
    %5568 = vset.pattern.permute.xlu0 0
    %5569 = vperm.xlu0 %5568, %v5367
    %v5570 = vpop.permute.xlu0 %5569
    %v5572 = vmul.f32 %v5570, %v5565
    %v5573 = vmul.f32 %v5570, %v5566
    %v5574 = vadd.f32 %v5295, %v5572
    %v5575 = vadd.f32 %v5296, %v5573
    %v5576 = vsub.f32 1.0, %v5367
    %v5577 = vmul.f32 %v5576, -10000000.0
    %5579 = vset.pattern.permute.xlu0 0
    %5580 = vperm.xlu0 %5579, %v5577
    %v5581 = vpop.permute.xlu0 %5580
    %v5583 = vadd.f32 %v5572, %v5581
    %v5584 = vadd.f32 %v5573, %v5581
    %v5585 = vmax.f32 %v5306, %v5583
    %v5586 = vmax.f32 %v5307, %v5584
    %v5587 = vsub.f32 1.0, %v5361
    %5589 = vset.pattern.permute.xlu0 0
    %5590 = vperm.xlu0 %5589, %v5587
    %v5591 = vpop.permute.xlu0 %5590
    %v5593 = vmul.f32 %v5591, %v5316
    %v5594 = vmul.f32 %v5591, %v5317
    %v5595 = vadd.f32 %v5565, %v5593
    %v5596 = vadd.f32 %v5566, %v5594
    %v5597 = vmul.f32 %v5563, %v5546
    %v5598 = vmul.f32 %v5563, %v5547
    %v5599 = vmul.f32 %v5591, %v5322
    %v5600 = vmul.f32 %v5591, %v5323
    %v5601 = vadd.f32 %v5597, %v5599
    %v5602 = vadd.f32 %v5598, %v5600
    %v5603 = vld [vmem:[#allocation6 + $0x40] sm:$0x3]
    %v5604 = vld [vmem:[#allocation6 + $0x8] sm:$0xc]
    %v5605 = vld [vmem:[#allocation6 + $0x50] sm:$0x3]
    %v5606 = vld [vmem:[#allocation6 + $0x18] sm:$0xc]
    %v5608 = vrot.slane %v5604, 6
    %v5611 = vrot.slane %v5606, 6
    %v5613 = vsel %vm242, %v5603, %v5336
    %v5614 = vsel %vm505, %v5613, %v5608
    %v5615 = vsel %vm507, %v5614, %v5339
    %v5616 = vsel %vm242, %v5605, %v5345
    %v5617 = vsel %vm505, %v5616, %v5611
    %v5618 = vsel %vm507, %v5617, %v5348
    %v5619 = vsel %vm242, %v3599, 0.0
    %v5620 = vsel %vm242, %v3598, 0.0
    %v5622 = vrot.slane %v5620, 4
    %v5624 = vsel %vm505, %v5619, %v5622
    %v5625 = vsel %vm242, %v3605, 0.0
    %v5626 = vsel %vm242, %v3603, 0.0
    %v5628 = vrot.slane %v5626, 4
    %v5630 = vsel %vm505, %v5625, %v5628
    %5633 = vrot.lane.b32.xlu0 %v5595, 32
    %v5634 = vpop.permute.xlu0 %5633
    %5635 = vrot.lane.b32.xlu0 %v5596, 32
    %v5636 = vpop.permute.xlu0 %5635
    %v5637 = vsel %vm527, %v5634, 0
    %v5639 = vsel %vm527, %v5636, 0
    %5641 = vmatpush.msra.mxu0 0.0
    %5642 = vmatpush.msra.mxu0 0.0
    %5643 = vmatpush.msra.mxu0 0.0
    %5644 = vmatpush.msra.mxu0 0.0
    %5645 = vmatpush.msra.mxu0 0.0
    %5646 = vmatpush.msra.mxu0 0.0
    %5647 = vmatpush.msra.mxu0 0.0
    %5648 = vmatpush.msra.mxu0 0.0
    %5649 = vmatpush.msra.mxu0 0.0
    %5650 = vmatpush.msra.mxu0 0.0
    %5651 = vmatpush.msra.mxu0 0.0
    %5652 = vmatpush.msra.mxu0 0.0
    %5653 = vmatpush.msra.mxu0 %v3280
    %5654 = vmatpush.msra.mxu0 %v3276
    %5655 = vmatpush.msra.mxu0 %v3272
    %5656 = vmatpush.msra.mxu0 %v3268
    %5657 = vmatmul.f32.gmra.mxu0 %v5637
    %v5658 = vpop.f32.mrf.mxu0
    %v5659 = vadd.f32 0.0, %v5658
    %5660 = vmatmul.f32.gmra.mxu0 %v5639
    %v5661 = vpop.f32.mrf.mxu0
    %v5662 = vadd.f32 0.0, %v5661
    %5663 = vdwg.mxu0
    %5664 = vmatpush.msra.mxu0 0.0
    %5665 = vmatpush.msra.mxu0 0.0
    %5666 = vmatpush.msra.mxu0 0.0
    %5667 = vmatpush.msra.mxu0 0.0
    %5668 = vmatpush.msra.mxu0 0.0
    %5669 = vmatpush.msra.mxu0 0.0
    %5670 = vmatpush.msra.mxu0 0.0
    %5671 = vmatpush.msra.mxu0 0.0
    %5672 = vmatpush.msra.mxu0 0.0
    %5673 = vmatpush.msra.mxu0 0.0
    %5674 = vmatpush.msra.mxu0 0.0
    %5675 = vmatpush.msra.mxu0 0.0
    %5676 = vmatpush.msra.mxu0 %v3281
    %5677 = vmatpush.msra.mxu0 %v3277
    %5678 = vmatpush.msra.mxu0 %v3273
    %5679 = vmatpush.msra.mxu0 %v3269
    %5680 = vmatmul.f32.gmra.mxu0 %v5637
    %v5681 = vpop.f32.mrf.mxu0
    %v5682 = vadd.f32 0.0, %v5681
    %5683 = vmatmul.f32.gmra.mxu0 %v5639
    %v5684 = vpop.f32.mrf.mxu0
    %v5685 = vadd.f32 0.0, %v5684
    %5686 = vdwg.mxu0
    %5687 = vmatpush.msra.mxu0 0.0
    %5688 = vmatpush.msra.mxu0 0.0
    %5689 = vmatpush.msra.mxu0 0.0
    %5690 = vmatpush.msra.mxu0 0.0
    %5691 = vmatpush.msra.mxu0 0.0
    %5692 = vmatpush.msra.mxu0 0.0
    %5693 = vmatpush.msra.mxu0 0.0
    %5694 = vmatpush.msra.mxu0 0.0
    %5695 = vmatpush.msra.mxu0 0.0
    %5696 = vmatpush.msra.mxu0 0.0
    %5697 = vmatpush.msra.mxu0 0.0
    %5698 = vmatpush.msra.mxu0 0.0
    %5699 = vmatpush.msra.mxu0 %v3282
    %5700 = vmatpush.msra.mxu0 %v3278
    %5701 = vmatpush.msra.mxu0 %v3274
    %5702 = vmatpush.msra.mxu0 %v3270
    %5703 = vmatmul.f32.gmra.mxu0 %v5637
    %v5704 = vpop.f32.mrf.mxu0
    %v5705 = vadd.f32 0.0, %v5704
    %5706 = vmatmul.f32.gmra.mxu0 %v5639
    %v5707 = vpop.f32.mrf.mxu0
    %v5708 = vadd.f32 0.0, %v5707
    %5709 = vdwg.mxu0
    %5710 = vmatpush.msra.mxu0 0.0
    %5711 = vmatpush.msra.mxu0 0.0
    %5712 = vmatpush.msra.mxu0 0.0
    %5713 = vmatpush.msra.mxu0 0.0
    %5714 = vmatpush.msra.mxu0 0.0
    %5715 = vmatpush.msra.mxu0 0.0
    %5716 = vmatpush.msra.mxu0 0.0
    %5717 = vmatpush.msra.mxu0 0.0
    %5718 = vmatpush.msra.mxu0 0.0
    %5719 = vmatpush.msra.mxu0 0.0
    %5720 = vmatpush.msra.mxu0 0.0
    %5721 = vmatpush.msra.mxu0 0.0
    %5722 = vmatpush.msra.mxu0 %v3283
    %5723 = vmatpush.msra.mxu0 %v3279
    %5724 = vmatpush.msra.mxu0 %v3275
    %5725 = vmatpush.msra.mxu0 %v3271
    %5726 = vmatmul.f32.gmra.mxu0 %v5637
    %v5727 = vpop.f32.mrf.mxu0
    %v5728 = vadd.f32 0.0, %v5727
    %5729 = vmatmul.f32.gmra.mxu0 %v5639
    %v5730 = vpop.f32.mrf.mxu0
    %v5731 = vadd.f32 0.0, %v5730
    %5732 = vdwg.mxu0
    %v5733 = vmul.f32 %v144, %v5659
    %v5734 = vmul.f32 %v145, %v5662
    %v5735 = vmul.f32 %v154, %v5682
    %v5736 = vmul.f32 %v155, %v5685
    %v5737 = vadd.f32 %v5733, %v5735
    %v5738 = vadd.f32 %v5734, %v5736
    %v5739 = vmul.f32 %v164, %v5705
    %v5740 = vmul.f32 %v165, %v5708
    %v5741 = vadd.f32 %v5737, %v5739
    %v5742 = vadd.f32 %v5738, %v5740
    %v5743 = vmul.f32 %v174, %v5728
    %v5744 = vmul.f32 %v175, %v5731
    %v5745 = vadd.f32 %v5741, %v5743
    %v5746 = vadd.f32 %v5742, %v5744
    %v5747 = vadd.f32 %v5615, %v5745
    %v5748 = vadd.f32 %v5618, %v5746
    %v5749 = vxor.u32 %v5747, 2147483648
    %v5750 = vxor.u32 %v5748, 2147483648
    %v5751 = vmul.f32 %v5749, 1.442695
    %v5752 = vpow.pop %v5751
    %v5753 = vmul.f32 %v5750, 1.442695
    %v5754 = vpow.pop %v5753
    %v5755 = vadd.f32 %v5752, 1.0
    %v5756 = vadd.f32 %v5754, 1.0
    %v5757 = vrcp.pop %v5755
    %v5758 = vmul.f32 %v5755, %v5757
    %v5759 = vsub.f32 1.0, %v5758
    %v5760 = vmul.f32 %v5757, %v5759
    %v5761 = vadd.f32 %v5757, %v5760
    %vm5762 = vweird.f32 %v5755
    %vm5763 = vweird.f32 %v5757
    %vm5764 = vmor %vm5762, %vm5763
    %v5765 = vsel %vm5764, %v5757, %v5761
    %v5766 = vand.u32 2147483647, %v5755
    %vm5767 = vcmp.eq.f32.partialorder %v5766, 8.507059e+37
    %v5768 = vand.u32 %v5755, 2147483648
    %v5769 = vor.u32 1.1754944e-38, %v5768
    %v5770 = vsel %vm5767, %v5769, %v5765
    %v5771 = vmul.f32 1.0, %v5770
    %v5772 = vrcp.pop %v5756
    %v5773 = vmul.f32 %v5756, %v5772
    %v5774 = vsub.f32 1.0, %v5773
    %v5775 = vmul.f32 %v5772, %v5774
    %v5776 = vadd.f32 %v5772, %v5775
    %vm5777 = vweird.f32 %v5756
    %vm5778 = vweird.f32 %v5772
    %vm5779 = vmor %vm5777, %vm5778
    %v5780 = vsel %vm5779, %v5772, %v5776
    %v5781 = vand.u32 2147483647, %v5756
    %vm5782 = vcmp.eq.f32.partialorder %v5781, 8.507059e+37
    %v5783 = vand.u32 %v5756, 2147483648
    %v5784 = vor.u32 1.1754944e-38, %v5783
    %v5785 = vsel %vm5782, %v5784, %v5780
    %v5786 = vmul.f32 1.0, %v5785
    %v5787 = vtanh.pop %v5747
    %v5788 = vtanh.pop %v5748
    %v5789 = vmul.f32 %v5771, %v5601
    %v5790 = vmul.f32 %v5786, %v5602
    %5793 = vrot.lane.b32.xlu0 %v5787, 64
    %v5794 = vpop.permute.xlu0 %5793
    %5795 = vrot.lane.b32.xlu0 %v5788, 64
    %v5796 = vpop.permute.xlu0 %5795
    %v5799 = vmul.f32 %v5771, %v5794
    %v5800 = vmul.f32 %v5786, %v5796
    %5803 = vrot.lane.b32.xlu0 %v5799, 32
    %v5804 = vpop.permute.xlu0 %5803
    %5805 = vrot.lane.b32.xlu0 %v5800, 32
    %v5806 = vpop.permute.xlu0 %5805
    %v5809 = vadd.f32 %v5789, %v5804
    %v5810 = vadd.f32 %v5790, %v5806
    %v5811 = vtanh.pop %v5809
    %v5812 = vtanh.pop %v5810
    %5815 = vrot.lane.b32.xlu0 %v5811, 64
    %v5816 = vpop.permute.xlu0 %5815
    %5817 = vrot.lane.b32.xlu0 %v5812, 64
    %v5818 = vpop.permute.xlu0 %5817
    %v5821 = vmul.f32 %v5771, %v5816
    %v5822 = vmul.f32 %v5786, %v5818
    %5824 = vset.pattern.permute.xlu0 0
    %5825 = vperm.xlu0 %5824, %v5624
    %v5826 = vpop.permute.xlu0 %5825
    %v5828 = vmul.f32 %v5826, %v5821
    %v5829 = vmul.f32 %v5826, %v5822
    %5831 = vset.pattern.permute.xlu0 0
    %5832 = vperm.xlu0 %5831, %v5630
    %v5833 = vpop.permute.xlu0 %5832
    %v5835 = vmul.f32 %v5833, %v5828
    %v5836 = vmul.f32 %v5833, %v5829
    %v5837 = vadd.f32 %v5574, %v5835
    %v5838 = vadd.f32 %v5575, %v5836
    %v5839 = vsub.f32 1.0, %v5630
    %v5840 = vmul.f32 %v5839, -10000000.0
    %5842 = vset.pattern.permute.xlu0 0
    %5843 = vperm.xlu0 %5842, %v5840
    %v5844 = vpop.permute.xlu0 %5843
    %v5846 = vadd.f32 %v5835, %v5844
    %v5847 = vadd.f32 %v5836, %v5844
    %v5848 = vmax.f32 %v5585, %v5846
    %v5849 = vmax.f32 %v5586, %v5847
    %v5850 = vsub.f32 1.0, %v5624
    %5852 = vset.pattern.permute.xlu0 0
    %5853 = vperm.xlu0 %5852, %v5850
    %v5854 = vpop.permute.xlu0 %5853
    %v5856 = vmul.f32 %v5854, %v5595
    %v5857 = vmul.f32 %v5854, %v5596
    %v5858 = vadd.f32 %v5828, %v5856
    %v5859 = vadd.f32 %v5829, %v5857
    %v5860 = vmul.f32 %v5826, %v5809
    %v5861 = vmul.f32 %v5826, %v5810
    %v5862 = vmul.f32 %v5854, %v5601
    %v5863 = vmul.f32 %v5854, %v5602
    %v5864 = vadd.f32 %v5860, %v5862
    %v5865 = vadd.f32 %v5861, %v5863
    %v5866 = vld [vmem:[#allocation6 + $0x40] sm:$0xc]
    %v5867 = vld [vmem:[#allocation6 + $0x8] sm:$0x3]
    %v5868 = vld [vmem:[#allocation6 + $0x50] sm:$0xc]
    %v5869 = vld [vmem:[#allocation6 + $0x18] sm:$0x3]
    %v5871 = vrot.slane %v5866, 2
    %v5874 = vrot.slane %v5867, 4
    %v5877 = vrot.slane %v5868, 2
    %v5880 = vrot.slane %v5869, 4
    %v5882 = vsel %vm242, %v5871, %v5336
    %v5883 = vsel %vm505, %v5882, %v5874
    %v5884 = vsel %vm507, %v5883, %v5339
    %v5885 = vsel %vm242, %v5877, %v5345
    %v5886 = vsel %vm505, %v5885, %v5880
    %v5887 = vsel %vm507, %v5886, %v5348
    %v5888 = vsel %vm242, %v3311, 0.0
    %v5889 = vsel %vm242, %v3310, 0.0
    %v5891 = vrot.slane %v5889, 4
    %v5893 = vsel %vm505, %v5888, %v5891
    %v5894 = vsel %vm242, %v3316, 0.0
    %v5895 = vsel %vm242, %v3314, 0.0
    %v5897 = vrot.slane %v5895, 4
    %v5899 = vsel %vm505, %v5894, %v5897
    %5902 = vrot.lane.b32.xlu0 %v5858, 32
    %v5903 = vpop.permute.xlu0 %5902
    %5904 = vrot.lane.b32.xlu0 %v5859, 32
    %v5905 = vpop.permute.xlu0 %5904
    %v5906 = vsel %vm527, %v5903, 0
    %v5908 = vsel %vm527, %v5905, 0
    %5910 = vmatpush.msra.mxu0 0.0
    %5911 = vmatpush.msra.mxu0 0.0
    %5912 = vmatpush.msra.mxu0 0.0
    %5913 = vmatpush.msra.mxu0 0.0
    %5914 = vmatpush.msra.mxu0 0.0
    %5915 = vmatpush.msra.mxu0 0.0
    %5916 = vmatpush.msra.mxu0 0.0
    %5917 = vmatpush.msra.mxu0 0.0
    %5918 = vmatpush.msra.mxu0 0.0
    %5919 = vmatpush.msra.mxu0 0.0
    %5920 = vmatpush.msra.mxu0 0.0
    %5921 = vmatpush.msra.mxu0 0.0
    %5922 = vmatpush.msra.mxu0 %v3280
    %5923 = vmatpush.msra.mxu0 %v3276
    %5924 = vmatpush.msra.mxu0 %v3272
    %5925 = vmatpush.msra.mxu0 %v3268
    %5926 = vmatmul.f32.gmra.mxu0 %v5906
    %v5927 = vpop.f32.mrf.mxu0
    %v5928 = vadd.f32 0.0, %v5927
    %5929 = vmatmul.f32.gmra.mxu0 %v5908
    %v5930 = vpop.f32.mrf.mxu0
    %v5931 = vadd.f32 0.0, %v5930
    %5932 = vdwg.mxu0
    %5933 = vmatpush.msra.mxu0 0.0
    %5934 = vmatpush.msra.mxu0 0.0
    %5935 = vmatpush.msra.mxu0 0.0
    %5936 = vmatpush.msra.mxu0 0.0
    %5937 = vmatpush.msra.mxu0 0.0
    %5938 = vmatpush.msra.mxu0 0.0
    %5939 = vmatpush.msra.mxu0 0.0
    %5940 = vmatpush.msra.mxu0 0.0
    %5941 = vmatpush.msra.mxu0 0.0
    %5942 = vmatpush.msra.mxu0 0.0
    %5943 = vmatpush.msra.mxu0 0.0
    %5944 = vmatpush.msra.mxu0 0.0
    %5945 = vmatpush.msra.mxu0 %v3281
    %5946 = vmatpush.msra.mxu0 %v3277
    %5947 = vmatpush.msra.mxu0 %v3273
    %5948 = vmatpush.msra.mxu0 %v3269
    %5949 = vmatmul.f32.gmra.mxu0 %v5906
    %v5950 = vpop.f32.mrf.mxu0
    %v5951 = vadd.f32 0.0, %v5950
    %5952 = vmatmul.f32.gmra.mxu0 %v5908
    %v5953 = vpop.f32.mrf.mxu0
    %v5954 = vadd.f32 0.0, %v5953
    %5955 = vdwg.mxu0
    %5956 = vmatpush.msra.mxu0 0.0
    %5957 = vmatpush.msra.mxu0 0.0
    %5958 = vmatpush.msra.mxu0 0.0
    %5959 = vmatpush.msra.mxu0 0.0
    %5960 = vmatpush.msra.mxu0 0.0
    %5961 = vmatpush.msra.mxu0 0.0
    %5962 = vmatpush.msra.mxu0 0.0
    %5963 = vmatpush.msra.mxu0 0.0
    %5964 = vmatpush.msra.mxu0 0.0
    %5965 = vmatpush.msra.mxu0 0.0
    %5966 = vmatpush.msra.mxu0 0.0
    %5967 = vmatpush.msra.mxu0 0.0
    %5968 = vmatpush.msra.mxu0 %v3282
    %5969 = vmatpush.msra.mxu0 %v3278
    %5970 = vmatpush.msra.mxu0 %v3274
    %5971 = vmatpush.msra.mxu0 %v3270
    %5972 = vmatmul.f32.gmra.mxu0 %v5906
    %v5973 = vpop.f32.mrf.mxu0
    %v5974 = vadd.f32 0.0, %v5973
    %5975 = vmatmul.f32.gmra.mxu0 %v5908
    %v5976 = vpop.f32.mrf.mxu0
    %v5977 = vadd.f32 0.0, %v5976
    %5978 = vdwg.mxu0
    %5979 = vmatpush.msra.mxu0 0.0
    %5980 = vmatpush.msra.mxu0 0.0
    %5981 = vmatpush.msra.mxu0 0.0
    %5982 = vmatpush.msra.mxu0 0.0
    %5983 = vmatpush.msra.mxu0 0.0
    %5984 = vmatpush.msra.mxu0 0.0
    %5985 = vmatpush.msra.mxu0 0.0
    %5986 = vmatpush.msra.mxu0 0.0
    %5987 = vmatpush.msra.mxu0 0.0
    %5988 = vmatpush.msra.mxu0 0.0
    %5989 = vmatpush.msra.mxu0 0.0
    %5990 = vmatpush.msra.mxu0 0.0
    %5991 = vmatpush.msra.mxu0 %v3283
    %5992 = vmatpush.msra.mxu0 %v3279
    %5993 = vmatpush.msra.mxu0 %v3275
    %5994 = vmatpush.msra.mxu0 %v3271
    %5995 = vmatmul.f32.gmra.mxu0 %v5906
    %v5996 = vpop.f32.mrf.mxu0
    %v5997 = vadd.f32 0.0, %v5996
    %5998 = vmatmul.f32.gmra.mxu0 %v5908
    %v5999 = vpop.f32.mrf.mxu0
    %v6000 = vadd.f32 0.0, %v5999
    %6001 = vdwg.mxu0
    %v6002 = vmul.f32 %v144, %v5928
    %v6003 = vmul.f32 %v145, %v5931
    %v6004 = vmul.f32 %v154, %v5951
    %v6005 = vmul.f32 %v155, %v5954
    %v6006 = vadd.f32 %v6002, %v6004
    %v6007 = vadd.f32 %v6003, %v6005
    %v6008 = vmul.f32 %v164, %v5974
    %v6009 = vmul.f32 %v165, %v5977
    %v6010 = vadd.f32 %v6006, %v6008
    %v6011 = vadd.f32 %v6007, %v6009
    %v6012 = vmul.f32 %v174, %v5997
    %v6013 = vmul.f32 %v175, %v6000
    %v6014 = vadd.f32 %v6010, %v6012
    %v6015 = vadd.f32 %v6011, %v6013
    %v6016 = vadd.f32 %v5884, %v6014
    %v6017 = vadd.f32 %v5887, %v6015
    %v6018 = vxor.u32 %v6016, 2147483648
    %v6019 = vxor.u32 %v6017, 2147483648
    %v6020 = vmul.f32 %v6018, 1.442695
    %v6021 = vpow.pop %v6020
    %v6022 = vmul.f32 %v6019, 1.442695
    %v6023 = vpow.pop %v6022
    %v6024 = vadd.f32 %v6021, 1.0
    %v6025 = vadd.f32 %v6023, 1.0
    %v6026 = vrcp.pop %v6024
    %v6027 = vmul.f32 %v6024, %v6026
    %v6028 = vsub.f32 1.0, %v6027
    %v6029 = vmul.f32 %v6026, %v6028
    %v6030 = vadd.f32 %v6026, %v6029
    %vm6031 = vweird.f32 %v6024
    %vm6032 = vweird.f32 %v6026
    %vm6033 = vmor %vm6031, %vm6032
    %v6034 = vsel %vm6033, %v6026, %v6030
    %v6035 = vand.u32 2147483647, %v6024
    %vm6036 = vcmp.eq.f32.partialorder %v6035, 8.507059e+37
    %v6037 = vand.u32 %v6024, 2147483648
    %v6038 = vor.u32 1.1754944e-38, %v6037
    %v6039 = vsel %vm6036, %v6038, %v6034
    %v6040 = vmul.f32 1.0, %v6039
    %v6041 = vrcp.pop %v6025
    %v6042 = vmul.f32 %v6025, %v6041
    %v6043 = vsub.f32 1.0, %v6042
    %v6044 = vmul.f32 %v6041, %v6043
    %v6045 = vadd.f32 %v6041, %v6044
    %vm6046 = vweird.f32 %v6025
    %vm6047 = vweird.f32 %v6041
    %vm6048 = vmor %vm6046, %vm6047
    %v6049 = vsel %vm6048, %v6041, %v6045
    %v6050 = vand.u32 2147483647, %v6025
    %vm6051 = vcmp.eq.f32.partialorder %v6050, 8.507059e+37
    %v6052 = vand.u32 %v6025, 2147483648
    %v6053 = vor.u32 1.1754944e-38, %v6052
    %v6054 = vsel %vm6051, %v6053, %v6049
    %v6055 = vmul.f32 1.0, %v6054
    %v6056 = vtanh.pop %v6016
    %v6057 = vtanh.pop %v6017
    %v6058 = vmul.f32 %v6040, %v5864
    %v6059 = vmul.f32 %v6055, %v5865
    %6062 = vrot.lane.b32.xlu0 %v6056, 64
    %v6063 = vpop.permute.xlu0 %6062
    %6064 = vrot.lane.b32.xlu0 %v6057, 64
    %v6065 = vpop.permute.xlu0 %6064
    %v6068 = vmul.f32 %v6040, %v6063
    %v6069 = vmul.f32 %v6055, %v6065
    %6072 = vrot.lane.b32.xlu0 %v6068, 32
    %v6073 = vpop.permute.xlu0 %6072
    %6074 = vrot.lane.b32.xlu0 %v6069, 32
    %v6075 = vpop.permute.xlu0 %6074
    %v6078 = vadd.f32 %v6058, %v6073
    %v6079 = vadd.f32 %v6059, %v6075
    %v6080 = vtanh.pop %v6078
    %v6081 = vtanh.pop %v6079
    %6084 = vrot.lane.b32.xlu0 %v6080, 64
    %v6085 = vpop.permute.xlu0 %6084
    %6086 = vrot.lane.b32.xlu0 %v6081, 64
    %v6087 = vpop.permute.xlu0 %6086
    %v6090 = vmul.f32 %v6040, %v6085
    %v6091 = vmul.f32 %v6055, %v6087
    %6093 = vset.pattern.permute.xlu0 0
    %6094 = vperm.xlu0 %6093, %v5893
    %v6095 = vpop.permute.xlu0 %6094
    %v6097 = vmul.f32 %v6095, %v6090
    %v6098 = vmul.f32 %v6095, %v6091
    %6100 = vset.pattern.permute.xlu0 0
    %6101 = vperm.xlu0 %6100, %v5899
    %v6102 = vpop.permute.xlu0 %6101
    %v6104 = vmul.f32 %v6102, %v6097
    %v6105 = vmul.f32 %v6102, %v6098
    %v6106 = vadd.f32 %v5837, %v6104
    %v6107 = vadd.f32 %v5838, %v6105
    %v6108 = vsub.f32 1.0, %v5899
    %v6109 = vmul.f32 %v6108, -10000000.0
    %6111 = vset.pattern.permute.xlu0 0
    %6112 = vperm.xlu0 %6111, %v6109
    %v6113 = vpop.permute.xlu0 %6112
    %v6115 = vadd.f32 %v6104, %v6113
    %v6116 = vadd.f32 %v6105, %v6113
    %v6117 = vmax.f32 %v5848, %v6115
    %v6118 = vmax.f32 %v5849, %v6116
    %v6119 = vld [vmem:[%s21] sm:$0x3]
    %v6120 = vrcp.pop %v6119
    %v6121 = vld [vmem:[%s23] sm:$0x3]
    %v6122 = vrcp.pop %v6121
    %6124 = vset.pattern.permute.xlu0 0
    %6125 = vperm.xlu0 %6124, %v6120
    %v6126 = vpop.permute.xlu0 %6125
    %v6128 = vmul.f32 %v6106, %v6126
    %v6129 = vrot.slane %v6126, 4
    %v6131 = vmul.f32 %v6106, %v6129
    %6133 = vset.pattern.permute.xlu0 0
    %6134 = vperm.xlu0 %6133, %v6122
    %v6135 = vpop.permute.xlu0 %6134
    %v6136 = vrot.slane %v6135, 6
    %v6138 = vmul.f32 %v6106, %v6136
    %v6139 = vrot.slane %v6135, 2
    %v6141 = vmul.f32 %v6106, %v6139
    %6143 = vrot.lane.b32.xlu0 %v6128, 32
    %v6144 = vpop.permute.xlu0 %6143
    %v6147 = vrot.slane %v6131, 4
    %6148 = vrot.lane.b32.xlu0 %v6147, 64
    %v6149 = vpop.permute.xlu0 %6148
    %6152 = vrot.lane.b32.xlu0 %v6117, 96
    %v6153 = vpop.permute.xlu0 %6152
    %v6155 = vrot.slane %v6117, 4
    %v6158 = vrot.slane %v6138, 2
    %6159 = vrot.lane.b32.xlu0 %v6158, 32
    %v6160 = vpop.permute.xlu0 %6159
    %v6163 = vrot.slane %v6141, 6
    %6164 = vrot.lane.b32.xlu0 %v6163, 64
    %v6165 = vpop.permute.xlu0 %6164
    %v6167 = vrot.slane %v6117, 2
    %6168 = vrot.lane.b32.xlu0 %v6167, 96
    %v6169 = vpop.permute.xlu0 %6168
    %v6171 = vrot.slane %v6117, 6
    %v6173 = vsel %vm527, %v6144, %v6149
    %v6174 = vsel %vm332, %v6173, %v6153
    %vm6175 = vcmask 785408
    %v6176 = vsel %vm6175, %v6174, %v6155
    %v6177 = vsel %vm527, %v6160, %v6165
    %v6178 = vsel %vm332, %v6177, %v6169
    %v6179 = vsel %vm6175, %v6178, %v6171
    %v6180 = vmul.f32 %v6107, %v6126
    %v6181 = vmul.f32 %v6107, %v6129
    %v6182 = vmul.f32 %v6107, %v6136
    %v6183 = vmul.f32 %v6107, %v6139
    %6185 = vrot.lane.b32.xlu0 %v6180, 32
    %v6186 = vpop.permute.xlu0 %6185
    %v6189 = vrot.slane %v6181, 4
    %6190 = vrot.lane.b32.xlu0 %v6189, 64
    %v6191 = vpop.permute.xlu0 %6190
    %6194 = vrot.lane.b32.xlu0 %v6118, 96
    %v6195 = vpop.permute.xlu0 %6194
    %v6197 = vrot.slane %v6118, 4
    %v6200 = vrot.slane %v6182, 2
    %6201 = vrot.lane.b32.xlu0 %v6200, 32
    %v6202 = vpop.permute.xlu0 %6201
    %v6205 = vrot.slane %v6183, 6
    %6206 = vrot.lane.b32.xlu0 %v6205, 64
    %v6207 = vpop.permute.xlu0 %6206
    %v6209 = vrot.slane %v6118, 2
    %6210 = vrot.lane.b32.xlu0 %v6209, 96
    %v6211 = vpop.permute.xlu0 %6210
    %v6213 = vrot.slane %v6118, 6
    %v6215 = vsel %vm527, %v6186, %v6191
    %v6216 = vsel %vm332, %v6215, %v6195
    %v6217 = vsel %vm6175, %v6216, %v6197
    %v6218 = vsel %vm527, %v6202, %v6207
    %v6219 = vsel %vm332, %v6218, %v6211
    %v6220 = vsel %vm6175, %v6219, %v6213
    %v6221 = vld [vmem:[%s49] sm:$0xff]
    %v6222 = vld [vmem:[%s49 + $0x8] sm:$0xff]
    %v6223 = vld [vmem:[%s49 + $0x10] sm:$0xff]
    %v6224 = vld [vmem:[%s49 + $0x18] sm:$0xff]
    %v6225 = vld [vmem:[%s49 + $0x20] sm:$0xff]
    %v6226 = vld [vmem:[%s49 + $0x28] sm:$0xff]
    %v6227 = vld [vmem:[%s49 + $0x30] sm:$0xff]
    %v6228 = vld [vmem:[%s49 + $0x38] sm:$0xff]
    %v6229 = vld [vmem:[%s49 + $0x40] sm:$0xff]
    %v6230 = vld [vmem:[%s49 + $0x48] sm:$0xff]
    %v6231 = vld [vmem:[%s49 + $0x50] sm:$0xff]
    %v6232 = vld [vmem:[%s49 + $0x58] sm:$0xff]
    %v6233 = vld [vmem:[%s49 + $0x60] sm:$0xff]
    %v6234 = vld [vmem:[%s49 + $0x68] sm:$0xff]
    %v6235 = vld [vmem:[%s49 + $0x70] sm:$0xff]
    %v6236 = vld [vmem:[%s49 + $0x78] sm:$0xff]
    %v6237 = vld [vmem:[%s49 + $0x80] sm:$0xff]
    %v6238 = vld [vmem:[%s49 + $0x88] sm:$0xff]
    %v6239 = vld [vmem:[%s49 + $0x90] sm:$0xff]
    %v6240 = vld [vmem:[%s49 + $0x98] sm:$0xff]
    %v6241 = vld [vmem:[%s49 + $0xa0] sm:$0xff]
    %v6242 = vld [vmem:[%s49 + $0xa8] sm:$0xff]
    %v6243 = vld [vmem:[%s49 + $0xb0] sm:$0xff]
    %v6244 = vld [vmem:[%s49 + $0xb8] sm:$0xff]
    %v6245 = vld [vmem:[%s49 + $0xc0] sm:$0xff]
    %v6246 = vld [vmem:[%s49 + $0xc8] sm:$0xff]
    %v6247 = vld [vmem:[%s49 + $0xd0] sm:$0xff]
    %v6248 = vld [vmem:[%s49 + $0xd8] sm:$0xff]
    %v6249 = vld [vmem:[%s49 + $0xe0] sm:$0xff]
    %v6250 = vld [vmem:[%s49 + $0xe8] sm:$0xff]
    %v6251 = vld [vmem:[%s49 + $0xf0] sm:$0xff]
    %v6252 = vld [vmem:[%s49 + $0xf8] sm:$0xff]
    %v6253 = vld [vmem:[%s49 + $0x100] sm:$0xff]
    %v6254 = vld [vmem:[%s49 + $0x108] sm:$0xff]
    %v6255 = vld [vmem:[%s49 + $0x110] sm:$0xff]
    %v6256 = vld [vmem:[%s49 + $0x118] sm:$0xff]
    %v6257 = vld [vmem:[%s49 + $0x120] sm:$0xff]
    %v6258 = vld [vmem:[%s49 + $0x128] sm:$0xff]
    %v6259 = vld [vmem:[%s49 + $0x130] sm:$0xff]
    %v6260 = vld [vmem:[%s49 + $0x138] sm:$0xff]
    %v6261 = vld [vmem:[%s49 + $0x140] sm:$0xff]
    %v6262 = vld [vmem:[%s49 + $0x148] sm:$0xff]
    %v6263 = vld [vmem:[%s49 + $0x150] sm:$0xff]
    %v6264 = vld [vmem:[%s49 + $0x158] sm:$0xff]
    %v6265 = vld [vmem:[%s49 + $0x160] sm:$0xff]
    %v6266 = vld [vmem:[%s49 + $0x168] sm:$0xff]
    %v6267 = vld [vmem:[%s49 + $0x170] sm:$0xff]
    %v6268 = vld [vmem:[%s49 + $0x178] sm:$0xff]
    %v6269 = vld [vmem:[%s49 + $0x180] sm:$0xff]
    %v6270 = vld [vmem:[%s49 + $0x188] sm:$0xff]
    %v6271 = vld [vmem:[%s49 + $0x190] sm:$0xff]
    %v6272 = vld [vmem:[%s49 + $0x198] sm:$0xff]
    %v6273 = vld [vmem:[%s49 + $0x1a0] sm:$0xff]
    %v6274 = vld [vmem:[%s49 + $0x1a8] sm:$0xff]
    %v6275 = vld [vmem:[%s49 + $0x1b0] sm:$0xff]
    %v6276 = vld [vmem:[%s49 + $0x1b8] sm:$0xff]
    %v6277 = vld [vmem:[%s49 + $0x1c0] sm:$0xff]
    %v6278 = vld [vmem:[%s49 + $0x1c8] sm:$0xff]
    %v6279 = vld [vmem:[%s49 + $0x1d0] sm:$0xff]
    %v6280 = vld [vmem:[%s49 + $0x1d8] sm:$0xff]
    %v6281 = vld [vmem:[%s49 + $0x1e0] sm:$0xff]
    %v6282 = vld [vmem:[%s49 + $0x1e8] sm:$0xff]
    %v6283 = vld [vmem:[%s49 + $0x1f0] sm:$0xff]
    %v6284 = vld [vmem:[%s49 + $0x1f8] sm:$0xff]
    %v6285 = vld [vmem:[%s49 + $0x200] sm:$0xff]
    %v6286 = vld [vmem:[%s49 + $0x208] sm:$0xff]
    %v6287 = vld [vmem:[%s49 + $0x210] sm:$0xff]
    %v6288 = vld [vmem:[%s49 + $0x218] sm:$0xff]
    %v6289 = vld [vmem:[%s49 + $0x220] sm:$0xff]
    %v6290 = vld [vmem:[%s49 + $0x228] sm:$0xff]
    %v6291 = vld [vmem:[%s49 + $0x230] sm:$0xff]
    %v6292 = vld [vmem:[%s49 + $0x238] sm:$0xff]
    %v6293 = vld [vmem:[%s49 + $0x240] sm:$0xff]
    %v6294 = vld [vmem:[%s49 + $0x248] sm:$0xff]
    %v6295 = vld [vmem:[%s49 + $0x250] sm:$0xff]
    %v6296 = vld [vmem:[%s49 + $0x258] sm:$0xff]
    %v6297 = vld [vmem:[%s49 + $0x260] sm:$0xff]
    %v6298 = vld [vmem:[%s49 + $0x268] sm:$0xff]
    %v6299 = vld [vmem:[%s49 + $0x270] sm:$0xff]
    %v6300 = vld [vmem:[%s49 + $0x278] sm:$0xff]
    %v6301 = vld [vmem:[%s49 + $0x280] sm:$0xff]
    %v6302 = vld [vmem:[%s49 + $0x288] sm:$0xff]
    %v6303 = vld [vmem:[%s49 + $0x290] sm:$0xff]
    %v6304 = vld [vmem:[%s49 + $0x298] sm:$0xff]
    %v6305 = vld [vmem:[%s49 + $0x2a0] sm:$0xff]
    %v6306 = vld [vmem:[%s49 + $0x2a8] sm:$0xff]
    %v6307 = vld [vmem:[%s49 + $0x2b0] sm:$0xff]
    %v6308 = vld [vmem:[%s49 + $0x2b8] sm:$0xff]
    %v6309 = vld [vmem:[%s49 + $0x2c0] sm:$0xff]
    %v6310 = vld [vmem:[%s49 + $0x2c8] sm:$0xff]
    %v6311 = vld [vmem:[%s49 + $0x2d0] sm:$0xff]
    %v6312 = vld [vmem:[%s49 + $0x2d8] sm:$0xff]
    %v6313 = vld [vmem:[%s49 + $0x2e0] sm:$0xff]
    %v6314 = vld [vmem:[%s49 + $0x2e8] sm:$0xff]
    %v6315 = vld [vmem:[%s49 + $0x2f0] sm:$0xff]
    %v6316 = vld [vmem:[%s49 + $0x2f8] sm:$0xff]
    %v6317 = vld [vmem:[%s49 + $0x300] sm:$0xff]
    %v6318 = vld [vmem:[%s49 + $0x308] sm:$0xff]
    %v6319 = vld [vmem:[%s49 + $0x310] sm:$0xff]
    %v6320 = vld [vmem:[%s49 + $0x318] sm:$0xff]
    %v6321 = vld [vmem:[%s49 + $0x320] sm:$0xff]
    %v6322 = vld [vmem:[%s49 + $0x328] sm:$0xff]
    %v6323 = vld [vmem:[%s49 + $0x330] sm:$0xff]
    %v6324 = vld [vmem:[%s49 + $0x338] sm:$0xff]
    %v6325 = vld [vmem:[%s49 + $0x340] sm:$0xff]
    %v6326 = vld [vmem:[%s49 + $0x348] sm:$0xff]
    %v6327 = vld [vmem:[%s49 + $0x350] sm:$0xff]
    %v6328 = vld [vmem:[%s49 + $0x358] sm:$0xff]
    %v6329 = vld [vmem:[%s49 + $0x360] sm:$0xff]
    %v6330 = vld [vmem:[%s49 + $0x368] sm:$0xff]
    %v6331 = vld [vmem:[%s49 + $0x370] sm:$0xff]
    %v6332 = vld [vmem:[%s49 + $0x378] sm:$0xff]
    %v6333 = vld [vmem:[%s49 + $0x380] sm:$0xff]
    %v6334 = vld [vmem:[%s49 + $0x388] sm:$0xff]
    %v6335 = vld [vmem:[%s49 + $0x390] sm:$0xff]
    %v6336 = vld [vmem:[%s49 + $0x398] sm:$0xff]
    %v6337 = vld [vmem:[%s49 + $0x3a0] sm:$0xff]
    %v6338 = vld [vmem:[%s49 + $0x3a8] sm:$0xff]
    %v6339 = vld [vmem:[%s49 + $0x3b0] sm:$0xff]
    %v6340 = vld [vmem:[%s49 + $0x3b8] sm:$0xff]
    %v6341 = vld [vmem:[%s49 + $0x3c0] sm:$0xff]
    %v6342 = vld [vmem:[%s49 + $0x3c8] sm:$0xff]
    %v6343 = vld [vmem:[%s49 + $0x3d0] sm:$0xff]
    %v6344 = vld [vmem:[%s49 + $0x3d8] sm:$0xff]
    %v6345 = vld [vmem:[%s49 + $0x3e0] sm:$0xff]
    %v6346 = vld [vmem:[%s49 + $0x3e8] sm:$0xff]
    %v6347 = vld [vmem:[%s49 + $0x3f0] sm:$0xff]
    %v6348 = vld [vmem:[%s49 + $0x3f8] sm:$0xff]
    %v6349 = vld [vmem:[%s51] sm:$0x3]
    %v6351 = vperm.slane %v6349, 0
    %v6352 = vperm.slane %v6349, 1
    %6355 = vmatpush.msra.mxu0 %v6251
    %6356 = vmatpush.msra.mxu0 %v6249
    %6357 = vmatpush.msra.mxu0 %v6247
    %6358 = vmatpush.msra.mxu0 %v6245
    %6359 = vmatpush.msra.mxu0 %v6243
    %6360 = vmatpush.msra.mxu0 %v6241
    %6361 = vmatpush.msra.mxu0 %v6239
    %6362 = vmatpush.msra.mxu0 %v6237
    %6363 = vmatpush.msra.mxu0 %v6235
    %6364 = vmatpush.msra.mxu0 %v6233
    %6365 = vmatpush.msra.mxu0 %v6231
    %6366 = vmatpush.msra.mxu0 %v6229
    %6367 = vmatpush.msra.mxu0 %v6227
    %6368 = vmatpush.msra.mxu0 %v6225
    %6369 = vmatpush.msra.mxu0 %v6223
    %6370 = vmatpush.msra.mxu0 %v6221
    %6371 = vmatmul.f32.gmra.mxu0 %v6176
    %v6372 = vpop.f32.mrf.mxu0
    %v6373 = vadd.f32 %v6351, %v6372
    %6374 = vdwg.mxu0
    %6375 = vmatpush.msra.mxu0 %v6283
    %6376 = vmatpush.msra.mxu0 %v6281
    %6377 = vmatpush.msra.mxu0 %v6279
    %6378 = vmatpush.msra.mxu0 %v6277
    %6379 = vmatpush.msra.mxu0 %v6275
    %6380 = vmatpush.msra.mxu0 %v6273
    %6381 = vmatpush.msra.mxu0 %v6271
    %6382 = vmatpush.msra.mxu0 %v6269
    %6383 = vmatpush.msra.mxu0 %v6267
    %6384 = vmatpush.msra.mxu0 %v6265
    %6385 = vmatpush.msra.mxu0 %v6263
    %6386 = vmatpush.msra.mxu0 %v6261
    %6387 = vmatpush.msra.mxu0 %v6259
    %6388 = vmatpush.msra.mxu0 %v6257
    %6389 = vmatpush.msra.mxu0 %v6255
    %6390 = vmatpush.msra.mxu0 %v6253
    %6391 = vmatmul.f32.gmra.mxu0 %v6179
    %v6392 = vpop.f32.mrf.mxu0
    %v6393 = vadd.f32 %v6373, %v6392
    %6394 = vdwg.mxu0
    %6395 = vmatpush.msra.mxu0 %v6315
    %6396 = vmatpush.msra.mxu0 %v6313
    %6397 = vmatpush.msra.mxu0 %v6311
    %6398 = vmatpush.msra.mxu0 %v6309
    %6399 = vmatpush.msra.mxu0 %v6307
    %6400 = vmatpush.msra.mxu0 %v6305
    %6401 = vmatpush.msra.mxu0 %v6303
    %6402 = vmatpush.msra.mxu0 %v6301
    %6403 = vmatpush.msra.mxu0 %v6299
    %6404 = vmatpush.msra.mxu0 %v6297
    %6405 = vmatpush.msra.mxu0 %v6295
    %6406 = vmatpush.msra.mxu0 %v6293
    %6407 = vmatpush.msra.mxu0 %v6291
    %6408 = vmatpush.msra.mxu0 %v6289
    %6409 = vmatpush.msra.mxu0 %v6287
    %6410 = vmatpush.msra.mxu0 %v6285
    %6411 = vmatmul.f32.gmra.mxu0 %v6217
    %v6412 = vpop.f32.mrf.mxu0
    %v6413 = vadd.f32 %v6393, %v6412
    %6414 = vdwg.mxu0
    %6415 = vmatpush.msra.mxu0 %v6347
    %6416 = vmatpush.msra.mxu0 %v6345
    %6417 = vmatpush.msra.mxu0 %v6343
    %6418 = vmatpush.msra.mxu0 %v6341
    %6419 = vmatpush.msra.mxu0 %v6339
    %6420 = vmatpush.msra.mxu0 %v6337
    %6421 = vmatpush.msra.mxu0 %v6335
    %6422 = vmatpush.msra.mxu0 %v6333
    %6423 = vmatpush.msra.mxu0 %v6331
    %6424 = vmatpush.msra.mxu0 %v6329
    %6425 = vmatpush.msra.mxu0 %v6327
    %6426 = vmatpush.msra.mxu0 %v6325
    %6427 = vmatpush.msra.mxu0 %v6323
    %6428 = vmatpush.msra.mxu0 %v6321
    %6429 = vmatpush.msra.mxu0 %v6319
    %6430 = vmatpush.msra.mxu0 %v6317
    %6431 = vmatmul.f32.gmra.mxu0 %v6220
    %v6432 = vpop.f32.mrf.mxu0
    %v6433 = vadd.f32 %v6413, %v6432
    %6434 = vdwg.mxu0
    %6435 = vmatpush.msra.mxu0 %v6252
    %6436 = vmatpush.msra.mxu0 %v6250
    %6437 = vmatpush.msra.mxu0 %v6248
    %6438 = vmatpush.msra.mxu0 %v6246
    %6439 = vmatpush.msra.mxu0 %v6244
    %6440 = vmatpush.msra.mxu0 %v6242
    %6441 = vmatpush.msra.mxu0 %v6240
    %6442 = vmatpush.msra.mxu0 %v6238
    %6443 = vmatpush.msra.mxu0 %v6236
    %6444 = vmatpush.msra.mxu0 %v6234
    %6445 = vmatpush.msra.mxu0 %v6232
    %6446 = vmatpush.msra.mxu0 %v6230
    %6447 = vmatpush.msra.mxu0 %v6228
    %6448 = vmatpush.msra.mxu0 %v6226
    %6449 = vmatpush.msra.mxu0 %v6224
    %6450 = vmatpush.msra.mxu0 %v6222
    %6451 = vmatmul.f32.gmra.mxu0 %v6176
    %v6452 = vpop.f32.mrf.mxu0
    %v6453 = vadd.f32 %v6352, %v6452
    %6454 = vdwg.mxu0
    %6455 = vmatpush.msra.mxu0 %v6284
    %6456 = vmatpush.msra.mxu0 %v6282
    %6457 = vmatpush.msra.mxu0 %v6280
    %6458 = vmatpush.msra.mxu0 %v6278
    %6459 = vmatpush.msra.mxu0 %v6276
    %6460 = vmatpush.msra.mxu0 %v6274
    %6461 = vmatpush.msra.mxu0 %v6272
    %6462 = vmatpush.msra.mxu0 %v6270
    %6463 = vmatpush.msra.mxu0 %v6268
    %6464 = vmatpush.msra.mxu0 %v6266
    %6465 = vmatpush.msra.mxu0 %v6264
    %6466 = vmatpush.msra.mxu0 %v6262
    %6467 = vmatpush.msra.mxu0 %v6260
    %6468 = vmatpush.msra.mxu0 %v6258
    %6469 = vmatpush.msra.mxu0 %v6256
    %6470 = vmatpush.msra.mxu0 %v6254
    %6471 = vmatmul.f32.gmra.mxu0 %v6179
    %v6472 = vpop.f32.mrf.mxu0
    %v6473 = vadd.f32 %v6453, %v6472
    %6474 = vdwg.mxu0
    %6475 = vmatpush.msra.mxu0 %v6316
    %6476 = vmatpush.msra.mxu0 %v6314
    %6477 = vmatpush.msra.mxu0 %v6312
    %6478 = vmatpush.msra.mxu0 %v6310
    %6479 = vmatpush.msra.mxu0 %v6308
    %6480 = vmatpush.msra.mxu0 %v6306
    %6481 = vmatpush.msra.mxu0 %v6304
    %6482 = vmatpush.msra.mxu0 %v6302
    %6483 = vmatpush.msra.mxu0 %v6300
    %6484 = vmatpush.msra.mxu0 %v6298
    %6485 = vmatpush.msra.mxu0 %v6296
    %6486 = vmatpush.msra.mxu0 %v6294
    %6487 = vmatpush.msra.mxu0 %v6292
    %6488 = vmatpush.msra.mxu0 %v6290
    %6489 = vmatpush.msra.mxu0 %v6288
    %6490 = vmatpush.msra.mxu0 %v6286
    %6491 = vmatmul.f32.gmra.mxu0 %v6217
    %v6492 = vpop.f32.mrf.mxu0
    %v6493 = vadd.f32 %v6473, %v6492
    %6494 = vdwg.mxu0
    %6495 = vmatpush.msra.mxu0 %v6348
    %6496 = vmatpush.msra.mxu0 %v6346
    %6497 = vmatpush.msra.mxu0 %v6344
    %6498 = vmatpush.msra.mxu0 %v6342
    %6499 = vmatpush.msra.mxu0 %v6340
    %6500 = vmatpush.msra.mxu0 %v6338
    %6501 = vmatpush.msra.mxu0 %v6336
    %6502 = vmatpush.msra.mxu0 %v6334
    %6503 = vmatpush.msra.mxu0 %v6332
    %6504 = vmatpush.msra.mxu0 %v6330
    %6505 = vmatpush.msra.mxu0 %v6328
    %6506 = vmatpush.msra.mxu0 %v6326
    %6507 = vmatpush.msra.mxu0 %v6324
    %6508 = vmatpush.msra.mxu0 %v6322
    %6509 = vmatpush.msra.mxu0 %v6320
    %6510 = vmatpush.msra.mxu0 %v6318
    %6511 = vmatmul.f32.gmra.mxu0 %v6220
    %v6512 = vpop.f32.mrf.mxu0
    %v6513 = vadd.f32 %v6493, %v6512
    %6514 = vdwg.mxu0
    %v6515 = vxor.u32 %v6433, 2147483648
    %v6516 = vxor.u32 %v6513, 2147483648
    %v6517 = vmul.f32 %v6515, 1.442695
    %v6518 = vpow.pop %v6517
    %v6519 = vmul.f32 %v6516, 1.442695
    %v6520 = vpow.pop %v6519
    %v6521 = vadd.f32 %v6518, 1.0
    %v6522 = vadd.f32 %v6520, 1.0
    %v6523 = vrcp.pop %v6521
    %v6524 = vmul.f32 %v6521, %v6523
    %v6525 = vsub.f32 1.0, %v6524
    %v6526 = vmul.f32 %v6523, %v6525
    %v6527 = vadd.f32 %v6523, %v6526
    %vm6528 = vweird.f32 %v6521
    %vm6529 = vweird.f32 %v6523
    %vm6530 = vmor %vm6528, %vm6529
    %v6531 = vsel %vm6530, %v6523, %v6527
    %v6532 = vand.u32 2147483647, %v6521
    %vm6533 = vcmp.eq.f32.partialorder %v6532, 8.507059e+37
    %v6534 = vand.u32 %v6521, 2147483648
    %v6535 = vor.u32 1.1754944e-38, %v6534
    %v6536 = vsel %vm6533, %v6535, %v6531
    %v6537 = vmul.f32 1.0, %v6536
    %v6538 = vrcp.pop %v6522
    %v6539 = vmul.f32 %v6522, %v6538
    %v6540 = vsub.f32 1.0, %v6539
    %v6541 = vmul.f32 %v6538, %v6540
    %v6542 = vadd.f32 %v6538, %v6541
    %vm6543 = vweird.f32 %v6522
    %vm6544 = vweird.f32 %v6538
    %vm6545 = vmor %vm6543, %vm6544
    %v6546 = vsel %vm6545, %v6538, %v6542
    %v6547 = vand.u32 2147483647, %v6522
    %vm6548 = vcmp.eq.f32.partialorder %v6547, 8.507059e+37
    %v6549 = vand.u32 %v6522, 2147483648
    %v6550 = vor.u32 1.1754944e-38, %v6549
    %v6551 = vsel %vm6548, %v6550, %v6546
    %v6552 = vmul.f32 1.0, %v6551
    %v6553 = vmul.f32 %v6537, %v6176
    %v6554 = vmul.f32 %v6552, %v6179
    %v6555 = vsub.f32 1.0, %v6537
    %v6556 = vsub.f32 1.0, %v6552
    %v6557 = vmul.f32 %v6555, %v6217
    %v6558 = vmul.f32 %v6556, %v6220
    %v6559 = vadd.f32 %v6553, %v6557
    %v6560 = vadd.f32 %v6554, %v6558
    %v6561 = vld [vmem:[%s53] sm:$0xff]
    %v6562 = vld [vmem:[%s53 + $0x8] sm:$0xff]
    %v6563 = vld [vmem:[%s53 + $0x10] sm:$0xff]
    %v6564 = vld [vmem:[%s53 + $0x18] sm:$0xff]
    %v6565 = vld [vmem:[%s53 + $0x20] sm:$0xff]
    %v6566 = vld [vmem:[%s53 + $0x28] sm:$0xff]
    %v6567 = vld [vmem:[%s53 + $0x30] sm:$0xff]
    %v6568 = vld [vmem:[%s53 + $0x38] sm:$0xff]
    %v6569 = vld [vmem:[%s53 + $0x40] sm:$0xff]
    %v6570 = vld [vmem:[%s53 + $0x48] sm:$0xff]
    %v6571 = vld [vmem:[%s53 + $0x50] sm:$0xff]
    %v6572 = vld [vmem:[%s53 + $0x58] sm:$0xff]
    %v6573 = vld [vmem:[%s53 + $0x60] sm:$0xff]
    %v6574 = vld [vmem:[%s53 + $0x68] sm:$0xff]
    %v6575 = vld [vmem:[%s53 + $0x70] sm:$0xff]
    %v6576 = vld [vmem:[%s53 + $0x78] sm:$0xff]
    %v6577 = vld [vmem:[%s53 + $0x80] sm:$0xff]
    %v6578 = vld [vmem:[%s53 + $0x88] sm:$0xff]
    %v6579 = vld [vmem:[%s53 + $0x90] sm:$0xff]
    %v6580 = vld [vmem:[%s53 + $0x98] sm:$0xff]
    %v6581 = vld [vmem:[%s53 + $0xa0] sm:$0xff]
    %v6582 = vld [vmem:[%s53 + $0xa8] sm:$0xff]
    %v6583 = vld [vmem:[%s53 + $0xb0] sm:$0xff]
    %v6584 = vld [vmem:[%s53 + $0xb8] sm:$0xff]
    %v6585 = vld [vmem:[%s53 + $0xc0] sm:$0xff]
    %v6586 = vld [vmem:[%s53 + $0xc8] sm:$0xff]
    %v6587 = vld [vmem:[%s53 + $0xd0] sm:$0xff]
    %v6588 = vld [vmem:[%s53 + $0xd8] sm:$0xff]
    %v6589 = vld [vmem:[%s53 + $0xe0] sm:$0xff]
    %v6590 = vld [vmem:[%s53 + $0xe8] sm:$0xff]
    %v6591 = vld [vmem:[%s53 + $0xf0] sm:$0xff]
    %v6592 = vld [vmem:[%s53 + $0xf8] sm:$0xff]
    %v6593 = vld [vmem:[%s55] sm:$0x1]
    %v6595 = vperm.slane %v6593, 0
    %6597 = vmatpush.msra.mxu0 %v6576
    %6598 = vmatpush.msra.mxu0 %v6575
    %6599 = vmatpush.msra.mxu0 %v6574
    %6600 = vmatpush.msra.mxu0 %v6573
    %6601 = vmatpush.msra.mxu0 %v6572
    %6602 = vmatpush.msra.mxu0 %v6571
    %6603 = vmatpush.msra.mxu0 %v6570
    %6604 = vmatpush.msra.mxu0 %v6569
    %6605 = vmatpush.msra.mxu0 %v6568
    %6606 = vmatpush.msra.mxu0 %v6567
    %6607 = vmatpush.msra.mxu0 %v6566
    %6608 = vmatpush.msra.mxu0 %v6565
    %6609 = vmatpush.msra.mxu0 %v6564
    %6610 = vmatpush.msra.mxu0 %v6563
    %6611 = vmatpush.msra.mxu0 %v6562
    %6612 = vmatpush.msra.mxu0 %v6561
    %6613 = vmatmul.f32.gmra.mxu0 %v6559
    %v6614 = vpop.f32.mrf.mxu0
    %v6615 = vadd.f32 %v6595, %v6614
    %6616 = vdwg.mxu0
    %6617 = vmatpush.msra.mxu0 %v6592
    %6618 = vmatpush.msra.mxu0 %v6591
    %6619 = vmatpush.msra.mxu0 %v6590
    %6620 = vmatpush.msra.mxu0 %v6589
    %6621 = vmatpush.msra.mxu0 %v6588
    %6622 = vmatpush.msra.mxu0 %v6587
    %6623 = vmatpush.msra.mxu0 %v6586
    %6624 = vmatpush.msra.mxu0 %v6585
    %6625 = vmatpush.msra.mxu0 %v6584
    %6626 = vmatpush.msra.mxu0 %v6583
    %6627 = vmatpush.msra.mxu0 %v6582
    %6628 = vmatpush.msra.mxu0 %v6581
    %6629 = vmatpush.msra.mxu0 %v6580
    %6630 = vmatpush.msra.mxu0 %v6579
    %6631 = vmatpush.msra.mxu0 %v6578
    %6632 = vmatpush.msra.mxu0 %v6577
    %6633 = vmatmul.f32.gmra.mxu0 %v6560
    %v6634 = vpop.f32.mrf.mxu0
    %v6635 = vadd.f32 %v6615, %v6634
    %6636 = vdwg.mxu0
    %v6637 = vtanh.pop %v6635
    %v6638 = vld [vmem:[%s57] sm:$0xff]
    %v6639 = vld [vmem:[%s57 + $0x8] sm:$0xff]
    %v6640 = vld [vmem:[%s57 + $0x10] sm:$0xff]
    %v6641 = vld [vmem:[%s57 + $0x18] sm:$0xff]
    %v6642 = vld [vmem:[%s59] sm:$0x1]
    %v6644 = vperm.slane %v6642, 0
    %v6647 = vsel %vm527, %v6637, 0
    %6649 = vmatpush.msra.mxu0 0.0
    %6650 = vmatpush.msra.mxu0 0.0
    %6651 = vmatpush.msra.mxu0 0.0
    %6652 = vmatpush.msra.mxu0 0.0
    %6653 = vmatpush.msra.mxu0 0.0
    %6654 = vmatpush.msra.mxu0 0.0
    %6655 = vmatpush.msra.mxu0 0.0
    %6656 = vmatpush.msra.mxu0 0.0
    %6657 = vmatpush.msra.mxu0 0.0
    %6658 = vmatpush.msra.mxu0 0.0
    %6659 = vmatpush.msra.mxu0 0.0
    %6660 = vmatpush.msra.mxu0 0.0
    %6661 = vmatpush.msra.mxu0 %v6641
    %6662 = vmatpush.msra.mxu0 %v6640
    %6663 = vmatpush.msra.mxu0 %v6639
    %6664 = vmatpush.msra.mxu0 %v6638
    %6665 = vmatmul.f32.gmra.mxu0 %v6647
    %v6666 = vpop.f32.mrf.mxu0
    %v6667 = vadd.f32 %v6644, %v6666
    %6668 = vdwg.mxu0
    %vm6669 = vcmask 17408
    %6670 = vst.msk [vmem:[#allocation8] sm:$0x3] %vm6669, %v6667
    %v6671 = vsel %vm6669, %v6667, -inf
    %6672 = vmax.xlane.f32.xlu0 %v6671
    %v6673 = vpop.xlane.xlu0 %6672
    %v6674 = vsub.f32 %v6667, %v6673
    %v6675 = vmul.f32 %v6674, 1.442695
    %v6676 = vpow.pop %v6675
    %v6677 = vsel %vm6669, %v6676, 0.0
    %6678 = vadd.xlane.f32.xlu0 %v6677
    %v6679 = vpop.xlane.xlu0 %6678
    %v6680 = vrcp.pop %v6679
    %v6681 = vmul.f32 %v6679, %v6680
    %v6682 = vsub.f32 1.0, %v6681
    %v6683 = vmul.f32 %v6680, %v6682
    %v6684 = vadd.f32 %v6680, %v6683
    %vm6685 = vweird.f32 %v6679
    %vm6686 = vweird.f32 %v6680
    %vm6687 = vmor %vm6685, %vm6686
    %v6688 = vsel %vm6687, %v6680, %v6684
    %v6689 = vand.u32 2147483647, %v6679
    %vm6690 = vcmp.eq.f32.partialorder %v6689, 8.507059e+37
    %v6691 = vand.u32 %v6679, 2147483648
    %v6692 = vor.u32 1.1754944e-38, %v6691
    %v6693 = vsel %vm6690, %v6692, %v6688
    %v6694 = vmul.f32 %v6676, %v6693
    %6695 = vst.msk [vmem:[#allocation10] sm:$0x3] %vm6669, %v6694
    // Predicated region
    $region122: #{esim_f_forward.1} parent=1 // pred_check
      _
    $region123: #{esim_f_forward.1} parent=1 // pred_check_branch
      %6697 = sbr.rel (0) target = $region125
    $region124: #{esim_f_forward.1} parent=1 // pred_region
      %6699 = vsyncadd [#allocation9], 0
      %s6701 = sshll.u32 [#allocation8], 4
      %s6702 = int_to_ptr.vmem [resolvable:$true] %s6701
      %s6703 = sshll.u32 %s61, 4
      %s6704 = int_to_ptr.hbm [resolvable:$true] %s6703
      %6706 = dma.vmem_to_hbm [thread:$0]  %s6702, 32, %s6704, [#allocation9]
    $region125: #{esim_f_forward.1} parent=1 // pred_fallthru
      _
    // Predicated region
    $region126: #{esim_f_forward.1} parent=1 // pred_check
      _
    $region127: #{esim_f_forward.1} parent=1 // pred_check_branch
      %6708 = sbr.rel (0) target = $region129
    $region128: #{esim_f_forward.1} parent=1 // pred_region
      %6710 = vsyncadd [#allocation11], 0
      %s6712 = sshll.u32 [#allocation10], 4
      %s6713 = int_to_ptr.vmem [resolvable:$true] %s6712
      %s6714 = sshll.u32 %s63, 4
      %s6715 = int_to_ptr.hbm [resolvable:$true] %s6714
      %6717 = dma.vmem_to_hbm [thread:$0]  %s6713, 32, %s6715, [#allocation11]
    $region129: #{esim_f_forward.1} parent=1 // pred_fallthru
      _
    // Predicated region
    $region130: #{esim_f_forward.1} parent=1 // pred_check
      _
    $region131: #{esim_f_forward.1} parent=1 // pred_check_branch
      %6719 = sbr.rel (0) target = $region133
    $region132: #{esim_f_forward.1} parent=1 // pred_region
      %6721 = dma.done [#allocation9], 32
    $region133: #{esim_f_forward.1} parent=1 // pred_fallthru
      _
    // Predicated region
    $region134: #{esim_f_forward.1} parent=1 // pred_check
      _
    $region135: #{esim_f_forward.1} parent=1 // pred_check_branch
      %6723 = sbr.rel (0) target = $region137
    $region136: #{esim_f_forward.1} parent=1 // pred_region
      %6725 = dma.done [#allocation11], 32
    $region137: #{esim_f_forward.1} parent=1 // pred_fallthru
      _
    %6726 = vsyncpa [#allocation9], 1
    %6727 = vsyncpa [#allocation11], 1

</llo_original>
